<compile_context>
chip_gen: v7x
topology: tpu7x:2x2x1
jax: 0.10.0
libtpu: 0.0.40
codegen_flags: <defaults>
</compile_context>

<pallas_src>
import functools

import jax
import jax.numpy as jnp
from jax.experimental import pallas as pl
from jax.experimental.pallas import tpu as pltpu

KSIZE = 3
EPS = 1e-5
LANE = 128


def _round_up(x, m):
    return (x + m - 1) // m * m


# ---------------------------------------------------------------------------
# Fused Pallas kernel: (conv3d + BN shift + ReLU) x 2 for one sample.
# ---------------------------------------------------------------------------
def _double_conv_kernel(lhs1_ref, w1_ref, s1_ref, w2_ref, s2_ref, o_ref, y_ref, *,
                        depth):
    # lhs1_ref: (D, 3*l_in1p) bf16   -- kd taps folded into K; spatially padded+flattened
    # w1_ref  : (3*l_in1p, l_midp) bf16 -- conv1 block-Toeplitz, output spatially padded
    # s1_ref  : (1, l_midp) f32      -- BN1 shift (+bias), zero on padded border columns
    # w2_ref  : (3, l_midp, l_out) bf16 -- conv2 block-Toeplitz per depth tap
    # s2_ref  : (1, l_out) f32       -- BN2 shift (+bias)
    # o_ref   : (D, l_out)           -- lane-dense output tile
    # y_ref   : (D+2, l_midp) bf16 VMEM scratch -- intermediate with 1-slice depth halo

    # Stage 1: one big MXU dot (all 3 depth taps live in K), f32 accumulation.
    acc1 = jnp.dot(lhs1_ref[...], w1_ref[...], preferred_element_type=jnp.float32)
    zero_row = jnp.zeros((1, y_ref.shape[1]), y_ref.dtype)
    y_ref[0:1, :] = zero_row                          # depth halo (front)
    y_ref[depth + 1:depth + 2, :] = zero_row          # depth halo (back)
    y_ref[1:depth + 1, :] = jnp.maximum(acc1 + s1_ref[...], 0.0).astype(y_ref.dtype)

    # Stage 2: 3 depth-tap dots on the VMEM-resident intermediate, f32 accumulation.
    acc2 = jnp.zeros(o_ref.shape, jnp.float32)
    for kd in range(KSIZE):
        acc2 = acc2 + jnp.dot(y_ref[kd:kd + depth, :], w2_ref[kd],
                              preferred_element_type=jnp.float32)
    o_ref[...] = jnp.maximum(acc2 + s2_ref[...], 0.0).astype(o_ref.dtype)


# ---------------------------------------------------------------------------
# One-time parameter prep (hoisted out of the forward path).
# ---------------------------------------------------------------------------
def _sel(n):
    # sel[k, i, o] = 1 iff padded-input index i == output index o + k  (SAME, pad=1)
    i = jnp.arange(n + 2)[:, None]
    o = jnp.arange(n)[None, :]
    return jnp.stack([(i == o + k).astype(jnp.float32) for k in range(KSIZE)], axis=0)


def _toeplitz(w_oidhw, h, w, pad_out_spatial):
    """Fold the (kh, kw, Cin) taps into a dense block-Toeplitz matrix per kd tap.

    Input columns index the zero-padded (h+2, w+2, cin) plane (row-major).  Output
    columns index (h, w, cout), or -- if pad_out_spatial -- the zero-padded
    (h+2, w+2, cout) plane with all-zero border columns (so the result can feed the
    next conv stage directly, no in-kernel spatial re-padding).
    """
    cout, cin = w_oidhw.shape[:2]
    ws = jnp.transpose(w_oidhw.astype(jnp.float32), (2, 3, 4, 1, 0))  # (kd,kh,kw,ci,co)
    t = jnp.einsum('aih,bjw,dabco->dijchwo', _sel(h), _sel(w), ws)
    # t: (3, h+2, w+2, cin, h, w, cout)
    if pad_out_spatial:
        t = jnp.pad(t, ((0, 0), (0, 0), (0, 0), (0, 0), (1, 1), (1, 1), (0, 0)))
        lo = (h + 2) * (w + 2) * cout
    else:
        lo = h * w * cout
    return t.reshape(KSIZE, (h + 2) * (w + 2) * cin, lo)


def prepare_double_conv(params, h, w):
    w1, s1 = params["w1_folded"], params["shift1"]
    w2, s2 = params["w2_folded"], params["shift2"]
    cmid, cin = w1.shape[:2]
    cout = w2.shape[0]
    l_in1 = (h + 2) * (w + 2) * cin
    l_in1p = _round_up(l_in1, LANE)
    l_mid = (h + 2) * (w + 2) * cmid
    l_midp = _round_up(l_mid, LANE)
    l_out = h * w * cout

    t1 = _toeplitz(w1, h, w, pad_out_spatial=True)             # (3, l_in1, l_mid)
    t1 = jnp.pad(t1, ((0, 0), (0, l_in1p - l_in1), (0, l_midp - l_mid)))
    w1mat = t1.reshape(KSIZE * l_in1p, l_midp).astype(jnp.bfloat16)

    t2 = _toeplitz(w2, h, w, pad_out_spatial=False)            # (3, l_mid, l_out)
    t2 = jnp.pad(t2, ((0, 0), (0, l_midp - l_mid), (0, 0)))
    w2mat = t2.astype(jnp.bfloat16)                            # (3, l_midp, l_out)

    # Shift rows: zero on the spatial border / alignment-pad columns so the padded
    # intermediate positions stay exactly 0 after the in-kernel ReLU.
    s1_sp = jnp.pad(jnp.broadcast_to(s1.astype(jnp.float32), (h, w, cmid)),
                    ((1, 1), (1, 1), (0, 0)))
    s1row = jnp.pad(s1_sp.reshape(1, l_mid), ((0, 0), (0, l_midp - l_mid)))
    s2row = jnp.tile(s2.astype(jnp.float32), h * w).reshape(1, l_out)
    return {"w1mat": w1mat, "s1row": s1row, "w2mat": w2mat, "s2row": s2row}


# ---------------------------------------------------------------------------
# Forward pass.
# ---------------------------------------------------------------------------
def double_conv_forward(x_ncdhw, prep):
    # x_ncdhw: (N, Cin, D, H, W) -> (N, Cout, D, H, W)
    n, cin, d, h, w = x_ncdhw.shape
    w1mat, s1row = prep["w1mat"], prep["s1row"]
    w2mat, s2row = prep["w2mat"], prep["s2row"]
    l_in1 = (h + 2) * (w + 2) * cin
    l_in1p = w1mat.shape[0] // KSIZE
    l_midp = w2mat.shape[1]
    l_out = w2mat.shape[2]
    cout = l_out // (h * w)
    assert l_in1p == _round_up(l_in1, LANE), "prepared params do not match input shape"

    # Glue: bf16 cast first, NDHWC, SAME zero pad, flatten the (H+2, W+2, Cin) plane into
    # the lane dim, pad K to a multiple of 128, and fold the 3 depth taps into K (cheap
    # 3x duplication of a small input; replaces the old halo stack).
    xf = jnp.transpose(x_ncdhw.astype(jnp.bfloat16), (0, 2, 3, 4, 1))   # NDHWC
    xf = jnp.pad(xf, ((0, 0), (1, 1), (1, 1), (1, 1), (0, 0)))
    xf = xf.reshape(n, d + 2, l_in1)
    xf = jnp.pad(xf, ((0, 0), (0, 0), (0, l_in1p - l_in1)))
    lhs1 = jnp.concatenate([xf[:, 0:d], xf[:, 1:d + 1], xf[:, 2:d + 2]], axis=-1)

    out = pl.pallas_call(
        functools.partial(_double_conv_kernel, depth=d),
        out_shape=jax.ShapeDtypeStruct((n, d, l_out), jnp.float32),
        grid_spec=pltpu.PrefetchScalarGridSpec(
            num_scalar_prefetch=0,
            grid=(n,),                            # one sample per step; 1 per TC on v7x
            in_specs=[
                pl.BlockSpec((pl.Squeezed(), d, KSIZE * l_in1p), lambda b: (b, 0, 0)),
                pl.BlockSpec((KSIZE * l_in1p, l_midp), lambda b: (0, 0)),   # resident
                pl.BlockSpec((1, l_midp), lambda b: (0, 0)),
                pl.BlockSpec((KSIZE, l_midp, l_out), lambda b: (0, 0, 0)),  # resident
                pl.BlockSpec((1, l_out), lambda b: (0, 0)),
            ],
            out_specs=pl.BlockSpec((pl.Squeezed(), d, l_out), lambda b: (b, 0, 0)),
            scratch_shapes=[pltpu.VMEM((d + 2, l_midp), jnp.bfloat16)],
        ),
        compiler_params=pltpu.CompilerParams(
            dimension_semantics=("parallel",),    # shards samples on v7x's 2 TensorCores
            vmem_limit_bytes=32 * 1024 * 1024,    # ~11 MiB used; safe on v7x's 64 MiB
        ),
    )(lhs1, w1mat, s1row, w2mat, s2row)

    out = out.reshape(n, d, h, w, cout)
    return jnp.transpose(out, (0, 4, 1, 2, 3))    # back to NCDHW


# ---------------------------------------------------------------------------
# Parameter init (mimics PyTorch Conv3d/BatchNorm3d defaults) + BN folding.
# ---------------------------------------------------------------------------
def init_double_conv_params(key, in_ch, out_ch, mid_ch=None, ksize=KSIZE, eps=EPS):
    if mid_ch is None:
        mid_ch = out_ch
    k1, k2 = jax.random.split(key)

    def conv_init(k, cin, cout):
        fan_in = cin * ksize ** 3
        bound = 1.0 / (fan_in ** 0.5)
        kw_, kb_ = jax.random.split(k)
        wgt = jax.random.uniform(kw_, (cout, cin, ksize, ksize, ksize),
                                 jnp.float32, -bound, bound)
        bias = jax.random.uniform(kb_, (cout,), jnp.float32, -bound, bound)
        return wgt, bias

    def fold_bn(wgt, bias, cout):
        gamma = jnp.ones((cout,), jnp.float32)
        beta = jnp.zeros((cout,), jnp.float32)
        mean = jnp.zeros((cout,), jnp.float32)
        var = jnp.ones((cout,), jnp.float32)
        scale = gamma / jnp.sqrt(var + eps)
        shift = scale * (bias - mean) + beta
        w_folded = (wgt * scale[:, None, None, None, None]).astype(jnp.bfloat16)
        return w_folded, shift

    w1, b1 = conv_init(k1, in_ch, mid_ch)
    w2, b2 = conv_init(k2, mid_ch, out_ch)
    w1f, s1 = fold_bn(w1, b1, mid_ch)
    w2f, s2 = fold_bn(w2, b2, out_ch)
    return {"w1_folded": w1f, "shift1": s1, "w2_folded": w2f, "shift2": s2}


# ---------------------------------------------------------------------------
# Pure-JAX reference (XLA conv, same bf16 operands / f32 accumulation) for checking.
# ---------------------------------------------------------------------------
def _ref_double_conv(x_ncdhw, params):
    def step(x, w_folded_bf16, shift):
        y = jax.lax.conv_general_dilated(
            x.astype(jnp.bfloat16), w_folded_bf16, (1, 1, 1), "SAME",
            dimension_numbers=("NCDHW", "OIDHW", "NCDHW"),
            preferred_element_type=jnp.float32)
        return jnp.maximum(y + shift.reshape(1, -1, 1, 1, 1), 0.0)

    y = step(x_ncdhw, params["w1_folded"], params["shift1"]).astype(jnp.bfloat16)
    return step(y, params["w2_folded"], params["shift2"]).astype(jnp.float32)


if __name__ == "__main__":
    key = jax.random.PRNGKey(0)
    kx, kp = jax.random.split(key)

    N, Cin, Cout, D, H, W = 2, 4, 8, 8, 8, 8
    x = jax.random.normal(kx, (N, Cin, D, H, W), jnp.float32)
    params = init_double_conv_params(kp, Cin, Cout)
    prep = prepare_double_conv(params, H, W)          # one-time, outside the fwd path

    fwd = jax.jit(double_conv_forward)
    out = jax.block_until_ready(fwd(x, prep))
    assert out.shape == (N, Cout, D, H, W)

    ref = jax.block_until_ready(_ref_double_conv(x, params))
    max_err = float(jnp.max(jnp.abs(out - ref)))
    assert bool(jnp.allclose(out, ref, atol=1e-2, rtol=1e-2)), (
        f"mismatch vs XLA reference (max abs err {max_err})")

    print("KERNEL_OK")
</pallas_src>

<mosaic_0001>
module attributes {stable_mosaic.version = 11 : i64} {
  func.func @_double_conv_kernel(%arg0: i32, %arg1: memref<1x8x1536xbf16, #tpu.memory_space<vmem>>, %arg2: memref<1536x896xbf16, #tpu.memory_space<vmem>>, %arg3: memref<1x896xf32, #tpu.memory_space<vmem>>, %arg4: memref<3x896x512xbf16, #tpu.memory_space<vmem>>, %arg5: memref<1x512xf32, #tpu.memory_space<vmem>>, %arg6: memref<1x8x512xf32, #tpu.memory_space<vmem>>, %arg7: memref<10x896xbf16, #tpu.memory_space<vmem>>) attributes {dimension_semantics = [#tpu.dimension_semantics<parallel>], iteration_bounds = array<i64: 2>, scalar_prefetch = 0 : i64, scratch_operands = 1 : i64, tpu.core_type = #tpu.core_type<tc>, window_params = [{transform_indices = @transform_0, window_bounds = array<i64: 1, 8, 1536>}, {pipeline_mode = #tpu.pipeline_mode<synchronous>, transform_indices = @transform_1, window_bounds = array<i64: 1536, 896>}, {pipeline_mode = #tpu.pipeline_mode<synchronous>, transform_indices = @transform_2, window_bounds = array<i64: 1, 896>}, {pipeline_mode = #tpu.pipeline_mode<synchronous>, transform_indices = @transform_3, window_bounds = array<i64: 3, 896, 512>}, {pipeline_mode = #tpu.pipeline_mode<synchronous>, transform_indices = @transform_4, window_bounds = array<i64: 1, 512>}, {transform_indices = @transform_5, window_bounds = array<i64: 1, 8, 512>}]} {
    %c0 = arith.constant 0 : index
    %c0_0 = arith.constant 0 : index
    %c0_1 = arith.constant 0 : index
    %0 = vector.load %arg1[%c0, %c0_0, %c0_1] : memref<1x8x1536xbf16, #tpu.memory_space<vmem>>, vector<1x8x1536xbf16>
    %1 = vector.shape_cast %0 : vector<1x8x1536xbf16> to vector<8x1536xbf16>
    %c0_2 = arith.constant 0 : index
    %c0_3 = arith.constant 0 : index
    %2 = vector.load %arg2[%c0_2, %c0_3] : memref<1536x896xbf16, #tpu.memory_space<vmem>>, vector<1536x896xbf16>
    %cst = arith.constant dense<0.000000e+00> : vector<8x896xf32>
    %3 = tpu.matmul %1, %2, %cst {dimension_numbers = #tpu.dot_dimension_numbers<[1], [0], [0], [1], [0, 0, 1, 1], [], []>} : vector<8x1536xbf16>, vector<1536x896xbf16>, vector<8x896xf32> -> vector<8x896xf32>
    %cst_4 = arith.constant 0.000000e+00 : bf16
    %4 = vector.broadcast %cst_4 : bf16 to vector<1x896xbf16>
    %c0_5 = arith.constant 0 : index
    %c0_6 = arith.constant 0 : index
    %5 = vector.load %arg7[%c0_5, %c0_6] : memref<10x896xbf16, #tpu.memory_space<vmem>>, vector<1x896xbf16>
    tpu.vector_store %arg7[%c0_5, %c0_6], %4 {strides = array<i32>} : memref<10x896xbf16, #tpu.memory_space<vmem>>, vector<1x896xbf16>,
    %c9 = arith.constant 9 : index
    %c0_7 = arith.constant 0 : index
    %6 = vector.load %arg7[%c9, %c0_7] : memref<10x896xbf16, #tpu.memory_space<vmem>>, vector<1x896xbf16>
    tpu.vector_store %arg7[%c9, %c0_7], %4 {strides = array<i32>} : memref<10x896xbf16, #tpu.memory_space<vmem>>, vector<1x896xbf16>,
    %c0_8 = arith.constant 0 : index
    %c0_9 = arith.constant 0 : index
    %7 = vector.load %arg3[%c0_8, %c0_9] : memref<1x896xf32, #tpu.memory_space<vmem>>, vector<1x896xf32>
    %8 = vector.broadcast %7 : vector<1x896xf32> to vector<8x896xf32>
    %9 = arith.addf %3, %8 : vector<8x896xf32>
    %cst_10 = arith.constant 0.000000e+00 : f32
    %10 = vector.broadcast %cst_10 : f32 to vector<8x896xf32>
    %11 = arith.maximumf %9, %10 : vector<8x896xf32>
    %12 = arith.truncf %11 : vector<8x896xf32> to vector<8x896xbf16>
    %c1 = arith.constant 1 : index
    %c0_11 = arith.constant 0 : index
    %13 = vector.load %arg7[%c1, %c0_11] : memref<10x896xbf16, #tpu.memory_space<vmem>>, vector<8x896xbf16>
    tpu.vector_store %arg7[%c1, %c0_11], %12 {strides = array<i32>} : memref<10x896xbf16, #tpu.memory_space<vmem>>, vector<8x896xbf16>,
    %cst_12 = arith.constant 0.000000e+00 : f32
    %14 = vector.broadcast %cst_12 : f32 to vector<8x512xf32>
    %c0_13 = arith.constant 0 : index
    %c0_14 = arith.constant 0 : index
    %15 = vector.load %arg7[%c0_13, %c0_14] : memref<10x896xbf16, #tpu.memory_space<vmem>>, vector<8x896xbf16>
    %c0_15 = arith.constant 0 : index
    %c0_16 = arith.constant 0 : index
    %c0_17 = arith.constant 0 : index
    %16 = vector.load %arg4[%c0_15, %c0_16, %c0_17] : memref<3x896x512xbf16, #tpu.memory_space<vmem>>, vector<1x896x512xbf16>
    %17 = vector.shape_cast %16 : vector<1x896x512xbf16> to vector<896x512xbf16>
    %cst_18 = arith.constant dense<0.000000e+00> : vector<8x512xf32>
    %18 = tpu.matmul %15, %17, %cst_18 {dimension_numbers = #tpu.dot_dimension_numbers<[1], [0], [0], [1], [0, 0, 1, 1], [], []>} : vector<8x896xbf16>, vector<896x512xbf16>, vector<8x512xf32> -> vector<8x512xf32>
    %19 = arith.addf %14, %18 : vector<8x512xf32>
    %c1_19 = arith.constant 1 : index
    %c0_20 = arith.constant 0 : index
    %20 = vector.load %arg7[%c1_19, %c0_20] : memref<10x896xbf16, #tpu.memory_space<vmem>>, vector<8x896xbf16>
    %c1_21 = arith.constant 1 : index
    %c0_22 = arith.constant 0 : index
    %c0_23 = arith.constant 0 : index
    %21 = vector.load %arg4[%c1_21, %c0_22, %c0_23] : memref<3x896x512xbf16, #tpu.memory_space<vmem>>, vector<1x896x512xbf16>
    %22 = vector.shape_cast %21 : vector<1x896x512xbf16> to vector<896x512xbf16>
    %cst_24 = arith.constant dense<0.000000e+00> : vector<8x512xf32>
    %23 = tpu.matmul %20, %22, %cst_24 {dimension_numbers = #tpu.dot_dimension_numbers<[1], [0], [0], [1], [0, 0, 1, 1], [], []>} : vector<8x896xbf16>, vector<896x512xbf16>, vector<8x512xf32> -> vector<8x512xf32>
    %24 = arith.addf %19, %23 : vector<8x512xf32>
    %c2 = arith.constant 2 : index
    %c0_25 = arith.constant 0 : index
    %25 = vector.load %arg7[%c2, %c0_25] : memref<10x896xbf16, #tpu.memory_space<vmem>>, vector<8x896xbf16>
    %c2_26 = arith.constant 2 : index
    %c0_27 = arith.constant 0 : index
    %c0_28 = arith.constant 0 : index
    %26 = vector.load %arg4[%c2_26, %c0_27, %c0_28] : memref<3x896x512xbf16, #tpu.memory_space<vmem>>, vector<1x896x512xbf16>
    %27 = vector.shape_cast %26 : vector<1x896x512xbf16> to vector<896x512xbf16>
    %cst_29 = arith.constant dense<0.000000e+00> : vector<8x512xf32>
    %28 = tpu.matmul %25, %27, %cst_29 {dimension_numbers = #tpu.dot_dimension_numbers<[1], [0], [0], [1], [0, 0, 1, 1], [], []>} : vector<8x896xbf16>, vector<896x512xbf16>, vector<8x512xf32> -> vector<8x512xf32>
    %29 = arith.addf %24, %28 : vector<8x512xf32>
    %c0_30 = arith.constant 0 : index
    %c0_31 = arith.constant 0 : index
    %30 = vector.load %arg5[%c0_30, %c0_31] : memref<1x512xf32, #tpu.memory_space<vmem>>, vector<1x512xf32>
    %31 = vector.broadcast %30 : vector<1x512xf32> to vector<8x512xf32>
    %32 = arith.addf %29, %31 : vector<8x512xf32>
    %cst_32 = arith.constant 0.000000e+00 : f32
    %33 = vector.broadcast %cst_32 : f32 to vector<8x512xf32>
    %34 = arith.maximumf %32, %33 : vector<8x512xf32>
    %c0_33 = arith.constant 0 : index
    %c0_34 = arith.constant 0 : index
    %c0_35 = arith.constant 0 : index
    %35 = vector.load %arg6[%c0_33, %c0_34, %c0_35] : memref<1x8x512xf32, #tpu.memory_space<vmem>>, vector<1x8x512xf32>
    %36 = vector.shape_cast %35 : vector<1x8x512xf32> to vector<8x512xf32>
    %37 = vector.shape_cast %34 : vector<8x512xf32> to vector<1x8x512xf32>
    tpu.vector_store %arg6[%c0_33, %c0_34, %c0_35], %37 {strides = array<i32>} : memref<1x8x512xf32, #tpu.memory_space<vmem>>, vector<1x8x512xf32>,
    return
  }
  func.func @transform_0(%arg0: i32) -> (i32, i32, i32) {
    %c0_i32 = arith.constant 0 : i32
    %c0_i32_0 = arith.constant 0 : i32
    %c0_i32_1 = arith.constant 0 : i32
    return %arg0, %c0_i32, %c0_i32_0 : i32, i32, i32
  }
  func.func @transform_1(%arg0: i32) -> (i32, i32) {
    %c0_i32 = arith.constant 0 : i32
    %c0_i32_0 = arith.constant 0 : i32
    %c0_i32_1 = arith.constant 0 : i32
    return %c0_i32, %c0_i32_0 : i32, i32
  }
  func.func @transform_2(%arg0: i32) -> (i32, i32) {
    %c0_i32 = arith.constant 0 : i32
    %c0_i32_0 = arith.constant 0 : i32
    %c0_i32_1 = arith.constant 0 : i32
    return %c0_i32, %c0_i32_0 : i32, i32
  }
  func.func @transform_3(%arg0: i32) -> (i32, i32, i32) {
    %c0_i32 = arith.constant 0 : i32
    %c0_i32_0 = arith.constant 0 : i32
    %c0_i32_1 = arith.constant 0 : i32
    %c0_i32_2 = arith.constant 0 : i32
    return %c0_i32, %c0_i32_0, %c0_i32_1 : i32, i32, i32
  }
  func.func @transform_4(%arg0: i32) -> (i32, i32) {
    %c0_i32 = arith.constant 0 : i32
    %c0_i32_0 = arith.constant 0 : i32
    %c0_i32_1 = arith.constant 0 : i32
    return %c0_i32, %c0_i32_0 : i32, i32
  }
  func.func @transform_5(%arg0: i32) -> (i32, i32, i32) {
    %c0_i32 = arith.constant 0 : i32
    %c0_i32_0 = arith.constant 0 : i32
    %c0_i32_1 = arith.constant 0 : i32
    return %arg0, %c0_i32, %c0_i32_0 : i32, i32, i32
  }
}

</mosaic_0001>

<llo_original>
// kernel: double_conv_forward.1
$region0: #{double_conv_forward.1}
  #allocation0 [shape = 'u32[]', space=smem, size = 0x4, offset = 0x4, fixed_abs, tag = 'smem constant byte address 0x4 - core index']
  #allocation1 [shape = 'u32[144,128]{1,0:T(1,128)}', space=vmem, size = 0x12000, scoped, tag = 'internal scratch']
  #allocation2 [shape = 'bf16[10,896]{1,0:T(8,128)(2,1)}', space=vmem, size = 0x7000, scoped, tag = 'scratch operand']
  %s0 = inlined_call_operand.vmem [shape: bf16[2,8,1536], index: 0, kind: input, shape index: {}]
  %s1 = inlined_call_operand.hbm [shape: bf16[1536,896], index: 1, kind: input, shape index: {}]
  %s2 = inlined_call_operand.hbm [shape: f32[1,896], index: 2, kind: input, shape index: {}]
  %s3 = inlined_call_operand.hbm [shape: bf16[3,896,512], index: 3, kind: input, shape index: {}]
  %s4 = inlined_call_operand.hbm [shape: f32[1,512], index: 4, kind: input, shape index: {}]
  %s5 = inlined_call_operand.vmem [shape: f32[2,8,512], index: 5, kind: output, shape index: {}]
  %s6 = sld [smem:[#allocation0]]
  $region69: #{double_conv_forward.1} parent=0
    _
  %s8 = ssub.s32 1, %s6
  %s9 = scalar_select 0, %s8, %s6
  $region1: #{double_conv_forward.1} parent=0
    #allocation3 [shape = 'u8[2752512]{0}', space=vmem, size = 0x2a0000, scoped, tag = 'input window, operand 1, single buffered']
    #allocation4 [shape = 's32[2]{0}', space=sflag, size = 0x8, scoped, tag = 'scoped memory for double_conv_forward.1']
    #allocation5 [shape = 'u8[3584]{0}', space=vmem, size = 0x1000, scoped, tag = 'input window, operand 2, single buffered']
    #allocation6 [shape = 's32[1]{0}', space=sflag, size = 0x4, scoped, tag = 'scoped memory for double_conv_forward.1']
    #allocation7 [shape = 'u8[2752512]{0}', space=vmem, size = 0x2a0000, scoped, tag = 'input window, operand 3, single buffered']
    #allocation8 [shape = 'u8[2048]{0}', space=vmem, size = 0x800, scoped, tag = 'input window, operand 4, single buffered']
    #allocation9 [shape = 's32[1]{0}', space=sflag, size = 0x4, scoped, tag = 'scoped memory for double_conv_forward.1']
    %10 = vsyncpa [#allocation4], 0
    %11 = vsyncpa [#allocation6], 0
    %12 = vsyncpa [#allocation9], 0
    loop: start=0, step=1, limit=4
    $region2: #{double_conv_forward.1} parent=1 // loop_pre_header
      _
    $region3: #{double_conv_forward.1} parent=1 // loop_header
      %s14 = sphi 0, %s18
      %p15 = scmp.ge.s32.totalorder %s14, 4
      %s24 = sphi 0, %s26
      %s27 = sphi 0, %s24
      %s28 = sphi 0, %s27
      %s44 = sphi 0, %s28
      %s48 = sphi 0, %s48
      %s50 = sphi 0, %s48
      %s51 = sphi 0, %s50
      %s65 = sphi 0, %s51
      %s69 = sphi 0, %s69
      %s71 = sphi 0, %s69
      %s72 = sphi 0, %s71
      %s86 = sphi 0, %s72
      %s90 = sphi 0, %s90
      %s92 = sphi 0, %s90
      %s93 = sphi 0, %s92
      %s107 = sphi 0, %s93
      %s111 = sphi 0, %s111
      %s113 = sphi 0, %s111
      %s114 = sphi 0, %s113
      %s128 = sphi 0, %s114
      %s134 = sphi 0, %s136
      %s137 = sphi 0, %s134
      %s138 = sphi 0, %s137
      %s154 = sphi 0, %s138
    $region4: #{double_conv_forward.1} parent=1 // loop_header_branch
      %17 = sbr.rel (%p15) target = $region8
    $region5: #{double_conv_forward.1} parent=1 // loop_body
      %s19 = ssub.s32 %s14, 1
      %s20 = ssub.s32 %s14, 2
      %s21 = sadd.s32 %s14, 1
      %s22 = ssub.s32 %s14, %s21
      %p23 = scmp.eq.s32.totalorder %s22, 0
      %s25 = sadd.s32 %s24, 1
      %s26 = scalar_select %p23, %s24, %s25
      %p29 = pneg %p23
      %p30 = scmp.eq.s32.totalorder %s14, 1
      %p31 = por %p29, %p30
      %p32 = scmp.ne.s32.totalorder %s24, %s27
      %p33 = scmp.eq.s32.totalorder %s14, 0
      %p34 = por %p32, %p33
      %p35 = scmp.ne.s32.totalorder %s24, %s27
      %p36 = scmp.eq.s32.totalorder %s19, 1
      %p37 = por %p35, %p36
      %p38 = scmp.ne.s32.totalorder %s27, %s28
      %p39 = scmp.eq.s32.totalorder %s19, 0
      %p40 = por %p38, %p39
      %p41 = scmp.ne.s32.totalorder %s27, %s28
      %p42 = scmp.eq.s32.totalorder %s20, 1
      %p43 = por %p41, %p42
      %p45 = scmp.ne.s32.totalorder %s28, %s44
      %p46 = scmp.eq.s32.totalorder %s20, 0
      %p47 = por %p45, %p46
      %s49 = sadd.s32 %s48, 1
      %p52 = scmp.eq.s32.totalorder %s14, 1
      %p53 = scmp.ne.s32.totalorder %s48, %s50
      %p54 = scmp.eq.s32.totalorder %s14, 0
      %p55 = por %p53, %p54
      %p56 = scmp.ne.s32.totalorder %s48, %s50
      %p57 = scmp.eq.s32.totalorder %s19, 1
      %p58 = por %p56, %p57
      %p59 = scmp.ne.s32.totalorder %s50, %s51
      %p60 = scmp.eq.s32.totalorder %s19, 0
      %p61 = por %p59, %p60
      %p62 = scmp.ne.s32.totalorder %s50, %s51
      %p63 = scmp.eq.s32.totalorder %s20, 1
      %p64 = por %p62, %p63
      %p66 = scmp.ne.s32.totalorder %s51, %s65
      %p67 = scmp.eq.s32.totalorder %s20, 0
      %p68 = por %p66, %p67
      %s70 = sadd.s32 %s69, 1
      %p73 = scmp.eq.s32.totalorder %s14, 1
      %p74 = scmp.ne.s32.totalorder %s69, %s71
      %p75 = scmp.eq.s32.totalorder %s14, 0
      %p76 = por %p74, %p75
      %p77 = scmp.ne.s32.totalorder %s69, %s71
      %p78 = scmp.eq.s32.totalorder %s19, 1
      %p79 = por %p77, %p78
      %p80 = scmp.ne.s32.totalorder %s71, %s72
      %p81 = scmp.eq.s32.totalorder %s19, 0
      %p82 = por %p80, %p81
      %p83 = scmp.ne.s32.totalorder %s71, %s72
      %p84 = scmp.eq.s32.totalorder %s20, 1
      %p85 = por %p83, %p84
      %p87 = scmp.ne.s32.totalorder %s72, %s86
      %p88 = scmp.eq.s32.totalorder %s20, 0
      %p89 = por %p87, %p88
      %s91 = sadd.s32 %s90, 1
      %p94 = scmp.eq.s32.totalorder %s14, 1
      %p95 = scmp.ne.s32.totalorder %s90, %s92
      %p96 = scmp.eq.s32.totalorder %s14, 0
      %p97 = por %p95, %p96
      %p98 = scmp.ne.s32.totalorder %s90, %s92
      %p99 = scmp.eq.s32.totalorder %s19, 1
      %p100 = por %p98, %p99
      %p101 = scmp.ne.s32.totalorder %s92, %s93
      %p102 = scmp.eq.s32.totalorder %s19, 0
      %p103 = por %p101, %p102
      %p104 = scmp.ne.s32.totalorder %s92, %s93
      %p105 = scmp.eq.s32.totalorder %s20, 1
      %p106 = por %p104, %p105
      %p108 = scmp.ne.s32.totalorder %s93, %s107
      %p109 = scmp.eq.s32.totalorder %s20, 0
      %p110 = por %p108, %p109
      %s112 = sadd.s32 %s111, 1
      %p115 = scmp.eq.s32.totalorder %s14, 1
      %p116 = scmp.ne.s32.totalorder %s111, %s113
      %p117 = scmp.eq.s32.totalorder %s14, 0
      %p118 = por %p116, %p117
      %p119 = scmp.ne.s32.totalorder %s111, %s113
      %p120 = scmp.eq.s32.totalorder %s19, 1
      %p121 = por %p119, %p120
      %p122 = scmp.ne.s32.totalorder %s113, %s114
      %p123 = scmp.eq.s32.totalorder %s19, 0
      %p124 = por %p122, %p123
      %p125 = scmp.ne.s32.totalorder %s113, %s114
      %p126 = scmp.eq.s32.totalorder %s20, 1
      %p127 = por %p125, %p126
      %p129 = scmp.ne.s32.totalorder %s114, %s128
      %p130 = scmp.eq.s32.totalorder %s20, 0
      %p131 = por %p129, %p130
      %s132 = ssub.s32 %s14, %s21
      %p133 = scmp.eq.s32.totalorder %s132, 0
      %s135 = sadd.s32 %s134, 1
      %s136 = scalar_select %p133, %s134, %s135
      %p139 = pneg %p133
      %p140 = scmp.eq.s32.totalorder %s14, 1
      %p141 = por %p139, %p140
      %p142 = scmp.ne.s32.totalorder %s134, %s137
      %p143 = scmp.eq.s32.totalorder %s14, 0
      %p144 = por %p142, %p143
      %p145 = scmp.ne.s32.totalorder %s134, %s137
      %p146 = scmp.eq.s32.totalorder %s19, 1
      %p147 = por %p145, %p146
      %p148 = scmp.ne.s32.totalorder %s137, %s138
      %p149 = scmp.eq.s32.totalorder %s19, 0
      %p150 = por %p148, %p149
      %p151 = scmp.ne.s32.totalorder %s137, %s138
      %p152 = scmp.eq.s32.totalorder %s20, 1
      %p153 = por %p151, %p152
      %p155 = scmp.ne.s32.totalorder %s138, %s154
      %p156 = scmp.eq.s32.totalorder %s20, 0
      %p157 = por %p155, %p156
      %p158 = scmp.le.s32.totalorder 1, %s14
      %p159 = scmp.lt.s32.totalorder %s14, 3
      %p160 = pnand %p158, %p159
      %p161 = pneg %p160
      // Predicated region
      $region9: #{double_conv_forward.1} parent=5 // pred_check
        _
      $region10: #{double_conv_forward.1} parent=5 // pred_check_branch
        %163 = sbr.rel (%p160) target = $region12
      $region11: #{double_conv_forward.1} parent=5 // pred_region
        %s164 = ssub.s32 %s14, 1
        // Predicated region
        $region13: #{double_conv_forward.1} parent=11 // pred_check
          %p165 = pneg %p61
        $region14: #{double_conv_forward.1} parent=11 // pred_check_branch
          %167 = sbr.rel (%p165) target = $region16
        $region15: #{double_conv_forward.1} parent=11 // pred_region
          %s169 = ssub.s32 86016, 86016
          %170 = vsyncadd [#allocation4], %s169
          %s171 = sshll.u32 [#allocation3], 4
          %s172 = int_to_ptr.vmem [resolvable:$true] %s171
          %177 = dma.hbm_to_vmem [thread:$0]  %s1, 86016, %s172, [#allocation4], 448, 448, 28
        $region16: #{double_conv_forward.1} parent=11 // pred_fallthru
          _
        // Predicated region
        $region17: #{double_conv_forward.1} parent=11 // pred_check
          %p178 = pneg %p82
        $region18: #{double_conv_forward.1} parent=11 // pred_check_branch
          %180 = sbr.rel (%p178) target = $region20
        $region19: #{double_conv_forward.1} parent=11 // pred_region
          %s182 = ssub.s32 112, 112
          %183 = vsyncadd [#allocation6], %s182
          %s185 = sshll.u32 [#allocation5], 4
          %s186 = int_to_ptr.vmem [resolvable:$true] %s185
          %188 = dma.hbm_to_vmem [thread:$0]  %s2, 112, %s186, [#allocation6]
        $region20: #{double_conv_forward.1} parent=11 // pred_fallthru
          _
        // Predicated region
        $region21: #{double_conv_forward.1} parent=11 // pred_check
          %p189 = pneg %p103
        $region22: #{double_conv_forward.1} parent=11 // pred_check_branch
          %191 = sbr.rel (%p189) target = $region24
        $region23: #{double_conv_forward.1} parent=11 // pred_region
          %s193 = ssub.s32 86016, 86016
          %194 = vsyncadd [#allocation6], %s193
          %s195 = sshll.u32 [#allocation7], 4
          %s196 = int_to_ptr.vmem [resolvable:$true] %s195
          %201 = dma.hbm_to_vmem [thread:$0]  %s3, 86016, %s196, [#allocation6], 256, 256, 16
        $region24: #{double_conv_forward.1} parent=11 // pred_fallthru
          _
        // Predicated region
        $region25: #{double_conv_forward.1} parent=11 // pred_check
          %p202 = pneg %p124
        $region26: #{double_conv_forward.1} parent=11 // pred_check_branch
          %204 = sbr.rel (%p202) target = $region28
        $region27: #{double_conv_forward.1} parent=11 // pred_region
          %s206 = ssub.s32 64, 64
          %207 = vsyncadd [#allocation9], %s206
          %s209 = sshll.u32 [#allocation8], 4
          %s210 = int_to_ptr.vmem [resolvable:$true] %s209
          %212 = dma.hbm_to_vmem [thread:$0]  %s4, 64, %s210, [#allocation9]
        $region28: #{double_conv_forward.1} parent=11 // pred_fallthru
          _
      $region12: #{double_conv_forward.1} parent=5 // pred_fallthru
        _
      %p213 = scmp.lt.s32.totalorder %s14, 2
      // Predicated region
      $region29: #{double_conv_forward.1} parent=5 // pred_check
        %p214 = pneg %p213
      $region30: #{double_conv_forward.1} parent=5 // pred_check_branch
        %216 = sbr.rel (%p214) target = $region32
      $region31: #{double_conv_forward.1} parent=5 // pred_region
        // Predicated region
        $region33: #{double_conv_forward.1} parent=31 // pred_check
          %p217 = pneg %p34
        $region34: #{double_conv_forward.1} parent=31 // pred_check_branch
          %219 = sbr.rel (%p217) target = $region36
        $region35: #{double_conv_forward.1} parent=31 // pred_region
          %p220 = scmp.lt.s32.totalorder %s14, 1
          %s221 = scalar_select %p220, %s14, 1
          %s222 = smul.addr %s221, 12
          %s223 = smul.addr %s222, 4
          %s224 = scalar_lea.vmem %s0, %s223
        $region36: #{double_conv_forward.1} parent=31 // pred_fallthru
          _
      $region32: #{double_conv_forward.1} parent=5 // pred_fallthru
        _
      %p225 = scmp.le.s32.totalorder 1, %s14
      %p226 = scmp.lt.s32.totalorder %s14, 3
      %p227 = pnand %p225, %p226
      %p228 = pneg %p227
      // Predicated region
      $region37: #{double_conv_forward.1} parent=5 // pred_check
        _
      $region38: #{double_conv_forward.1} parent=5 // pred_check_branch
        %230 = sbr.rel (%p227) target = $region40
      $region39: #{double_conv_forward.1} parent=5 // pred_region
        %s231 = ssub.s32 %s14, 1
        // Predicated region
        $region41: #{double_conv_forward.1} parent=39 // pred_check
          %p232 = pneg %p61
        $region42: #{double_conv_forward.1} parent=39 // pred_check_branch
          %234 = sbr.rel (%p232) target = $region44
        $region43: #{double_conv_forward.1} parent=39 // pred_region
          %235 = dma.done [#allocation4], 86016
        $region44: #{double_conv_forward.1} parent=39 // pred_fallthru
          _
        // Predicated region
        $region45: #{double_conv_forward.1} parent=39 // pred_check
          %p236 = pneg %p82
        $region46: #{double_conv_forward.1} parent=39 // pred_check_branch
          %238 = sbr.rel (%p236) target = $region48
        $region47: #{double_conv_forward.1} parent=39 // pred_region
          %239 = dma.done [#allocation6], 112
        $region48: #{double_conv_forward.1} parent=39 // pred_fallthru
          _
        // Predicated region
        $region49: #{double_conv_forward.1} parent=39 // pred_check
          %p240 = pneg %p103
        $region50: #{double_conv_forward.1} parent=39 // pred_check_branch
          %242 = sbr.rel (%p240) target = $region52
        $region51: #{double_conv_forward.1} parent=39 // pred_region
          %243 = dma.done [#allocation6], 86016
        $region52: #{double_conv_forward.1} parent=39 // pred_fallthru
          _
        // Predicated region
        $region53: #{double_conv_forward.1} parent=39 // pred_check
          %p244 = pneg %p124
        $region54: #{double_conv_forward.1} parent=39 // pred_check_branch
          %246 = sbr.rel (%p244) target = $region56
        $region55: #{double_conv_forward.1} parent=39 // pred_region
          %247 = dma.done [#allocation9], 64
        $region56: #{double_conv_forward.1} parent=39 // pred_fallthru
          _
        %p248 = scmp.lt.s32.totalorder %s19, 1
        %s249 = scalar_select %p248, %s19, 1
        %s250 = smul.addr %s249, 12
        %s251 = smul.addr %s250, 4
        %s252 = scalar_lea.vmem %s0, %s251
        %p253 = pneg %p40
        %p254 = pneg %p37
        %p255 = pneg %p61
        %p256 = pneg %p58
        %p257 = pneg %p82
        %p258 = pneg %p79
        %p259 = pneg %p103
        %p260 = pneg %p100
        %p261 = pneg %p124
        %p262 = pneg %p121
        %p263 = pneg %p150
        %p264 = pneg %p147
        %p265 = scmp.lt.s32.totalorder %s19, 1
        %s266 = scalar_select %p265, %s19, 1
        %s267 = smul.addr %s266, 4
        %s268 = smul.addr %s267, 8
        %s269 = scalar_lea.vmem %s5, %s268
        %p270 = scmp.lt.s32.totalorder %s19, 1
        %s271 = scalar_select %p270, %s19, 1
        %s272 = smul.addr %s271, 12
        %s273 = smul.addr %s272, 4
        %s274 = scalar_lea.vmem %s0, %s273
        %p275 = scmp.lt.s32.totalorder %s19, 1
        %s276 = scalar_select %p275, %s19, 1
        %s277 = smul.addr %s276, 4
        %s278 = smul.addr %s277, 8
        %s279 = scalar_lea.vmem %s5, %s278
        %v281 = vld [vmem:[%s274] sm:$0xff]
        %v282 = vld [vmem:[%s274 + $0x8] sm:$0xff]
        %v283 = vld [vmem:[%s274 + $0x10] sm:$0xff]
        %v284 = vld [vmem:[%s274 + $0x18] sm:$0xff]
        %v285 = vld [vmem:[%s274 + $0x20] sm:$0xff]
        %v286 = vld [vmem:[%s274 + $0x28] sm:$0xff]
        %v287 = vld [vmem:[#allocation3] sm:$0xff]
        %v288 = vld [vmem:[#allocation3 + $0x8] sm:$0xff]
        %v289 = vld [vmem:[#allocation3 + $0x10] sm:$0xff]
        %v290 = vld [vmem:[#allocation3 + $0x18] sm:$0xf]
        %v291 = vld [vmem:[#allocation3 + $0x1c] sm:$0xff]
        %v292 = vld [vmem:[#allocation3 + $0x24] sm:$0xff]
        %v293 = vld [vmem:[#allocation3 + $0x2c] sm:$0xff]
        %v294 = vld [vmem:[#allocation3 + $0x34] sm:$0xf]
        %v295 = vld [vmem:[#allocation3 + $0x38] sm:$0xff]
        %v296 = vld [vmem:[#allocation3 + $0x40] sm:$0xff]
        %v297 = vld [vmem:[#allocation3 + $0x48] sm:$0xff]
        %v298 = vld [vmem:[#allocation3 + $0x50] sm:$0xf]
        %v299 = vld [vmem:[#allocation3 + $0x54] sm:$0xff]
        %v300 = vld [vmem:[#allocation3 + $0x5c] sm:$0xff]
        %v301 = vld [vmem:[#allocation3 + $0x64] sm:$0xff]
        %v302 = vld [vmem:[#allocation3 + $0x6c] sm:$0xf]
        %v303 = vld [vmem:[#allocation3 + $0x70] sm:$0xff]
        %v304 = vld [vmem:[#allocation3 + $0x78] sm:$0xff]
        %v305 = vld [vmem:[#allocation3 + $0x80] sm:$0xff]
        %v306 = vld [vmem:[#allocation3 + $0x88] sm:$0xf]
        %v307 = vld [vmem:[#allocation3 + $0x8c] sm:$0xff]
        %v308 = vld [vmem:[#allocation3 + $0x94] sm:$0xff]
        %v309 = vld [vmem:[#allocation3 + $0x9c] sm:$0xff]
        %v310 = vld [vmem:[#allocation3 + $0xa4] sm:$0xf]
        %v311 = vld [vmem:[#allocation3 + $0xa8] sm:$0xff]
        %v312 = vld [vmem:[#allocation3 + $0xb0] sm:$0xff]
        %v313 = vld [vmem:[#allocation3 + $0xb8] sm:$0xff]
        %v314 = vld [vmem:[#allocation3 + $0xc0] sm:$0xf]
        %v315 = vld [vmem:[#allocation3 + $0xc4] sm:$0xff]
        %v316 = vld [vmem:[#allocation3 + $0xcc] sm:$0xff]
        %v317 = vld [vmem:[#allocation3 + $0xd4] sm:$0xff]
        %v318 = vld [vmem:[#allocation3 + $0xdc] sm:$0xf]
        %v319 = vld [vmem:[#allocation3 + $0xe0] sm:$0xff]
        %v320 = vld [vmem:[#allocation3 + $0xe8] sm:$0xff]
        %v321 = vld [vmem:[#allocation3 + $0xf0] sm:$0xff]
        %v322 = vld [vmem:[#allocation3 + $0xf8] sm:$0xf]
        %v323 = vld [vmem:[#allocation3 + $0xfc] sm:$0xff]
        %v324 = vld [vmem:[#allocation3 + $0x104] sm:$0xff]
        %v325 = vld [vmem:[#allocation3 + $0x10c] sm:$0xff]
        %v326 = vld [vmem:[#allocation3 + $0x114] sm:$0xf]
        %v327 = vld [vmem:[#allocation3 + $0x118] sm:$0xff]
        %v328 = vld [vmem:[#allocation3 + $0x120] sm:$0xff]
        %v329 = vld [vmem:[#allocation3 + $0x128] sm:$0xff]
        %v330 = vld [vmem:[#allocation3 + $0x130] sm:$0xf]
        %v331 = vld [vmem:[#allocation3 + $0x134] sm:$0xff]
        %v332 = vld [vmem:[#allocation3 + $0x13c] sm:$0xff]
        %v333 = vld [vmem:[#allocation3 + $0x144] sm:$0xff]
        %v334 = vld [vmem:[#allocation3 + $0x14c] sm:$0xf]
        %v335 = vld [vmem:[#allocation3 + $0x150] sm:$0xff]
        %v336 = vld [vmem:[#allocation3 + $0x158] sm:$0xff]
        %v337 = vld [vmem:[#allocation3 + $0x160] sm:$0xff]
        %v338 = vld [vmem:[#allocation3 + $0x168] sm:$0xf]
        %v339 = vld [vmem:[#allocation3 + $0x16c] sm:$0xff]
        %v340 = vld [vmem:[#allocation3 + $0x174] sm:$0xff]
        %v341 = vld [vmem:[#allocation3 + $0x17c] sm:$0xff]
        %v342 = vld [vmem:[#allocation3 + $0x184] sm:$0xf]
        %v343 = vld [vmem:[#allocation3 + $0x188] sm:$0xff]
        %v344 = vld [vmem:[#allocation3 + $0x190] sm:$0xff]
        %v345 = vld [vmem:[#allocation3 + $0x198] sm:$0xff]
        %v346 = vld [vmem:[#allocation3 + $0x1a0] sm:$0xf]
        %v347 = vld [vmem:[#allocation3 + $0x1a4] sm:$0xff]
        %v348 = vld [vmem:[#allocation3 + $0x1ac] sm:$0xff]
        %v349 = vld [vmem:[#allocation3 + $0x1b4] sm:$0xff]
        %v350 = vld [vmem:[#allocation3 + $0x1bc] sm:$0xf]
        %v351 = vld [vmem:[#allocation3 + $0x1c0] sm:$0xff]
        %v352 = vld [vmem:[#allocation3 + $0x1c8] sm:$0xff]
        %v353 = vld [vmem:[#allocation3 + $0x1d0] sm:$0xff]
        %v354 = vld [vmem:[#allocation3 + $0x1d8] sm:$0xf]
        %v355 = vld [vmem:[#allocation3 + $0x1dc] sm:$0xff]
        %v356 = vld [vmem:[#allocation3 + $0x1e4] sm:$0xff]
        %v357 = vld [vmem:[#allocation3 + $0x1ec] sm:$0xff]
        %v358 = vld [vmem:[#allocation3 + $0x1f4] sm:$0xf]
        %v359 = vld [vmem:[#allocation3 + $0x1f8] sm:$0xff]
        %v360 = vld [vmem:[#allocation3 + $0x200] sm:$0xff]
        %v361 = vld [vmem:[#allocation3 + $0x208] sm:$0xff]
        %v362 = vld [vmem:[#allocation3 + $0x210] sm:$0xf]
        %v363 = vld [vmem:[#allocation3 + $0x214] sm:$0xff]
        %v364 = vld [vmem:[#allocation3 + $0x21c] sm:$0xff]
        %v365 = vld [vmem:[#allocation3 + $0x224] sm:$0xff]
        %v366 = vld [vmem:[#allocation3 + $0x22c] sm:$0xf]
        %v367 = vld [vmem:[#allocation3 + $0x230] sm:$0xff]
        %v368 = vld [vmem:[#allocation3 + $0x238] sm:$0xff]
        %v369 = vld [vmem:[#allocation3 + $0x240] sm:$0xff]
        %v370 = vld [vmem:[#allocation3 + $0x248] sm:$0xf]
        %v371 = vld [vmem:[#allocation3 + $0x24c] sm:$0xff]
        %v372 = vld [vmem:[#allocation3 + $0x254] sm:$0xff]
        %v373 = vld [vmem:[#allocation3 + $0x25c] sm:$0xff]
        %v374 = vld [vmem:[#allocation3 + $0x264] sm:$0xf]
        %v375 = vld [vmem:[#allocation3 + $0x268] sm:$0xff]
        %v376 = vld [vmem:[#allocation3 + $0x270] sm:$0xff]
        %v377 = vld [vmem:[#allocation3 + $0x278] sm:$0xff]
        %v378 = vld [vmem:[#allocation3 + $0x280] sm:$0xf]
        %v379 = vld [vmem:[#allocation3 + $0x284] sm:$0xff]
        %v380 = vld [vmem:[#allocation3 + $0x28c] sm:$0xff]
        %v381 = vld [vmem:[#allocation3 + $0x294] sm:$0xff]
        %v382 = vld [vmem:[#allocation3 + $0x29c] sm:$0xf]
        %v383 = vld [vmem:[#allocation3 + $0x2a0] sm:$0xff]
        %v384 = vld [vmem:[#allocation3 + $0x2a8] sm:$0xff]
        %v385 = vld [vmem:[#allocation3 + $0x2b0] sm:$0xff]
        %v386 = vld [vmem:[#allocation3 + $0x2b8] sm:$0xf]
        %v387 = vld [vmem:[#allocation3 + $0x2bc] sm:$0xff]
        %v388 = vld [vmem:[#allocation3 + $0x2c4] sm:$0xff]
        %v389 = vld [vmem:[#allocation3 + $0x2cc] sm:$0xff]
        %v390 = vld [vmem:[#allocation3 + $0x2d4] sm:$0xf]
        %v391 = vld [vmem:[#allocation3 + $0x2d8] sm:$0xff]
        %v392 = vld [vmem:[#allocation3 + $0x2e0] sm:$0xff]
        %v393 = vld [vmem:[#allocation3 + $0x2e8] sm:$0xff]
        %v394 = vld [vmem:[#allocation3 + $0x2f0] sm:$0xf]
        %v395 = vld [vmem:[#allocation3 + $0x2f4] sm:$0xff]
        %v396 = vld [vmem:[#allocation3 + $0x2fc] sm:$0xff]
        %v397 = vld [vmem:[#allocation3 + $0x304] sm:$0xff]
        %v398 = vld [vmem:[#allocation3 + $0x30c] sm:$0xf]
        %v399 = vld [vmem:[#allocation3 + $0x310] sm:$0xff]
        %v400 = vld [vmem:[#allocation3 + $0x318] sm:$0xff]
        %v401 = vld [vmem:[#allocation3 + $0x320] sm:$0xff]
        %v402 = vld [vmem:[#allocation3 + $0x328] sm:$0xf]
        %v403 = vld [vmem:[#allocation3 + $0x32c] sm:$0xff]
        %v404 = vld [vmem:[#allocation3 + $0x334] sm:$0xff]
        %v405 = vld [vmem:[#allocation3 + $0x33c] sm:$0xff]
        %v406 = vld [vmem:[#allocation3 + $0x344] sm:$0xf]
        %v407 = vld [vmem:[#allocation3 + $0x348] sm:$0xff]
        %v408 = vld [vmem:[#allocation3 + $0x350] sm:$0xff]
        %v409 = vld [vmem:[#allocation3 + $0x358] sm:$0xff]
        %v410 = vld [vmem:[#allocation3 + $0x360] sm:$0xf]
        %v411 = vld [vmem:[#allocation3 + $0x364] sm:$0xff]
        %v412 = vld [vmem:[#allocation3 + $0x36c] sm:$0xff]
        %v413 = vld [vmem:[#allocation3 + $0x374] sm:$0xff]
        %v414 = vld [vmem:[#allocation3 + $0x37c] sm:$0xf]
        %v415 = vld [vmem:[#allocation3 + $0x380] sm:$0xff]
        %v416 = vld [vmem:[#allocation3 + $0x388] sm:$0xff]
        %v417 = vld [vmem:[#allocation3 + $0x390] sm:$0xff]
        %v418 = vld [vmem:[#allocation3 + $0x398] sm:$0xf]
        %v419 = vld [vmem:[#allocation3 + $0x39c] sm:$0xff]
        %v420 = vld [vmem:[#allocation3 + $0x3a4] sm:$0xff]
        %v421 = vld [vmem:[#allocation3 + $0x3ac] sm:$0xff]
        %v422 = vld [vmem:[#allocation3 + $0x3b4] sm:$0xf]
        %v423 = vld [vmem:[#allocation3 + $0x3b8] sm:$0xff]
        %v424 = vld [vmem:[#allocation3 + $0x3c0] sm:$0xff]
        %v425 = vld [vmem:[#allocation3 + $0x3c8] sm:$0xff]
        %v426 = vld [vmem:[#allocation3 + $0x3d0] sm:$0xf]
        %v427 = vld [vmem:[#allocation3 + $0x3d4] sm:$0xff]
        %v428 = vld [vmem:[#allocation3 + $0x3dc] sm:$0xff]
        %v429 = vld [vmem:[#allocation3 + $0x3e4] sm:$0xff]
        %v430 = vld [vmem:[#allocation3 + $0x3ec] sm:$0xf]
        %v431 = vld [vmem:[#allocation3 + $0x3f0] sm:$0xff]
        %v432 = vld [vmem:[#allocation3 + $0x3f8] sm:$0xff]
        %v433 = vld [vmem:[#allocation3 + $0x400] sm:$0xff]
        %v434 = vld [vmem:[#allocation3 + $0x408] sm:$0xf]
        %v435 = vld [vmem:[#allocation3 + $0x40c] sm:$0xff]
        %v436 = vld [vmem:[#allocation3 + $0x414] sm:$0xff]
        %v437 = vld [vmem:[#allocation3 + $0x41c] sm:$0xff]
        %v438 = vld [vmem:[#allocation3 + $0x424] sm:$0xf]
        %v439 = vld [vmem:[#allocation3 + $0x428] sm:$0xff]
        %v440 = vld [vmem:[#allocation3 + $0x430] sm:$0xff]
        %v441 = vld [vmem:[#allocation3 + $0x438] sm:$0xff]
        %v442 = vld [vmem:[#allocation3 + $0x440] sm:$0xf]
        %v443 = vld [vmem:[#allocation3 + $0x444] sm:$0xff]
        %v444 = vld [vmem:[#allocation3 + $0x44c] sm:$0xff]
        %v445 = vld [vmem:[#allocation3 + $0x454] sm:$0xff]
        %v446 = vld [vmem:[#allocation3 + $0x45c] sm:$0xf]
        %v447 = vld [vmem:[#allocation3 + $0x460] sm:$0xff]
        %v448 = vld [vmem:[#allocation3 + $0x468] sm:$0xff]
        %v449 = vld [vmem:[#allocation3 + $0x470] sm:$0xff]
        %v450 = vld [vmem:[#allocation3 + $0x478] sm:$0xf]
        %v451 = vld [vmem:[#allocation3 + $0x47c] sm:$0xff]
        %v452 = vld [vmem:[#allocation3 + $0x484] sm:$0xff]
        %v453 = vld [vmem:[#allocation3 + $0x48c] sm:$0xff]
        %v454 = vld [vmem:[#allocation3 + $0x494] sm:$0xf]
        %v455 = vld [vmem:[#allocation3 + $0x498] sm:$0xff]
        %v456 = vld [vmem:[#allocation3 + $0x4a0] sm:$0xff]
        %v457 = vld [vmem:[#allocation3 + $0x4a8] sm:$0xff]
        %v458 = vld [vmem:[#allocation3 + $0x4b0] sm:$0xf]
        %v459 = vld [vmem:[#allocation3 + $0x4b4] sm:$0xff]
        %v460 = vld [vmem:[#allocation3 + $0x4bc] sm:$0xff]
        %v461 = vld [vmem:[#allocation3 + $0x4c4] sm:$0xff]
        %v462 = vld [vmem:[#allocation3 + $0x4cc] sm:$0xf]
        %v463 = vld [vmem:[#allocation3 + $0x4d0] sm:$0xff]
        %v464 = vld [vmem:[#allocation3 + $0x4d8] sm:$0xff]
        %v465 = vld [vmem:[#allocation3 + $0x4e0] sm:$0xff]
        %v466 = vld [vmem:[#allocation3 + $0x4e8] sm:$0xf]
        %v467 = vld [vmem:[#allocation3 + $0x4ec] sm:$0xff]
        %v468 = vld [vmem:[#allocation3 + $0x4f4] sm:$0xff]
        %v469 = vld [vmem:[#allocation3 + $0x4fc] sm:$0xff]
        %v470 = vld [vmem:[#allocation3 + $0x504] sm:$0xf]
        %v471 = vld [vmem:[#allocation3 + $0x508] sm:$0xff]
        %v472 = vld [vmem:[#allocation3 + $0x510] sm:$0xff]
        %v473 = vld [vmem:[#allocation3 + $0x518] sm:$0xff]
        %v474 = vld [vmem:[#allocation3 + $0x520] sm:$0xf]
        %v475 = vld [vmem:[#allocation3 + $0x524] sm:$0xff]
        %v476 = vld [vmem:[#allocation3 + $0x52c] sm:$0xff]
        %v477 = vld [vmem:[#allocation3 + $0x534] sm:$0xff]
        %v478 = vld [vmem:[#allocation3 + $0x53c] sm:$0xf]
        %v479 = vld [vmem:[#allocation3 + $0x540] sm:$0xff]
        %v480 = vld [vmem:[#allocation3 + $0x548] sm:$0xff]
        %v481 = vld [vmem:[#allocation3 + $0x550] sm:$0xff]
        %v482 = vld [vmem:[#allocation3 + $0x558] sm:$0xf]
        %v483 = vld [vmem:[#allocation3 + $0x55c] sm:$0xff]
        %v484 = vld [vmem:[#allocation3 + $0x564] sm:$0xff]
        %v485 = vld [vmem:[#allocation3 + $0x56c] sm:$0xff]
        %v486 = vld [vmem:[#allocation3 + $0x574] sm:$0xf]
        %v487 = vld [vmem:[#allocation3 + $0x578] sm:$0xff]
        %v488 = vld [vmem:[#allocation3 + $0x580] sm:$0xff]
        %v489 = vld [vmem:[#allocation3 + $0x588] sm:$0xff]
        %v490 = vld [vmem:[#allocation3 + $0x590] sm:$0xf]
        %v491 = vld [vmem:[#allocation3 + $0x594] sm:$0xff]
        %v492 = vld [vmem:[#allocation3 + $0x59c] sm:$0xff]
        %v493 = vld [vmem:[#allocation3 + $0x5a4] sm:$0xff]
        %v494 = vld [vmem:[#allocation3 + $0x5ac] sm:$0xf]
        %v495 = vld [vmem:[#allocation3 + $0x5b0] sm:$0xff]
        %v496 = vld [vmem:[#allocation3 + $0x5b8] sm:$0xff]
        %v497 = vld [vmem:[#allocation3 + $0x5c0] sm:$0xff]
        %v498 = vld [vmem:[#allocation3 + $0x5c8] sm:$0xf]
        %v499 = vld [vmem:[#allocation3 + $0x5cc] sm:$0xff]
        %v500 = vld [vmem:[#allocation3 + $0x5d4] sm:$0xff]
        %v501 = vld [vmem:[#allocation3 + $0x5dc] sm:$0xff]
        %v502 = vld [vmem:[#allocation3 + $0x5e4] sm:$0xf]
        %v503 = vld [vmem:[#allocation3 + $0x5e8] sm:$0xff]
        %v504 = vld [vmem:[#allocation3 + $0x5f0] sm:$0xff]
        %v505 = vld [vmem:[#allocation3 + $0x5f8] sm:$0xff]
        %v506 = vld [vmem:[#allocation3 + $0x600] sm:$0xf]
        %v507 = vld [vmem:[#allocation3 + $0x604] sm:$0xff]
        %v508 = vld [vmem:[#allocation3 + $0x60c] sm:$0xff]
        %v509 = vld [vmem:[#allocation3 + $0x614] sm:$0xff]
        %v510 = vld [vmem:[#allocation3 + $0x61c] sm:$0xf]
        %v511 = vld [vmem:[#allocation3 + $0x620] sm:$0xff]
        %v512 = vld [vmem:[#allocation3 + $0x628] sm:$0xff]
        %v513 = vld [vmem:[#allocation3 + $0x630] sm:$0xff]
        %v514 = vld [vmem:[#allocation3 + $0x638] sm:$0xf]
        %v515 = vld [vmem:[#allocation3 + $0x63c] sm:$0xff]
        %v516 = vld [vmem:[#allocation3 + $0x644] sm:$0xff]
        %v517 = vld [vmem:[#allocation3 + $0x64c] sm:$0xff]
        %v518 = vld [vmem:[#allocation3 + $0x654] sm:$0xf]
        %v519 = vld [vmem:[#allocation3 + $0x658] sm:$0xff]
        %v520 = vld [vmem:[#allocation3 + $0x660] sm:$0xff]
        %v521 = vld [vmem:[#allocation3 + $0x668] sm:$0xff]
        %v522 = vld [vmem:[#allocation3 + $0x670] sm:$0xf]
        %v523 = vld [vmem:[#allocation3 + $0x674] sm:$0xff]
        %v524 = vld [vmem:[#allocation3 + $0x67c] sm:$0xff]
        %v525 = vld [vmem:[#allocation3 + $0x684] sm:$0xff]
        %v526 = vld [vmem:[#allocation3 + $0x68c] sm:$0xf]
        %v527 = vld [vmem:[#allocation3 + $0x690] sm:$0xff]
        %v528 = vld [vmem:[#allocation3 + $0x698] sm:$0xff]
        %v529 = vld [vmem:[#allocation3 + $0x6a0] sm:$0xff]
        %v530 = vld [vmem:[#allocation3 + $0x6a8] sm:$0xf]
        %v531 = vld [vmem:[#allocation3 + $0x6ac] sm:$0xff]
        %v532 = vld [vmem:[#allocation3 + $0x6b4] sm:$0xff]
        %v533 = vld [vmem:[#allocation3 + $0x6bc] sm:$0xff]
        %v534 = vld [vmem:[#allocation3 + $0x6c4] sm:$0xf]
        %v535 = vld [vmem:[#allocation3 + $0x6c8] sm:$0xff]
        %v536 = vld [vmem:[#allocation3 + $0x6d0] sm:$0xff]
        %v537 = vld [vmem:[#allocation3 + $0x6d8] sm:$0xff]
        %v538 = vld [vmem:[#allocation3 + $0x6e0] sm:$0xf]
        %v539 = vld [vmem:[#allocation3 + $0x6e4] sm:$0xff]
        %v540 = vld [vmem:[#allocation3 + $0x6ec] sm:$0xff]
        %v541 = vld [vmem:[#allocation3 + $0x6f4] sm:$0xff]
        %v542 = vld [vmem:[#allocation3 + $0x6fc] sm:$0xf]
        %v543 = vld [vmem:[#allocation3 + $0x700] sm:$0xff]
        %v544 = vld [vmem:[#allocation3 + $0x708] sm:$0xff]
        %v545 = vld [vmem:[#allocation3 + $0x710] sm:$0xff]
        %v546 = vld [vmem:[#allocation3 + $0x718] sm:$0xf]
        %v547 = vld [vmem:[#allocation3 + $0x71c] sm:$0xff]
        %v548 = vld [vmem:[#allocation3 + $0x724] sm:$0xff]
        %v549 = vld [vmem:[#allocation3 + $0x72c] sm:$0xff]
        %v550 = vld [vmem:[#allocation3 + $0x734] sm:$0xf]
        %v551 = vld [vmem:[#allocation3 + $0x738] sm:$0xff]
        %v552 = vld [vmem:[#allocation3 + $0x740] sm:$0xff]
        %v553 = vld [vmem:[#allocation3 + $0x748] sm:$0xff]
        %v554 = vld [vmem:[#allocation3 + $0x750] sm:$0xf]
        %v555 = vld [vmem:[#allocation3 + $0x754] sm:$0xff]
        %v556 = vld [vmem:[#allocation3 + $0x75c] sm:$0xff]
        %v557 = vld [vmem:[#allocation3 + $0x764] sm:$0xff]
        %v558 = vld [vmem:[#allocation3 + $0x76c] sm:$0xf]
        %v559 = vld [vmem:[#allocation3 + $0x770] sm:$0xff]
        %v560 = vld [vmem:[#allocation3 + $0x778] sm:$0xff]
        %v561 = vld [vmem:[#allocation3 + $0x780] sm:$0xff]
        %v562 = vld [vmem:[#allocation3 + $0x788] sm:$0xf]
        %v563 = vld [vmem:[#allocation3 + $0x78c] sm:$0xff]
        %v564 = vld [vmem:[#allocation3 + $0x794] sm:$0xff]
        %v565 = vld [vmem:[#allocation3 + $0x79c] sm:$0xff]
        %v566 = vld [vmem:[#allocation3 + $0x7a4] sm:$0xf]
        %v567 = vld [vmem:[#allocation3 + $0x7a8] sm:$0xff]
        %v568 = vld [vmem:[#allocation3 + $0x7b0] sm:$0xff]
        %v569 = vld [vmem:[#allocation3 + $0x7b8] sm:$0xff]
        %v570 = vld [vmem:[#allocation3 + $0x7c0] sm:$0xf]
        %v571 = vld [vmem:[#allocation3 + $0x7c4] sm:$0xff]
        %v572 = vld [vmem:[#allocation3 + $0x7cc] sm:$0xff]
        %v573 = vld [vmem:[#allocation3 + $0x7d4] sm:$0xff]
        %v574 = vld [vmem:[#allocation3 + $0x7dc] sm:$0xf]
        %v575 = vld [vmem:[#allocation3 + $0x7e0] sm:$0xff]
        %v576 = vld [vmem:[#allocation3 + $0x7e8] sm:$0xff]
        %v577 = vld [vmem:[#allocation3 + $0x7f0] sm:$0xff]
        %v578 = vld [vmem:[#allocation3 + $0x7f8] sm:$0xf]
        %v579 = vld [vmem:[#allocation3 + $0x7fc] sm:$0xff]
        %v580 = vld [vmem:[#allocation3 + $0x804] sm:$0xff]
        %v581 = vld [vmem:[#allocation3 + $0x80c] sm:$0xff]
        %v582 = vld [vmem:[#allocation3 + $0x814] sm:$0xf]
        %v583 = vld [vmem:[#allocation3 + $0x818] sm:$0xff]
        %v584 = vld [vmem:[#allocation3 + $0x820] sm:$0xff]
        %v585 = vld [vmem:[#allocation3 + $0x828] sm:$0xff]
        %v586 = vld [vmem:[#allocation3 + $0x830] sm:$0xf]
        %v587 = vld [vmem:[#allocation3 + $0x834] sm:$0xff]
        %v588 = vld [vmem:[#allocation3 + $0x83c] sm:$0xff]
        %v589 = vld [vmem:[#allocation3 + $0x844] sm:$0xff]
        %v590 = vld [vmem:[#allocation3 + $0x84c] sm:$0xf]
        %v591 = vld [vmem:[#allocation3 + $0x850] sm:$0xff]
        %v592 = vld [vmem:[#allocation3 + $0x858] sm:$0xff]
        %v593 = vld [vmem:[#allocation3 + $0x860] sm:$0xff]
        %v594 = vld [vmem:[#allocation3 + $0x868] sm:$0xf]
        %v595 = vld [vmem:[#allocation3 + $0x86c] sm:$0xff]
        %v596 = vld [vmem:[#allocation3 + $0x874] sm:$0xff]
        %v597 = vld [vmem:[#allocation3 + $0x87c] sm:$0xff]
        %v598 = vld [vmem:[#allocation3 + $0x884] sm:$0xf]
        %v599 = vld [vmem:[#allocation3 + $0x888] sm:$0xff]
        %v600 = vld [vmem:[#allocation3 + $0x890] sm:$0xff]
        %v601 = vld [vmem:[#allocation3 + $0x898] sm:$0xff]
        %v602 = vld [vmem:[#allocation3 + $0x8a0] sm:$0xf]
        %v603 = vld [vmem:[#allocation3 + $0x8a4] sm:$0xff]
        %v604 = vld [vmem:[#allocation3 + $0x8ac] sm:$0xff]
        %v605 = vld [vmem:[#allocation3 + $0x8b4] sm:$0xff]
        %v606 = vld [vmem:[#allocation3 + $0x8bc] sm:$0xf]
        %v607 = vld [vmem:[#allocation3 + $0x8c0] sm:$0xff]
        %v608 = vld [vmem:[#allocation3 + $0x8c8] sm:$0xff]
        %v609 = vld [vmem:[#allocation3 + $0x8d0] sm:$0xff]
        %v610 = vld [vmem:[#allocation3 + $0x8d8] sm:$0xf]
        %v611 = vld [vmem:[#allocation3 + $0x8dc] sm:$0xff]
        %v612 = vld [vmem:[#allocation3 + $0x8e4] sm:$0xff]
        %v613 = vld [vmem:[#allocation3 + $0x8ec] sm:$0xff]
        %v614 = vld [vmem:[#allocation3 + $0x8f4] sm:$0xf]
        %v615 = vld [vmem:[#allocation3 + $0x8f8] sm:$0xff]
        %v616 = vld [vmem:[#allocation3 + $0x900] sm:$0xff]
        %v617 = vld [vmem:[#allocation3 + $0x908] sm:$0xff]
        %v618 = vld [vmem:[#allocation3 + $0x910] sm:$0xf]
        %v619 = vld [vmem:[#allocation3 + $0x914] sm:$0xff]
        %v620 = vld [vmem:[#allocation3 + $0x91c] sm:$0xff]
        %v621 = vld [vmem:[#allocation3 + $0x924] sm:$0xff]
        %v622 = vld [vmem:[#allocation3 + $0x92c] sm:$0xf]
        %v623 = vld [vmem:[#allocation3 + $0x930] sm:$0xff]
        %v624 = vld [vmem:[#allocation3 + $0x938] sm:$0xff]
        %v625 = vld [vmem:[#allocation3 + $0x940] sm:$0xff]
        %v626 = vld [vmem:[#allocation3 + $0x948] sm:$0xf]
        %v627 = vld [vmem:[#allocation3 + $0x94c] sm:$0xff]
        %v628 = vld [vmem:[#allocation3 + $0x954] sm:$0xff]
        %v629 = vld [vmem:[#allocation3 + $0x95c] sm:$0xff]
        %v630 = vld [vmem:[#allocation3 + $0x964] sm:$0xf]
        %v631 = vld [vmem:[#allocation3 + $0x968] sm:$0xff]
        %v632 = vld [vmem:[#allocation3 + $0x970] sm:$0xff]
        %v633 = vld [vmem:[#allocation3 + $0x978] sm:$0xff]
        %v634 = vld [vmem:[#allocation3 + $0x980] sm:$0xf]
        %v635 = vld [vmem:[#allocation3 + $0x984] sm:$0xff]
        %v636 = vld [vmem:[#allocation3 + $0x98c] sm:$0xff]
        %v637 = vld [vmem:[#allocation3 + $0x994] sm:$0xff]
        %v638 = vld [vmem:[#allocation3 + $0x99c] sm:$0xf]
        %v639 = vld [vmem:[#allocation3 + $0x9a0] sm:$0xff]
        %v640 = vld [vmem:[#allocation3 + $0x9a8] sm:$0xff]
        %v641 = vld [vmem:[#allocation3 + $0x9b0] sm:$0xff]
        %v642 = vld [vmem:[#allocation3 + $0x9b8] sm:$0xf]
        %v643 = vld [vmem:[#allocation3 + $0x9bc] sm:$0xff]
        %v644 = vld [vmem:[#allocation3 + $0x9c4] sm:$0xff]
        %v645 = vld [vmem:[#allocation3 + $0x9cc] sm:$0xff]
        %v646 = vld [vmem:[#allocation3 + $0x9d4] sm:$0xf]
        %v647 = vld [vmem:[#allocation3 + $0x9d8] sm:$0xff]
        %v648 = vld [vmem:[#allocation3 + $0x9e0] sm:$0xff]
        %v649 = vld [vmem:[#allocation3 + $0x9e8] sm:$0xff]
        %v650 = vld [vmem:[#allocation3 + $0x9f0] sm:$0xf]
        %v651 = vld [vmem:[#allocation3 + $0x9f4] sm:$0xff]
        %v652 = vld [vmem:[#allocation3 + $0x9fc] sm:$0xff]
        %v653 = vld [vmem:[#allocation3 + $0xa04] sm:$0xff]
        %v654 = vld [vmem:[#allocation3 + $0xa0c] sm:$0xf]
        %v655 = vld [vmem:[#allocation3 + $0xa10] sm:$0xff]
        %v656 = vld [vmem:[#allocation3 + $0xa18] sm:$0xff]
        %v657 = vld [vmem:[#allocation3 + $0xa20] sm:$0xff]
        %v658 = vld [vmem:[#allocation3 + $0xa28] sm:$0xf]
        %v659 = vld [vmem:[#allocation3 + $0xa2c] sm:$0xff]
        %v660 = vld [vmem:[#allocation3 + $0xa34] sm:$0xff]
        %v661 = vld [vmem:[#allocation3 + $0xa3c] sm:$0xff]
        %v662 = vld [vmem:[#allocation3 + $0xa44] sm:$0xf]
        %v663 = vld [vmem:[#allocation3 + $0xa48] sm:$0xff]
        %v664 = vld [vmem:[#allocation3 + $0xa50] sm:$0xff]
        %v665 = vld [vmem:[#allocation3 + $0xa58] sm:$0xff]
        %v666 = vld [vmem:[#allocation3 + $0xa60] sm:$0xf]
        %v667 = vld [vmem:[#allocation3 + $0xa64] sm:$0xff]
        %v668 = vld [vmem:[#allocation3 + $0xa6c] sm:$0xff]
        %v669 = vld [vmem:[#allocation3 + $0xa74] sm:$0xff]
        %v670 = vld [vmem:[#allocation3 + $0xa7c] sm:$0xf]
        %v671 = vld [vmem:[#allocation3 + $0xa80] sm:$0xff]
        %v672 = vld [vmem:[#allocation3 + $0xa88] sm:$0xff]
        %v673 = vld [vmem:[#allocation3 + $0xa90] sm:$0xff]
        %v674 = vld [vmem:[#allocation3 + $0xa98] sm:$0xf]
        %v675 = vld [vmem:[#allocation3 + $0xa9c] sm:$0xff]
        %v676 = vld [vmem:[#allocation3 + $0xaa4] sm:$0xff]
        %v677 = vld [vmem:[#allocation3 + $0xaac] sm:$0xff]
        %v678 = vld [vmem:[#allocation3 + $0xab4] sm:$0xf]
        %v679 = vld [vmem:[#allocation3 + $0xab8] sm:$0xff]
        %v680 = vld [vmem:[#allocation3 + $0xac0] sm:$0xff]
        %v681 = vld [vmem:[#allocation3 + $0xac8] sm:$0xff]
        %v682 = vld [vmem:[#allocation3 + $0xad0] sm:$0xf]
        %v683 = vld [vmem:[#allocation3 + $0xad4] sm:$0xff]
        %v684 = vld [vmem:[#allocation3 + $0xadc] sm:$0xff]
        %v685 = vld [vmem:[#allocation3 + $0xae4] sm:$0xff]
        %v686 = vld [vmem:[#allocation3 + $0xaec] sm:$0xf]
        %v687 = vld [vmem:[#allocation3 + $0xaf0] sm:$0xff]
        %v688 = vld [vmem:[#allocation3 + $0xaf8] sm:$0xff]
        %v689 = vld [vmem:[#allocation3 + $0xb00] sm:$0xff]
        %v690 = vld [vmem:[#allocation3 + $0xb08] sm:$0xf]
        %v691 = vld [vmem:[#allocation3 + $0xb0c] sm:$0xff]
        %v692 = vld [vmem:[#allocation3 + $0xb14] sm:$0xff]
        %v693 = vld [vmem:[#allocation3 + $0xb1c] sm:$0xff]
        %v694 = vld [vmem:[#allocation3 + $0xb24] sm:$0xf]
        %v695 = vld [vmem:[#allocation3 + $0xb28] sm:$0xff]
        %v696 = vld [vmem:[#allocation3 + $0xb30] sm:$0xff]
        %v697 = vld [vmem:[#allocation3 + $0xb38] sm:$0xff]
        %v698 = vld [vmem:[#allocation3 + $0xb40] sm:$0xf]
        %v699 = vld [vmem:[#allocation3 + $0xb44] sm:$0xff]
        %v700 = vld [vmem:[#allocation3 + $0xb4c] sm:$0xff]
        %v701 = vld [vmem:[#allocation3 + $0xb54] sm:$0xff]
        %v702 = vld [vmem:[#allocation3 + $0xb5c] sm:$0xf]
        %v703 = vld [vmem:[#allocation3 + $0xb60] sm:$0xff]
        %v704 = vld [vmem:[#allocation3 + $0xb68] sm:$0xff]
        %v705 = vld [vmem:[#allocation3 + $0xb70] sm:$0xff]
        %v706 = vld [vmem:[#allocation3 + $0xb78] sm:$0xf]
        %v707 = vld [vmem:[#allocation3 + $0xb7c] sm:$0xff]
        %v708 = vld [vmem:[#allocation3 + $0xb84] sm:$0xff]
        %v709 = vld [vmem:[#allocation3 + $0xb8c] sm:$0xff]
        %v710 = vld [vmem:[#allocation3 + $0xb94] sm:$0xf]
        %v711 = vld [vmem:[#allocation3 + $0xb98] sm:$0xff]
        %v712 = vld [vmem:[#allocation3 + $0xba0] sm:$0xff]
        %v713 = vld [vmem:[#allocation3 + $0xba8] sm:$0xff]
        %v714 = vld [vmem:[#allocation3 + $0xbb0] sm:$0xf]
        %v715 = vld [vmem:[#allocation3 + $0xbb4] sm:$0xff]
        %v716 = vld [vmem:[#allocation3 + $0xbbc] sm:$0xff]
        %v717 = vld [vmem:[#allocation3 + $0xbc4] sm:$0xff]
        %v718 = vld [vmem:[#allocation3 + $0xbcc] sm:$0xf]
        %v719 = vld [vmem:[#allocation3 + $0xbd0] sm:$0xff]
        %v720 = vld [vmem:[#allocation3 + $0xbd8] sm:$0xff]
        %v721 = vld [vmem:[#allocation3 + $0xbe0] sm:$0xff]
        %v722 = vld [vmem:[#allocation3 + $0xbe8] sm:$0xf]
        %v723 = vld [vmem:[#allocation3 + $0xbec] sm:$0xff]
        %v724 = vld [vmem:[#allocation3 + $0xbf4] sm:$0xff]
        %v725 = vld [vmem:[#allocation3 + $0xbfc] sm:$0xff]
        %v726 = vld [vmem:[#allocation3 + $0xc04] sm:$0xf]
        %v727 = vld [vmem:[#allocation3 + $0xc08] sm:$0xff]
        %v728 = vld [vmem:[#allocation3 + $0xc10] sm:$0xff]
        %v729 = vld [vmem:[#allocation3 + $0xc18] sm:$0xff]
        %v730 = vld [vmem:[#allocation3 + $0xc20] sm:$0xf]
        %v731 = vld [vmem:[#allocation3 + $0xc24] sm:$0xff]
        %v732 = vld [vmem:[#allocation3 + $0xc2c] sm:$0xff]
        %v733 = vld [vmem:[#allocation3 + $0xc34] sm:$0xff]
        %v734 = vld [vmem:[#allocation3 + $0xc3c] sm:$0xf]
        %v735 = vld [vmem:[#allocation3 + $0xc40] sm:$0xff]
        %v736 = vld [vmem:[#allocation3 + $0xc48] sm:$0xff]
        %v737 = vld [vmem:[#allocation3 + $0xc50] sm:$0xff]
        %v738 = vld [vmem:[#allocation3 + $0xc58] sm:$0xf]
        %v739 = vld [vmem:[#allocation3 + $0xc5c] sm:$0xff]
        %v740 = vld [vmem:[#allocation3 + $0xc64] sm:$0xff]
        %v741 = vld [vmem:[#allocation3 + $0xc6c] sm:$0xff]
        %v742 = vld [vmem:[#allocation3 + $0xc74] sm:$0xf]
        %v743 = vld [vmem:[#allocation3 + $0xc78] sm:$0xff]
        %v744 = vld [vmem:[#allocation3 + $0xc80] sm:$0xff]
        %v745 = vld [vmem:[#allocation3 + $0xc88] sm:$0xff]
        %v746 = vld [vmem:[#allocation3 + $0xc90] sm:$0xf]
        %v747 = vld [vmem:[#allocation3 + $0xc94] sm:$0xff]
        %v748 = vld [vmem:[#allocation3 + $0xc9c] sm:$0xff]
        %v749 = vld [vmem:[#allocation3 + $0xca4] sm:$0xff]
        %v750 = vld [vmem:[#allocation3 + $0xcac] sm:$0xf]
        %v751 = vld [vmem:[#allocation3 + $0xcb0] sm:$0xff]
        %v752 = vld [vmem:[#allocation3 + $0xcb8] sm:$0xff]
        %v753 = vld [vmem:[#allocation3 + $0xcc0] sm:$0xff]
        %v754 = vld [vmem:[#allocation3 + $0xcc8] sm:$0xf]
        %v755 = vld [vmem:[#allocation3 + $0xccc] sm:$0xff]
        %v756 = vld [vmem:[#allocation3 + $0xcd4] sm:$0xff]
        %v757 = vld [vmem:[#allocation3 + $0xcdc] sm:$0xff]
        %v758 = vld [vmem:[#allocation3 + $0xce4] sm:$0xf]
        %v759 = vld [vmem:[#allocation3 + $0xce8] sm:$0xff]
        %v760 = vld [vmem:[#allocation3 + $0xcf0] sm:$0xff]
        %v761 = vld [vmem:[#allocation3 + $0xcf8] sm:$0xff]
        %v762 = vld [vmem:[#allocation3 + $0xd00] sm:$0xf]
        %v763 = vld [vmem:[#allocation3 + $0xd04] sm:$0xff]
        %v764 = vld [vmem:[#allocation3 + $0xd0c] sm:$0xff]
        %v765 = vld [vmem:[#allocation3 + $0xd14] sm:$0xff]
        %v766 = vld [vmem:[#allocation3 + $0xd1c] sm:$0xf]
        %v767 = vld [vmem:[#allocation3 + $0xd20] sm:$0xff]
        %v768 = vld [vmem:[#allocation3 + $0xd28] sm:$0xff]
        %v769 = vld [vmem:[#allocation3 + $0xd30] sm:$0xff]
        %v770 = vld [vmem:[#allocation3 + $0xd38] sm:$0xf]
        %v771 = vld [vmem:[#allocation3 + $0xd3c] sm:$0xff]
        %v772 = vld [vmem:[#allocation3 + $0xd44] sm:$0xff]
        %v773 = vld [vmem:[#allocation3 + $0xd4c] sm:$0xff]
        %v774 = vld [vmem:[#allocation3 + $0xd54] sm:$0xf]
        %v775 = vld [vmem:[#allocation3 + $0xd58] sm:$0xff]
        %v776 = vld [vmem:[#allocation3 + $0xd60] sm:$0xff]
        %v777 = vld [vmem:[#allocation3 + $0xd68] sm:$0xff]
        %v778 = vld [vmem:[#allocation3 + $0xd70] sm:$0xf]
        %v779 = vld [vmem:[#allocation3 + $0xd74] sm:$0xff]
        %v780 = vld [vmem:[#allocation3 + $0xd7c] sm:$0xff]
        %v781 = vld [vmem:[#allocation3 + $0xd84] sm:$0xff]
        %v782 = vld [vmem:[#allocation3 + $0xd8c] sm:$0xf]
        %v783 = vld [vmem:[#allocation3 + $0xd90] sm:$0xff]
        %v784 = vld [vmem:[#allocation3 + $0xd98] sm:$0xff]
        %v785 = vld [vmem:[#allocation3 + $0xda0] sm:$0xff]
        %v786 = vld [vmem:[#allocation3 + $0xda8] sm:$0xf]
        %v787 = vld [vmem:[#allocation3 + $0xdac] sm:$0xff]
        %v788 = vld [vmem:[#allocation3 + $0xdb4] sm:$0xff]
        %v789 = vld [vmem:[#allocation3 + $0xdbc] sm:$0xff]
        %v790 = vld [vmem:[#allocation3 + $0xdc4] sm:$0xf]
        %v791 = vld [vmem:[#allocation3 + $0xdc8] sm:$0xff]
        %v792 = vld [vmem:[#allocation3 + $0xdd0] sm:$0xff]
        %v793 = vld [vmem:[#allocation3 + $0xdd8] sm:$0xff]
        %v794 = vld [vmem:[#allocation3 + $0xde0] sm:$0xf]
        %v795 = vld [vmem:[#allocation3 + $0xde4] sm:$0xff]
        %v796 = vld [vmem:[#allocation3 + $0xdec] sm:$0xff]
        %v797 = vld [vmem:[#allocation3 + $0xdf4] sm:$0xff]
        %v798 = vld [vmem:[#allocation3 + $0xdfc] sm:$0xf]
        %v799 = vld [vmem:[#allocation3 + $0xe00] sm:$0xff]
        %v800 = vld [vmem:[#allocation3 + $0xe08] sm:$0xff]
        %v801 = vld [vmem:[#allocation3 + $0xe10] sm:$0xff]
        %v802 = vld [vmem:[#allocation3 + $0xe18] sm:$0xf]
        %v803 = vld [vmem:[#allocation3 + $0xe1c] sm:$0xff]
        %v804 = vld [vmem:[#allocation3 + $0xe24] sm:$0xff]
        %v805 = vld [vmem:[#allocation3 + $0xe2c] sm:$0xff]
        %v806 = vld [vmem:[#allocation3 + $0xe34] sm:$0xf]
        %v807 = vld [vmem:[#allocation3 + $0xe38] sm:$0xff]
        %v808 = vld [vmem:[#allocation3 + $0xe40] sm:$0xff]
        %v809 = vld [vmem:[#allocation3 + $0xe48] sm:$0xff]
        %v810 = vld [vmem:[#allocation3 + $0xe50] sm:$0xf]
        %v811 = vld [vmem:[#allocation3 + $0xe54] sm:$0xff]
        %v812 = vld [vmem:[#allocation3 + $0xe5c] sm:$0xff]
        %v813 = vld [vmem:[#allocation3 + $0xe64] sm:$0xff]
        %v814 = vld [vmem:[#allocation3 + $0xe6c] sm:$0xf]
        %v815 = vld [vmem:[#allocation3 + $0xe70] sm:$0xff]
        %v816 = vld [vmem:[#allocation3 + $0xe78] sm:$0xff]
        %v817 = vld [vmem:[#allocation3 + $0xe80] sm:$0xff]
        %v818 = vld [vmem:[#allocation3 + $0xe88] sm:$0xf]
        %v819 = vld [vmem:[#allocation3 + $0xe8c] sm:$0xff]
        %v820 = vld [vmem:[#allocation3 + $0xe94] sm:$0xff]
        %v821 = vld [vmem:[#allocation3 + $0xe9c] sm:$0xff]
        %v822 = vld [vmem:[#allocation3 + $0xea4] sm:$0xf]
        %v823 = vld [vmem:[#allocation3 + $0xea8] sm:$0xff]
        %v824 = vld [vmem:[#allocation3 + $0xeb0] sm:$0xff]
        %v825 = vld [vmem:[#allocation3 + $0xeb8] sm:$0xff]
        %v826 = vld [vmem:[#allocation3 + $0xec0] sm:$0xf]
        %v827 = vld [vmem:[#allocation3 + $0xec4] sm:$0xff]
        %v828 = vld [vmem:[#allocation3 + $0xecc] sm:$0xff]
        %v829 = vld [vmem:[#allocation3 + $0xed4] sm:$0xff]
        %v830 = vld [vmem:[#allocation3 + $0xedc] sm:$0xf]
        %v831 = vld [vmem:[#allocation3 + $0xee0] sm:$0xff]
        %v832 = vld [vmem:[#allocation3 + $0xee8] sm:$0xff]
        %v833 = vld [vmem:[#allocation3 + $0xef0] sm:$0xff]
        %v834 = vld [vmem:[#allocation3 + $0xef8] sm:$0xf]
        %v835 = vld [vmem:[#allocation3 + $0xefc] sm:$0xff]
        %v836 = vld [vmem:[#allocation3 + $0xf04] sm:$0xff]
        %v837 = vld [vmem:[#allocation3 + $0xf0c] sm:$0xff]
        %v838 = vld [vmem:[#allocation3 + $0xf14] sm:$0xf]
        %v839 = vld [vmem:[#allocation3 + $0xf18] sm:$0xff]
        %v840 = vld [vmem:[#allocation3 + $0xf20] sm:$0xff]
        %v841 = vld [vmem:[#allocation3 + $0xf28] sm:$0xff]
        %v842 = vld [vmem:[#allocation3 + $0xf30] sm:$0xf]
        %v843 = vld [vmem:[#allocation3 + $0xf34] sm:$0xff]
        %v844 = vld [vmem:[#allocation3 + $0xf3c] sm:$0xff]
        %v845 = vld [vmem:[#allocation3 + $0xf44] sm:$0xff]
        %v846 = vld [vmem:[#allocation3 + $0xf4c] sm:$0xf]
        %v847 = vld [vmem:[#allocation3 + $0xf50] sm:$0xff]
        %v848 = vld [vmem:[#allocation3 + $0xf58] sm:$0xff]
        %v849 = vld [vmem:[#allocation3 + $0xf60] sm:$0xff]
        %v850 = vld [vmem:[#allocation3 + $0xf68] sm:$0xf]
        %v851 = vld [vmem:[#allocation3 + $0xf6c] sm:$0xff]
        %v852 = vld [vmem:[#allocation3 + $0xf74] sm:$0xff]
        %v853 = vld [vmem:[#allocation3 + $0xf7c] sm:$0xff]
        %v854 = vld [vmem:[#allocation3 + $0xf84] sm:$0xf]
        %v855 = vld [vmem:[#allocation3 + $0xf88] sm:$0xff]
        %v856 = vld [vmem:[#allocation3 + $0xf90] sm:$0xff]
        %v857 = vld [vmem:[#allocation3 + $0xf98] sm:$0xff]
        %v858 = vld [vmem:[#allocation3 + $0xfa0] sm:$0xf]
        %v859 = vld [vmem:[#allocation3 + $0xfa4] sm:$0xff]
        %v860 = vld [vmem:[#allocation3 + $0xfac] sm:$0xff]
        %v861 = vld [vmem:[#allocation3 + $0xfb4] sm:$0xff]
        %v862 = vld [vmem:[#allocation3 + $0xfbc] sm:$0xf]
        %v863 = vld [vmem:[#allocation3 + $0xfc0] sm:$0xff]
        %v864 = vld [vmem:[#allocation3 + $0xfc8] sm:$0xff]
        %v865 = vld [vmem:[#allocation3 + $0xfd0] sm:$0xff]
        %v866 = vld [vmem:[#allocation3 + $0xfd8] sm:$0xf]
        %v867 = vld [vmem:[#allocation3 + $0xfdc] sm:$0xff]
        %v868 = vld [vmem:[#allocation3 + $0xfe4] sm:$0xff]
        %v869 = vld [vmem:[#allocation3 + $0xfec] sm:$0xff]
        %v870 = vld [vmem:[#allocation3 + $0xff4] sm:$0xf]
        %v871 = vld [vmem:[#allocation3 + $0xff8] sm:$0xff]
        %v872 = vld [vmem:[#allocation3 + $0x1000] sm:$0xff]
        %v873 = vld [vmem:[#allocation3 + $0x1008] sm:$0xff]
        %v874 = vld [vmem:[#allocation3 + $0x1010] sm:$0xf]
        %v875 = vld [vmem:[#allocation3 + $0x1014] sm:$0xff]
        %v876 = vld [vmem:[#allocation3 + $0x101c] sm:$0xff]
        %v877 = vld [vmem:[#allocation3 + $0x1024] sm:$0xff]
        %v878 = vld [vmem:[#allocation3 + $0x102c] sm:$0xf]
        %v879 = vld [vmem:[#allocation3 + $0x1030] sm:$0xff]
        %v880 = vld [vmem:[#allocation3 + $0x1038] sm:$0xff]
        %v881 = vld [vmem:[#allocation3 + $0x1040] sm:$0xff]
        %v882 = vld [vmem:[#allocation3 + $0x1048] sm:$0xf]
        %v883 = vld [vmem:[#allocation3 + $0x104c] sm:$0xff]
        %v884 = vld [vmem:[#allocation3 + $0x1054] sm:$0xff]
        %v885 = vld [vmem:[#allocation3 + $0x105c] sm:$0xff]
        %v886 = vld [vmem:[#allocation3 + $0x1064] sm:$0xf]
        %v887 = vld [vmem:[#allocation3 + $0x1068] sm:$0xff]
        %v888 = vld [vmem:[#allocation3 + $0x1070] sm:$0xff]
        %v889 = vld [vmem:[#allocation3 + $0x1078] sm:$0xff]
        %v890 = vld [vmem:[#allocation3 + $0x1080] sm:$0xf]
        %v891 = vld [vmem:[#allocation3 + $0x1084] sm:$0xff]
        %v892 = vld [vmem:[#allocation3 + $0x108c] sm:$0xff]
        %v893 = vld [vmem:[#allocation3 + $0x1094] sm:$0xff]
        %v894 = vld [vmem:[#allocation3 + $0x109c] sm:$0xf]
        %v895 = vld [vmem:[#allocation3 + $0x10a0] sm:$0xff]
        %v896 = vld [vmem:[#allocation3 + $0x10a8] sm:$0xff]
        %v897 = vld [vmem:[#allocation3 + $0x10b0] sm:$0xff]
        %v898 = vld [vmem:[#allocation3 + $0x10b8] sm:$0xf]
        %v899 = vld [vmem:[#allocation3 + $0x10bc] sm:$0xff]
        %v900 = vld [vmem:[#allocation3 + $0x10c4] sm:$0xff]
        %v901 = vld [vmem:[#allocation3 + $0x10cc] sm:$0xff]
        %v902 = vld [vmem:[#allocation3 + $0x10d4] sm:$0xf]
        %v903 = vld [vmem:[#allocation3 + $0x10d8] sm:$0xff]
        %v904 = vld [vmem:[#allocation3 + $0x10e0] sm:$0xff]
        %v905 = vld [vmem:[#allocation3 + $0x10e8] sm:$0xff]
        %v906 = vld [vmem:[#allocation3 + $0x10f0] sm:$0xf]
        %v907 = vld [vmem:[#allocation3 + $0x10f4] sm:$0xff]
        %v908 = vld [vmem:[#allocation3 + $0x10fc] sm:$0xff]
        %v909 = vld [vmem:[#allocation3 + $0x1104] sm:$0xff]
        %v910 = vld [vmem:[#allocation3 + $0x110c] sm:$0xf]
        %v911 = vld [vmem:[#allocation3 + $0x1110] sm:$0xff]
        %v912 = vld [vmem:[#allocation3 + $0x1118] sm:$0xff]
        %v913 = vld [vmem:[#allocation3 + $0x1120] sm:$0xff]
        %v914 = vld [vmem:[#allocation3 + $0x1128] sm:$0xf]
        %v915 = vld [vmem:[#allocation3 + $0x112c] sm:$0xff]
        %v916 = vld [vmem:[#allocation3 + $0x1134] sm:$0xff]
        %v917 = vld [vmem:[#allocation3 + $0x113c] sm:$0xff]
        %v918 = vld [vmem:[#allocation3 + $0x1144] sm:$0xf]
        %v919 = vld [vmem:[#allocation3 + $0x1148] sm:$0xff]
        %v920 = vld [vmem:[#allocation3 + $0x1150] sm:$0xff]
        %v921 = vld [vmem:[#allocation3 + $0x1158] sm:$0xff]
        %v922 = vld [vmem:[#allocation3 + $0x1160] sm:$0xf]
        %v923 = vld [vmem:[#allocation3 + $0x1164] sm:$0xff]
        %v924 = vld [vmem:[#allocation3 + $0x116c] sm:$0xff]
        %v925 = vld [vmem:[#allocation3 + $0x1174] sm:$0xff]
        %v926 = vld [vmem:[#allocation3 + $0x117c] sm:$0xf]
        %v927 = vld [vmem:[#allocation3 + $0x1180] sm:$0xff]
        %v928 = vld [vmem:[#allocation3 + $0x1188] sm:$0xff]
        %v929 = vld [vmem:[#allocation3 + $0x1190] sm:$0xff]
        %v930 = vld [vmem:[#allocation3 + $0x1198] sm:$0xf]
        %v931 = vld [vmem:[#allocation3 + $0x119c] sm:$0xff]
        %v932 = vld [vmem:[#allocation3 + $0x11a4] sm:$0xff]
        %v933 = vld [vmem:[#allocation3 + $0x11ac] sm:$0xff]
        %v934 = vld [vmem:[#allocation3 + $0x11b4] sm:$0xf]
        %v935 = vld [vmem:[#allocation3 + $0x11b8] sm:$0xff]
        %v936 = vld [vmem:[#allocation3 + $0x11c0] sm:$0xff]
        %v937 = vld [vmem:[#allocation3 + $0x11c8] sm:$0xff]
        %v938 = vld [vmem:[#allocation3 + $0x11d0] sm:$0xf]
        %v939 = vld [vmem:[#allocation3 + $0x11d4] sm:$0xff]
        %v940 = vld [vmem:[#allocation3 + $0x11dc] sm:$0xff]
        %v941 = vld [vmem:[#allocation3 + $0x11e4] sm:$0xff]
        %v942 = vld [vmem:[#allocation3 + $0x11ec] sm:$0xf]
        %v943 = vld [vmem:[#allocation3 + $0x11f0] sm:$0xff]
        %v944 = vld [vmem:[#allocation3 + $0x11f8] sm:$0xff]
        %v945 = vld [vmem:[#allocation3 + $0x1200] sm:$0xff]
        %v946 = vld [vmem:[#allocation3 + $0x1208] sm:$0xf]
        %v947 = vld [vmem:[#allocation3 + $0x120c] sm:$0xff]
        %v948 = vld [vmem:[#allocation3 + $0x1214] sm:$0xff]
        %v949 = vld [vmem:[#allocation3 + $0x121c] sm:$0xff]
        %v950 = vld [vmem:[#allocation3 + $0x1224] sm:$0xf]
        %v951 = vld [vmem:[#allocation3 + $0x1228] sm:$0xff]
        %v952 = vld [vmem:[#allocation3 + $0x1230] sm:$0xff]
        %v953 = vld [vmem:[#allocation3 + $0x1238] sm:$0xff]
        %v954 = vld [vmem:[#allocation3 + $0x1240] sm:$0xf]
        %v955 = vld [vmem:[#allocation3 + $0x1244] sm:$0xff]
        %v956 = vld [vmem:[#allocation3 + $0x124c] sm:$0xff]
        %v957 = vld [vmem:[#allocation3 + $0x1254] sm:$0xff]
        %v958 = vld [vmem:[#allocation3 + $0x125c] sm:$0xf]
        %v959 = vld [vmem:[#allocation3 + $0x1260] sm:$0xff]
        %v960 = vld [vmem:[#allocation3 + $0x1268] sm:$0xff]
        %v961 = vld [vmem:[#allocation3 + $0x1270] sm:$0xff]
        %v962 = vld [vmem:[#allocation3 + $0x1278] sm:$0xf]
        %v963 = vld [vmem:[#allocation3 + $0x127c] sm:$0xff]
        %v964 = vld [vmem:[#allocation3 + $0x1284] sm:$0xff]
        %v965 = vld [vmem:[#allocation3 + $0x128c] sm:$0xff]
        %v966 = vld [vmem:[#allocation3 + $0x1294] sm:$0xf]
        %v967 = vld [vmem:[#allocation3 + $0x1298] sm:$0xff]
        %v968 = vld [vmem:[#allocation3 + $0x12a0] sm:$0xff]
        %v969 = vld [vmem:[#allocation3 + $0x12a8] sm:$0xff]
        %v970 = vld [vmem:[#allocation3 + $0x12b0] sm:$0xf]
        %v971 = vld [vmem:[#allocation3 + $0x12b4] sm:$0xff]
        %v972 = vld [vmem:[#allocation3 + $0x12bc] sm:$0xff]
        %v973 = vld [vmem:[#allocation3 + $0x12c4] sm:$0xff]
        %v974 = vld [vmem:[#allocation3 + $0x12cc] sm:$0xf]
        %v975 = vld [vmem:[#allocation3 + $0x12d0] sm:$0xff]
        %v976 = vld [vmem:[#allocation3 + $0x12d8] sm:$0xff]
        %v977 = vld [vmem:[#allocation3 + $0x12e0] sm:$0xff]
        %v978 = vld [vmem:[#allocation3 + $0x12e8] sm:$0xf]
        %v979 = vld [vmem:[#allocation3 + $0x12ec] sm:$0xff]
        %v980 = vld [vmem:[#allocation3 + $0x12f4] sm:$0xff]
        %v981 = vld [vmem:[#allocation3 + $0x12fc] sm:$0xff]
        %v982 = vld [vmem:[#allocation3 + $0x1304] sm:$0xf]
        %v983 = vld [vmem:[#allocation3 + $0x1308] sm:$0xff]
        %v984 = vld [vmem:[#allocation3 + $0x1310] sm:$0xff]
        %v985 = vld [vmem:[#allocation3 + $0x1318] sm:$0xff]
        %v986 = vld [vmem:[#allocation3 + $0x1320] sm:$0xf]
        %v987 = vld [vmem:[#allocation3 + $0x1324] sm:$0xff]
        %v988 = vld [vmem:[#allocation3 + $0x132c] sm:$0xff]
        %v989 = vld [vmem:[#allocation3 + $0x1334] sm:$0xff]
        %v990 = vld [vmem:[#allocation3 + $0x133c] sm:$0xf]
        %v991 = vld [vmem:[#allocation3 + $0x1340] sm:$0xff]
        %v992 = vld [vmem:[#allocation3 + $0x1348] sm:$0xff]
        %v993 = vld [vmem:[#allocation3 + $0x1350] sm:$0xff]
        %v994 = vld [vmem:[#allocation3 + $0x1358] sm:$0xf]
        %v995 = vld [vmem:[#allocation3 + $0x135c] sm:$0xff]
        %v996 = vld [vmem:[#allocation3 + $0x1364] sm:$0xff]
        %v997 = vld [vmem:[#allocation3 + $0x136c] sm:$0xff]
        %v998 = vld [vmem:[#allocation3 + $0x1374] sm:$0xf]
        %v999 = vld [vmem:[#allocation3 + $0x1378] sm:$0xff]
        %v1000 = vld [vmem:[#allocation3 + $0x1380] sm:$0xff]
        %v1001 = vld [vmem:[#allocation3 + $0x1388] sm:$0xff]
        %v1002 = vld [vmem:[#allocation3 + $0x1390] sm:$0xf]
        %v1003 = vld [vmem:[#allocation3 + $0x1394] sm:$0xff]
        %v1004 = vld [vmem:[#allocation3 + $0x139c] sm:$0xff]
        %v1005 = vld [vmem:[#allocation3 + $0x13a4] sm:$0xff]
        %v1006 = vld [vmem:[#allocation3 + $0x13ac] sm:$0xf]
        %v1007 = vld [vmem:[#allocation3 + $0x13b0] sm:$0xff]
        %v1008 = vld [vmem:[#allocation3 + $0x13b8] sm:$0xff]
        %v1009 = vld [vmem:[#allocation3 + $0x13c0] sm:$0xff]
        %v1010 = vld [vmem:[#allocation3 + $0x13c8] sm:$0xf]
        %v1011 = vld [vmem:[#allocation3 + $0x13cc] sm:$0xff]
        %v1012 = vld [vmem:[#allocation3 + $0x13d4] sm:$0xff]
        %v1013 = vld [vmem:[#allocation3 + $0x13dc] sm:$0xff]
        %v1014 = vld [vmem:[#allocation3 + $0x13e4] sm:$0xf]
        %v1015 = vld [vmem:[#allocation3 + $0x13e8] sm:$0xff]
        %v1016 = vld [vmem:[#allocation3 + $0x13f0] sm:$0xff]
        %v1017 = vld [vmem:[#allocation3 + $0x13f8] sm:$0xff]
        %v1018 = vld [vmem:[#allocation3 + $0x1400] sm:$0xf]
        %v1019 = vld [vmem:[#allocation3 + $0x1404] sm:$0xff]
        %v1020 = vld [vmem:[#allocation3 + $0x140c] sm:$0xff]
        %v1021 = vld [vmem:[#allocation3 + $0x1414] sm:$0xff]
        %v1022 = vld [vmem:[#allocation3 + $0x141c] sm:$0xf]
        %v1023 = vld [vmem:[#allocation3 + $0x1420] sm:$0xff]
        %v1024 = vld [vmem:[#allocation3 + $0x1428] sm:$0xff]
        %v1025 = vld [vmem:[#allocation3 + $0x1430] sm:$0xff]
        %v1026 = vld [vmem:[#allocation3 + $0x1438] sm:$0xf]
        %v1027 = vld [vmem:[#allocation3 + $0x143c] sm:$0xff]
        %v1028 = vld [vmem:[#allocation3 + $0x1444] sm:$0xff]
        %v1029 = vld [vmem:[#allocation3 + $0x144c] sm:$0xff]
        %v1030 = vld [vmem:[#allocation3 + $0x1454] sm:$0xf]
        %v1031 = vld [vmem:[#allocation3 + $0x1458] sm:$0xff]
        %v1032 = vld [vmem:[#allocation3 + $0x1460] sm:$0xff]
        %v1033 = vld [vmem:[#allocation3 + $0x1468] sm:$0xff]
        %v1034 = vld [vmem:[#allocation3 + $0x1470] sm:$0xf]
        %v1035 = vld [vmem:[#allocation3 + $0x1474] sm:$0xff]
        %v1036 = vld [vmem:[#allocation3 + $0x147c] sm:$0xff]
        %v1037 = vld [vmem:[#allocation3 + $0x1484] sm:$0xff]
        %v1038 = vld [vmem:[#allocation3 + $0x148c] sm:$0xf]
        %v1039 = vld [vmem:[#allocation3 + $0x1490] sm:$0xff]
        %v1040 = vld [vmem:[#allocation3 + $0x1498] sm:$0xff]
        %v1041 = vld [vmem:[#allocation3 + $0x14a0] sm:$0xff]
        %v1042 = vld [vmem:[#allocation3 + $0x14a8] sm:$0xf]
        %v1043 = vld [vmem:[#allocation3 + $0x14ac] sm:$0xff]
        %v1044 = vld [vmem:[#allocation3 + $0x14b4] sm:$0xff]
        %v1045 = vld [vmem:[#allocation3 + $0x14bc] sm:$0xff]
        %v1046 = vld [vmem:[#allocation3 + $0x14c4] sm:$0xf]
        %v1047 = vld [vmem:[#allocation3 + $0x14c8] sm:$0xff]
        %v1048 = vld [vmem:[#allocation3 + $0x14d0] sm:$0xff]
        %v1049 = vld [vmem:[#allocation3 + $0x14d8] sm:$0xff]
        %v1050 = vld [vmem:[#allocation3 + $0x14e0] sm:$0xf]
        %v1051 = vld [vmem:[#allocation3 + $0x14e4] sm:$0xff]
        %v1052 = vld [vmem:[#allocation3 + $0x14ec] sm:$0xff]
        %v1053 = vld [vmem:[#allocation3 + $0x14f4] sm:$0xff]
        %v1054 = vld [vmem:[#allocation3 + $0x14fc] sm:$0xf]
        %vm1055 = vcmask 1040384
        %vm1056 = vsmask.f32 256
        %vm1057 = vmand %vm1055, %vm1056
        %vm1058 = vcmask 1044484
        %vm1059 = vsmask.f32 4352
        %vm1060 = vmand %vm1058, %vm1059
        %vm1061 = vmor %vm1060, %vm1057
        %v1062 = vld [vmem:[#allocation2] sm:$0x11]
        %v1063 = vsel %vm1061, 0, %v1062
        %1064 = vst [vmem:[#allocation2] sm:$0x11] %v1063
        %v1065 = vld [vmem:[#allocation2 + $0x8] sm:$0x11]
        %v1066 = vsel %vm1061, 0, %v1065
        %1067 = vst [vmem:[#allocation2 + $0x8] sm:$0x11] %v1066
        %v1068 = vld [vmem:[#allocation2 + $0x10] sm:$0x11]
        %v1069 = vsel %vm1061, 0, %v1068
        %1070 = vst [vmem:[#allocation2 + $0x10] sm:$0x11] %v1069
        %v1071 = vld [vmem:[#allocation2 + $0x18] sm:$0x1]
        %v1072 = vsel %vm1057, 0, %v1071
        %1073 = vst [vmem:[#allocation2 + $0x18] sm:$0x1] %v1072
        %vm1074 = vsmask.f32 7938
        %vm1075 = vmand %vm1055, %vm1074
        %vm1076 = vsmask.f32 7954
        %vm1077 = vmand %vm1058, %vm1076
        %vm1078 = vmor %vm1077, %vm1075
        %v1079 = vld [vmem:[#allocation2 + $0x1c] sm:$0x11]
        %v1080 = vsel %vm1078, 0, %v1079
        %1081 = vst [vmem:[#allocation2 + $0x1c] sm:$0x11] %v1080
        %v1082 = vld [vmem:[#allocation2 + $0x24] sm:$0x11]
        %v1083 = vsel %vm1078, 0, %v1082
        %1084 = vst [vmem:[#allocation2 + $0x24] sm:$0x11] %v1083
        %v1085 = vld [vmem:[#allocation2 + $0x2c] sm:$0x11]
        %v1086 = vsel %vm1078, 0, %v1085
        %1087 = vst [vmem:[#allocation2 + $0x2c] sm:$0x11] %v1086
        %v1088 = vld [vmem:[#allocation2 + $0x34] sm:$0x1]
        %v1089 = vsel %vm1075, 0, %v1088
        %1090 = vst [vmem:[#allocation2 + $0x34] sm:$0x1] %v1089
        %v1091 = vld [vmem:[#allocation5] sm:$0xff]
        %v1093 = vlaneseq
        %v1094 = vshrl.u32 %v1093, 7
        %v1095 = vsub.s32 0, %v1094
        %v1096 = vrot.slane %v1091, %v1095
        %v1097 = vlaneseq
        %v1098 = vshrl.u32 %v1097, 7
        %v1099 = vsub.s32 1, %v1098
        %v1100 = vrot.slane %v1091, %v1099
        %v1101 = vlaneseq
        %v1102 = vshrl.u32 %v1101, 7
        %v1103 = vsub.s32 2, %v1102
        %v1104 = vrot.slane %v1091, %v1103
        %v1105 = vlaneseq
        %v1106 = vshrl.u32 %v1105, 7
        %v1107 = vsub.s32 3, %v1106
        %v1108 = vrot.slane %v1091, %v1107
        %v1109 = vlaneseq
        %v1110 = vshrl.u32 %v1109, 7
        %v1111 = vsub.s32 4, %v1110
        %v1112 = vrot.slane %v1091, %v1111
        %v1113 = vlaneseq
        %v1114 = vshrl.u32 %v1113, 7
        %v1115 = vsub.s32 5, %v1114
        %v1116 = vrot.slane %v1091, %v1115
        %v1117 = vlaneseq
        %v1118 = vshrl.u32 %v1117, 7
        %v1119 = vsub.s32 6, %v1118
        %v1120 = vrot.slane %v1091, %v1119
        %v1134 = vunpack.c.l.b16 %v281
        %v1135 = vunpack.c.h.b16 %v281
        %v1136 = vunpack.c.l.b16 %v282
        %v1137 = vunpack.c.h.b16 %v282
        %v1138 = vunpack.c.l.b16 %v283
        %v1139 = vunpack.c.h.b16 %v283
        %v1140 = vunpack.c.l.b16 %v284
        %v1141 = vunpack.c.h.b16 %v284
        %v1142 = vunpack.c.l.b16 %v285
        %v1143 = vunpack.c.h.b16 %v285
        %v1144 = vunpack.c.l.b16 %v286
        %v1145 = vunpack.c.h.b16 %v286
        %v1146 = vpack.c.b16 %v1134, %v1134
        %v1147 = vpack.c.b16 %v1135, %v1135
        %v1148 = vpack.c.b16 %v1136, %v1136
        %v1149 = vpack.c.b16 %v1137, %v1137
        %v1150 = vpack.c.b16 %v1138, %v1138
        %v1151 = vpack.c.b16 %v1139, %v1139
        %v1152 = vpack.c.b16 %v1140, %v1140
        %v1153 = vpack.c.b16 %v1141, %v1141
        %v1154 = vpack.c.b16 %v1142, %v1142
        %v1155 = vpack.c.b16 %v1143, %v1143
        %v1156 = vpack.c.b16 %v1144, %v1144
        %v1157 = vpack.c.b16 %v1145, %v1145
        %v1938 = vunpack.c.l.b16 %v287
        %v1939 = vunpack.c.h.b16 %v287
        %v1940 = vunpack.c.l.b16 %v288
        %v1941 = vunpack.c.h.b16 %v288
        %v1942 = vunpack.c.l.b16 %v289
        %v1943 = vunpack.c.h.b16 %v289
        %v1944 = vunpack.c.l.b16 %v290
        %v1945 = vunpack.c.l.b16 %v291
        %v1946 = vunpack.c.h.b16 %v291
        %v1947 = vunpack.c.l.b16 %v292
        %v1948 = vunpack.c.h.b16 %v292
        %v1949 = vunpack.c.l.b16 %v293
        %v1950 = vunpack.c.h.b16 %v293
        %v1951 = vunpack.c.l.b16 %v294
        %v1952 = vunpack.c.l.b16 %v295
        %v1953 = vunpack.c.h.b16 %v295
        %v1954 = vunpack.c.l.b16 %v296
        %v1955 = vunpack.c.h.b16 %v296
        %v1956 = vunpack.c.l.b16 %v297
        %v1957 = vunpack.c.h.b16 %v297
        %v1958 = vunpack.c.l.b16 %v298
        %v1959 = vunpack.c.l.b16 %v299
        %v1960 = vunpack.c.h.b16 %v299
        %v1961 = vunpack.c.l.b16 %v300
        %v1962 = vunpack.c.h.b16 %v300
        %v1963 = vunpack.c.l.b16 %v301
        %v1964 = vunpack.c.h.b16 %v301
        %v1965 = vunpack.c.l.b16 %v302
        %v1966 = vunpack.c.l.b16 %v303
        %v1967 = vunpack.c.h.b16 %v303
        %v1968 = vunpack.c.l.b16 %v304
        %v1969 = vunpack.c.h.b16 %v304
        %v1970 = vunpack.c.l.b16 %v305
        %v1971 = vunpack.c.h.b16 %v305
        %v1972 = vunpack.c.l.b16 %v306
        %v1973 = vunpack.c.l.b16 %v307
        %v1974 = vunpack.c.h.b16 %v307
        %v1975 = vunpack.c.l.b16 %v308
        %v1976 = vunpack.c.h.b16 %v308
        %v1977 = vunpack.c.l.b16 %v309
        %v1978 = vunpack.c.h.b16 %v309
        %v1979 = vunpack.c.l.b16 %v310
        %v1980 = vunpack.c.l.b16 %v311
        %v1981 = vunpack.c.h.b16 %v311
        %v1982 = vunpack.c.l.b16 %v312
        %v1983 = vunpack.c.h.b16 %v312
        %v1984 = vunpack.c.l.b16 %v313
        %v1985 = vunpack.c.h.b16 %v313
        %v1986 = vunpack.c.l.b16 %v314
        %v1987 = vunpack.c.l.b16 %v315
        %v1988 = vunpack.c.h.b16 %v315
        %v1989 = vunpack.c.l.b16 %v316
        %v1990 = vunpack.c.h.b16 %v316
        %v1991 = vunpack.c.l.b16 %v317
        %v1992 = vunpack.c.h.b16 %v317
        %v1993 = vunpack.c.l.b16 %v318
        %v1994 = vunpack.c.l.b16 %v319
        %v1995 = vunpack.c.h.b16 %v319
        %v1996 = vunpack.c.l.b16 %v320
        %v1997 = vunpack.c.h.b16 %v320
        %v1998 = vunpack.c.l.b16 %v321
        %v1999 = vunpack.c.h.b16 %v321
        %v2000 = vunpack.c.l.b16 %v322
        %v2001 = vunpack.c.l.b16 %v323
        %v2002 = vunpack.c.h.b16 %v323
        %v2003 = vunpack.c.l.b16 %v324
        %v2004 = vunpack.c.h.b16 %v324
        %v2005 = vunpack.c.l.b16 %v325
        %v2006 = vunpack.c.h.b16 %v325
        %v2007 = vunpack.c.l.b16 %v326
        %v2008 = vunpack.c.l.b16 %v327
        %v2009 = vunpack.c.h.b16 %v327
        %v2010 = vunpack.c.l.b16 %v328
        %v2011 = vunpack.c.h.b16 %v328
        %v2012 = vunpack.c.l.b16 %v329
        %v2013 = vunpack.c.h.b16 %v329
        %v2014 = vunpack.c.l.b16 %v330
        %v2015 = vunpack.c.l.b16 %v331
        %v2016 = vunpack.c.h.b16 %v331
        %v2017 = vunpack.c.l.b16 %v332
        %v2018 = vunpack.c.h.b16 %v332
        %v2019 = vunpack.c.l.b16 %v333
        %v2020 = vunpack.c.h.b16 %v333
        %v2021 = vunpack.c.l.b16 %v334
        %v2022 = vunpack.c.l.b16 %v335
        %v2023 = vunpack.c.h.b16 %v335
        %v2024 = vunpack.c.l.b16 %v336
        %v2025 = vunpack.c.h.b16 %v336
        %v2026 = vunpack.c.l.b16 %v337
        %v2027 = vunpack.c.h.b16 %v337
        %v2028 = vunpack.c.l.b16 %v338
        %v2029 = vunpack.c.l.b16 %v339
        %v2030 = vunpack.c.h.b16 %v339
        %v2031 = vunpack.c.l.b16 %v340
        %v2032 = vunpack.c.h.b16 %v340
        %v2033 = vunpack.c.l.b16 %v341
        %v2034 = vunpack.c.h.b16 %v341
        %v2035 = vunpack.c.l.b16 %v342
        %v2036 = vunpack.c.l.b16 %v343
        %v2037 = vunpack.c.h.b16 %v343
        %v2038 = vunpack.c.l.b16 %v344
        %v2039 = vunpack.c.h.b16 %v344
        %v2040 = vunpack.c.l.b16 %v345
        %v2041 = vunpack.c.h.b16 %v345
        %v2042 = vunpack.c.l.b16 %v346
        %v2043 = vunpack.c.l.b16 %v347
        %v2044 = vunpack.c.h.b16 %v347
        %v2045 = vunpack.c.l.b16 %v348
        %v2046 = vunpack.c.h.b16 %v348
        %v2047 = vunpack.c.l.b16 %v349
        %v2048 = vunpack.c.h.b16 %v349
        %v2049 = vunpack.c.l.b16 %v350
        %v2050 = vunpack.c.l.b16 %v351
        %v2051 = vunpack.c.h.b16 %v351
        %v2052 = vunpack.c.l.b16 %v352
        %v2053 = vunpack.c.h.b16 %v352
        %v2054 = vunpack.c.l.b16 %v353
        %v2055 = vunpack.c.h.b16 %v353
        %v2056 = vunpack.c.l.b16 %v354
        %v2057 = vunpack.c.l.b16 %v355
        %v2058 = vunpack.c.h.b16 %v355
        %v2059 = vunpack.c.l.b16 %v356
        %v2060 = vunpack.c.h.b16 %v356
        %v2061 = vunpack.c.l.b16 %v357
        %v2062 = vunpack.c.h.b16 %v357
        %v2063 = vunpack.c.l.b16 %v358
        %v2064 = vunpack.c.l.b16 %v359
        %v2065 = vunpack.c.h.b16 %v359
        %v2066 = vunpack.c.l.b16 %v360
        %v2067 = vunpack.c.h.b16 %v360
        %v2068 = vunpack.c.l.b16 %v361
        %v2069 = vunpack.c.h.b16 %v361
        %v2070 = vunpack.c.l.b16 %v362
        %v2071 = vunpack.c.l.b16 %v363
        %v2072 = vunpack.c.h.b16 %v363
        %v2073 = vunpack.c.l.b16 %v364
        %v2074 = vunpack.c.h.b16 %v364
        %v2075 = vunpack.c.l.b16 %v365
        %v2076 = vunpack.c.h.b16 %v365
        %v2077 = vunpack.c.l.b16 %v366
        %v2078 = vunpack.c.l.b16 %v367
        %v2079 = vunpack.c.h.b16 %v367
        %v2080 = vunpack.c.l.b16 %v368
        %v2081 = vunpack.c.h.b16 %v368
        %v2082 = vunpack.c.l.b16 %v369
        %v2083 = vunpack.c.h.b16 %v369
        %v2084 = vunpack.c.l.b16 %v370
        %v2085 = vunpack.c.l.b16 %v371
        %v2086 = vunpack.c.h.b16 %v371
        %v2087 = vunpack.c.l.b16 %v372
        %v2088 = vunpack.c.h.b16 %v372
        %v2089 = vunpack.c.l.b16 %v373
        %v2090 = vunpack.c.h.b16 %v373
        %v2091 = vunpack.c.l.b16 %v374
        %v2092 = vunpack.c.l.b16 %v375
        %v2093 = vunpack.c.h.b16 %v375
        %v2094 = vunpack.c.l.b16 %v376
        %v2095 = vunpack.c.h.b16 %v376
        %v2096 = vunpack.c.l.b16 %v377
        %v2097 = vunpack.c.h.b16 %v377
        %v2098 = vunpack.c.l.b16 %v378
        %v2099 = vunpack.c.l.b16 %v379
        %v2100 = vunpack.c.h.b16 %v379
        %v2101 = vunpack.c.l.b16 %v380
        %v2102 = vunpack.c.h.b16 %v380
        %v2103 = vunpack.c.l.b16 %v381
        %v2104 = vunpack.c.h.b16 %v381
        %v2105 = vunpack.c.l.b16 %v382
        %v2106 = vunpack.c.l.b16 %v383
        %v2107 = vunpack.c.h.b16 %v383
        %v2108 = vunpack.c.l.b16 %v384
        %v2109 = vunpack.c.h.b16 %v384
        %v2110 = vunpack.c.l.b16 %v385
        %v2111 = vunpack.c.h.b16 %v385
        %v2112 = vunpack.c.l.b16 %v386
        %v2113 = vunpack.c.l.b16 %v387
        %v2114 = vunpack.c.h.b16 %v387
        %v2115 = vunpack.c.l.b16 %v388
        %v2116 = vunpack.c.h.b16 %v388
        %v2117 = vunpack.c.l.b16 %v389
        %v2118 = vunpack.c.h.b16 %v389
        %v2119 = vunpack.c.l.b16 %v390
        %v2120 = vunpack.c.l.b16 %v391
        %v2121 = vunpack.c.h.b16 %v391
        %v2122 = vunpack.c.l.b16 %v392
        %v2123 = vunpack.c.h.b16 %v392
        %v2124 = vunpack.c.l.b16 %v393
        %v2125 = vunpack.c.h.b16 %v393
        %v2126 = vunpack.c.l.b16 %v394
        %v2127 = vunpack.c.l.b16 %v395
        %v2128 = vunpack.c.h.b16 %v395
        %v2129 = vunpack.c.l.b16 %v396
        %v2130 = vunpack.c.h.b16 %v396
        %v2131 = vunpack.c.l.b16 %v397
        %v2132 = vunpack.c.h.b16 %v397
        %v2133 = vunpack.c.l.b16 %v398
        %v2134 = vunpack.c.l.b16 %v399
        %v2135 = vunpack.c.h.b16 %v399
        %v2136 = vunpack.c.l.b16 %v400
        %v2137 = vunpack.c.h.b16 %v400
        %v2138 = vunpack.c.l.b16 %v401
        %v2139 = vunpack.c.h.b16 %v401
        %v2140 = vunpack.c.l.b16 %v402
        %v2141 = vunpack.c.l.b16 %v403
        %v2142 = vunpack.c.h.b16 %v403
        %v2143 = vunpack.c.l.b16 %v404
        %v2144 = vunpack.c.h.b16 %v404
        %v2145 = vunpack.c.l.b16 %v405
        %v2146 = vunpack.c.h.b16 %v405
        %v2147 = vunpack.c.l.b16 %v406
        %v2148 = vunpack.c.l.b16 %v407
        %v2149 = vunpack.c.h.b16 %v407
        %v2150 = vunpack.c.l.b16 %v408
        %v2151 = vunpack.c.h.b16 %v408
        %v2152 = vunpack.c.l.b16 %v409
        %v2153 = vunpack.c.h.b16 %v409
        %v2154 = vunpack.c.l.b16 %v410
        %v2155 = vunpack.c.l.b16 %v411
        %v2156 = vunpack.c.h.b16 %v411
        %v2157 = vunpack.c.l.b16 %v412
        %v2158 = vunpack.c.h.b16 %v412
        %v2159 = vunpack.c.l.b16 %v413
        %v2160 = vunpack.c.h.b16 %v413
        %v2161 = vunpack.c.l.b16 %v414
        %v2162 = vunpack.c.l.b16 %v415
        %v2163 = vunpack.c.h.b16 %v415
        %v2164 = vunpack.c.l.b16 %v416
        %v2165 = vunpack.c.h.b16 %v416
        %v2166 = vunpack.c.l.b16 %v417
        %v2167 = vunpack.c.h.b16 %v417
        %v2168 = vunpack.c.l.b16 %v418
        %v2169 = vunpack.c.l.b16 %v419
        %v2170 = vunpack.c.h.b16 %v419
        %v2171 = vunpack.c.l.b16 %v420
        %v2172 = vunpack.c.h.b16 %v420
        %v2173 = vunpack.c.l.b16 %v421
        %v2174 = vunpack.c.h.b16 %v421
        %v2175 = vunpack.c.l.b16 %v422
        %v2176 = vunpack.c.l.b16 %v423
        %v2177 = vunpack.c.h.b16 %v423
        %v2178 = vunpack.c.l.b16 %v424
        %v2179 = vunpack.c.h.b16 %v424
        %v2180 = vunpack.c.l.b16 %v425
        %v2181 = vunpack.c.h.b16 %v425
        %v2182 = vunpack.c.l.b16 %v426
        %v2183 = vunpack.c.l.b16 %v427
        %v2184 = vunpack.c.h.b16 %v427
        %v2185 = vunpack.c.l.b16 %v428
        %v2186 = vunpack.c.h.b16 %v428
        %v2187 = vunpack.c.l.b16 %v429
        %v2188 = vunpack.c.h.b16 %v429
        %v2189 = vunpack.c.l.b16 %v430
        %v2190 = vunpack.c.l.b16 %v431
        %v2191 = vunpack.c.h.b16 %v431
        %v2192 = vunpack.c.l.b16 %v432
        %v2193 = vunpack.c.h.b16 %v432
        %v2194 = vunpack.c.l.b16 %v433
        %v2195 = vunpack.c.h.b16 %v433
        %v2196 = vunpack.c.l.b16 %v434
        %v2197 = vunpack.c.l.b16 %v435
        %v2198 = vunpack.c.h.b16 %v435
        %v2199 = vunpack.c.l.b16 %v436
        %v2200 = vunpack.c.h.b16 %v436
        %v2201 = vunpack.c.l.b16 %v437
        %v2202 = vunpack.c.h.b16 %v437
        %v2203 = vunpack.c.l.b16 %v438
        %v2204 = vunpack.c.l.b16 %v439
        %v2205 = vunpack.c.h.b16 %v439
        %v2206 = vunpack.c.l.b16 %v440
        %v2207 = vunpack.c.h.b16 %v440
        %v2208 = vunpack.c.l.b16 %v441
        %v2209 = vunpack.c.h.b16 %v441
        %v2210 = vunpack.c.l.b16 %v442
        %v2211 = vunpack.c.l.b16 %v443
        %v2212 = vunpack.c.h.b16 %v443
        %v2213 = vunpack.c.l.b16 %v444
        %v2214 = vunpack.c.h.b16 %v444
        %v2215 = vunpack.c.l.b16 %v445
        %v2216 = vunpack.c.h.b16 %v445
        %v2217 = vunpack.c.l.b16 %v446
        %v2218 = vunpack.c.l.b16 %v447
        %v2219 = vunpack.c.h.b16 %v447
        %v2220 = vunpack.c.l.b16 %v448
        %v2221 = vunpack.c.h.b16 %v448
        %v2222 = vunpack.c.l.b16 %v449
        %v2223 = vunpack.c.h.b16 %v449
        %v2224 = vunpack.c.l.b16 %v450
        %v2225 = vunpack.c.l.b16 %v451
        %v2226 = vunpack.c.h.b16 %v451
        %v2227 = vunpack.c.l.b16 %v452
        %v2228 = vunpack.c.h.b16 %v452
        %v2229 = vunpack.c.l.b16 %v453
        %v2230 = vunpack.c.h.b16 %v453
        %v2231 = vunpack.c.l.b16 %v454
        %v2232 = vunpack.c.l.b16 %v455
        %v2233 = vunpack.c.h.b16 %v455
        %v2234 = vunpack.c.l.b16 %v456
        %v2235 = vunpack.c.h.b16 %v456
        %v2236 = vunpack.c.l.b16 %v457
        %v2237 = vunpack.c.h.b16 %v457
        %v2238 = vunpack.c.l.b16 %v458
        %v2239 = vunpack.c.l.b16 %v459
        %v2240 = vunpack.c.h.b16 %v459
        %v2241 = vunpack.c.l.b16 %v460
        %v2242 = vunpack.c.h.b16 %v460
        %v2243 = vunpack.c.l.b16 %v461
        %v2244 = vunpack.c.h.b16 %v461
        %v2245 = vunpack.c.l.b16 %v462
        %v2246 = vunpack.c.l.b16 %v463
        %v2247 = vunpack.c.h.b16 %v463
        %v2248 = vunpack.c.l.b16 %v464
        %v2249 = vunpack.c.h.b16 %v464
        %v2250 = vunpack.c.l.b16 %v465
        %v2251 = vunpack.c.h.b16 %v465
        %v2252 = vunpack.c.l.b16 %v466
        %v2253 = vunpack.c.l.b16 %v467
        %v2254 = vunpack.c.h.b16 %v467
        %v2255 = vunpack.c.l.b16 %v468
        %v2256 = vunpack.c.h.b16 %v468
        %v2257 = vunpack.c.l.b16 %v469
        %v2258 = vunpack.c.h.b16 %v469
        %v2259 = vunpack.c.l.b16 %v470
        %v2260 = vunpack.c.l.b16 %v471
        %v2261 = vunpack.c.h.b16 %v471
        %v2262 = vunpack.c.l.b16 %v472
        %v2263 = vunpack.c.h.b16 %v472
        %v2264 = vunpack.c.l.b16 %v473
        %v2265 = vunpack.c.h.b16 %v473
        %v2266 = vunpack.c.l.b16 %v474
        %v2267 = vunpack.c.l.b16 %v475
        %v2268 = vunpack.c.h.b16 %v475
        %v2269 = vunpack.c.l.b16 %v476
        %v2270 = vunpack.c.h.b16 %v476
        %v2271 = vunpack.c.l.b16 %v477
        %v2272 = vunpack.c.h.b16 %v477
        %v2273 = vunpack.c.l.b16 %v478
        %v2274 = vunpack.c.l.b16 %v479
        %v2275 = vunpack.c.h.b16 %v479
        %v2276 = vunpack.c.l.b16 %v480
        %v2277 = vunpack.c.h.b16 %v480
        %v2278 = vunpack.c.l.b16 %v481
        %v2279 = vunpack.c.h.b16 %v481
        %v2280 = vunpack.c.l.b16 %v482
        %v2281 = vunpack.c.l.b16 %v483
        %v2282 = vunpack.c.h.b16 %v483
        %v2283 = vunpack.c.l.b16 %v484
        %v2284 = vunpack.c.h.b16 %v484
        %v2285 = vunpack.c.l.b16 %v485
        %v2286 = vunpack.c.h.b16 %v485
        %v2287 = vunpack.c.l.b16 %v486
        %v2288 = vunpack.c.l.b16 %v487
        %v2289 = vunpack.c.h.b16 %v487
        %v2290 = vunpack.c.l.b16 %v488
        %v2291 = vunpack.c.h.b16 %v488
        %v2292 = vunpack.c.l.b16 %v489
        %v2293 = vunpack.c.h.b16 %v489
        %v2294 = vunpack.c.l.b16 %v490
        %v2295 = vunpack.c.l.b16 %v491
        %v2296 = vunpack.c.h.b16 %v491
        %v2297 = vunpack.c.l.b16 %v492
        %v2298 = vunpack.c.h.b16 %v492
        %v2299 = vunpack.c.l.b16 %v493
        %v2300 = vunpack.c.h.b16 %v493
        %v2301 = vunpack.c.l.b16 %v494
        %v2302 = vunpack.c.l.b16 %v495
        %v2303 = vunpack.c.h.b16 %v495
        %v2304 = vunpack.c.l.b16 %v496
        %v2305 = vunpack.c.h.b16 %v496
        %v2306 = vunpack.c.l.b16 %v497
        %v2307 = vunpack.c.h.b16 %v497
        %v2308 = vunpack.c.l.b16 %v498
        %v2309 = vunpack.c.l.b16 %v499
        %v2310 = vunpack.c.h.b16 %v499
        %v2311 = vunpack.c.l.b16 %v500
        %v2312 = vunpack.c.h.b16 %v500
        %v2313 = vunpack.c.l.b16 %v501
        %v2314 = vunpack.c.h.b16 %v501
        %v2315 = vunpack.c.l.b16 %v502
        %v2316 = vunpack.c.l.b16 %v503
        %v2317 = vunpack.c.h.b16 %v503
        %v2318 = vunpack.c.l.b16 %v504
        %v2319 = vunpack.c.h.b16 %v504
        %v2320 = vunpack.c.l.b16 %v505
        %v2321 = vunpack.c.h.b16 %v505
        %v2322 = vunpack.c.l.b16 %v506
        %v2323 = vunpack.c.l.b16 %v507
        %v2324 = vunpack.c.h.b16 %v507
        %v2325 = vunpack.c.l.b16 %v508
        %v2326 = vunpack.c.h.b16 %v508
        %v2327 = vunpack.c.l.b16 %v509
        %v2328 = vunpack.c.h.b16 %v509
        %v2329 = vunpack.c.l.b16 %v510
        %v2330 = vunpack.c.l.b16 %v511
        %v2331 = vunpack.c.h.b16 %v511
        %v2332 = vunpack.c.l.b16 %v512
        %v2333 = vunpack.c.h.b16 %v512
        %v2334 = vunpack.c.l.b16 %v513
        %v2335 = vunpack.c.h.b16 %v513
        %v2336 = vunpack.c.l.b16 %v514
        %v2337 = vunpack.c.l.b16 %v515
        %v2338 = vunpack.c.h.b16 %v515
        %v2339 = vunpack.c.l.b16 %v516
        %v2340 = vunpack.c.h.b16 %v516
        %v2341 = vunpack.c.l.b16 %v517
        %v2342 = vunpack.c.h.b16 %v517
        %v2343 = vunpack.c.l.b16 %v518
        %v2344 = vunpack.c.l.b16 %v519
        %v2345 = vunpack.c.h.b16 %v519
        %v2346 = vunpack.c.l.b16 %v520
        %v2347 = vunpack.c.h.b16 %v520
        %v2348 = vunpack.c.l.b16 %v521
        %v2349 = vunpack.c.h.b16 %v521
        %v2350 = vunpack.c.l.b16 %v522
        %v2351 = vunpack.c.l.b16 %v523
        %v2352 = vunpack.c.h.b16 %v523
        %v2353 = vunpack.c.l.b16 %v524
        %v2354 = vunpack.c.h.b16 %v524
        %v2355 = vunpack.c.l.b16 %v525
        %v2356 = vunpack.c.h.b16 %v525
        %v2357 = vunpack.c.l.b16 %v526
        %v2358 = vunpack.c.l.b16 %v527
        %v2359 = vunpack.c.h.b16 %v527
        %v2360 = vunpack.c.l.b16 %v528
        %v2361 = vunpack.c.h.b16 %v528
        %v2362 = vunpack.c.l.b16 %v529
        %v2363 = vunpack.c.h.b16 %v529
        %v2364 = vunpack.c.l.b16 %v530
        %v2365 = vunpack.c.l.b16 %v531
        %v2366 = vunpack.c.h.b16 %v531
        %v2367 = vunpack.c.l.b16 %v532
        %v2368 = vunpack.c.h.b16 %v532
        %v2369 = vunpack.c.l.b16 %v533
        %v2370 = vunpack.c.h.b16 %v533
        %v2371 = vunpack.c.l.b16 %v534
        %v2372 = vunpack.c.l.b16 %v535
        %v2373 = vunpack.c.h.b16 %v535
        %v2374 = vunpack.c.l.b16 %v536
        %v2375 = vunpack.c.h.b16 %v536
        %v2376 = vunpack.c.l.b16 %v537
        %v2377 = vunpack.c.h.b16 %v537
        %v2378 = vunpack.c.l.b16 %v538
        %v2379 = vunpack.c.l.b16 %v539
        %v2380 = vunpack.c.h.b16 %v539
        %v2381 = vunpack.c.l.b16 %v540
        %v2382 = vunpack.c.h.b16 %v540
        %v2383 = vunpack.c.l.b16 %v541
        %v2384 = vunpack.c.h.b16 %v541
        %v2385 = vunpack.c.l.b16 %v542
        %v2386 = vunpack.c.l.b16 %v543
        %v2387 = vunpack.c.h.b16 %v543
        %v2388 = vunpack.c.l.b16 %v544
        %v2389 = vunpack.c.h.b16 %v544
        %v2390 = vunpack.c.l.b16 %v545
        %v2391 = vunpack.c.h.b16 %v545
        %v2392 = vunpack.c.l.b16 %v546
        %v2393 = vunpack.c.l.b16 %v547
        %v2394 = vunpack.c.h.b16 %v547
        %v2395 = vunpack.c.l.b16 %v548
        %v2396 = vunpack.c.h.b16 %v548
        %v2397 = vunpack.c.l.b16 %v549
        %v2398 = vunpack.c.h.b16 %v549
        %v2399 = vunpack.c.l.b16 %v550
        %v2400 = vunpack.c.l.b16 %v551
        %v2401 = vunpack.c.h.b16 %v551
        %v2402 = vunpack.c.l.b16 %v552
        %v2403 = vunpack.c.h.b16 %v552
        %v2404 = vunpack.c.l.b16 %v553
        %v2405 = vunpack.c.h.b16 %v553
        %v2406 = vunpack.c.l.b16 %v554
        %v2407 = vunpack.c.l.b16 %v555
        %v2408 = vunpack.c.h.b16 %v555
        %v2409 = vunpack.c.l.b16 %v556
        %v2410 = vunpack.c.h.b16 %v556
        %v2411 = vunpack.c.l.b16 %v557
        %v2412 = vunpack.c.h.b16 %v557
        %v2413 = vunpack.c.l.b16 %v558
        %v2414 = vunpack.c.l.b16 %v559
        %v2415 = vunpack.c.h.b16 %v559
        %v2416 = vunpack.c.l.b16 %v560
        %v2417 = vunpack.c.h.b16 %v560
        %v2418 = vunpack.c.l.b16 %v561
        %v2419 = vunpack.c.h.b16 %v561
        %v2420 = vunpack.c.l.b16 %v562
        %v2421 = vunpack.c.l.b16 %v563
        %v2422 = vunpack.c.h.b16 %v563
        %v2423 = vunpack.c.l.b16 %v564
        %v2424 = vunpack.c.h.b16 %v564
        %v2425 = vunpack.c.l.b16 %v565
        %v2426 = vunpack.c.h.b16 %v565
        %v2427 = vunpack.c.l.b16 %v566
        %v2428 = vunpack.c.l.b16 %v567
        %v2429 = vunpack.c.h.b16 %v567
        %v2430 = vunpack.c.l.b16 %v568
        %v2431 = vunpack.c.h.b16 %v568
        %v2432 = vunpack.c.l.b16 %v569
        %v2433 = vunpack.c.h.b16 %v569
        %v2434 = vunpack.c.l.b16 %v570
        %v2435 = vunpack.c.l.b16 %v571
        %v2436 = vunpack.c.h.b16 %v571
        %v2437 = vunpack.c.l.b16 %v572
        %v2438 = vunpack.c.h.b16 %v572
        %v2439 = vunpack.c.l.b16 %v573
        %v2440 = vunpack.c.h.b16 %v573
        %v2441 = vunpack.c.l.b16 %v574
        %v2442 = vunpack.c.l.b16 %v575
        %v2443 = vunpack.c.h.b16 %v575
        %v2444 = vunpack.c.l.b16 %v576
        %v2445 = vunpack.c.h.b16 %v576
        %v2446 = vunpack.c.l.b16 %v577
        %v2447 = vunpack.c.h.b16 %v577
        %v2448 = vunpack.c.l.b16 %v578
        %v2449 = vunpack.c.l.b16 %v579
        %v2450 = vunpack.c.h.b16 %v579
        %v2451 = vunpack.c.l.b16 %v580
        %v2452 = vunpack.c.h.b16 %v580
        %v2453 = vunpack.c.l.b16 %v581
        %v2454 = vunpack.c.h.b16 %v581
        %v2455 = vunpack.c.l.b16 %v582
        %v2456 = vunpack.c.l.b16 %v583
        %v2457 = vunpack.c.h.b16 %v583
        %v2458 = vunpack.c.l.b16 %v584
        %v2459 = vunpack.c.h.b16 %v584
        %v2460 = vunpack.c.l.b16 %v585
        %v2461 = vunpack.c.h.b16 %v585
        %v2462 = vunpack.c.l.b16 %v586
        %v2463 = vunpack.c.l.b16 %v587
        %v2464 = vunpack.c.h.b16 %v587
        %v2465 = vunpack.c.l.b16 %v588
        %v2466 = vunpack.c.h.b16 %v588
        %v2467 = vunpack.c.l.b16 %v589
        %v2468 = vunpack.c.h.b16 %v589
        %v2469 = vunpack.c.l.b16 %v590
        %v2470 = vunpack.c.l.b16 %v591
        %v2471 = vunpack.c.h.b16 %v591
        %v2472 = vunpack.c.l.b16 %v592
        %v2473 = vunpack.c.h.b16 %v592
        %v2474 = vunpack.c.l.b16 %v593
        %v2475 = vunpack.c.h.b16 %v593
        %v2476 = vunpack.c.l.b16 %v594
        %v2477 = vunpack.c.l.b16 %v595
        %v2478 = vunpack.c.h.b16 %v595
        %v2479 = vunpack.c.l.b16 %v596
        %v2480 = vunpack.c.h.b16 %v596
        %v2481 = vunpack.c.l.b16 %v597
        %v2482 = vunpack.c.h.b16 %v597
        %v2483 = vunpack.c.l.b16 %v598
        %v2484 = vunpack.c.l.b16 %v599
        %v2485 = vunpack.c.h.b16 %v599
        %v2486 = vunpack.c.l.b16 %v600
        %v2487 = vunpack.c.h.b16 %v600
        %v2488 = vunpack.c.l.b16 %v601
        %v2489 = vunpack.c.h.b16 %v601
        %v2490 = vunpack.c.l.b16 %v602
        %v2491 = vunpack.c.l.b16 %v603
        %v2492 = vunpack.c.h.b16 %v603
        %v2493 = vunpack.c.l.b16 %v604
        %v2494 = vunpack.c.h.b16 %v604
        %v2495 = vunpack.c.l.b16 %v605
        %v2496 = vunpack.c.h.b16 %v605
        %v2497 = vunpack.c.l.b16 %v606
        %v2498 = vunpack.c.l.b16 %v607
        %v2499 = vunpack.c.h.b16 %v607
        %v2500 = vunpack.c.l.b16 %v608
        %v2501 = vunpack.c.h.b16 %v608
        %v2502 = vunpack.c.l.b16 %v609
        %v2503 = vunpack.c.h.b16 %v609
        %v2504 = vunpack.c.l.b16 %v610
        %v2505 = vunpack.c.l.b16 %v611
        %v2506 = vunpack.c.h.b16 %v611
        %v2507 = vunpack.c.l.b16 %v612
        %v2508 = vunpack.c.h.b16 %v612
        %v2509 = vunpack.c.l.b16 %v613
        %v2510 = vunpack.c.h.b16 %v613
        %v2511 = vunpack.c.l.b16 %v614
        %v2512 = vunpack.c.l.b16 %v615
        %v2513 = vunpack.c.h.b16 %v615
        %v2514 = vunpack.c.l.b16 %v616
        %v2515 = vunpack.c.h.b16 %v616
        %v2516 = vunpack.c.l.b16 %v617
        %v2517 = vunpack.c.h.b16 %v617
        %v2518 = vunpack.c.l.b16 %v618
        %v2519 = vunpack.c.l.b16 %v619
        %v2520 = vunpack.c.h.b16 %v619
        %v2521 = vunpack.c.l.b16 %v620
        %v2522 = vunpack.c.h.b16 %v620
        %v2523 = vunpack.c.l.b16 %v621
        %v2524 = vunpack.c.h.b16 %v621
        %v2525 = vunpack.c.l.b16 %v622
        %v2526 = vunpack.c.l.b16 %v623
        %v2527 = vunpack.c.h.b16 %v623
        %v2528 = vunpack.c.l.b16 %v624
        %v2529 = vunpack.c.h.b16 %v624
        %v2530 = vunpack.c.l.b16 %v625
        %v2531 = vunpack.c.h.b16 %v625
        %v2532 = vunpack.c.l.b16 %v626
        %v2533 = vunpack.c.l.b16 %v627
        %v2534 = vunpack.c.h.b16 %v627
        %v2535 = vunpack.c.l.b16 %v628
        %v2536 = vunpack.c.h.b16 %v628
        %v2537 = vunpack.c.l.b16 %v629
        %v2538 = vunpack.c.h.b16 %v629
        %v2539 = vunpack.c.l.b16 %v630
        %v2540 = vunpack.c.l.b16 %v631
        %v2541 = vunpack.c.h.b16 %v631
        %v2542 = vunpack.c.l.b16 %v632
        %v2543 = vunpack.c.h.b16 %v632
        %v2544 = vunpack.c.l.b16 %v633
        %v2545 = vunpack.c.h.b16 %v633
        %v2546 = vunpack.c.l.b16 %v634
        %v2547 = vunpack.c.l.b16 %v635
        %v2548 = vunpack.c.h.b16 %v635
        %v2549 = vunpack.c.l.b16 %v636
        %v2550 = vunpack.c.h.b16 %v636
        %v2551 = vunpack.c.l.b16 %v637
        %v2552 = vunpack.c.h.b16 %v637
        %v2553 = vunpack.c.l.b16 %v638
        %v2554 = vunpack.c.l.b16 %v639
        %v2555 = vunpack.c.h.b16 %v639
        %v2556 = vunpack.c.l.b16 %v640
        %v2557 = vunpack.c.h.b16 %v640
        %v2558 = vunpack.c.l.b16 %v641
        %v2559 = vunpack.c.h.b16 %v641
        %v2560 = vunpack.c.l.b16 %v642
        %v2561 = vunpack.c.l.b16 %v643
        %v2562 = vunpack.c.h.b16 %v643
        %v2563 = vunpack.c.l.b16 %v644
        %v2564 = vunpack.c.h.b16 %v644
        %v2565 = vunpack.c.l.b16 %v645
        %v2566 = vunpack.c.h.b16 %v645
        %v2567 = vunpack.c.l.b16 %v646
        %v2568 = vunpack.c.l.b16 %v647
        %v2569 = vunpack.c.h.b16 %v647
        %v2570 = vunpack.c.l.b16 %v648
        %v2571 = vunpack.c.h.b16 %v648
        %v2572 = vunpack.c.l.b16 %v649
        %v2573 = vunpack.c.h.b16 %v649
        %v2574 = vunpack.c.l.b16 %v650
        %v2575 = vunpack.c.l.b16 %v651
        %v2576 = vunpack.c.h.b16 %v651
        %v2577 = vunpack.c.l.b16 %v652
        %v2578 = vunpack.c.h.b16 %v652
        %v2579 = vunpack.c.l.b16 %v653
        %v2580 = vunpack.c.h.b16 %v653
        %v2581 = vunpack.c.l.b16 %v654
        %v2582 = vunpack.c.l.b16 %v655
        %v2583 = vunpack.c.h.b16 %v655
        %v2584 = vunpack.c.l.b16 %v656
        %v2585 = vunpack.c.h.b16 %v656
        %v2586 = vunpack.c.l.b16 %v657
        %v2587 = vunpack.c.h.b16 %v657
        %v2588 = vunpack.c.l.b16 %v658
        %v2589 = vunpack.c.l.b16 %v659
        %v2590 = vunpack.c.h.b16 %v659
        %v2591 = vunpack.c.l.b16 %v660
        %v2592 = vunpack.c.h.b16 %v660
        %v2593 = vunpack.c.l.b16 %v661
        %v2594 = vunpack.c.h.b16 %v661
        %v2595 = vunpack.c.l.b16 %v662
        %v2596 = vunpack.c.l.b16 %v663
        %v2597 = vunpack.c.h.b16 %v663
        %v2598 = vunpack.c.l.b16 %v664
        %v2599 = vunpack.c.h.b16 %v664
        %v2600 = vunpack.c.l.b16 %v665
        %v2601 = vunpack.c.h.b16 %v665
        %v2602 = vunpack.c.l.b16 %v666
        %v2603 = vunpack.c.l.b16 %v667
        %v2604 = vunpack.c.h.b16 %v667
        %v2605 = vunpack.c.l.b16 %v668
        %v2606 = vunpack.c.h.b16 %v668
        %v2607 = vunpack.c.l.b16 %v669
        %v2608 = vunpack.c.h.b16 %v669
        %v2609 = vunpack.c.l.b16 %v670
        %v2610 = vunpack.c.l.b16 %v671
        %v2611 = vunpack.c.h.b16 %v671
        %v2612 = vunpack.c.l.b16 %v672
        %v2613 = vunpack.c.h.b16 %v672
        %v2614 = vunpack.c.l.b16 %v673
        %v2615 = vunpack.c.h.b16 %v673
        %v2616 = vunpack.c.l.b16 %v674
        %v2617 = vunpack.c.l.b16 %v675
        %v2618 = vunpack.c.h.b16 %v675
        %v2619 = vunpack.c.l.b16 %v676
        %v2620 = vunpack.c.h.b16 %v676
        %v2621 = vunpack.c.l.b16 %v677
        %v2622 = vunpack.c.h.b16 %v677
        %v2623 = vunpack.c.l.b16 %v678
        %v2624 = vunpack.c.l.b16 %v679
        %v2625 = vunpack.c.h.b16 %v679
        %v2626 = vunpack.c.l.b16 %v680
        %v2627 = vunpack.c.h.b16 %v680
        %v2628 = vunpack.c.l.b16 %v681
        %v2629 = vunpack.c.h.b16 %v681
        %v2630 = vunpack.c.l.b16 %v682
        %v2631 = vunpack.c.l.b16 %v683
        %v2632 = vunpack.c.h.b16 %v683
        %v2633 = vunpack.c.l.b16 %v684
        %v2634 = vunpack.c.h.b16 %v684
        %v2635 = vunpack.c.l.b16 %v685
        %v2636 = vunpack.c.h.b16 %v685
        %v2637 = vunpack.c.l.b16 %v686
        %v2638 = vunpack.c.l.b16 %v687
        %v2639 = vunpack.c.h.b16 %v687
        %v2640 = vunpack.c.l.b16 %v688
        %v2641 = vunpack.c.h.b16 %v688
        %v2642 = vunpack.c.l.b16 %v689
        %v2643 = vunpack.c.h.b16 %v689
        %v2644 = vunpack.c.l.b16 %v690
        %v2645 = vunpack.c.l.b16 %v691
        %v2646 = vunpack.c.h.b16 %v691
        %v2647 = vunpack.c.l.b16 %v692
        %v2648 = vunpack.c.h.b16 %v692
        %v2649 = vunpack.c.l.b16 %v693
        %v2650 = vunpack.c.h.b16 %v693
        %v2651 = vunpack.c.l.b16 %v694
        %v2652 = vunpack.c.l.b16 %v695
        %v2653 = vunpack.c.h.b16 %v695
        %v2654 = vunpack.c.l.b16 %v696
        %v2655 = vunpack.c.h.b16 %v696
        %v2656 = vunpack.c.l.b16 %v697
        %v2657 = vunpack.c.h.b16 %v697
        %v2658 = vunpack.c.l.b16 %v698
        %v2659 = vunpack.c.l.b16 %v699
        %v2660 = vunpack.c.h.b16 %v699
        %v2661 = vunpack.c.l.b16 %v700
        %v2662 = vunpack.c.h.b16 %v700
        %v2663 = vunpack.c.l.b16 %v701
        %v2664 = vunpack.c.h.b16 %v701
        %v2665 = vunpack.c.l.b16 %v702
        %v2666 = vunpack.c.l.b16 %v703
        %v2667 = vunpack.c.h.b16 %v703
        %v2668 = vunpack.c.l.b16 %v704
        %v2669 = vunpack.c.h.b16 %v704
        %v2670 = vunpack.c.l.b16 %v705
        %v2671 = vunpack.c.h.b16 %v705
        %v2672 = vunpack.c.l.b16 %v706
        %v2673 = vunpack.c.l.b16 %v707
        %v2674 = vunpack.c.h.b16 %v707
        %v2675 = vunpack.c.l.b16 %v708
        %v2676 = vunpack.c.h.b16 %v708
        %v2677 = vunpack.c.l.b16 %v709
        %v2678 = vunpack.c.h.b16 %v709
        %v2679 = vunpack.c.l.b16 %v710
        %v2680 = vunpack.c.l.b16 %v711
        %v2681 = vunpack.c.h.b16 %v711
        %v2682 = vunpack.c.l.b16 %v712
        %v2683 = vunpack.c.h.b16 %v712
        %v2684 = vunpack.c.l.b16 %v713
        %v2685 = vunpack.c.h.b16 %v713
        %v2686 = vunpack.c.l.b16 %v714
        %v2687 = vunpack.c.l.b16 %v715
        %v2688 = vunpack.c.h.b16 %v715
        %v2689 = vunpack.c.l.b16 %v716
        %v2690 = vunpack.c.h.b16 %v716
        %v2691 = vunpack.c.l.b16 %v717
        %v2692 = vunpack.c.h.b16 %v717
        %v2693 = vunpack.c.l.b16 %v718
        %v2694 = vunpack.c.l.b16 %v719
        %v2695 = vunpack.c.h.b16 %v719
        %v2696 = vunpack.c.l.b16 %v720
        %v2697 = vunpack.c.h.b16 %v720
        %v2698 = vunpack.c.l.b16 %v721
        %v2699 = vunpack.c.h.b16 %v721
        %v2700 = vunpack.c.l.b16 %v722
        %v2701 = vunpack.c.l.b16 %v723
        %v2702 = vunpack.c.h.b16 %v723
        %v2703 = vunpack.c.l.b16 %v724
        %v2704 = vunpack.c.h.b16 %v724
        %v2705 = vunpack.c.l.b16 %v725
        %v2706 = vunpack.c.h.b16 %v725
        %v2707 = vunpack.c.l.b16 %v726
        %v2708 = vunpack.c.l.b16 %v727
        %v2709 = vunpack.c.h.b16 %v727
        %v2710 = vunpack.c.l.b16 %v728
        %v2711 = vunpack.c.h.b16 %v728
        %v2712 = vunpack.c.l.b16 %v729
        %v2713 = vunpack.c.h.b16 %v729
        %v2714 = vunpack.c.l.b16 %v730
        %v2715 = vunpack.c.l.b16 %v731
        %v2716 = vunpack.c.h.b16 %v731
        %v2717 = vunpack.c.l.b16 %v732
        %v2718 = vunpack.c.h.b16 %v732
        %v2719 = vunpack.c.l.b16 %v733
        %v2720 = vunpack.c.h.b16 %v733
        %v2721 = vunpack.c.l.b16 %v734
        %v2722 = vunpack.c.l.b16 %v735
        %v2723 = vunpack.c.h.b16 %v735
        %v2724 = vunpack.c.l.b16 %v736
        %v2725 = vunpack.c.h.b16 %v736
        %v2726 = vunpack.c.l.b16 %v737
        %v2727 = vunpack.c.h.b16 %v737
        %v2728 = vunpack.c.l.b16 %v738
        %v2729 = vunpack.c.l.b16 %v739
        %v2730 = vunpack.c.h.b16 %v739
        %v2731 = vunpack.c.l.b16 %v740
        %v2732 = vunpack.c.h.b16 %v740
        %v2733 = vunpack.c.l.b16 %v741
        %v2734 = vunpack.c.h.b16 %v741
        %v2735 = vunpack.c.l.b16 %v742
        %v2736 = vunpack.c.l.b16 %v743
        %v2737 = vunpack.c.h.b16 %v743
        %v2738 = vunpack.c.l.b16 %v744
        %v2739 = vunpack.c.h.b16 %v744
        %v2740 = vunpack.c.l.b16 %v745
        %v2741 = vunpack.c.h.b16 %v745
        %v2742 = vunpack.c.l.b16 %v746
        %v2743 = vunpack.c.l.b16 %v747
        %v2744 = vunpack.c.h.b16 %v747
        %v2745 = vunpack.c.l.b16 %v748
        %v2746 = vunpack.c.h.b16 %v748
        %v2747 = vunpack.c.l.b16 %v749
        %v2748 = vunpack.c.h.b16 %v749
        %v2749 = vunpack.c.l.b16 %v750
        %v2750 = vunpack.c.l.b16 %v751
        %v2751 = vunpack.c.h.b16 %v751
        %v2752 = vunpack.c.l.b16 %v752
        %v2753 = vunpack.c.h.b16 %v752
        %v2754 = vunpack.c.l.b16 %v753
        %v2755 = vunpack.c.h.b16 %v753
        %v2756 = vunpack.c.l.b16 %v754
        %v2757 = vunpack.c.l.b16 %v755
        %v2758 = vunpack.c.h.b16 %v755
        %v2759 = vunpack.c.l.b16 %v756
        %v2760 = vunpack.c.h.b16 %v756
        %v2761 = vunpack.c.l.b16 %v757
        %v2762 = vunpack.c.h.b16 %v757
        %v2763 = vunpack.c.l.b16 %v758
        %v2764 = vunpack.c.l.b16 %v759
        %v2765 = vunpack.c.h.b16 %v759
        %v2766 = vunpack.c.l.b16 %v760
        %v2767 = vunpack.c.h.b16 %v760
        %v2768 = vunpack.c.l.b16 %v761
        %v2769 = vunpack.c.h.b16 %v761
        %v2770 = vunpack.c.l.b16 %v762
        %v2771 = vunpack.c.l.b16 %v763
        %v2772 = vunpack.c.h.b16 %v763
        %v2773 = vunpack.c.l.b16 %v764
        %v2774 = vunpack.c.h.b16 %v764
        %v2775 = vunpack.c.l.b16 %v765
        %v2776 = vunpack.c.h.b16 %v765
        %v2777 = vunpack.c.l.b16 %v766
        %v2778 = vunpack.c.l.b16 %v767
        %v2779 = vunpack.c.h.b16 %v767
        %v2780 = vunpack.c.l.b16 %v768
        %v2781 = vunpack.c.h.b16 %v768
        %v2782 = vunpack.c.l.b16 %v769
        %v2783 = vunpack.c.h.b16 %v769
        %v2784 = vunpack.c.l.b16 %v770
        %v2785 = vunpack.c.l.b16 %v771
        %v2786 = vunpack.c.h.b16 %v771
        %v2787 = vunpack.c.l.b16 %v772
        %v2788 = vunpack.c.h.b16 %v772
        %v2789 = vunpack.c.l.b16 %v773
        %v2790 = vunpack.c.h.b16 %v773
        %v2791 = vunpack.c.l.b16 %v774
        %v2792 = vunpack.c.l.b16 %v775
        %v2793 = vunpack.c.h.b16 %v775
        %v2794 = vunpack.c.l.b16 %v776
        %v2795 = vunpack.c.h.b16 %v776
        %v2796 = vunpack.c.l.b16 %v777
        %v2797 = vunpack.c.h.b16 %v777
        %v2798 = vunpack.c.l.b16 %v778
        %v2799 = vunpack.c.l.b16 %v779
        %v2800 = vunpack.c.h.b16 %v779
        %v2801 = vunpack.c.l.b16 %v780
        %v2802 = vunpack.c.h.b16 %v780
        %v2803 = vunpack.c.l.b16 %v781
        %v2804 = vunpack.c.h.b16 %v781
        %v2805 = vunpack.c.l.b16 %v782
        %v2806 = vunpack.c.l.b16 %v783
        %v2807 = vunpack.c.h.b16 %v783
        %v2808 = vunpack.c.l.b16 %v784
        %v2809 = vunpack.c.h.b16 %v784
        %v2810 = vunpack.c.l.b16 %v785
        %v2811 = vunpack.c.h.b16 %v785
        %v2812 = vunpack.c.l.b16 %v786
        %v2813 = vunpack.c.l.b16 %v787
        %v2814 = vunpack.c.h.b16 %v787
        %v2815 = vunpack.c.l.b16 %v788
        %v2816 = vunpack.c.h.b16 %v788
        %v2817 = vunpack.c.l.b16 %v789
        %v2818 = vunpack.c.h.b16 %v789
        %v2819 = vunpack.c.l.b16 %v790
        %v2820 = vunpack.c.l.b16 %v791
        %v2821 = vunpack.c.h.b16 %v791
        %v2822 = vunpack.c.l.b16 %v792
        %v2823 = vunpack.c.h.b16 %v792
        %v2824 = vunpack.c.l.b16 %v793
        %v2825 = vunpack.c.h.b16 %v793
        %v2826 = vunpack.c.l.b16 %v794
        %v2827 = vunpack.c.l.b16 %v795
        %v2828 = vunpack.c.h.b16 %v795
        %v2829 = vunpack.c.l.b16 %v796
        %v2830 = vunpack.c.h.b16 %v796
        %v2831 = vunpack.c.l.b16 %v797
        %v2832 = vunpack.c.h.b16 %v797
        %v2833 = vunpack.c.l.b16 %v798
        %v2834 = vunpack.c.l.b16 %v799
        %v2835 = vunpack.c.h.b16 %v799
        %v2836 = vunpack.c.l.b16 %v800
        %v2837 = vunpack.c.h.b16 %v800
        %v2838 = vunpack.c.l.b16 %v801
        %v2839 = vunpack.c.h.b16 %v801
        %v2840 = vunpack.c.l.b16 %v802
        %v2841 = vunpack.c.l.b16 %v803
        %v2842 = vunpack.c.h.b16 %v803
        %v2843 = vunpack.c.l.b16 %v804
        %v2844 = vunpack.c.h.b16 %v804
        %v2845 = vunpack.c.l.b16 %v805
        %v2846 = vunpack.c.h.b16 %v805
        %v2847 = vunpack.c.l.b16 %v806
        %v2848 = vunpack.c.l.b16 %v807
        %v2849 = vunpack.c.h.b16 %v807
        %v2850 = vunpack.c.l.b16 %v808
        %v2851 = vunpack.c.h.b16 %v808
        %v2852 = vunpack.c.l.b16 %v809
        %v2853 = vunpack.c.h.b16 %v809
        %v2854 = vunpack.c.l.b16 %v810
        %v2855 = vunpack.c.l.b16 %v811
        %v2856 = vunpack.c.h.b16 %v811
        %v2857 = vunpack.c.l.b16 %v812
        %v2858 = vunpack.c.h.b16 %v812
        %v2859 = vunpack.c.l.b16 %v813
        %v2860 = vunpack.c.h.b16 %v813
        %v2861 = vunpack.c.l.b16 %v814
        %v2862 = vunpack.c.l.b16 %v815
        %v2863 = vunpack.c.h.b16 %v815
        %v2864 = vunpack.c.l.b16 %v816
        %v2865 = vunpack.c.h.b16 %v816
        %v2866 = vunpack.c.l.b16 %v817
        %v2867 = vunpack.c.h.b16 %v817
        %v2868 = vunpack.c.l.b16 %v818
        %v2869 = vunpack.c.l.b16 %v819
        %v2870 = vunpack.c.h.b16 %v819
        %v2871 = vunpack.c.l.b16 %v820
        %v2872 = vunpack.c.h.b16 %v820
        %v2873 = vunpack.c.l.b16 %v821
        %v2874 = vunpack.c.h.b16 %v821
        %v2875 = vunpack.c.l.b16 %v822
        %v2876 = vunpack.c.l.b16 %v823
        %v2877 = vunpack.c.h.b16 %v823
        %v2878 = vunpack.c.l.b16 %v824
        %v2879 = vunpack.c.h.b16 %v824
        %v2880 = vunpack.c.l.b16 %v825
        %v2881 = vunpack.c.h.b16 %v825
        %v2882 = vunpack.c.l.b16 %v826
        %v2883 = vunpack.c.l.b16 %v827
        %v2884 = vunpack.c.h.b16 %v827
        %v2885 = vunpack.c.l.b16 %v828
        %v2886 = vunpack.c.h.b16 %v828
        %v2887 = vunpack.c.l.b16 %v829
        %v2888 = vunpack.c.h.b16 %v829
        %v2889 = vunpack.c.l.b16 %v830
        %v2890 = vunpack.c.l.b16 %v831
        %v2891 = vunpack.c.h.b16 %v831
        %v2892 = vunpack.c.l.b16 %v832
        %v2893 = vunpack.c.h.b16 %v832
        %v2894 = vunpack.c.l.b16 %v833
        %v2895 = vunpack.c.h.b16 %v833
        %v2896 = vunpack.c.l.b16 %v834
        %v2897 = vunpack.c.l.b16 %v835
        %v2898 = vunpack.c.h.b16 %v835
        %v2899 = vunpack.c.l.b16 %v836
        %v2900 = vunpack.c.h.b16 %v836
        %v2901 = vunpack.c.l.b16 %v837
        %v2902 = vunpack.c.h.b16 %v837
        %v2903 = vunpack.c.l.b16 %v838
        %v2904 = vunpack.c.l.b16 %v839
        %v2905 = vunpack.c.h.b16 %v839
        %v2906 = vunpack.c.l.b16 %v840
        %v2907 = vunpack.c.h.b16 %v840
        %v2908 = vunpack.c.l.b16 %v841
        %v2909 = vunpack.c.h.b16 %v841
        %v2910 = vunpack.c.l.b16 %v842
        %v2911 = vunpack.c.l.b16 %v843
        %v2912 = vunpack.c.h.b16 %v843
        %v2913 = vunpack.c.l.b16 %v844
        %v2914 = vunpack.c.h.b16 %v844
        %v2915 = vunpack.c.l.b16 %v845
        %v2916 = vunpack.c.h.b16 %v845
        %v2917 = vunpack.c.l.b16 %v846
        %v2918 = vunpack.c.l.b16 %v847
        %v2919 = vunpack.c.h.b16 %v847
        %v2920 = vunpack.c.l.b16 %v848
        %v2921 = vunpack.c.h.b16 %v848
        %v2922 = vunpack.c.l.b16 %v849
        %v2923 = vunpack.c.h.b16 %v849
        %v2924 = vunpack.c.l.b16 %v850
        %v2925 = vunpack.c.l.b16 %v851
        %v2926 = vunpack.c.h.b16 %v851
        %v2927 = vunpack.c.l.b16 %v852
        %v2928 = vunpack.c.h.b16 %v852
        %v2929 = vunpack.c.l.b16 %v853
        %v2930 = vunpack.c.h.b16 %v853
        %v2931 = vunpack.c.l.b16 %v854
        %v2932 = vunpack.c.l.b16 %v855
        %v2933 = vunpack.c.h.b16 %v855
        %v2934 = vunpack.c.l.b16 %v856
        %v2935 = vunpack.c.h.b16 %v856
        %v2936 = vunpack.c.l.b16 %v857
        %v2937 = vunpack.c.h.b16 %v857
        %v2938 = vunpack.c.l.b16 %v858
        %v2939 = vunpack.c.l.b16 %v859
        %v2940 = vunpack.c.h.b16 %v859
        %v2941 = vunpack.c.l.b16 %v860
        %v2942 = vunpack.c.h.b16 %v860
        %v2943 = vunpack.c.l.b16 %v861
        %v2944 = vunpack.c.h.b16 %v861
        %v2945 = vunpack.c.l.b16 %v862
        %v2946 = vunpack.c.l.b16 %v863
        %v2947 = vunpack.c.h.b16 %v863
        %v2948 = vunpack.c.l.b16 %v864
        %v2949 = vunpack.c.h.b16 %v864
        %v2950 = vunpack.c.l.b16 %v865
        %v2951 = vunpack.c.h.b16 %v865
        %v2952 = vunpack.c.l.b16 %v866
        %v2953 = vunpack.c.l.b16 %v867
        %v2954 = vunpack.c.h.b16 %v867
        %v2955 = vunpack.c.l.b16 %v868
        %v2956 = vunpack.c.h.b16 %v868
        %v2957 = vunpack.c.l.b16 %v869
        %v2958 = vunpack.c.h.b16 %v869
        %v2959 = vunpack.c.l.b16 %v870
        %v2960 = vunpack.c.l.b16 %v871
        %v2961 = vunpack.c.h.b16 %v871
        %v2962 = vunpack.c.l.b16 %v872
        %v2963 = vunpack.c.h.b16 %v872
        %v2964 = vunpack.c.l.b16 %v873
        %v2965 = vunpack.c.h.b16 %v873
        %v2966 = vunpack.c.l.b16 %v874
        %v2967 = vunpack.c.l.b16 %v875
        %v2968 = vunpack.c.h.b16 %v875
        %v2969 = vunpack.c.l.b16 %v876
        %v2970 = vunpack.c.h.b16 %v876
        %v2971 = vunpack.c.l.b16 %v877
        %v2972 = vunpack.c.h.b16 %v877
        %v2973 = vunpack.c.l.b16 %v878
        %v2974 = vunpack.c.l.b16 %v879
        %v2975 = vunpack.c.h.b16 %v879
        %v2976 = vunpack.c.l.b16 %v880
        %v2977 = vunpack.c.h.b16 %v880
        %v2978 = vunpack.c.l.b16 %v881
        %v2979 = vunpack.c.h.b16 %v881
        %v2980 = vunpack.c.l.b16 %v882
        %v2981 = vunpack.c.l.b16 %v883
        %v2982 = vunpack.c.h.b16 %v883
        %v2983 = vunpack.c.l.b16 %v884
        %v2984 = vunpack.c.h.b16 %v884
        %v2985 = vunpack.c.l.b16 %v885
        %v2986 = vunpack.c.h.b16 %v885
        %v2987 = vunpack.c.l.b16 %v886
        %v2988 = vunpack.c.l.b16 %v887
        %v2989 = vunpack.c.h.b16 %v887
        %v2990 = vunpack.c.l.b16 %v888
        %v2991 = vunpack.c.h.b16 %v888
        %v2992 = vunpack.c.l.b16 %v889
        %v2993 = vunpack.c.h.b16 %v889
        %v2994 = vunpack.c.l.b16 %v890
        %v2995 = vunpack.c.l.b16 %v891
        %v2996 = vunpack.c.h.b16 %v891
        %v2997 = vunpack.c.l.b16 %v892
        %v2998 = vunpack.c.h.b16 %v892
        %v2999 = vunpack.c.l.b16 %v893
        %v3000 = vunpack.c.h.b16 %v893
        %v3001 = vunpack.c.l.b16 %v894
        %v3002 = vunpack.c.l.b16 %v895
        %v3003 = vunpack.c.h.b16 %v895
        %v3004 = vunpack.c.l.b16 %v896
        %v3005 = vunpack.c.h.b16 %v896
        %v3006 = vunpack.c.l.b16 %v897
        %v3007 = vunpack.c.h.b16 %v897
        %v3008 = vunpack.c.l.b16 %v898
        %v3009 = vunpack.c.l.b16 %v899
        %v3010 = vunpack.c.h.b16 %v899
        %v3011 = vunpack.c.l.b16 %v900
        %v3012 = vunpack.c.h.b16 %v900
        %v3013 = vunpack.c.l.b16 %v901
        %v3014 = vunpack.c.h.b16 %v901
        %v3015 = vunpack.c.l.b16 %v902
        %v3016 = vunpack.c.l.b16 %v903
        %v3017 = vunpack.c.h.b16 %v903
        %v3018 = vunpack.c.l.b16 %v904
        %v3019 = vunpack.c.h.b16 %v904
        %v3020 = vunpack.c.l.b16 %v905
        %v3021 = vunpack.c.h.b16 %v905
        %v3022 = vunpack.c.l.b16 %v906
        %v3023 = vunpack.c.l.b16 %v907
        %v3024 = vunpack.c.h.b16 %v907
        %v3025 = vunpack.c.l.b16 %v908
        %v3026 = vunpack.c.h.b16 %v908
        %v3027 = vunpack.c.l.b16 %v909
        %v3028 = vunpack.c.h.b16 %v909
        %v3029 = vunpack.c.l.b16 %v910
        %v3030 = vunpack.c.l.b16 %v911
        %v3031 = vunpack.c.h.b16 %v911
        %v3032 = vunpack.c.l.b16 %v912
        %v3033 = vunpack.c.h.b16 %v912
        %v3034 = vunpack.c.l.b16 %v913
        %v3035 = vunpack.c.h.b16 %v913
        %v3036 = vunpack.c.l.b16 %v914
        %v3037 = vunpack.c.l.b16 %v915
        %v3038 = vunpack.c.h.b16 %v915
        %v3039 = vunpack.c.l.b16 %v916
        %v3040 = vunpack.c.h.b16 %v916
        %v3041 = vunpack.c.l.b16 %v917
        %v3042 = vunpack.c.h.b16 %v917
        %v3043 = vunpack.c.l.b16 %v918
        %v3044 = vunpack.c.l.b16 %v919
        %v3045 = vunpack.c.h.b16 %v919
        %v3046 = vunpack.c.l.b16 %v920
        %v3047 = vunpack.c.h.b16 %v920
        %v3048 = vunpack.c.l.b16 %v921
        %v3049 = vunpack.c.h.b16 %v921
        %v3050 = vunpack.c.l.b16 %v922
        %v3051 = vunpack.c.l.b16 %v923
        %v3052 = vunpack.c.h.b16 %v923
        %v3053 = vunpack.c.l.b16 %v924
        %v3054 = vunpack.c.h.b16 %v924
        %v3055 = vunpack.c.l.b16 %v925
        %v3056 = vunpack.c.h.b16 %v925
        %v3057 = vunpack.c.l.b16 %v926
        %v3058 = vunpack.c.l.b16 %v927
        %v3059 = vunpack.c.h.b16 %v927
        %v3060 = vunpack.c.l.b16 %v928
        %v3061 = vunpack.c.h.b16 %v928
        %v3062 = vunpack.c.l.b16 %v929
        %v3063 = vunpack.c.h.b16 %v929
        %v3064 = vunpack.c.l.b16 %v930
        %v3065 = vunpack.c.l.b16 %v931
        %v3066 = vunpack.c.h.b16 %v931
        %v3067 = vunpack.c.l.b16 %v932
        %v3068 = vunpack.c.h.b16 %v932
        %v3069 = vunpack.c.l.b16 %v933
        %v3070 = vunpack.c.h.b16 %v933
        %v3071 = vunpack.c.l.b16 %v934
        %v3072 = vunpack.c.l.b16 %v935
        %v3073 = vunpack.c.h.b16 %v935
        %v3074 = vunpack.c.l.b16 %v936
        %v3075 = vunpack.c.h.b16 %v936
        %v3076 = vunpack.c.l.b16 %v937
        %v3077 = vunpack.c.h.b16 %v937
        %v3078 = vunpack.c.l.b16 %v938
        %v3079 = vunpack.c.l.b16 %v939
        %v3080 = vunpack.c.h.b16 %v939
        %v3081 = vunpack.c.l.b16 %v940
        %v3082 = vunpack.c.h.b16 %v940
        %v3083 = vunpack.c.l.b16 %v941
        %v3084 = vunpack.c.h.b16 %v941
        %v3085 = vunpack.c.l.b16 %v942
        %v3086 = vunpack.c.l.b16 %v943
        %v3087 = vunpack.c.h.b16 %v943
        %v3088 = vunpack.c.l.b16 %v944
        %v3089 = vunpack.c.h.b16 %v944
        %v3090 = vunpack.c.l.b16 %v945
        %v3091 = vunpack.c.h.b16 %v945
        %v3092 = vunpack.c.l.b16 %v946
        %v3093 = vunpack.c.l.b16 %v947
        %v3094 = vunpack.c.h.b16 %v947
        %v3095 = vunpack.c.l.b16 %v948
        %v3096 = vunpack.c.h.b16 %v948
        %v3097 = vunpack.c.l.b16 %v949
        %v3098 = vunpack.c.h.b16 %v949
        %v3099 = vunpack.c.l.b16 %v950
        %v3100 = vunpack.c.l.b16 %v951
        %v3101 = vunpack.c.h.b16 %v951
        %v3102 = vunpack.c.l.b16 %v952
        %v3103 = vunpack.c.h.b16 %v952
        %v3104 = vunpack.c.l.b16 %v953
        %v3105 = vunpack.c.h.b16 %v953
        %v3106 = vunpack.c.l.b16 %v954
        %v3107 = vunpack.c.l.b16 %v955
        %v3108 = vunpack.c.h.b16 %v955
        %v3109 = vunpack.c.l.b16 %v956
        %v3110 = vunpack.c.h.b16 %v956
        %v3111 = vunpack.c.l.b16 %v957
        %v3112 = vunpack.c.h.b16 %v957
        %v3113 = vunpack.c.l.b16 %v958
        %v3114 = vunpack.c.l.b16 %v959
        %v3115 = vunpack.c.h.b16 %v959
        %v3116 = vunpack.c.l.b16 %v960
        %v3117 = vunpack.c.h.b16 %v960
        %v3118 = vunpack.c.l.b16 %v961
        %v3119 = vunpack.c.h.b16 %v961
        %v3120 = vunpack.c.l.b16 %v962
        %v3121 = vunpack.c.l.b16 %v963
        %v3122 = vunpack.c.h.b16 %v963
        %v3123 = vunpack.c.l.b16 %v964
        %v3124 = vunpack.c.h.b16 %v964
        %v3125 = vunpack.c.l.b16 %v965
        %v3126 = vunpack.c.h.b16 %v965
        %v3127 = vunpack.c.l.b16 %v966
        %v3128 = vunpack.c.l.b16 %v967
        %v3129 = vunpack.c.h.b16 %v967
        %v3130 = vunpack.c.l.b16 %v968
        %v3131 = vunpack.c.h.b16 %v968
        %v3132 = vunpack.c.l.b16 %v969
        %v3133 = vunpack.c.h.b16 %v969
        %v3134 = vunpack.c.l.b16 %v970
        %v3135 = vunpack.c.l.b16 %v971
        %v3136 = vunpack.c.h.b16 %v971
        %v3137 = vunpack.c.l.b16 %v972
        %v3138 = vunpack.c.h.b16 %v972
        %v3139 = vunpack.c.l.b16 %v973
        %v3140 = vunpack.c.h.b16 %v973
        %v3141 = vunpack.c.l.b16 %v974
        %v3142 = vunpack.c.l.b16 %v975
        %v3143 = vunpack.c.h.b16 %v975
        %v3144 = vunpack.c.l.b16 %v976
        %v3145 = vunpack.c.h.b16 %v976
        %v3146 = vunpack.c.l.b16 %v977
        %v3147 = vunpack.c.h.b16 %v977
        %v3148 = vunpack.c.l.b16 %v978
        %v3149 = vunpack.c.l.b16 %v979
        %v3150 = vunpack.c.h.b16 %v979
        %v3151 = vunpack.c.l.b16 %v980
        %v3152 = vunpack.c.h.b16 %v980
        %v3153 = vunpack.c.l.b16 %v981
        %v3154 = vunpack.c.h.b16 %v981
        %v3155 = vunpack.c.l.b16 %v982
        %v3156 = vunpack.c.l.b16 %v983
        %v3157 = vunpack.c.h.b16 %v983
        %v3158 = vunpack.c.l.b16 %v984
        %v3159 = vunpack.c.h.b16 %v984
        %v3160 = vunpack.c.l.b16 %v985
        %v3161 = vunpack.c.h.b16 %v985
        %v3162 = vunpack.c.l.b16 %v986
        %v3163 = vunpack.c.l.b16 %v987
        %v3164 = vunpack.c.h.b16 %v987
        %v3165 = vunpack.c.l.b16 %v988
        %v3166 = vunpack.c.h.b16 %v988
        %v3167 = vunpack.c.l.b16 %v989
        %v3168 = vunpack.c.h.b16 %v989
        %v3169 = vunpack.c.l.b16 %v990
        %v3170 = vunpack.c.l.b16 %v991
        %v3171 = vunpack.c.h.b16 %v991
        %v3172 = vunpack.c.l.b16 %v992
        %v3173 = vunpack.c.h.b16 %v992
        %v3174 = vunpack.c.l.b16 %v993
        %v3175 = vunpack.c.h.b16 %v993
        %v3176 = vunpack.c.l.b16 %v994
        %v3177 = vunpack.c.l.b16 %v995
        %v3178 = vunpack.c.h.b16 %v995
        %v3179 = vunpack.c.l.b16 %v996
        %v3180 = vunpack.c.h.b16 %v996
        %v3181 = vunpack.c.l.b16 %v997
        %v3182 = vunpack.c.h.b16 %v997
        %v3183 = vunpack.c.l.b16 %v998
        %v3184 = vunpack.c.l.b16 %v999
        %v3185 = vunpack.c.h.b16 %v999
        %v3186 = vunpack.c.l.b16 %v1000
        %v3187 = vunpack.c.h.b16 %v1000
        %v3188 = vunpack.c.l.b16 %v1001
        %v3189 = vunpack.c.h.b16 %v1001
        %v3190 = vunpack.c.l.b16 %v1002
        %v3191 = vunpack.c.l.b16 %v1003
        %v3192 = vunpack.c.h.b16 %v1003
        %v3193 = vunpack.c.l.b16 %v1004
        %v3194 = vunpack.c.h.b16 %v1004
        %v3195 = vunpack.c.l.b16 %v1005
        %v3196 = vunpack.c.h.b16 %v1005
        %v3197 = vunpack.c.l.b16 %v1006
        %v3198 = vunpack.c.l.b16 %v1007
        %v3199 = vunpack.c.h.b16 %v1007
        %v3200 = vunpack.c.l.b16 %v1008
        %v3201 = vunpack.c.h.b16 %v1008
        %v3202 = vunpack.c.l.b16 %v1009
        %v3203 = vunpack.c.h.b16 %v1009
        %v3204 = vunpack.c.l.b16 %v1010
        %v3205 = vunpack.c.l.b16 %v1011
        %v3206 = vunpack.c.h.b16 %v1011
        %v3207 = vunpack.c.l.b16 %v1012
        %v3208 = vunpack.c.h.b16 %v1012
        %v3209 = vunpack.c.l.b16 %v1013
        %v3210 = vunpack.c.h.b16 %v1013
        %v3211 = vunpack.c.l.b16 %v1014
        %v3212 = vunpack.c.l.b16 %v1015
        %v3213 = vunpack.c.h.b16 %v1015
        %v3214 = vunpack.c.l.b16 %v1016
        %v3215 = vunpack.c.h.b16 %v1016
        %v3216 = vunpack.c.l.b16 %v1017
        %v3217 = vunpack.c.h.b16 %v1017
        %v3218 = vunpack.c.l.b16 %v1018
        %v3219 = vunpack.c.l.b16 %v1019
        %v3220 = vunpack.c.h.b16 %v1019
        %v3221 = vunpack.c.l.b16 %v1020
        %v3222 = vunpack.c.h.b16 %v1020
        %v3223 = vunpack.c.l.b16 %v1021
        %v3224 = vunpack.c.h.b16 %v1021
        %v3225 = vunpack.c.l.b16 %v1022
        %v3226 = vunpack.c.l.b16 %v1023
        %v3227 = vunpack.c.h.b16 %v1023
        %v3228 = vunpack.c.l.b16 %v1024
        %v3229 = vunpack.c.h.b16 %v1024
        %v3230 = vunpack.c.l.b16 %v1025
        %v3231 = vunpack.c.h.b16 %v1025
        %v3232 = vunpack.c.l.b16 %v1026
        %v3233 = vunpack.c.l.b16 %v1027
        %v3234 = vunpack.c.h.b16 %v1027
        %v3235 = vunpack.c.l.b16 %v1028
        %v3236 = vunpack.c.h.b16 %v1028
        %v3237 = vunpack.c.l.b16 %v1029
        %v3238 = vunpack.c.h.b16 %v1029
        %v3239 = vunpack.c.l.b16 %v1030
        %v3240 = vunpack.c.l.b16 %v1031
        %v3241 = vunpack.c.h.b16 %v1031
        %v3242 = vunpack.c.l.b16 %v1032
        %v3243 = vunpack.c.h.b16 %v1032
        %v3244 = vunpack.c.l.b16 %v1033
        %v3245 = vunpack.c.h.b16 %v1033
        %v3246 = vunpack.c.l.b16 %v1034
        %v3247 = vunpack.c.l.b16 %v1035
        %v3248 = vunpack.c.h.b16 %v1035
        %v3249 = vunpack.c.l.b16 %v1036
        %v3250 = vunpack.c.h.b16 %v1036
        %v3251 = vunpack.c.l.b16 %v1037
        %v3252 = vunpack.c.h.b16 %v1037
        %v3253 = vunpack.c.l.b16 %v1038
        %v3254 = vunpack.c.l.b16 %v1039
        %v3255 = vunpack.c.h.b16 %v1039
        %v3256 = vunpack.c.l.b16 %v1040
        %v3257 = vunpack.c.h.b16 %v1040
        %v3258 = vunpack.c.l.b16 %v1041
        %v3259 = vunpack.c.h.b16 %v1041
        %v3260 = vunpack.c.l.b16 %v1042
        %v3261 = vunpack.c.l.b16 %v1043
        %v3262 = vunpack.c.h.b16 %v1043
        %v3263 = vunpack.c.l.b16 %v1044
        %v3264 = vunpack.c.h.b16 %v1044
        %v3265 = vunpack.c.l.b16 %v1045
        %v3266 = vunpack.c.h.b16 %v1045
        %v3267 = vunpack.c.l.b16 %v1046
        %v3268 = vunpack.c.l.b16 %v1047
        %v3269 = vunpack.c.h.b16 %v1047
        %v3270 = vunpack.c.l.b16 %v1048
        %v3271 = vunpack.c.h.b16 %v1048
        %v3272 = vunpack.c.l.b16 %v1049
        %v3273 = vunpack.c.h.b16 %v1049
        %v3274 = vunpack.c.l.b16 %v1050
        %v3275 = vunpack.c.l.b16 %v1051
        %v3276 = vunpack.c.h.b16 %v1051
        %v3277 = vunpack.c.l.b16 %v1052
        %v3278 = vunpack.c.h.b16 %v1052
        %v3279 = vunpack.c.l.b16 %v1053
        %v3280 = vunpack.c.h.b16 %v1053
        %v3281 = vunpack.c.l.b16 %v1054
        %v3282 = vpack.c.b16 %v1945, %v1938
        %v3283 = vpack.c.b16 %v1946, %v1939
        %v3284 = vpack.c.b16 %v1947, %v1940
        %v3285 = vpack.c.b16 %v1948, %v1941
        %v3286 = vpack.c.b16 %v1949, %v1942
        %v3287 = vpack.c.b16 %v1950, %v1943
        %v3288 = vpack.c.b16 %v1951, %v1944
        %v3289 = vpack.c.b16 %v1959, %v1952
        %v3290 = vpack.c.b16 %v1960, %v1953
        %v3291 = vpack.c.b16 %v1961, %v1954
        %v3292 = vpack.c.b16 %v1962, %v1955
        %v3293 = vpack.c.b16 %v1963, %v1956
        %v3294 = vpack.c.b16 %v1964, %v1957
        %v3295 = vpack.c.b16 %v1965, %v1958
        %v3296 = vpack.c.b16 %v1973, %v1966
        %v3297 = vpack.c.b16 %v1974, %v1967
        %v3298 = vpack.c.b16 %v1975, %v1968
        %v3299 = vpack.c.b16 %v1976, %v1969
        %v3300 = vpack.c.b16 %v1977, %v1970
        %v3301 = vpack.c.b16 %v1978, %v1971
        %v3302 = vpack.c.b16 %v1979, %v1972
        %v3303 = vpack.c.b16 %v1987, %v1980
        %v3304 = vpack.c.b16 %v1988, %v1981
        %v3305 = vpack.c.b16 %v1989, %v1982
        %v3306 = vpack.c.b16 %v1990, %v1983
        %v3307 = vpack.c.b16 %v1991, %v1984
        %v3308 = vpack.c.b16 %v1992, %v1985
        %v3309 = vpack.c.b16 %v1993, %v1986
        %v3310 = vpack.c.b16 %v2001, %v1994
        %v3311 = vpack.c.b16 %v2002, %v1995
        %v3312 = vpack.c.b16 %v2003, %v1996
        %v3313 = vpack.c.b16 %v2004, %v1997
        %v3314 = vpack.c.b16 %v2005, %v1998
        %v3315 = vpack.c.b16 %v2006, %v1999
        %v3316 = vpack.c.b16 %v2007, %v2000
        %v3317 = vpack.c.b16 %v2015, %v2008
        %v3318 = vpack.c.b16 %v2016, %v2009
        %v3319 = vpack.c.b16 %v2017, %v2010
        %v3320 = vpack.c.b16 %v2018, %v2011
        %v3321 = vpack.c.b16 %v2019, %v2012
        %v3322 = vpack.c.b16 %v2020, %v2013
        %v3323 = vpack.c.b16 %v2021, %v2014
        %v3324 = vpack.c.b16 %v2029, %v2022
        %v3325 = vpack.c.b16 %v2030, %v2023
        %v3326 = vpack.c.b16 %v2031, %v2024
        %v3327 = vpack.c.b16 %v2032, %v2025
        %v3328 = vpack.c.b16 %v2033, %v2026
        %v3329 = vpack.c.b16 %v2034, %v2027
        %v3330 = vpack.c.b16 %v2035, %v2028
        %v3331 = vpack.c.b16 %v2043, %v2036
        %v3332 = vpack.c.b16 %v2044, %v2037
        %v3333 = vpack.c.b16 %v2045, %v2038
        %v3334 = vpack.c.b16 %v2046, %v2039
        %v3335 = vpack.c.b16 %v2047, %v2040
        %v3336 = vpack.c.b16 %v2048, %v2041
        %v3337 = vpack.c.b16 %v2049, %v2042
        %v3338 = vpack.c.b16 %v2057, %v2050
        %v3339 = vpack.c.b16 %v2058, %v2051
        %v3340 = vpack.c.b16 %v2059, %v2052
        %v3341 = vpack.c.b16 %v2060, %v2053
        %v3342 = vpack.c.b16 %v2061, %v2054
        %v3343 = vpack.c.b16 %v2062, %v2055
        %v3344 = vpack.c.b16 %v2063, %v2056
        %v3345 = vpack.c.b16 %v2071, %v2064
        %v3346 = vpack.c.b16 %v2072, %v2065
        %v3347 = vpack.c.b16 %v2073, %v2066
        %v3348 = vpack.c.b16 %v2074, %v2067
        %v3349 = vpack.c.b16 %v2075, %v2068
        %v3350 = vpack.c.b16 %v2076, %v2069
        %v3351 = vpack.c.b16 %v2077, %v2070
        %v3352 = vpack.c.b16 %v2085, %v2078
        %v3353 = vpack.c.b16 %v2086, %v2079
        %v3354 = vpack.c.b16 %v2087, %v2080
        %v3355 = vpack.c.b16 %v2088, %v2081
        %v3356 = vpack.c.b16 %v2089, %v2082
        %v3357 = vpack.c.b16 %v2090, %v2083
        %v3358 = vpack.c.b16 %v2091, %v2084
        %v3359 = vpack.c.b16 %v2099, %v2092
        %v3360 = vpack.c.b16 %v2100, %v2093
        %v3361 = vpack.c.b16 %v2101, %v2094
        %v3362 = vpack.c.b16 %v2102, %v2095
        %v3363 = vpack.c.b16 %v2103, %v2096
        %v3364 = vpack.c.b16 %v2104, %v2097
        %v3365 = vpack.c.b16 %v2105, %v2098
        %v3366 = vpack.c.b16 %v2113, %v2106
        %v3367 = vpack.c.b16 %v2114, %v2107
        %v3368 = vpack.c.b16 %v2115, %v2108
        %v3369 = vpack.c.b16 %v2116, %v2109
        %v3370 = vpack.c.b16 %v2117, %v2110
        %v3371 = vpack.c.b16 %v2118, %v2111
        %v3372 = vpack.c.b16 %v2119, %v2112
        %v3373 = vpack.c.b16 %v2127, %v2120
        %v3374 = vpack.c.b16 %v2128, %v2121
        %v3375 = vpack.c.b16 %v2129, %v2122
        %v3376 = vpack.c.b16 %v2130, %v2123
        %v3377 = vpack.c.b16 %v2131, %v2124
        %v3378 = vpack.c.b16 %v2132, %v2125
        %v3379 = vpack.c.b16 %v2133, %v2126
        %v3380 = vpack.c.b16 %v2141, %v2134
        %v3381 = vpack.c.b16 %v2142, %v2135
        %v3382 = vpack.c.b16 %v2143, %v2136
        %v3383 = vpack.c.b16 %v2144, %v2137
        %v3384 = vpack.c.b16 %v2145, %v2138
        %v3385 = vpack.c.b16 %v2146, %v2139
        %v3386 = vpack.c.b16 %v2147, %v2140
        %v3387 = vpack.c.b16 %v2155, %v2148
        %v3388 = vpack.c.b16 %v2156, %v2149
        %v3389 = vpack.c.b16 %v2157, %v2150
        %v3390 = vpack.c.b16 %v2158, %v2151
        %v3391 = vpack.c.b16 %v2159, %v2152
        %v3392 = vpack.c.b16 %v2160, %v2153
        %v3393 = vpack.c.b16 %v2161, %v2154
        %v3394 = vpack.c.b16 %v2169, %v2162
        %v3395 = vpack.c.b16 %v2170, %v2163
        %v3396 = vpack.c.b16 %v2171, %v2164
        %v3397 = vpack.c.b16 %v2172, %v2165
        %v3398 = vpack.c.b16 %v2173, %v2166
        %v3399 = vpack.c.b16 %v2174, %v2167
        %v3400 = vpack.c.b16 %v2175, %v2168
        %v3401 = vpack.c.b16 %v2183, %v2176
        %v3402 = vpack.c.b16 %v2184, %v2177
        %v3403 = vpack.c.b16 %v2185, %v2178
        %v3404 = vpack.c.b16 %v2186, %v2179
        %v3405 = vpack.c.b16 %v2187, %v2180
        %v3406 = vpack.c.b16 %v2188, %v2181
        %v3407 = vpack.c.b16 %v2189, %v2182
        %v3408 = vpack.c.b16 %v2197, %v2190
        %v3409 = vpack.c.b16 %v2198, %v2191
        %v3410 = vpack.c.b16 %v2199, %v2192
        %v3411 = vpack.c.b16 %v2200, %v2193
        %v3412 = vpack.c.b16 %v2201, %v2194
        %v3413 = vpack.c.b16 %v2202, %v2195
        %v3414 = vpack.c.b16 %v2203, %v2196
        %v3415 = vpack.c.b16 %v2211, %v2204
        %v3416 = vpack.c.b16 %v2212, %v2205
        %v3417 = vpack.c.b16 %v2213, %v2206
        %v3418 = vpack.c.b16 %v2214, %v2207
        %v3419 = vpack.c.b16 %v2215, %v2208
        %v3420 = vpack.c.b16 %v2216, %v2209
        %v3421 = vpack.c.b16 %v2217, %v2210
        %v3422 = vpack.c.b16 %v2225, %v2218
        %v3423 = vpack.c.b16 %v2226, %v2219
        %v3424 = vpack.c.b16 %v2227, %v2220
        %v3425 = vpack.c.b16 %v2228, %v2221
        %v3426 = vpack.c.b16 %v2229, %v2222
        %v3427 = vpack.c.b16 %v2230, %v2223
        %v3428 = vpack.c.b16 %v2231, %v2224
        %v3429 = vpack.c.b16 %v2239, %v2232
        %v3430 = vpack.c.b16 %v2240, %v2233
        %v3431 = vpack.c.b16 %v2241, %v2234
        %v3432 = vpack.c.b16 %v2242, %v2235
        %v3433 = vpack.c.b16 %v2243, %v2236
        %v3434 = vpack.c.b16 %v2244, %v2237
        %v3435 = vpack.c.b16 %v2245, %v2238
        %v3436 = vpack.c.b16 %v2253, %v2246
        %v3437 = vpack.c.b16 %v2254, %v2247
        %v3438 = vpack.c.b16 %v2255, %v2248
        %v3439 = vpack.c.b16 %v2256, %v2249
        %v3440 = vpack.c.b16 %v2257, %v2250
        %v3441 = vpack.c.b16 %v2258, %v2251
        %v3442 = vpack.c.b16 %v2259, %v2252
        %v3443 = vpack.c.b16 %v2267, %v2260
        %v3444 = vpack.c.b16 %v2268, %v2261
        %v3445 = vpack.c.b16 %v2269, %v2262
        %v3446 = vpack.c.b16 %v2270, %v2263
        %v3447 = vpack.c.b16 %v2271, %v2264
        %v3448 = vpack.c.b16 %v2272, %v2265
        %v3449 = vpack.c.b16 %v2273, %v2266
        %v3450 = vpack.c.b16 %v2281, %v2274
        %v3451 = vpack.c.b16 %v2282, %v2275
        %v3452 = vpack.c.b16 %v2283, %v2276
        %v3453 = vpack.c.b16 %v2284, %v2277
        %v3454 = vpack.c.b16 %v2285, %v2278
        %v3455 = vpack.c.b16 %v2286, %v2279
        %v3456 = vpack.c.b16 %v2287, %v2280
        %v3457 = vpack.c.b16 %v2295, %v2288
        %v3458 = vpack.c.b16 %v2296, %v2289
        %v3459 = vpack.c.b16 %v2297, %v2290
        %v3460 = vpack.c.b16 %v2298, %v2291
        %v3461 = vpack.c.b16 %v2299, %v2292
        %v3462 = vpack.c.b16 %v2300, %v2293
        %v3463 = vpack.c.b16 %v2301, %v2294
        %v3464 = vpack.c.b16 %v2309, %v2302
        %v3465 = vpack.c.b16 %v2310, %v2303
        %v3466 = vpack.c.b16 %v2311, %v2304
        %v3467 = vpack.c.b16 %v2312, %v2305
        %v3468 = vpack.c.b16 %v2313, %v2306
        %v3469 = vpack.c.b16 %v2314, %v2307
        %v3470 = vpack.c.b16 %v2315, %v2308
        %v3471 = vpack.c.b16 %v2323, %v2316
        %v3472 = vpack.c.b16 %v2324, %v2317
        %v3473 = vpack.c.b16 %v2325, %v2318
        %v3474 = vpack.c.b16 %v2326, %v2319
        %v3475 = vpack.c.b16 %v2327, %v2320
        %v3476 = vpack.c.b16 %v2328, %v2321
        %v3477 = vpack.c.b16 %v2329, %v2322
        %v3478 = vpack.c.b16 %v2337, %v2330
        %v3479 = vpack.c.b16 %v2338, %v2331
        %v3480 = vpack.c.b16 %v2339, %v2332
        %v3481 = vpack.c.b16 %v2340, %v2333
        %v3482 = vpack.c.b16 %v2341, %v2334
        %v3483 = vpack.c.b16 %v2342, %v2335
        %v3484 = vpack.c.b16 %v2343, %v2336
        %v3485 = vpack.c.b16 %v2351, %v2344
        %v3486 = vpack.c.b16 %v2352, %v2345
        %v3487 = vpack.c.b16 %v2353, %v2346
        %v3488 = vpack.c.b16 %v2354, %v2347
        %v3489 = vpack.c.b16 %v2355, %v2348
        %v3490 = vpack.c.b16 %v2356, %v2349
        %v3491 = vpack.c.b16 %v2357, %v2350
        %v3492 = vpack.c.b16 %v2365, %v2358
        %v3493 = vpack.c.b16 %v2366, %v2359
        %v3494 = vpack.c.b16 %v2367, %v2360
        %v3495 = vpack.c.b16 %v2368, %v2361
        %v3496 = vpack.c.b16 %v2369, %v2362
        %v3497 = vpack.c.b16 %v2370, %v2363
        %v3498 = vpack.c.b16 %v2371, %v2364
        %v3499 = vpack.c.b16 %v2379, %v2372
        %v3500 = vpack.c.b16 %v2380, %v2373
        %v3501 = vpack.c.b16 %v2381, %v2374
        %v3502 = vpack.c.b16 %v2382, %v2375
        %v3503 = vpack.c.b16 %v2383, %v2376
        %v3504 = vpack.c.b16 %v2384, %v2377
        %v3505 = vpack.c.b16 %v2385, %v2378
        %v3506 = vpack.c.b16 %v2393, %v2386
        %v3507 = vpack.c.b16 %v2394, %v2387
        %v3508 = vpack.c.b16 %v2395, %v2388
        %v3509 = vpack.c.b16 %v2396, %v2389
        %v3510 = vpack.c.b16 %v2397, %v2390
        %v3511 = vpack.c.b16 %v2398, %v2391
        %v3512 = vpack.c.b16 %v2399, %v2392
        %v3513 = vpack.c.b16 %v2407, %v2400
        %v3514 = vpack.c.b16 %v2408, %v2401
        %v3515 = vpack.c.b16 %v2409, %v2402
        %v3516 = vpack.c.b16 %v2410, %v2403
        %v3517 = vpack.c.b16 %v2411, %v2404
        %v3518 = vpack.c.b16 %v2412, %v2405
        %v3519 = vpack.c.b16 %v2413, %v2406
        %v3520 = vpack.c.b16 %v2421, %v2414
        %v3521 = vpack.c.b16 %v2422, %v2415
        %v3522 = vpack.c.b16 %v2423, %v2416
        %v3523 = vpack.c.b16 %v2424, %v2417
        %v3524 = vpack.c.b16 %v2425, %v2418
        %v3525 = vpack.c.b16 %v2426, %v2419
        %v3526 = vpack.c.b16 %v2427, %v2420
        %v3527 = vpack.c.b16 %v2435, %v2428
        %v3528 = vpack.c.b16 %v2436, %v2429
        %v3529 = vpack.c.b16 %v2437, %v2430
        %v3530 = vpack.c.b16 %v2438, %v2431
        %v3531 = vpack.c.b16 %v2439, %v2432
        %v3532 = vpack.c.b16 %v2440, %v2433
        %v3533 = vpack.c.b16 %v2441, %v2434
        %v3534 = vpack.c.b16 %v2449, %v2442
        %v3535 = vpack.c.b16 %v2450, %v2443
        %v3536 = vpack.c.b16 %v2451, %v2444
        %v3537 = vpack.c.b16 %v2452, %v2445
        %v3538 = vpack.c.b16 %v2453, %v2446
        %v3539 = vpack.c.b16 %v2454, %v2447
        %v3540 = vpack.c.b16 %v2455, %v2448
        %v3541 = vpack.c.b16 %v2463, %v2456
        %v3542 = vpack.c.b16 %v2464, %v2457
        %v3543 = vpack.c.b16 %v2465, %v2458
        %v3544 = vpack.c.b16 %v2466, %v2459
        %v3545 = vpack.c.b16 %v2467, %v2460
        %v3546 = vpack.c.b16 %v2468, %v2461
        %v3547 = vpack.c.b16 %v2469, %v2462
        %v3548 = vpack.c.b16 %v2477, %v2470
        %v3549 = vpack.c.b16 %v2478, %v2471
        %v3550 = vpack.c.b16 %v2479, %v2472
        %v3551 = vpack.c.b16 %v2480, %v2473
        %v3552 = vpack.c.b16 %v2481, %v2474
        %v3553 = vpack.c.b16 %v2482, %v2475
        %v3554 = vpack.c.b16 %v2483, %v2476
        %v3555 = vpack.c.b16 %v2491, %v2484
        %v3556 = vpack.c.b16 %v2492, %v2485
        %v3557 = vpack.c.b16 %v2493, %v2486
        %v3558 = vpack.c.b16 %v2494, %v2487
        %v3559 = vpack.c.b16 %v2495, %v2488
        %v3560 = vpack.c.b16 %v2496, %v2489
        %v3561 = vpack.c.b16 %v2497, %v2490
        %v3562 = vpack.c.b16 %v2505, %v2498
        %v3563 = vpack.c.b16 %v2506, %v2499
        %v3564 = vpack.c.b16 %v2507, %v2500
        %v3565 = vpack.c.b16 %v2508, %v2501
        %v3566 = vpack.c.b16 %v2509, %v2502
        %v3567 = vpack.c.b16 %v2510, %v2503
        %v3568 = vpack.c.b16 %v2511, %v2504
        %v3569 = vpack.c.b16 %v2519, %v2512
        %v3570 = vpack.c.b16 %v2520, %v2513
        %v3571 = vpack.c.b16 %v2521, %v2514
        %v3572 = vpack.c.b16 %v2522, %v2515
        %v3573 = vpack.c.b16 %v2523, %v2516
        %v3574 = vpack.c.b16 %v2524, %v2517
        %v3575 = vpack.c.b16 %v2525, %v2518
        %v3576 = vpack.c.b16 %v2533, %v2526
        %v3577 = vpack.c.b16 %v2534, %v2527
        %v3578 = vpack.c.b16 %v2535, %v2528
        %v3579 = vpack.c.b16 %v2536, %v2529
        %v3580 = vpack.c.b16 %v2537, %v2530
        %v3581 = vpack.c.b16 %v2538, %v2531
        %v3582 = vpack.c.b16 %v2539, %v2532
        %v3583 = vpack.c.b16 %v2547, %v2540
        %v3584 = vpack.c.b16 %v2548, %v2541
        %v3585 = vpack.c.b16 %v2549, %v2542
        %v3586 = vpack.c.b16 %v2550, %v2543
        %v3587 = vpack.c.b16 %v2551, %v2544
        %v3588 = vpack.c.b16 %v2552, %v2545
        %v3589 = vpack.c.b16 %v2553, %v2546
        %v3590 = vpack.c.b16 %v2561, %v2554
        %v3591 = vpack.c.b16 %v2562, %v2555
        %v3592 = vpack.c.b16 %v2563, %v2556
        %v3593 = vpack.c.b16 %v2564, %v2557
        %v3594 = vpack.c.b16 %v2565, %v2558
        %v3595 = vpack.c.b16 %v2566, %v2559
        %v3596 = vpack.c.b16 %v2567, %v2560
        %v3597 = vpack.c.b16 %v2575, %v2568
        %v3598 = vpack.c.b16 %v2576, %v2569
        %v3599 = vpack.c.b16 %v2577, %v2570
        %v3600 = vpack.c.b16 %v2578, %v2571
        %v3601 = vpack.c.b16 %v2579, %v2572
        %v3602 = vpack.c.b16 %v2580, %v2573
        %v3603 = vpack.c.b16 %v2581, %v2574
        %v3604 = vpack.c.b16 %v2589, %v2582
        %v3605 = vpack.c.b16 %v2590, %v2583
        %v3606 = vpack.c.b16 %v2591, %v2584
        %v3607 = vpack.c.b16 %v2592, %v2585
        %v3608 = vpack.c.b16 %v2593, %v2586
        %v3609 = vpack.c.b16 %v2594, %v2587
        %v3610 = vpack.c.b16 %v2595, %v2588
        %v3611 = vpack.c.b16 %v2603, %v2596
        %v3612 = vpack.c.b16 %v2604, %v2597
        %v3613 = vpack.c.b16 %v2605, %v2598
        %v3614 = vpack.c.b16 %v2606, %v2599
        %v3615 = vpack.c.b16 %v2607, %v2600
        %v3616 = vpack.c.b16 %v2608, %v2601
        %v3617 = vpack.c.b16 %v2609, %v2602
        %v3618 = vpack.c.b16 %v2617, %v2610
        %v3619 = vpack.c.b16 %v2618, %v2611
        %v3620 = vpack.c.b16 %v2619, %v2612
        %v3621 = vpack.c.b16 %v2620, %v2613
        %v3622 = vpack.c.b16 %v2621, %v2614
        %v3623 = vpack.c.b16 %v2622, %v2615
        %v3624 = vpack.c.b16 %v2623, %v2616
        %v3625 = vpack.c.b16 %v2631, %v2624
        %v3626 = vpack.c.b16 %v2632, %v2625
        %v3627 = vpack.c.b16 %v2633, %v2626
        %v3628 = vpack.c.b16 %v2634, %v2627
        %v3629 = vpack.c.b16 %v2635, %v2628
        %v3630 = vpack.c.b16 %v2636, %v2629
        %v3631 = vpack.c.b16 %v2637, %v2630
        %v3632 = vpack.c.b16 %v2645, %v2638
        %v3633 = vpack.c.b16 %v2646, %v2639
        %v3634 = vpack.c.b16 %v2647, %v2640
        %v3635 = vpack.c.b16 %v2648, %v2641
        %v3636 = vpack.c.b16 %v2649, %v2642
        %v3637 = vpack.c.b16 %v2650, %v2643
        %v3638 = vpack.c.b16 %v2651, %v2644
        %v3639 = vpack.c.b16 %v2659, %v2652
        %v3640 = vpack.c.b16 %v2660, %v2653
        %v3641 = vpack.c.b16 %v2661, %v2654
        %v3642 = vpack.c.b16 %v2662, %v2655
        %v3643 = vpack.c.b16 %v2663, %v2656
        %v3644 = vpack.c.b16 %v2664, %v2657
        %v3645 = vpack.c.b16 %v2665, %v2658
        %v3646 = vpack.c.b16 %v2673, %v2666
        %v3647 = vpack.c.b16 %v2674, %v2667
        %v3648 = vpack.c.b16 %v2675, %v2668
        %v3649 = vpack.c.b16 %v2676, %v2669
        %v3650 = vpack.c.b16 %v2677, %v2670
        %v3651 = vpack.c.b16 %v2678, %v2671
        %v3652 = vpack.c.b16 %v2679, %v2672
        %v3653 = vpack.c.b16 %v2687, %v2680
        %v3654 = vpack.c.b16 %v2688, %v2681
        %v3655 = vpack.c.b16 %v2689, %v2682
        %v3656 = vpack.c.b16 %v2690, %v2683
        %v3657 = vpack.c.b16 %v2691, %v2684
        %v3658 = vpack.c.b16 %v2692, %v2685
        %v3659 = vpack.c.b16 %v2693, %v2686
        %v3660 = vpack.c.b16 %v2701, %v2694
        %v3661 = vpack.c.b16 %v2702, %v2695
        %v3662 = vpack.c.b16 %v2703, %v2696
        %v3663 = vpack.c.b16 %v2704, %v2697
        %v3664 = vpack.c.b16 %v2705, %v2698
        %v3665 = vpack.c.b16 %v2706, %v2699
        %v3666 = vpack.c.b16 %v2707, %v2700
        %v3667 = vpack.c.b16 %v2715, %v2708
        %v3668 = vpack.c.b16 %v2716, %v2709
        %v3669 = vpack.c.b16 %v2717, %v2710
        %v3670 = vpack.c.b16 %v2718, %v2711
        %v3671 = vpack.c.b16 %v2719, %v2712
        %v3672 = vpack.c.b16 %v2720, %v2713
        %v3673 = vpack.c.b16 %v2721, %v2714
        %v3674 = vpack.c.b16 %v2729, %v2722
        %v3675 = vpack.c.b16 %v2730, %v2723
        %v3676 = vpack.c.b16 %v2731, %v2724
        %v3677 = vpack.c.b16 %v2732, %v2725
        %v3678 = vpack.c.b16 %v2733, %v2726
        %v3679 = vpack.c.b16 %v2734, %v2727
        %v3680 = vpack.c.b16 %v2735, %v2728
        %v3681 = vpack.c.b16 %v2743, %v2736
        %v3682 = vpack.c.b16 %v2744, %v2737
        %v3683 = vpack.c.b16 %v2745, %v2738
        %v3684 = vpack.c.b16 %v2746, %v2739
        %v3685 = vpack.c.b16 %v2747, %v2740
        %v3686 = vpack.c.b16 %v2748, %v2741
        %v3687 = vpack.c.b16 %v2749, %v2742
        %v3688 = vpack.c.b16 %v2757, %v2750
        %v3689 = vpack.c.b16 %v2758, %v2751
        %v3690 = vpack.c.b16 %v2759, %v2752
        %v3691 = vpack.c.b16 %v2760, %v2753
        %v3692 = vpack.c.b16 %v2761, %v2754
        %v3693 = vpack.c.b16 %v2762, %v2755
        %v3694 = vpack.c.b16 %v2763, %v2756
        %v3695 = vpack.c.b16 %v2771, %v2764
        %v3696 = vpack.c.b16 %v2772, %v2765
        %v3697 = vpack.c.b16 %v2773, %v2766
        %v3698 = vpack.c.b16 %v2774, %v2767
        %v3699 = vpack.c.b16 %v2775, %v2768
        %v3700 = vpack.c.b16 %v2776, %v2769
        %v3701 = vpack.c.b16 %v2777, %v2770
        %v3702 = vpack.c.b16 %v2785, %v2778
        %v3703 = vpack.c.b16 %v2786, %v2779
        %v3704 = vpack.c.b16 %v2787, %v2780
        %v3705 = vpack.c.b16 %v2788, %v2781
        %v3706 = vpack.c.b16 %v2789, %v2782
        %v3707 = vpack.c.b16 %v2790, %v2783
        %v3708 = vpack.c.b16 %v2791, %v2784
        %v3709 = vpack.c.b16 %v2799, %v2792
        %v3710 = vpack.c.b16 %v2800, %v2793
        %v3711 = vpack.c.b16 %v2801, %v2794
        %v3712 = vpack.c.b16 %v2802, %v2795
        %v3713 = vpack.c.b16 %v2803, %v2796
        %v3714 = vpack.c.b16 %v2804, %v2797
        %v3715 = vpack.c.b16 %v2805, %v2798
        %v3716 = vpack.c.b16 %v2813, %v2806
        %v3717 = vpack.c.b16 %v2814, %v2807
        %v3718 = vpack.c.b16 %v2815, %v2808
        %v3719 = vpack.c.b16 %v2816, %v2809
        %v3720 = vpack.c.b16 %v2817, %v2810
        %v3721 = vpack.c.b16 %v2818, %v2811
        %v3722 = vpack.c.b16 %v2819, %v2812
        %v3723 = vpack.c.b16 %v2827, %v2820
        %v3724 = vpack.c.b16 %v2828, %v2821
        %v3725 = vpack.c.b16 %v2829, %v2822
        %v3726 = vpack.c.b16 %v2830, %v2823
        %v3727 = vpack.c.b16 %v2831, %v2824
        %v3728 = vpack.c.b16 %v2832, %v2825
        %v3729 = vpack.c.b16 %v2833, %v2826
        %v3730 = vpack.c.b16 %v2841, %v2834
        %v3731 = vpack.c.b16 %v2842, %v2835
        %v3732 = vpack.c.b16 %v2843, %v2836
        %v3733 = vpack.c.b16 %v2844, %v2837
        %v3734 = vpack.c.b16 %v2845, %v2838
        %v3735 = vpack.c.b16 %v2846, %v2839
        %v3736 = vpack.c.b16 %v2847, %v2840
        %v3737 = vpack.c.b16 %v2855, %v2848
        %v3738 = vpack.c.b16 %v2856, %v2849
        %v3739 = vpack.c.b16 %v2857, %v2850
        %v3740 = vpack.c.b16 %v2858, %v2851
        %v3741 = vpack.c.b16 %v2859, %v2852
        %v3742 = vpack.c.b16 %v2860, %v2853
        %v3743 = vpack.c.b16 %v2861, %v2854
        %v3744 = vpack.c.b16 %v2869, %v2862
        %v3745 = vpack.c.b16 %v2870, %v2863
        %v3746 = vpack.c.b16 %v2871, %v2864
        %v3747 = vpack.c.b16 %v2872, %v2865
        %v3748 = vpack.c.b16 %v2873, %v2866
        %v3749 = vpack.c.b16 %v2874, %v2867
        %v3750 = vpack.c.b16 %v2875, %v2868
        %v3751 = vpack.c.b16 %v2883, %v2876
        %v3752 = vpack.c.b16 %v2884, %v2877
        %v3753 = vpack.c.b16 %v2885, %v2878
        %v3754 = vpack.c.b16 %v2886, %v2879
        %v3755 = vpack.c.b16 %v2887, %v2880
        %v3756 = vpack.c.b16 %v2888, %v2881
        %v3757 = vpack.c.b16 %v2889, %v2882
        %v3758 = vpack.c.b16 %v2897, %v2890
        %v3759 = vpack.c.b16 %v2898, %v2891
        %v3760 = vpack.c.b16 %v2899, %v2892
        %v3761 = vpack.c.b16 %v2900, %v2893
        %v3762 = vpack.c.b16 %v2901, %v2894
        %v3763 = vpack.c.b16 %v2902, %v2895
        %v3764 = vpack.c.b16 %v2903, %v2896
        %v3765 = vpack.c.b16 %v2911, %v2904
        %v3766 = vpack.c.b16 %v2912, %v2905
        %v3767 = vpack.c.b16 %v2913, %v2906
        %v3768 = vpack.c.b16 %v2914, %v2907
        %v3769 = vpack.c.b16 %v2915, %v2908
        %v3770 = vpack.c.b16 %v2916, %v2909
        %v3771 = vpack.c.b16 %v2917, %v2910
        %v3772 = vpack.c.b16 %v2925, %v2918
        %v3773 = vpack.c.b16 %v2926, %v2919
        %v3774 = vpack.c.b16 %v2927, %v2920
        %v3775 = vpack.c.b16 %v2928, %v2921
        %v3776 = vpack.c.b16 %v2929, %v2922
        %v3777 = vpack.c.b16 %v2930, %v2923
        %v3778 = vpack.c.b16 %v2931, %v2924
        %v3779 = vpack.c.b16 %v2939, %v2932
        %v3780 = vpack.c.b16 %v2940, %v2933
        %v3781 = vpack.c.b16 %v2941, %v2934
        %v3782 = vpack.c.b16 %v2942, %v2935
        %v3783 = vpack.c.b16 %v2943, %v2936
        %v3784 = vpack.c.b16 %v2944, %v2937
        %v3785 = vpack.c.b16 %v2945, %v2938
        %v3786 = vpack.c.b16 %v2953, %v2946
        %v3787 = vpack.c.b16 %v2954, %v2947
        %v3788 = vpack.c.b16 %v2955, %v2948
        %v3789 = vpack.c.b16 %v2956, %v2949
        %v3790 = vpack.c.b16 %v2957, %v2950
        %v3791 = vpack.c.b16 %v2958, %v2951
        %v3792 = vpack.c.b16 %v2959, %v2952
        %v3793 = vpack.c.b16 %v2967, %v2960
        %v3794 = vpack.c.b16 %v2968, %v2961
        %v3795 = vpack.c.b16 %v2969, %v2962
        %v3796 = vpack.c.b16 %v2970, %v2963
        %v3797 = vpack.c.b16 %v2971, %v2964
        %v3798 = vpack.c.b16 %v2972, %v2965
        %v3799 = vpack.c.b16 %v2973, %v2966
        %v3800 = vpack.c.b16 %v2981, %v2974
        %v3801 = vpack.c.b16 %v2982, %v2975
        %v3802 = vpack.c.b16 %v2983, %v2976
        %v3803 = vpack.c.b16 %v2984, %v2977
        %v3804 = vpack.c.b16 %v2985, %v2978
        %v3805 = vpack.c.b16 %v2986, %v2979
        %v3806 = vpack.c.b16 %v2987, %v2980
        %v3807 = vpack.c.b16 %v2995, %v2988
        %v3808 = vpack.c.b16 %v2996, %v2989
        %v3809 = vpack.c.b16 %v2997, %v2990
        %v3810 = vpack.c.b16 %v2998, %v2991
        %v3811 = vpack.c.b16 %v2999, %v2992
        %v3812 = vpack.c.b16 %v3000, %v2993
        %v3813 = vpack.c.b16 %v3001, %v2994
        %v3814 = vpack.c.b16 %v3009, %v3002
        %v3815 = vpack.c.b16 %v3010, %v3003
        %v3816 = vpack.c.b16 %v3011, %v3004
        %v3817 = vpack.c.b16 %v3012, %v3005
        %v3818 = vpack.c.b16 %v3013, %v3006
        %v3819 = vpack.c.b16 %v3014, %v3007
        %v3820 = vpack.c.b16 %v3015, %v3008
        %v3821 = vpack.c.b16 %v3023, %v3016
        %v3822 = vpack.c.b16 %v3024, %v3017
        %v3823 = vpack.c.b16 %v3025, %v3018
        %v3824 = vpack.c.b16 %v3026, %v3019
        %v3825 = vpack.c.b16 %v3027, %v3020
        %v3826 = vpack.c.b16 %v3028, %v3021
        %v3827 = vpack.c.b16 %v3029, %v3022
        %v3828 = vpack.c.b16 %v3037, %v3030
        %v3829 = vpack.c.b16 %v3038, %v3031
        %v3830 = vpack.c.b16 %v3039, %v3032
        %v3831 = vpack.c.b16 %v3040, %v3033
        %v3832 = vpack.c.b16 %v3041, %v3034
        %v3833 = vpack.c.b16 %v3042, %v3035
        %v3834 = vpack.c.b16 %v3043, %v3036
        %v3835 = vpack.c.b16 %v3051, %v3044
        %v3836 = vpack.c.b16 %v3052, %v3045
        %v3837 = vpack.c.b16 %v3053, %v3046
        %v3838 = vpack.c.b16 %v3054, %v3047
        %v3839 = vpack.c.b16 %v3055, %v3048
        %v3840 = vpack.c.b16 %v3056, %v3049
        %v3841 = vpack.c.b16 %v3057, %v3050
        %v3842 = vpack.c.b16 %v3065, %v3058
        %v3843 = vpack.c.b16 %v3066, %v3059
        %v3844 = vpack.c.b16 %v3067, %v3060
        %v3845 = vpack.c.b16 %v3068, %v3061
        %v3846 = vpack.c.b16 %v3069, %v3062
        %v3847 = vpack.c.b16 %v3070, %v3063
        %v3848 = vpack.c.b16 %v3071, %v3064
        %v3849 = vpack.c.b16 %v3079, %v3072
        %v3850 = vpack.c.b16 %v3080, %v3073
        %v3851 = vpack.c.b16 %v3081, %v3074
        %v3852 = vpack.c.b16 %v3082, %v3075
        %v3853 = vpack.c.b16 %v3083, %v3076
        %v3854 = vpack.c.b16 %v3084, %v3077
        %v3855 = vpack.c.b16 %v3085, %v3078
        %v3856 = vpack.c.b16 %v3093, %v3086
        %v3857 = vpack.c.b16 %v3094, %v3087
        %v3858 = vpack.c.b16 %v3095, %v3088
        %v3859 = vpack.c.b16 %v3096, %v3089
        %v3860 = vpack.c.b16 %v3097, %v3090
        %v3861 = vpack.c.b16 %v3098, %v3091
        %v3862 = vpack.c.b16 %v3099, %v3092
        %v3863 = vpack.c.b16 %v3107, %v3100
        %v3864 = vpack.c.b16 %v3108, %v3101
        %v3865 = vpack.c.b16 %v3109, %v3102
        %v3866 = vpack.c.b16 %v3110, %v3103
        %v3867 = vpack.c.b16 %v3111, %v3104
        %v3868 = vpack.c.b16 %v3112, %v3105
        %v3869 = vpack.c.b16 %v3113, %v3106
        %v3870 = vpack.c.b16 %v3121, %v3114
        %v3871 = vpack.c.b16 %v3122, %v3115
        %v3872 = vpack.c.b16 %v3123, %v3116
        %v3873 = vpack.c.b16 %v3124, %v3117
        %v3874 = vpack.c.b16 %v3125, %v3118
        %v3875 = vpack.c.b16 %v3126, %v3119
        %v3876 = vpack.c.b16 %v3127, %v3120
        %v3877 = vpack.c.b16 %v3135, %v3128
        %v3878 = vpack.c.b16 %v3136, %v3129
        %v3879 = vpack.c.b16 %v3137, %v3130
        %v3880 = vpack.c.b16 %v3138, %v3131
        %v3881 = vpack.c.b16 %v3139, %v3132
        %v3882 = vpack.c.b16 %v3140, %v3133
        %v3883 = vpack.c.b16 %v3141, %v3134
        %v3884 = vpack.c.b16 %v3149, %v3142
        %v3885 = vpack.c.b16 %v3150, %v3143
        %v3886 = vpack.c.b16 %v3151, %v3144
        %v3887 = vpack.c.b16 %v3152, %v3145
        %v3888 = vpack.c.b16 %v3153, %v3146
        %v3889 = vpack.c.b16 %v3154, %v3147
        %v3890 = vpack.c.b16 %v3155, %v3148
        %v3891 = vpack.c.b16 %v3163, %v3156
        %v3892 = vpack.c.b16 %v3164, %v3157
        %v3893 = vpack.c.b16 %v3165, %v3158
        %v3894 = vpack.c.b16 %v3166, %v3159
        %v3895 = vpack.c.b16 %v3167, %v3160
        %v3896 = vpack.c.b16 %v3168, %v3161
        %v3897 = vpack.c.b16 %v3169, %v3162
        %v3898 = vpack.c.b16 %v3177, %v3170
        %v3899 = vpack.c.b16 %v3178, %v3171
        %v3900 = vpack.c.b16 %v3179, %v3172
        %v3901 = vpack.c.b16 %v3180, %v3173
        %v3902 = vpack.c.b16 %v3181, %v3174
        %v3903 = vpack.c.b16 %v3182, %v3175
        %v3904 = vpack.c.b16 %v3183, %v3176
        %v3905 = vpack.c.b16 %v3191, %v3184
        %v3906 = vpack.c.b16 %v3192, %v3185
        %v3907 = vpack.c.b16 %v3193, %v3186
        %v3908 = vpack.c.b16 %v3194, %v3187
        %v3909 = vpack.c.b16 %v3195, %v3188
        %v3910 = vpack.c.b16 %v3196, %v3189
        %v3911 = vpack.c.b16 %v3197, %v3190
        %v3912 = vpack.c.b16 %v3205, %v3198
        %v3913 = vpack.c.b16 %v3206, %v3199
        %v3914 = vpack.c.b16 %v3207, %v3200
        %v3915 = vpack.c.b16 %v3208, %v3201
        %v3916 = vpack.c.b16 %v3209, %v3202
        %v3917 = vpack.c.b16 %v3210, %v3203
        %v3918 = vpack.c.b16 %v3211, %v3204
        %v3919 = vpack.c.b16 %v3219, %v3212
        %v3920 = vpack.c.b16 %v3220, %v3213
        %v3921 = vpack.c.b16 %v3221, %v3214
        %v3922 = vpack.c.b16 %v3222, %v3215
        %v3923 = vpack.c.b16 %v3223, %v3216
        %v3924 = vpack.c.b16 %v3224, %v3217
        %v3925 = vpack.c.b16 %v3225, %v3218
        %v3926 = vpack.c.b16 %v3233, %v3226
        %v3927 = vpack.c.b16 %v3234, %v3227
        %v3928 = vpack.c.b16 %v3235, %v3228
        %v3929 = vpack.c.b16 %v3236, %v3229
        %v3930 = vpack.c.b16 %v3237, %v3230
        %v3931 = vpack.c.b16 %v3238, %v3231
        %v3932 = vpack.c.b16 %v3239, %v3232
        %v3933 = vpack.c.b16 %v3247, %v3240
        %v3934 = vpack.c.b16 %v3248, %v3241
        %v3935 = vpack.c.b16 %v3249, %v3242
        %v3936 = vpack.c.b16 %v3250, %v3243
        %v3937 = vpack.c.b16 %v3251, %v3244
        %v3938 = vpack.c.b16 %v3252, %v3245
        %v3939 = vpack.c.b16 %v3253, %v3246
        %v3940 = vpack.c.b16 %v3261, %v3254
        %v3941 = vpack.c.b16 %v3262, %v3255
        %v3942 = vpack.c.b16 %v3263, %v3256
        %v3943 = vpack.c.b16 %v3264, %v3257
        %v3944 = vpack.c.b16 %v3265, %v3258
        %v3945 = vpack.c.b16 %v3266, %v3259
        %v3946 = vpack.c.b16 %v3267, %v3260
        %v3947 = vpack.c.b16 %v3275, %v3268
        %v3948 = vpack.c.b16 %v3276, %v3269
        %v3949 = vpack.c.b16 %v3277, %v3270
        %v3950 = vpack.c.b16 %v3278, %v3271
        %v3951 = vpack.c.b16 %v3279, %v3272
        %v3952 = vpack.c.b16 %v3280, %v3273
        %v3953 = vpack.c.b16 %v3281, %v3274
        %4626 = vmatprep.subr.bf16.mxu0 %v3283
        %4627 = vmatpush1.bf16.msra.mxu0 %v3282
        %4628 = vmatprep.subr.bf16.mxu0 %v3290
        %4629 = vmatpush1.bf16.msra.mxu0 %v3289
        %4630 = vmatprep.subr.bf16.mxu0 %v3297
        %4631 = vmatpush1.bf16.msra.mxu0 %v3296
        %4632 = vmatprep.subr.bf16.mxu0 %v3304
        %4633 = vmatpush1.bf16.msra.mxu0 %v3303
        %4634 = vmatprep.subr.bf16.mxu0 %v3311
        %4635 = vmatpush1.bf16.msra.mxu0 %v3310
        %4636 = vmatprep.subr.bf16.mxu0 %v3318
        %4637 = vmatpush1.bf16.msra.mxu0 %v3317
        %4638 = vmatprep.subr.bf16.mxu0 %v3325
        %4639 = vmatpush1.bf16.msra.mxu0 %v3324
        %4640 = vmatprep.subr.bf16.mxu0 %v3332
        %4641 = vmatpush1.bf16.msra.mxu0 %v3331
        %4642 = vmatprep.subr.bf16.mxu0 %v3339
        %4643 = vmatpush1.bf16.msra.mxu0 %v3338
        %4644 = vmatprep.subr.bf16.mxu0 %v3346
        %4645 = vmatpush1.bf16.msra.mxu0 %v3345
        %4646 = vmatprep.subr.bf16.mxu0 %v3353
        %4647 = vmatpush1.bf16.msra.mxu0 %v3352
        %4648 = vmatprep.subr.bf16.mxu0 %v3360
        %4649 = vmatpush1.bf16.msra.mxu0 %v3359
        %4650 = vmatprep.subr.bf16.mxu0 %v3367
        %4651 = vmatpush1.bf16.msra.mxu0 %v3366
        %4652 = vmatprep.subr.bf16.mxu0 %v3374
        %4653 = vmatpush1.bf16.msra.mxu0 %v3373
        %4654 = vmatprep.subr.bf16.mxu0 %v3381
        %4655 = vmatpush1.bf16.msra.mxu0 %v3380
        %4656 = vmatprep.subr.bf16.mxu0 %v3388
        %4657 = vmatpush1.bf16.msra.mxu0 %v3387
        %4658 = vmatprep.mubr.bf16.mxu0 %v1147
        %4659 = vmatmul.mubr.bf16.gmra.mrb[0].mxu0 %v1146
        %v4660 = vpop.f32.mrb[0].mxu0
        %v4661 = vadd.f32 %v1096, %v4660
        %v4662 = vpop.f32.mrb[0].mxu0
        %v4663 = vadd.f32 %v1100, %v4662
        %v4664 = vpop.f32.mrb[0].mxu0
        %v4665 = vpop.f32.mrb[0].mxu0
        %4666 = vdwg.mxu0
        %4667 = vmatprep.subr.bf16.mxu0 %v3395
        %4668 = vmatpush1.bf16.msra.mxu0 %v3394
        %4669 = vmatprep.subr.bf16.mxu0 %v3402
        %4670 = vmatpush1.bf16.msra.mxu0 %v3401
        %4671 = vmatprep.subr.bf16.mxu0 %v3409
        %4672 = vmatpush1.bf16.msra.mxu0 %v3408
        %4673 = vmatprep.subr.bf16.mxu0 %v3416
        %4674 = vmatpush1.bf16.msra.mxu0 %v3415
        %4675 = vmatprep.subr.bf16.mxu0 %v3423
        %4676 = vmatpush1.bf16.msra.mxu0 %v3422
        %4677 = vmatprep.subr.bf16.mxu0 %v3430
        %4678 = vmatpush1.bf16.msra.mxu0 %v3429
        %4679 = vmatprep.subr.bf16.mxu0 %v3437
        %4680 = vmatpush1.bf16.msra.mxu0 %v3436
        %4681 = vmatprep.subr.bf16.mxu0 %v3444
        %4682 = vmatpush1.bf16.msra.mxu0 %v3443
        %4683 = vmatprep.subr.bf16.mxu0 %v3451
        %4684 = vmatpush1.bf16.msra.mxu0 %v3450
        %4685 = vmatprep.subr.bf16.mxu0 %v3458
        %4686 = vmatpush1.bf16.msra.mxu0 %v3457
        %4687 = vmatprep.subr.bf16.mxu0 %v3465
        %4688 = vmatpush1.bf16.msra.mxu0 %v3464
        %4689 = vmatprep.subr.bf16.mxu0 %v3472
        %4690 = vmatpush1.bf16.msra.mxu0 %v3471
        %4691 = vmatprep.subr.bf16.mxu0 %v3479
        %4692 = vmatpush1.bf16.msra.mxu0 %v3478
        %4693 = vmatprep.subr.bf16.mxu0 %v3486
        %4694 = vmatpush1.bf16.msra.mxu0 %v3485
        %4695 = vmatprep.subr.bf16.mxu0 %v3493
        %4696 = vmatpush1.bf16.msra.mxu0 %v3492
        %4697 = vmatprep.subr.bf16.mxu0 %v3500
        %4698 = vmatpush1.bf16.msra.mxu0 %v3499
        %4699 = vmatprep.mubr.bf16.mxu0 %v1149
        %4700 = vmatmul.mubr.bf16.gmra.mrb[0].mxu0 %v1148
        %v4701 = vpop.f32.mrb[0].mxu0
        %v4702 = vadd.f32 %v4661, %v4701
        %v4703 = vpop.f32.mrb[0].mxu0
        %v4704 = vadd.f32 %v4663, %v4703
        %v4705 = vpop.f32.mrb[0].mxu0
        %v4706 = vpop.f32.mrb[0].mxu0
        %4707 = vdwg.mxu0
        %4708 = vmatprep.subr.bf16.mxu0 %v3507
        %4709 = vmatpush1.bf16.msra.mxu0 %v3506
        %4710 = vmatprep.subr.bf16.mxu0 %v3514
        %4711 = vmatpush1.bf16.msra.mxu0 %v3513
        %4712 = vmatprep.subr.bf16.mxu0 %v3521
        %4713 = vmatpush1.bf16.msra.mxu0 %v3520
        %4714 = vmatprep.subr.bf16.mxu0 %v3528
        %4715 = vmatpush1.bf16.msra.mxu0 %v3527
        %4716 = vmatprep.subr.bf16.mxu0 %v3535
        %4717 = vmatpush1.bf16.msra.mxu0 %v3534
        %4718 = vmatprep.subr.bf16.mxu0 %v3542
        %4719 = vmatpush1.bf16.msra.mxu0 %v3541
        %4720 = vmatprep.subr.bf16.mxu0 %v3549
        %4721 = vmatpush1.bf16.msra.mxu0 %v3548
        %4722 = vmatprep.subr.bf16.mxu0 %v3556
        %4723 = vmatpush1.bf16.msra.mxu0 %v3555
        %4724 = vmatprep.subr.bf16.mxu0 %v3563
        %4725 = vmatpush1.bf16.msra.mxu0 %v3562
        %4726 = vmatprep.subr.bf16.mxu0 %v3570
        %4727 = vmatpush1.bf16.msra.mxu0 %v3569
        %4728 = vmatprep.subr.bf16.mxu0 %v3577
        %4729 = vmatpush1.bf16.msra.mxu0 %v3576
        %4730 = vmatprep.subr.bf16.mxu0 %v3584
        %4731 = vmatpush1.bf16.msra.mxu0 %v3583
        %4732 = vmatprep.subr.bf16.mxu0 %v3591
        %4733 = vmatpush1.bf16.msra.mxu0 %v3590
        %4734 = vmatprep.subr.bf16.mxu0 %v3598
        %4735 = vmatpush1.bf16.msra.mxu0 %v3597
        %4736 = vmatprep.subr.bf16.mxu0 %v3605
        %4737 = vmatpush1.bf16.msra.mxu0 %v3604
        %4738 = vmatprep.subr.bf16.mxu0 %v3612
        %4739 = vmatpush1.bf16.msra.mxu0 %v3611
        %4740 = vmatprep.mubr.bf16.mxu0 %v1151
        %4741 = vmatmul.mubr.bf16.gmra.mrb[0].mxu0 %v1150
        %v4742 = vpop.f32.mrb[0].mxu0
        %v4743 = vadd.f32 %v4702, %v4742
        %v4744 = vpop.f32.mrb[0].mxu0
        %v4745 = vadd.f32 %v4704, %v4744
        %v4746 = vpop.f32.mrb[0].mxu0
        %v4747 = vpop.f32.mrb[0].mxu0
        %4748 = vdwg.mxu0
        %4749 = vmatprep.subr.bf16.mxu0 %v3619
        %4750 = vmatpush1.bf16.msra.mxu0 %v3618
        %4751 = vmatprep.subr.bf16.mxu0 %v3626
        %4752 = vmatpush1.bf16.msra.mxu0 %v3625
        %4753 = vmatprep.subr.bf16.mxu0 %v3633
        %4754 = vmatpush1.bf16.msra.mxu0 %v3632
        %4755 = vmatprep.subr.bf16.mxu0 %v3640
        %4756 = vmatpush1.bf16.msra.mxu0 %v3639
        %4757 = vmatprep.subr.bf16.mxu0 %v3647
        %4758 = vmatpush1.bf16.msra.mxu0 %v3646
        %4759 = vmatprep.subr.bf16.mxu0 %v3654
        %4760 = vmatpush1.bf16.msra.mxu0 %v3653
        %4761 = vmatprep.subr.bf16.mxu0 %v3661
        %4762 = vmatpush1.bf16.msra.mxu0 %v3660
        %4763 = vmatprep.subr.bf16.mxu0 %v3668
        %4764 = vmatpush1.bf16.msra.mxu0 %v3667
        %4765 = vmatprep.subr.bf16.mxu0 %v3675
        %4766 = vmatpush1.bf16.msra.mxu0 %v3674
        %4767 = vmatprep.subr.bf16.mxu0 %v3682
        %4768 = vmatpush1.bf16.msra.mxu0 %v3681
        %4769 = vmatprep.subr.bf16.mxu0 %v3689
        %4770 = vmatpush1.bf16.msra.mxu0 %v3688
        %4771 = vmatprep.subr.bf16.mxu0 %v3696
        %4772 = vmatpush1.bf16.msra.mxu0 %v3695
        %4773 = vmatprep.subr.bf16.mxu0 %v3703
        %4774 = vmatpush1.bf16.msra.mxu0 %v3702
        %4775 = vmatprep.subr.bf16.mxu0 %v3710
        %4776 = vmatpush1.bf16.msra.mxu0 %v3709
        %4777 = vmatprep.subr.bf16.mxu0 %v3717
        %4778 = vmatpush1.bf16.msra.mxu0 %v3716
        %4779 = vmatprep.subr.bf16.mxu0 %v3724
        %4780 = vmatpush1.bf16.msra.mxu0 %v3723
        %4781 = vmatprep.mubr.bf16.mxu0 %v1153
        %4782 = vmatmul.mubr.bf16.gmra.mrb[0].mxu0 %v1152
        %v4783 = vpop.f32.mrb[0].mxu0
        %v4784 = vadd.f32 %v4743, %v4783
        %v4785 = vpop.f32.mrb[0].mxu0
        %v4786 = vadd.f32 %v4745, %v4785
        %v4787 = vpop.f32.mrb[0].mxu0
        %v4788 = vpop.f32.mrb[0].mxu0
        %4789 = vdwg.mxu0
        %4790 = vmatprep.subr.bf16.mxu0 %v3731
        %4791 = vmatpush1.bf16.msra.mxu0 %v3730
        %4792 = vmatprep.subr.bf16.mxu0 %v3738
        %4793 = vmatpush1.bf16.msra.mxu0 %v3737
        %4794 = vmatprep.subr.bf16.mxu0 %v3745
        %4795 = vmatpush1.bf16.msra.mxu0 %v3744
        %4796 = vmatprep.subr.bf16.mxu0 %v3752
        %4797 = vmatpush1.bf16.msra.mxu0 %v3751
        %4798 = vmatprep.subr.bf16.mxu0 %v3759
        %4799 = vmatpush1.bf16.msra.mxu0 %v3758
        %4800 = vmatprep.subr.bf16.mxu0 %v3766
        %4801 = vmatpush1.bf16.msra.mxu0 %v3765
        %4802 = vmatprep.subr.bf16.mxu0 %v3773
        %4803 = vmatpush1.bf16.msra.mxu0 %v3772
        %4804 = vmatprep.subr.bf16.mxu0 %v3780
        %4805 = vmatpush1.bf16.msra.mxu0 %v3779
        %4806 = vmatprep.subr.bf16.mxu0 %v3787
        %4807 = vmatpush1.bf16.msra.mxu0 %v3786
        %4808 = vmatprep.subr.bf16.mxu0 %v3794
        %4809 = vmatpush1.bf16.msra.mxu0 %v3793
        %4810 = vmatprep.subr.bf16.mxu0 %v3801
        %4811 = vmatpush1.bf16.msra.mxu0 %v3800
        %4812 = vmatprep.subr.bf16.mxu0 %v3808
        %4813 = vmatpush1.bf16.msra.mxu0 %v3807
        %4814 = vmatprep.subr.bf16.mxu0 %v3815
        %4815 = vmatpush1.bf16.msra.mxu0 %v3814
        %4816 = vmatprep.subr.bf16.mxu0 %v3822
        %4817 = vmatpush1.bf16.msra.mxu0 %v3821
        %4818 = vmatprep.subr.bf16.mxu0 %v3829
        %4819 = vmatpush1.bf16.msra.mxu0 %v3828
        %4820 = vmatprep.subr.bf16.mxu0 %v3836
        %4821 = vmatpush1.bf16.msra.mxu0 %v3835
        %4822 = vmatprep.mubr.bf16.mxu0 %v1155
        %4823 = vmatmul.mubr.bf16.gmra.mrb[0].mxu0 %v1154
        %v4824 = vpop.f32.mrb[0].mxu0
        %v4825 = vadd.f32 %v4784, %v4824
        %v4826 = vpop.f32.mrb[0].mxu0
        %v4827 = vadd.f32 %v4786, %v4826
        %v4828 = vpop.f32.mrb[0].mxu0
        %v4829 = vpop.f32.mrb[0].mxu0
        %4830 = vdwg.mxu0
        %4831 = vmatprep.subr.bf16.mxu0 %v3843
        %4832 = vmatpush1.bf16.msra.mxu0 %v3842
        %4833 = vmatprep.subr.bf16.mxu0 %v3850
        %4834 = vmatpush1.bf16.msra.mxu0 %v3849
        %4835 = vmatprep.subr.bf16.mxu0 %v3857
        %4836 = vmatpush1.bf16.msra.mxu0 %v3856
        %4837 = vmatprep.subr.bf16.mxu0 %v3864
        %4838 = vmatpush1.bf16.msra.mxu0 %v3863
        %4839 = vmatprep.subr.bf16.mxu0 %v3871
        %4840 = vmatpush1.bf16.msra.mxu0 %v3870
        %4841 = vmatprep.subr.bf16.mxu0 %v3878
        %4842 = vmatpush1.bf16.msra.mxu0 %v3877
        %4843 = vmatprep.subr.bf16.mxu0 %v3885
        %4844 = vmatpush1.bf16.msra.mxu0 %v3884
        %4845 = vmatprep.subr.bf16.mxu0 %v3892
        %4846 = vmatpush1.bf16.msra.mxu0 %v3891
        %4847 = vmatprep.subr.bf16.mxu0 %v3899
        %4848 = vmatpush1.bf16.msra.mxu0 %v3898
        %4849 = vmatprep.subr.bf16.mxu0 %v3906
        %4850 = vmatpush1.bf16.msra.mxu0 %v3905
        %4851 = vmatprep.subr.bf16.mxu0 %v3913
        %4852 = vmatpush1.bf16.msra.mxu0 %v3912
        %4853 = vmatprep.subr.bf16.mxu0 %v3920
        %4854 = vmatpush1.bf16.msra.mxu0 %v3919
        %4855 = vmatprep.subr.bf16.mxu0 %v3927
        %4856 = vmatpush1.bf16.msra.mxu0 %v3926
        %4857 = vmatprep.subr.bf16.mxu0 %v3934
        %4858 = vmatpush1.bf16.msra.mxu0 %v3933
        %4859 = vmatprep.subr.bf16.mxu0 %v3941
        %4860 = vmatpush1.bf16.msra.mxu0 %v3940
        %4861 = vmatprep.subr.bf16.mxu0 %v3948
        %4862 = vmatpush1.bf16.msra.mxu0 %v3947
        %4863 = vmatprep.mubr.bf16.mxu0 %v1157
        %4864 = vmatmul.mubr.bf16.gmra.mrb[0].mxu0 %v1156
        %v4865 = vpop.f32.mrb[0].mxu0
        %v4866 = vadd.f32 %v4825, %v4865
        %v4867 = vpop.f32.mrb[0].mxu0
        %v4868 = vadd.f32 %v4827, %v4867
        %v4869 = vpop.f32.mrb[0].mxu0
        %v4870 = vpop.f32.mrb[0].mxu0
        %4871 = vdwg.mxu0
        %4872 = vmatprep.subr.bf16.mxu0 %v3285
        %4873 = vmatpush1.bf16.msra.mxu0 %v3284
        %4874 = vmatprep.subr.bf16.mxu0 %v3292
        %4875 = vmatpush1.bf16.msra.mxu0 %v3291
        %4876 = vmatprep.subr.bf16.mxu0 %v3299
        %4877 = vmatpush1.bf16.msra.mxu0 %v3298
        %4878 = vmatprep.subr.bf16.mxu0 %v3306
        %4879 = vmatpush1.bf16.msra.mxu0 %v3305
        %4880 = vmatprep.subr.bf16.mxu0 %v3313
        %4881 = vmatpush1.bf16.msra.mxu0 %v3312
        %4882 = vmatprep.subr.bf16.mxu0 %v3320
        %4883 = vmatpush1.bf16.msra.mxu0 %v3319
        %4884 = vmatprep.subr.bf16.mxu0 %v3327
        %4885 = vmatpush1.bf16.msra.mxu0 %v3326
        %4886 = vmatprep.subr.bf16.mxu0 %v3334
        %4887 = vmatpush1.bf16.msra.mxu0 %v3333
        %4888 = vmatprep.subr.bf16.mxu0 %v3341
        %4889 = vmatpush1.bf16.msra.mxu0 %v3340
        %4890 = vmatprep.subr.bf16.mxu0 %v3348
        %4891 = vmatpush1.bf16.msra.mxu0 %v3347
        %4892 = vmatprep.subr.bf16.mxu0 %v3355
        %4893 = vmatpush1.bf16.msra.mxu0 %v3354
        %4894 = vmatprep.subr.bf16.mxu0 %v3362
        %4895 = vmatpush1.bf16.msra.mxu0 %v3361
        %4896 = vmatprep.subr.bf16.mxu0 %v3369
        %4897 = vmatpush1.bf16.msra.mxu0 %v3368
        %4898 = vmatprep.subr.bf16.mxu0 %v3376
        %4899 = vmatpush1.bf16.msra.mxu0 %v3375
        %4900 = vmatprep.subr.bf16.mxu0 %v3383
        %4901 = vmatpush1.bf16.msra.mxu0 %v3382
        %4902 = vmatprep.subr.bf16.mxu0 %v3390
        %4903 = vmatpush1.bf16.msra.mxu0 %v3389
        %4904 = vmatprep.mubr.bf16.mxu0 %v1147
        %4905 = vmatmul.mubr.bf16.gmra.mrb[0].mxu0 %v1146
        %v4906 = vpop.f32.mrb[0].mxu0
        %v4907 = vadd.f32 %v1104, %v4906
        %v4908 = vpop.f32.mrb[0].mxu0
        %v4909 = vadd.f32 %v1108, %v4908
        %v4910 = vpop.f32.mrb[0].mxu0
        %v4911 = vpop.f32.mrb[0].mxu0
        %4912 = vdwg.mxu0
        %4913 = vmatprep.subr.bf16.mxu0 %v3397
        %4914 = vmatpush1.bf16.msra.mxu0 %v3396
        %4915 = vmatprep.subr.bf16.mxu0 %v3404
        %4916 = vmatpush1.bf16.msra.mxu0 %v3403
        %4917 = vmatprep.subr.bf16.mxu0 %v3411
        %4918 = vmatpush1.bf16.msra.mxu0 %v3410
        %4919 = vmatprep.subr.bf16.mxu0 %v3418
        %4920 = vmatpush1.bf16.msra.mxu0 %v3417
        %4921 = vmatprep.subr.bf16.mxu0 %v3425
        %4922 = vmatpush1.bf16.msra.mxu0 %v3424
        %4923 = vmatprep.subr.bf16.mxu0 %v3432
        %4924 = vmatpush1.bf16.msra.mxu0 %v3431
        %4925 = vmatprep.subr.bf16.mxu0 %v3439
        %4926 = vmatpush1.bf16.msra.mxu0 %v3438
        %4927 = vmatprep.subr.bf16.mxu0 %v3446
        %4928 = vmatpush1.bf16.msra.mxu0 %v3445
        %4929 = vmatprep.subr.bf16.mxu0 %v3453
        %4930 = vmatpush1.bf16.msra.mxu0 %v3452
        %4931 = vmatprep.subr.bf16.mxu0 %v3460
        %4932 = vmatpush1.bf16.msra.mxu0 %v3459
        %4933 = vmatprep.subr.bf16.mxu0 %v3467
        %4934 = vmatpush1.bf16.msra.mxu0 %v3466
        %4935 = vmatprep.subr.bf16.mxu0 %v3474
        %4936 = vmatpush1.bf16.msra.mxu0 %v3473
        %4937 = vmatprep.subr.bf16.mxu0 %v3481
        %4938 = vmatpush1.bf16.msra.mxu0 %v3480
        %4939 = vmatprep.subr.bf16.mxu0 %v3488
        %4940 = vmatpush1.bf16.msra.mxu0 %v3487
        %4941 = vmatprep.subr.bf16.mxu0 %v3495
        %4942 = vmatpush1.bf16.msra.mxu0 %v3494
        %4943 = vmatprep.subr.bf16.mxu0 %v3502
        %4944 = vmatpush1.bf16.msra.mxu0 %v3501
        %4945 = vmatprep.mubr.bf16.mxu0 %v1149
        %4946 = vmatmul.mubr.bf16.gmra.mrb[0].mxu0 %v1148
        %v4947 = vpop.f32.mrb[0].mxu0
        %v4948 = vadd.f32 %v4907, %v4947
        %v4949 = vpop.f32.mrb[0].mxu0
        %v4950 = vadd.f32 %v4909, %v4949
        %v4951 = vpop.f32.mrb[0].mxu0
        %v4952 = vpop.f32.mrb[0].mxu0
        %4953 = vdwg.mxu0
        %4954 = vmatprep.subr.bf16.mxu0 %v3509
        %4955 = vmatpush1.bf16.msra.mxu0 %v3508
        %4956 = vmatprep.subr.bf16.mxu0 %v3516
        %4957 = vmatpush1.bf16.msra.mxu0 %v3515
        %4958 = vmatprep.subr.bf16.mxu0 %v3523
        %4959 = vmatpush1.bf16.msra.mxu0 %v3522
        %4960 = vmatprep.subr.bf16.mxu0 %v3530
        %4961 = vmatpush1.bf16.msra.mxu0 %v3529
        %4962 = vmatprep.subr.bf16.mxu0 %v3537
        %4963 = vmatpush1.bf16.msra.mxu0 %v3536
        %4964 = vmatprep.subr.bf16.mxu0 %v3544
        %4965 = vmatpush1.bf16.msra.mxu0 %v3543
        %4966 = vmatprep.subr.bf16.mxu0 %v3551
        %4967 = vmatpush1.bf16.msra.mxu0 %v3550
        %4968 = vmatprep.subr.bf16.mxu0 %v3558
        %4969 = vmatpush1.bf16.msra.mxu0 %v3557
        %4970 = vmatprep.subr.bf16.mxu0 %v3565
        %4971 = vmatpush1.bf16.msra.mxu0 %v3564
        %4972 = vmatprep.subr.bf16.mxu0 %v3572
        %4973 = vmatpush1.bf16.msra.mxu0 %v3571
        %4974 = vmatprep.subr.bf16.mxu0 %v3579
        %4975 = vmatpush1.bf16.msra.mxu0 %v3578
        %4976 = vmatprep.subr.bf16.mxu0 %v3586
        %4977 = vmatpush1.bf16.msra.mxu0 %v3585
        %4978 = vmatprep.subr.bf16.mxu0 %v3593
        %4979 = vmatpush1.bf16.msra.mxu0 %v3592
        %4980 = vmatprep.subr.bf16.mxu0 %v3600
        %4981 = vmatpush1.bf16.msra.mxu0 %v3599
        %4982 = vmatprep.subr.bf16.mxu0 %v3607
        %4983 = vmatpush1.bf16.msra.mxu0 %v3606
        %4984 = vmatprep.subr.bf16.mxu0 %v3614
        %4985 = vmatpush1.bf16.msra.mxu0 %v3613
        %4986 = vmatprep.mubr.bf16.mxu0 %v1151
        %4987 = vmatmul.mubr.bf16.gmra.mrb[0].mxu0 %v1150
        %v4988 = vpop.f32.mrb[0].mxu0
        %v4989 = vadd.f32 %v4948, %v4988
        %v4990 = vpop.f32.mrb[0].mxu0
        %v4991 = vadd.f32 %v4950, %v4990
        %v4992 = vpop.f32.mrb[0].mxu0
        %v4993 = vpop.f32.mrb[0].mxu0
        %4994 = vdwg.mxu0
        %4995 = vmatprep.subr.bf16.mxu0 %v3621
        %4996 = vmatpush1.bf16.msra.mxu0 %v3620
        %4997 = vmatprep.subr.bf16.mxu0 %v3628
        %4998 = vmatpush1.bf16.msra.mxu0 %v3627
        %4999 = vmatprep.subr.bf16.mxu0 %v3635
        %5000 = vmatpush1.bf16.msra.mxu0 %v3634
        %5001 = vmatprep.subr.bf16.mxu0 %v3642
        %5002 = vmatpush1.bf16.msra.mxu0 %v3641
        %5003 = vmatprep.subr.bf16.mxu0 %v3649
        %5004 = vmatpush1.bf16.msra.mxu0 %v3648
        %5005 = vmatprep.subr.bf16.mxu0 %v3656
        %5006 = vmatpush1.bf16.msra.mxu0 %v3655
        %5007 = vmatprep.subr.bf16.mxu0 %v3663
        %5008 = vmatpush1.bf16.msra.mxu0 %v3662
        %5009 = vmatprep.subr.bf16.mxu0 %v3670
        %5010 = vmatpush1.bf16.msra.mxu0 %v3669
        %5011 = vmatprep.subr.bf16.mxu0 %v3677
        %5012 = vmatpush1.bf16.msra.mxu0 %v3676
        %5013 = vmatprep.subr.bf16.mxu0 %v3684
        %5014 = vmatpush1.bf16.msra.mxu0 %v3683
        %5015 = vmatprep.subr.bf16.mxu0 %v3691
        %5016 = vmatpush1.bf16.msra.mxu0 %v3690
        %5017 = vmatprep.subr.bf16.mxu0 %v3698
        %5018 = vmatpush1.bf16.msra.mxu0 %v3697
        %5019 = vmatprep.subr.bf16.mxu0 %v3705
        %5020 = vmatpush1.bf16.msra.mxu0 %v3704
        %5021 = vmatprep.subr.bf16.mxu0 %v3712
        %5022 = vmatpush1.bf16.msra.mxu0 %v3711
        %5023 = vmatprep.subr.bf16.mxu0 %v3719
        %5024 = vmatpush1.bf16.msra.mxu0 %v3718
        %5025 = vmatprep.subr.bf16.mxu0 %v3726
        %5026 = vmatpush1.bf16.msra.mxu0 %v3725
        %5027 = vmatprep.mubr.bf16.mxu0 %v1153
        %5028 = vmatmul.mubr.bf16.gmra.mrb[0].mxu0 %v1152
        %v5029 = vpop.f32.mrb[0].mxu0
        %v5030 = vadd.f32 %v4989, %v5029
        %v5031 = vpop.f32.mrb[0].mxu0
        %v5032 = vadd.f32 %v4991, %v5031
        %v5033 = vpop.f32.mrb[0].mxu0
        %v5034 = vpop.f32.mrb[0].mxu0
        %5035 = vdwg.mxu0
        %5036 = vmatprep.subr.bf16.mxu0 %v3733
        %5037 = vmatpush1.bf16.msra.mxu0 %v3732
        %5038 = vmatprep.subr.bf16.mxu0 %v3740
        %5039 = vmatpush1.bf16.msra.mxu0 %v3739
        %5040 = vmatprep.subr.bf16.mxu0 %v3747
        %5041 = vmatpush1.bf16.msra.mxu0 %v3746
        %5042 = vmatprep.subr.bf16.mxu0 %v3754
        %5043 = vmatpush1.bf16.msra.mxu0 %v3753
        %5044 = vmatprep.subr.bf16.mxu0 %v3761
        %5045 = vmatpush1.bf16.msra.mxu0 %v3760
        %5046 = vmatprep.subr.bf16.mxu0 %v3768
        %5047 = vmatpush1.bf16.msra.mxu0 %v3767
        %5048 = vmatprep.subr.bf16.mxu0 %v3775
        %5049 = vmatpush1.bf16.msra.mxu0 %v3774
        %5050 = vmatprep.subr.bf16.mxu0 %v3782
        %5051 = vmatpush1.bf16.msra.mxu0 %v3781
        %5052 = vmatprep.subr.bf16.mxu0 %v3789
        %5053 = vmatpush1.bf16.msra.mxu0 %v3788
        %5054 = vmatprep.subr.bf16.mxu0 %v3796
        %5055 = vmatpush1.bf16.msra.mxu0 %v3795
        %5056 = vmatprep.subr.bf16.mxu0 %v3803
        %5057 = vmatpush1.bf16.msra.mxu0 %v3802
        %5058 = vmatprep.subr.bf16.mxu0 %v3810
        %5059 = vmatpush1.bf16.msra.mxu0 %v3809
        %5060 = vmatprep.subr.bf16.mxu0 %v3817
        %5061 = vmatpush1.bf16.msra.mxu0 %v3816
        %5062 = vmatprep.subr.bf16.mxu0 %v3824
        %5063 = vmatpush1.bf16.msra.mxu0 %v3823
        %5064 = vmatprep.subr.bf16.mxu0 %v3831
        %5065 = vmatpush1.bf16.msra.mxu0 %v3830
        %5066 = vmatprep.subr.bf16.mxu0 %v3838
        %5067 = vmatpush1.bf16.msra.mxu0 %v3837
        %5068 = vmatprep.mubr.bf16.mxu0 %v1155
        %5069 = vmatmul.mubr.bf16.gmra.mrb[0].mxu0 %v1154
        %v5070 = vpop.f32.mrb[0].mxu0
        %v5071 = vadd.f32 %v5030, %v5070
        %v5072 = vpop.f32.mrb[0].mxu0
        %v5073 = vadd.f32 %v5032, %v5072
        %v5074 = vpop.f32.mrb[0].mxu0
        %v5075 = vpop.f32.mrb[0].mxu0
        %5076 = vdwg.mxu0
        %5077 = vmatprep.subr.bf16.mxu0 %v3845
        %5078 = vmatpush1.bf16.msra.mxu0 %v3844
        %5079 = vmatprep.subr.bf16.mxu0 %v3852
        %5080 = vmatpush1.bf16.msra.mxu0 %v3851
        %5081 = vmatprep.subr.bf16.mxu0 %v3859
        %5082 = vmatpush1.bf16.msra.mxu0 %v3858
        %5083 = vmatprep.subr.bf16.mxu0 %v3866
        %5084 = vmatpush1.bf16.msra.mxu0 %v3865
        %5085 = vmatprep.subr.bf16.mxu0 %v3873
        %5086 = vmatpush1.bf16.msra.mxu0 %v3872
        %5087 = vmatprep.subr.bf16.mxu0 %v3880
        %5088 = vmatpush1.bf16.msra.mxu0 %v3879
        %5089 = vmatprep.subr.bf16.mxu0 %v3887
        %5090 = vmatpush1.bf16.msra.mxu0 %v3886
        %5091 = vmatprep.subr.bf16.mxu0 %v3894
        %5092 = vmatpush1.bf16.msra.mxu0 %v3893
        %5093 = vmatprep.subr.bf16.mxu0 %v3901
        %5094 = vmatpush1.bf16.msra.mxu0 %v3900
        %5095 = vmatprep.subr.bf16.mxu0 %v3908
        %5096 = vmatpush1.bf16.msra.mxu0 %v3907
        %5097 = vmatprep.subr.bf16.mxu0 %v3915
        %5098 = vmatpush1.bf16.msra.mxu0 %v3914
        %5099 = vmatprep.subr.bf16.mxu0 %v3922
        %5100 = vmatpush1.bf16.msra.mxu0 %v3921
        %5101 = vmatprep.subr.bf16.mxu0 %v3929
        %5102 = vmatpush1.bf16.msra.mxu0 %v3928
        %5103 = vmatprep.subr.bf16.mxu0 %v3936
        %5104 = vmatpush1.bf16.msra.mxu0 %v3935
        %5105 = vmatprep.subr.bf16.mxu0 %v3943
        %5106 = vmatpush1.bf16.msra.mxu0 %v3942
        %5107 = vmatprep.subr.bf16.mxu0 %v3950
        %5108 = vmatpush1.bf16.msra.mxu0 %v3949
        %5109 = vmatprep.mubr.bf16.mxu0 %v1157
        %5110 = vmatmul.mubr.bf16.gmra.mrb[0].mxu0 %v1156
        %v5111 = vpop.f32.mrb[0].mxu0
        %v5112 = vadd.f32 %v5071, %v5111
        %v5113 = vpop.f32.mrb[0].mxu0
        %v5114 = vadd.f32 %v5073, %v5113
        %v5115 = vpop.f32.mrb[0].mxu0
        %v5116 = vpop.f32.mrb[0].mxu0
        %5117 = vdwg.mxu0
        %5118 = vmatprep.subr.bf16.mxu0 %v3287
        %5119 = vmatpush1.bf16.msra.mxu0 %v3286
        %5120 = vmatprep.subr.bf16.mxu0 %v3294
        %5121 = vmatpush1.bf16.msra.mxu0 %v3293
        %5122 = vmatprep.subr.bf16.mxu0 %v3301
        %5123 = vmatpush1.bf16.msra.mxu0 %v3300
        %5124 = vmatprep.subr.bf16.mxu0 %v3308
        %5125 = vmatpush1.bf16.msra.mxu0 %v3307
        %5126 = vmatprep.subr.bf16.mxu0 %v3315
        %5127 = vmatpush1.bf16.msra.mxu0 %v3314
        %5128 = vmatprep.subr.bf16.mxu0 %v3322
        %5129 = vmatpush1.bf16.msra.mxu0 %v3321
        %5130 = vmatprep.subr.bf16.mxu0 %v3329
        %5131 = vmatpush1.bf16.msra.mxu0 %v3328
        %5132 = vmatprep.subr.bf16.mxu0 %v3336
        %5133 = vmatpush1.bf16.msra.mxu0 %v3335
        %5134 = vmatprep.subr.bf16.mxu0 %v3343
        %5135 = vmatpush1.bf16.msra.mxu0 %v3342
        %5136 = vmatprep.subr.bf16.mxu0 %v3350
        %5137 = vmatpush1.bf16.msra.mxu0 %v3349
        %5138 = vmatprep.subr.bf16.mxu0 %v3357
        %5139 = vmatpush1.bf16.msra.mxu0 %v3356
        %5140 = vmatprep.subr.bf16.mxu0 %v3364
        %5141 = vmatpush1.bf16.msra.mxu0 %v3363
        %5142 = vmatprep.subr.bf16.mxu0 %v3371
        %5143 = vmatpush1.bf16.msra.mxu0 %v3370
        %5144 = vmatprep.subr.bf16.mxu0 %v3378
        %5145 = vmatpush1.bf16.msra.mxu0 %v3377
        %5146 = vmatprep.subr.bf16.mxu0 %v3385
        %5147 = vmatpush1.bf16.msra.mxu0 %v3384
        %5148 = vmatprep.subr.bf16.mxu0 %v3392
        %5149 = vmatpush1.bf16.msra.mxu0 %v3391
        %5150 = vmatprep.mubr.bf16.mxu0 %v1147
        %5151 = vmatmul.mubr.bf16.gmra.mrb[0].mxu0 %v1146
        %v5152 = vpop.f32.mrb[0].mxu0
        %v5153 = vadd.f32 %v1112, %v5152
        %v5154 = vpop.f32.mrb[0].mxu0
        %v5155 = vadd.f32 %v1116, %v5154
        %v5156 = vpop.f32.mrb[0].mxu0
        %v5157 = vpop.f32.mrb[0].mxu0
        %5158 = vdwg.mxu0
        %5159 = vmatprep.subr.bf16.mxu0 %v3399
        %5160 = vmatpush1.bf16.msra.mxu0 %v3398
        %5161 = vmatprep.subr.bf16.mxu0 %v3406
        %5162 = vmatpush1.bf16.msra.mxu0 %v3405
        %5163 = vmatprep.subr.bf16.mxu0 %v3413
        %5164 = vmatpush1.bf16.msra.mxu0 %v3412
        %5165 = vmatprep.subr.bf16.mxu0 %v3420
        %5166 = vmatpush1.bf16.msra.mxu0 %v3419
        %5167 = vmatprep.subr.bf16.mxu0 %v3427
        %5168 = vmatpush1.bf16.msra.mxu0 %v3426
        %5169 = vmatprep.subr.bf16.mxu0 %v3434
        %5170 = vmatpush1.bf16.msra.mxu0 %v3433
        %5171 = vmatprep.subr.bf16.mxu0 %v3441
        %5172 = vmatpush1.bf16.msra.mxu0 %v3440
        %5173 = vmatprep.subr.bf16.mxu0 %v3448
        %5174 = vmatpush1.bf16.msra.mxu0 %v3447
        %5175 = vmatprep.subr.bf16.mxu0 %v3455
        %5176 = vmatpush1.bf16.msra.mxu0 %v3454
        %5177 = vmatprep.subr.bf16.mxu0 %v3462
        %5178 = vmatpush1.bf16.msra.mxu0 %v3461
        %5179 = vmatprep.subr.bf16.mxu0 %v3469
        %5180 = vmatpush1.bf16.msra.mxu0 %v3468
        %5181 = vmatprep.subr.bf16.mxu0 %v3476
        %5182 = vmatpush1.bf16.msra.mxu0 %v3475
        %5183 = vmatprep.subr.bf16.mxu0 %v3483
        %5184 = vmatpush1.bf16.msra.mxu0 %v3482
        %5185 = vmatprep.subr.bf16.mxu0 %v3490
        %5186 = vmatpush1.bf16.msra.mxu0 %v3489
        %5187 = vmatprep.subr.bf16.mxu0 %v3497
        %5188 = vmatpush1.bf16.msra.mxu0 %v3496
        %5189 = vmatprep.subr.bf16.mxu0 %v3504
        %5190 = vmatpush1.bf16.msra.mxu0 %v3503
        %5191 = vmatprep.mubr.bf16.mxu0 %v1149
        %5192 = vmatmul.mubr.bf16.gmra.mrb[0].mxu0 %v1148
        %v5193 = vpop.f32.mrb[0].mxu0
        %v5194 = vadd.f32 %v5153, %v5193
        %v5195 = vpop.f32.mrb[0].mxu0
        %v5196 = vadd.f32 %v5155, %v5195
        %v5197 = vpop.f32.mrb[0].mxu0
        %v5198 = vpop.f32.mrb[0].mxu0
        %5199 = vdwg.mxu0
        %5200 = vmatprep.subr.bf16.mxu0 %v3511
        %5201 = vmatpush1.bf16.msra.mxu0 %v3510
        %5202 = vmatprep.subr.bf16.mxu0 %v3518
        %5203 = vmatpush1.bf16.msra.mxu0 %v3517
        %5204 = vmatprep.subr.bf16.mxu0 %v3525
        %5205 = vmatpush1.bf16.msra.mxu0 %v3524
        %5206 = vmatprep.subr.bf16.mxu0 %v3532
        %5207 = vmatpush1.bf16.msra.mxu0 %v3531
        %5208 = vmatprep.subr.bf16.mxu0 %v3539
        %5209 = vmatpush1.bf16.msra.mxu0 %v3538
        %5210 = vmatprep.subr.bf16.mxu0 %v3546
        %5211 = vmatpush1.bf16.msra.mxu0 %v3545
        %5212 = vmatprep.subr.bf16.mxu0 %v3553
        %5213 = vmatpush1.bf16.msra.mxu0 %v3552
        %5214 = vmatprep.subr.bf16.mxu0 %v3560
        %5215 = vmatpush1.bf16.msra.mxu0 %v3559
        %5216 = vmatprep.subr.bf16.mxu0 %v3567
        %5217 = vmatpush1.bf16.msra.mxu0 %v3566
        %5218 = vmatprep.subr.bf16.mxu0 %v3574
        %5219 = vmatpush1.bf16.msra.mxu0 %v3573
        %5220 = vmatprep.subr.bf16.mxu0 %v3581
        %5221 = vmatpush1.bf16.msra.mxu0 %v3580
        %5222 = vmatprep.subr.bf16.mxu0 %v3588
        %5223 = vmatpush1.bf16.msra.mxu0 %v3587
        %5224 = vmatprep.subr.bf16.mxu0 %v3595
        %5225 = vmatpush1.bf16.msra.mxu0 %v3594
        %5226 = vmatprep.subr.bf16.mxu0 %v3602
        %5227 = vmatpush1.bf16.msra.mxu0 %v3601
        %5228 = vmatprep.subr.bf16.mxu0 %v3609
        %5229 = vmatpush1.bf16.msra.mxu0 %v3608
        %5230 = vmatprep.subr.bf16.mxu0 %v3616
        %5231 = vmatpush1.bf16.msra.mxu0 %v3615
        %5232 = vmatprep.mubr.bf16.mxu0 %v1151
        %5233 = vmatmul.mubr.bf16.gmra.mrb[0].mxu0 %v1150
        %v5234 = vpop.f32.mrb[0].mxu0
        %v5235 = vadd.f32 %v5194, %v5234
        %v5236 = vpop.f32.mrb[0].mxu0
        %v5237 = vadd.f32 %v5196, %v5236
        %v5238 = vpop.f32.mrb[0].mxu0
        %v5239 = vpop.f32.mrb[0].mxu0
        %5240 = vdwg.mxu0
        %5241 = vmatprep.subr.bf16.mxu0 %v3623
        %5242 = vmatpush1.bf16.msra.mxu0 %v3622
        %5243 = vmatprep.subr.bf16.mxu0 %v3630
        %5244 = vmatpush1.bf16.msra.mxu0 %v3629
        %5245 = vmatprep.subr.bf16.mxu0 %v3637
        %5246 = vmatpush1.bf16.msra.mxu0 %v3636
        %5247 = vmatprep.subr.bf16.mxu0 %v3644
        %5248 = vmatpush1.bf16.msra.mxu0 %v3643
        %5249 = vmatprep.subr.bf16.mxu0 %v3651
        %5250 = vmatpush1.bf16.msra.mxu0 %v3650
        %5251 = vmatprep.subr.bf16.mxu0 %v3658
        %5252 = vmatpush1.bf16.msra.mxu0 %v3657
        %5253 = vmatprep.subr.bf16.mxu0 %v3665
        %5254 = vmatpush1.bf16.msra.mxu0 %v3664
        %5255 = vmatprep.subr.bf16.mxu0 %v3672
        %5256 = vmatpush1.bf16.msra.mxu0 %v3671
        %5257 = vmatprep.subr.bf16.mxu0 %v3679
        %5258 = vmatpush1.bf16.msra.mxu0 %v3678
        %5259 = vmatprep.subr.bf16.mxu0 %v3686
        %5260 = vmatpush1.bf16.msra.mxu0 %v3685
        %5261 = vmatprep.subr.bf16.mxu0 %v3693
        %5262 = vmatpush1.bf16.msra.mxu0 %v3692
        %5263 = vmatprep.subr.bf16.mxu0 %v3700
        %5264 = vmatpush1.bf16.msra.mxu0 %v3699
        %5265 = vmatprep.subr.bf16.mxu0 %v3707
        %5266 = vmatpush1.bf16.msra.mxu0 %v3706
        %5267 = vmatprep.subr.bf16.mxu0 %v3714
        %5268 = vmatpush1.bf16.msra.mxu0 %v3713
        %5269 = vmatprep.subr.bf16.mxu0 %v3721
        %5270 = vmatpush1.bf16.msra.mxu0 %v3720
        %5271 = vmatprep.subr.bf16.mxu0 %v3728
        %5272 = vmatpush1.bf16.msra.mxu0 %v3727
        %5273 = vmatprep.mubr.bf16.mxu0 %v1153
        %5274 = vmatmul.mubr.bf16.gmra.mrb[0].mxu0 %v1152
        %v5275 = vpop.f32.mrb[0].mxu0
        %v5276 = vadd.f32 %v5235, %v5275
        %v5277 = vpop.f32.mrb[0].mxu0
        %v5278 = vadd.f32 %v5237, %v5277
        %v5279 = vpop.f32.mrb[0].mxu0
        %v5280 = vpop.f32.mrb[0].mxu0
        %5281 = vdwg.mxu0
        %5282 = vmatprep.subr.bf16.mxu0 %v3735
        %5283 = vmatpush1.bf16.msra.mxu0 %v3734
        %5284 = vmatprep.subr.bf16.mxu0 %v3742
        %5285 = vmatpush1.bf16.msra.mxu0 %v3741
        %5286 = vmatprep.subr.bf16.mxu0 %v3749
        %5287 = vmatpush1.bf16.msra.mxu0 %v3748
        %5288 = vmatprep.subr.bf16.mxu0 %v3756
        %5289 = vmatpush1.bf16.msra.mxu0 %v3755
        %5290 = vmatprep.subr.bf16.mxu0 %v3763
        %5291 = vmatpush1.bf16.msra.mxu0 %v3762
        %5292 = vmatprep.subr.bf16.mxu0 %v3770
        %5293 = vmatpush1.bf16.msra.mxu0 %v3769
        %5294 = vmatprep.subr.bf16.mxu0 %v3777
        %5295 = vmatpush1.bf16.msra.mxu0 %v3776
        %5296 = vmatprep.subr.bf16.mxu0 %v3784
        %5297 = vmatpush1.bf16.msra.mxu0 %v3783
        %5298 = vmatprep.subr.bf16.mxu0 %v3791
        %5299 = vmatpush1.bf16.msra.mxu0 %v3790
        %5300 = vmatprep.subr.bf16.mxu0 %v3798
        %5301 = vmatpush1.bf16.msra.mxu0 %v3797
        %5302 = vmatprep.subr.bf16.mxu0 %v3805
        %5303 = vmatpush1.bf16.msra.mxu0 %v3804
        %5304 = vmatprep.subr.bf16.mxu0 %v3812
        %5305 = vmatpush1.bf16.msra.mxu0 %v3811
        %5306 = vmatprep.subr.bf16.mxu0 %v3819
        %5307 = vmatpush1.bf16.msra.mxu0 %v3818
        %5308 = vmatprep.subr.bf16.mxu0 %v3826
        %5309 = vmatpush1.bf16.msra.mxu0 %v3825
        %5310 = vmatprep.subr.bf16.mxu0 %v3833
        %5311 = vmatpush1.bf16.msra.mxu0 %v3832
        %5312 = vmatprep.subr.bf16.mxu0 %v3840
        %5313 = vmatpush1.bf16.msra.mxu0 %v3839
        %5314 = vmatprep.mubr.bf16.mxu0 %v1155
        %5315 = vmatmul.mubr.bf16.gmra.mrb[0].mxu0 %v1154
        %v5316 = vpop.f32.mrb[0].mxu0
        %v5317 = vadd.f32 %v5276, %v5316
        %v5318 = vpop.f32.mrb[0].mxu0
        %v5319 = vadd.f32 %v5278, %v5318
        %v5320 = vpop.f32.mrb[0].mxu0
        %v5321 = vpop.f32.mrb[0].mxu0
        %5322 = vdwg.mxu0
        %5323 = vmatprep.subr.bf16.mxu0 %v3847
        %5324 = vmatpush1.bf16.msra.mxu0 %v3846
        %5325 = vmatprep.subr.bf16.mxu0 %v3854
        %5326 = vmatpush1.bf16.msra.mxu0 %v3853
        %5327 = vmatprep.subr.bf16.mxu0 %v3861
        %5328 = vmatpush1.bf16.msra.mxu0 %v3860
        %5329 = vmatprep.subr.bf16.mxu0 %v3868
        %5330 = vmatpush1.bf16.msra.mxu0 %v3867
        %5331 = vmatprep.subr.bf16.mxu0 %v3875
        %5332 = vmatpush1.bf16.msra.mxu0 %v3874
        %5333 = vmatprep.subr.bf16.mxu0 %v3882
        %5334 = vmatpush1.bf16.msra.mxu0 %v3881
        %5335 = vmatprep.subr.bf16.mxu0 %v3889
        %5336 = vmatpush1.bf16.msra.mxu0 %v3888
        %5337 = vmatprep.subr.bf16.mxu0 %v3896
        %5338 = vmatpush1.bf16.msra.mxu0 %v3895
        %5339 = vmatprep.subr.bf16.mxu0 %v3903
        %5340 = vmatpush1.bf16.msra.mxu0 %v3902
        %5341 = vmatprep.subr.bf16.mxu0 %v3910
        %5342 = vmatpush1.bf16.msra.mxu0 %v3909
        %5343 = vmatprep.subr.bf16.mxu0 %v3917
        %5344 = vmatpush1.bf16.msra.mxu0 %v3916
        %5345 = vmatprep.subr.bf16.mxu0 %v3924
        %5346 = vmatpush1.bf16.msra.mxu0 %v3923
        %5347 = vmatprep.subr.bf16.mxu0 %v3931
        %5348 = vmatpush1.bf16.msra.mxu0 %v3930
        %5349 = vmatprep.subr.bf16.mxu0 %v3938
        %5350 = vmatpush1.bf16.msra.mxu0 %v3937
        %5351 = vmatprep.subr.bf16.mxu0 %v3945
        %5352 = vmatpush1.bf16.msra.mxu0 %v3944
        %5353 = vmatprep.subr.bf16.mxu0 %v3952
        %5354 = vmatpush1.bf16.msra.mxu0 %v3951
        %5355 = vmatprep.mubr.bf16.mxu0 %v1157
        %5356 = vmatmul.mubr.bf16.gmra.mrb[0].mxu0 %v1156
        %v5357 = vpop.f32.mrb[0].mxu0
        %v5358 = vadd.f32 %v5317, %v5357
        %v5359 = vpop.f32.mrb[0].mxu0
        %v5360 = vadd.f32 %v5319, %v5359
        %v5361 = vpop.f32.mrb[0].mxu0
        %v5362 = vpop.f32.mrb[0].mxu0
        %5363 = vdwg.mxu0
        %5364 = vmatprep.subr.bf16.mxu0 0
        %5365 = vmatpush1.bf16.msra.mxu0 %v3288
        %5366 = vmatprep.subr.bf16.mxu0 0
        %5367 = vmatpush1.bf16.msra.mxu0 %v3295
        %5368 = vmatprep.subr.bf16.mxu0 0
        %5369 = vmatpush1.bf16.msra.mxu0 %v3302
        %5370 = vmatprep.subr.bf16.mxu0 0
        %5371 = vmatpush1.bf16.msra.mxu0 %v3309
        %5372 = vmatprep.subr.bf16.mxu0 0
        %5373 = vmatpush1.bf16.msra.mxu0 %v3316
        %5374 = vmatprep.subr.bf16.mxu0 0
        %5375 = vmatpush1.bf16.msra.mxu0 %v3323
        %5376 = vmatprep.subr.bf16.mxu0 0
        %5377 = vmatpush1.bf16.msra.mxu0 %v3330
        %5378 = vmatprep.subr.bf16.mxu0 0
        %5379 = vmatpush1.bf16.msra.mxu0 %v3337
        %5380 = vmatprep.subr.bf16.mxu0 0
        %5381 = vmatpush1.bf16.msra.mxu0 %v3344
        %5382 = vmatprep.subr.bf16.mxu0 0
        %5383 = vmatpush1.bf16.msra.mxu0 %v3351
        %5384 = vmatprep.subr.bf16.mxu0 0
        %5385 = vmatpush1.bf16.msra.mxu0 %v3358
        %5386 = vmatprep.subr.bf16.mxu0 0
        %5387 = vmatpush1.bf16.msra.mxu0 %v3365
        %5388 = vmatprep.subr.bf16.mxu0 0
        %5389 = vmatpush1.bf16.msra.mxu0 %v3372
        %5390 = vmatprep.subr.bf16.mxu0 0
        %5391 = vmatpush1.bf16.msra.mxu0 %v3379
        %5392 = vmatprep.subr.bf16.mxu0 0
        %5393 = vmatpush1.bf16.msra.mxu0 %v3386
        %5394 = vmatprep.subr.bf16.mxu0 0
        %5395 = vmatpush1.bf16.msra.mxu0 %v3393
        %5396 = vmatprep.mubr.bf16.mxu0 %v1147
        %5397 = vmatmul.mubr.bf16.gmra.mrb[0].mxu0 %v1146
        %v5398 = vpop.f32.mrb[0].mxu0
        %v5399 = vadd.f32 %v1120, %v5398
        %v5400 = vpop.f32.mrb[0].mxu0
        %v5401 = vpop.f32.mrb[0].mxu0
        %v5402 = vpop.f32.mrb[0].mxu0
        %5403 = vdwg.mxu0
        %5404 = vmatprep.subr.bf16.mxu0 0
        %5405 = vmatpush1.bf16.msra.mxu0 %v3400
        %5406 = vmatprep.subr.bf16.mxu0 0
        %5407 = vmatpush1.bf16.msra.mxu0 %v3407
        %5408 = vmatprep.subr.bf16.mxu0 0
        %5409 = vmatpush1.bf16.msra.mxu0 %v3414
        %5410 = vmatprep.subr.bf16.mxu0 0
        %5411 = vmatpush1.bf16.msra.mxu0 %v3421
        %5412 = vmatprep.subr.bf16.mxu0 0
        %5413 = vmatpush1.bf16.msra.mxu0 %v3428
        %5414 = vmatprep.subr.bf16.mxu0 0
        %5415 = vmatpush1.bf16.msra.mxu0 %v3435
        %5416 = vmatprep.subr.bf16.mxu0 0
        %5417 = vmatpush1.bf16.msra.mxu0 %v3442
        %5418 = vmatprep.subr.bf16.mxu0 0
        %5419 = vmatpush1.bf16.msra.mxu0 %v3449
        %5420 = vmatprep.subr.bf16.mxu0 0
        %5421 = vmatpush1.bf16.msra.mxu0 %v3456
        %5422 = vmatprep.subr.bf16.mxu0 0
        %5423 = vmatpush1.bf16.msra.mxu0 %v3463
        %5424 = vmatprep.subr.bf16.mxu0 0
        %5425 = vmatpush1.bf16.msra.mxu0 %v3470
        %5426 = vmatprep.subr.bf16.mxu0 0
        %5427 = vmatpush1.bf16.msra.mxu0 %v3477
        %5428 = vmatprep.subr.bf16.mxu0 0
        %5429 = vmatpush1.bf16.msra.mxu0 %v3484
        %5430 = vmatprep.subr.bf16.mxu0 0
        %5431 = vmatpush1.bf16.msra.mxu0 %v3491
        %5432 = vmatprep.subr.bf16.mxu0 0
        %5433 = vmatpush1.bf16.msra.mxu0 %v3498
        %5434 = vmatprep.subr.bf16.mxu0 0
        %5435 = vmatpush1.bf16.msra.mxu0 %v3505
        %5436 = vmatprep.mubr.bf16.mxu0 %v1149
        %5437 = vmatmul.mubr.bf16.gmra.mrb[0].mxu0 %v1148
        %v5438 = vpop.f32.mrb[0].mxu0
        %v5439 = vadd.f32 %v5399, %v5438
        %v5440 = vpop.f32.mrb[0].mxu0
        %v5441 = vpop.f32.mrb[0].mxu0
        %v5442 = vpop.f32.mrb[0].mxu0
        %5443 = vdwg.mxu0
        %5444 = vmatprep.subr.bf16.mxu0 0
        %5445 = vmatpush1.bf16.msra.mxu0 %v3512
        %5446 = vmatprep.subr.bf16.mxu0 0
        %5447 = vmatpush1.bf16.msra.mxu0 %v3519
        %5448 = vmatprep.subr.bf16.mxu0 0
        %5449 = vmatpush1.bf16.msra.mxu0 %v3526
        %5450 = vmatprep.subr.bf16.mxu0 0
        %5451 = vmatpush1.bf16.msra.mxu0 %v3533
        %5452 = vmatprep.subr.bf16.mxu0 0
        %5453 = vmatpush1.bf16.msra.mxu0 %v3540
        %5454 = vmatprep.subr.bf16.mxu0 0
        %5455 = vmatpush1.bf16.msra.mxu0 %v3547
        %5456 = vmatprep.subr.bf16.mxu0 0
        %5457 = vmatpush1.bf16.msra.mxu0 %v3554
        %5458 = vmatprep.subr.bf16.mxu0 0
        %5459 = vmatpush1.bf16.msra.mxu0 %v3561
        %5460 = vmatprep.subr.bf16.mxu0 0
        %5461 = vmatpush1.bf16.msra.mxu0 %v3568
        %5462 = vmatprep.subr.bf16.mxu0 0
        %5463 = vmatpush1.bf16.msra.mxu0 %v3575
        %5464 = vmatprep.subr.bf16.mxu0 0
        %5465 = vmatpush1.bf16.msra.mxu0 %v3582
        %5466 = vmatprep.subr.bf16.mxu0 0
        %5467 = vmatpush1.bf16.msra.mxu0 %v3589
        %5468 = vmatprep.subr.bf16.mxu0 0
        %5469 = vmatpush1.bf16.msra.mxu0 %v3596
        %5470 = vmatprep.subr.bf16.mxu0 0
        %5471 = vmatpush1.bf16.msra.mxu0 %v3603
        %5472 = vmatprep.subr.bf16.mxu0 0
        %5473 = vmatpush1.bf16.msra.mxu0 %v3610
        %5474 = vmatprep.subr.bf16.mxu0 0
        %5475 = vmatpush1.bf16.msra.mxu0 %v3617
        %5476 = vmatprep.mubr.bf16.mxu0 %v1151
        %5477 = vmatmul.mubr.bf16.gmra.mrb[0].mxu0 %v1150
        %v5478 = vpop.f32.mrb[0].mxu0
        %v5479 = vadd.f32 %v5439, %v5478
        %v5480 = vpop.f32.mrb[0].mxu0
        %v5481 = vpop.f32.mrb[0].mxu0
        %v5482 = vpop.f32.mrb[0].mxu0
        %5483 = vdwg.mxu0
        %5484 = vmatprep.subr.bf16.mxu0 0
        %5485 = vmatpush1.bf16.msra.mxu0 %v3624
        %5486 = vmatprep.subr.bf16.mxu0 0
        %5487 = vmatpush1.bf16.msra.mxu0 %v3631
        %5488 = vmatprep.subr.bf16.mxu0 0
        %5489 = vmatpush1.bf16.msra.mxu0 %v3638
        %5490 = vmatprep.subr.bf16.mxu0 0
        %5491 = vmatpush1.bf16.msra.mxu0 %v3645
        %5492 = vmatprep.subr.bf16.mxu0 0
        %5493 = vmatpush1.bf16.msra.mxu0 %v3652
        %5494 = vmatprep.subr.bf16.mxu0 0
        %5495 = vmatpush1.bf16.msra.mxu0 %v3659
        %5496 = vmatprep.subr.bf16.mxu0 0
        %5497 = vmatpush1.bf16.msra.mxu0 %v3666
        %5498 = vmatprep.subr.bf16.mxu0 0
        %5499 = vmatpush1.bf16.msra.mxu0 %v3673
        %5500 = vmatprep.subr.bf16.mxu0 0
        %5501 = vmatpush1.bf16.msra.mxu0 %v3680
        %5502 = vmatprep.subr.bf16.mxu0 0
        %5503 = vmatpush1.bf16.msra.mxu0 %v3687
        %5504 = vmatprep.subr.bf16.mxu0 0
        %5505 = vmatpush1.bf16.msra.mxu0 %v3694
        %5506 = vmatprep.subr.bf16.mxu0 0
        %5507 = vmatpush1.bf16.msra.mxu0 %v3701
        %5508 = vmatprep.subr.bf16.mxu0 0
        %5509 = vmatpush1.bf16.msra.mxu0 %v3708
        %5510 = vmatprep.subr.bf16.mxu0 0
        %5511 = vmatpush1.bf16.msra.mxu0 %v3715
        %5512 = vmatprep.subr.bf16.mxu0 0
        %5513 = vmatpush1.bf16.msra.mxu0 %v3722
        %5514 = vmatprep.subr.bf16.mxu0 0
        %5515 = vmatpush1.bf16.msra.mxu0 %v3729
        %5516 = vmatprep.mubr.bf16.mxu0 %v1153
        %5517 = vmatmul.mubr.bf16.gmra.mrb[0].mxu0 %v1152
        %v5518 = vpop.f32.mrb[0].mxu0
        %v5519 = vadd.f32 %v5479, %v5518
        %v5520 = vpop.f32.mrb[0].mxu0
        %v5521 = vpop.f32.mrb[0].mxu0
        %v5522 = vpop.f32.mrb[0].mxu0
        %5523 = vdwg.mxu0
        %5524 = vmatprep.subr.bf16.mxu0 0
        %5525 = vmatpush1.bf16.msra.mxu0 %v3736
        %5526 = vmatprep.subr.bf16.mxu0 0
        %5527 = vmatpush1.bf16.msra.mxu0 %v3743
        %5528 = vmatprep.subr.bf16.mxu0 0
        %5529 = vmatpush1.bf16.msra.mxu0 %v3750
        %5530 = vmatprep.subr.bf16.mxu0 0
        %5531 = vmatpush1.bf16.msra.mxu0 %v3757
        %5532 = vmatprep.subr.bf16.mxu0 0
        %5533 = vmatpush1.bf16.msra.mxu0 %v3764
        %5534 = vmatprep.subr.bf16.mxu0 0
        %5535 = vmatpush1.bf16.msra.mxu0 %v3771
        %5536 = vmatprep.subr.bf16.mxu0 0
        %5537 = vmatpush1.bf16.msra.mxu0 %v3778
        %5538 = vmatprep.subr.bf16.mxu0 0
        %5539 = vmatpush1.bf16.msra.mxu0 %v3785
        %5540 = vmatprep.subr.bf16.mxu0 0
        %5541 = vmatpush1.bf16.msra.mxu0 %v3792
        %5542 = vmatprep.subr.bf16.mxu0 0
        %5543 = vmatpush1.bf16.msra.mxu0 %v3799
        %5544 = vmatprep.subr.bf16.mxu0 0
        %5545 = vmatpush1.bf16.msra.mxu0 %v3806
        %5546 = vmatprep.subr.bf16.mxu0 0
        %5547 = vmatpush1.bf16.msra.mxu0 %v3813
        %5548 = vmatprep.subr.bf16.mxu0 0
        %5549 = vmatpush1.bf16.msra.mxu0 %v3820
        %5550 = vmatprep.subr.bf16.mxu0 0
        %5551 = vmatpush1.bf16.msra.mxu0 %v3827
        %5552 = vmatprep.subr.bf16.mxu0 0
        %5553 = vmatpush1.bf16.msra.mxu0 %v3834
        %5554 = vmatprep.subr.bf16.mxu0 0
        %5555 = vmatpush1.bf16.msra.mxu0 %v3841
        %5556 = vmatprep.mubr.bf16.mxu0 %v1155
        %5557 = vmatmul.mubr.bf16.gmra.mrb[0].mxu0 %v1154
        %v5558 = vpop.f32.mrb[0].mxu0
        %v5559 = vadd.f32 %v5519, %v5558
        %v5560 = vpop.f32.mrb[0].mxu0
        %v5561 = vpop.f32.mrb[0].mxu0
        %v5562 = vpop.f32.mrb[0].mxu0
        %5563 = vdwg.mxu0
        %5564 = vmatprep.subr.bf16.mxu0 0
        %5565 = vmatpush1.bf16.msra.mxu0 %v3848
        %5566 = vmatprep.subr.bf16.mxu0 0
        %5567 = vmatpush1.bf16.msra.mxu0 %v3855
        %5568 = vmatprep.subr.bf16.mxu0 0
        %5569 = vmatpush1.bf16.msra.mxu0 %v3862
        %5570 = vmatprep.subr.bf16.mxu0 0
        %5571 = vmatpush1.bf16.msra.mxu0 %v3869
        %5572 = vmatprep.subr.bf16.mxu0 0
        %5573 = vmatpush1.bf16.msra.mxu0 %v3876
        %5574 = vmatprep.subr.bf16.mxu0 0
        %5575 = vmatpush1.bf16.msra.mxu0 %v3883
        %5576 = vmatprep.subr.bf16.mxu0 0
        %5577 = vmatpush1.bf16.msra.mxu0 %v3890
        %5578 = vmatprep.subr.bf16.mxu0 0
        %5579 = vmatpush1.bf16.msra.mxu0 %v3897
        %5580 = vmatprep.subr.bf16.mxu0 0
        %5581 = vmatpush1.bf16.msra.mxu0 %v3904
        %5582 = vmatprep.subr.bf16.mxu0 0
        %5583 = vmatpush1.bf16.msra.mxu0 %v3911
        %5584 = vmatprep.subr.bf16.mxu0 0
        %5585 = vmatpush1.bf16.msra.mxu0 %v3918
        %5586 = vmatprep.subr.bf16.mxu0 0
        %5587 = vmatpush1.bf16.msra.mxu0 %v3925
        %5588 = vmatprep.subr.bf16.mxu0 0
        %5589 = vmatpush1.bf16.msra.mxu0 %v3932
        %5590 = vmatprep.subr.bf16.mxu0 0
        %5591 = vmatpush1.bf16.msra.mxu0 %v3939
        %5592 = vmatprep.subr.bf16.mxu0 0
        %5593 = vmatpush1.bf16.msra.mxu0 %v3946
        %5594 = vmatprep.subr.bf16.mxu0 0
        %5595 = vmatpush1.bf16.msra.mxu0 %v3953
        %5596 = vmatprep.mubr.bf16.mxu0 %v1157
        %5597 = vmatmul.mubr.bf16.gmra.mrb[0].mxu0 %v1156
        %v5598 = vpop.f32.mrb[0].mxu0
        %v5599 = vadd.f32 %v5559, %v5598
        %v5600 = vpop.f32.mrb[0].mxu0
        %v5601 = vpop.f32.mrb[0].mxu0
        %v5602 = vpop.f32.mrb[0].mxu0
        %5603 = vdwg.mxu0
        %v5604 = vmax.f32 %v4866, 0.0
        %v5605 = vmax.f32 %v4868, 0.0
        %v5606 = vmax.f32 %v5112, 0.0
        %v5607 = vmax.f32 %v5114, 0.0
        %v5608 = vmax.f32 %v5358, 0.0
        %v5609 = vmax.f32 %v5360, 0.0
        %v5610 = vmax.f32 %v5599, 0.0
        %v5611 = vpack.c.bf16 %v5604, %v5604
        %v5612 = vpack.c.bf16 %v5605, %v5605
        %v5613 = vpack.c.bf16 %v5606, %v5606
        %v5614 = vpack.c.bf16 %v5607, %v5607
        %v5615 = vpack.c.bf16 %v5608, %v5608
        %v5616 = vpack.c.bf16 %v5609, %v5609
        %v5617 = vpack.c.bf16 %v5610, %v5610
        %v5625 = vunpack.c.l.b16 %v5611
        %v5626 = vunpack.c.l.b16 %v5612
        %v5627 = vunpack.c.l.b16 %v5613
        %v5628 = vunpack.c.l.b16 %v5614
        %v5629 = vunpack.c.l.b16 %v5615
        %v5630 = vunpack.c.l.b16 %v5616
        %v5631 = vunpack.c.l.b16 %v5617
        %v5632 = vpack.c.b16 %v5626, %v5625
        %v5633 = vpack.c.b16 %v5628, %v5627
        %v5634 = vpack.c.b16 %v5630, %v5629
        %v5635 = vpack.c.b16 %v5631, %v5631
        %v5637 = vshrl.u32 %v5632, 16
        %v5639 = vrot.slane %v5637, 7
        %v5640 = vshll.u32 %v5632, 16
        %v5642 = vor.u32 %v5639, %v5640
        %v5644 = vshrl.u32 %v5633, 16
        %v5646 = vrot.slane %v5644, 7
        %v5647 = vshll.u32 %v5633, 16
        %v5649 = vor.u32 %v5646, %v5647
        %v5651 = vshrl.u32 %v5634, 16
        %v5653 = vrot.slane %v5651, 7
        %v5654 = vshll.u32 %v5634, 16
        %v5656 = vor.u32 %v5653, %v5654
        %v5658 = vshrl.u32 %v5635, 16
        %v5660 = vrot.slane %v5658, 7
        %v5661 = vshll.u32 %v5635, 16
        %v5663 = vor.u32 %v5660, %v5661
        %v5664 = vrot.slane %v5639, 4
        %v5665 = vrot.slane %v5646, 4
        %v5666 = vrot.slane %v5653, 4
        %v5667 = vrot.slane %v5660, 4
        %vm5676 = vcmask 1043456
        %vm5677 = vmand %vm5676, %vm1074
        %vm5678 = vcmask 1047556
        %vm5679 = vmand %vm5678, %vm1076
        %vm5680 = vmor %vm5679, %vm5677
        %v5681 = vld [vmem:[#allocation2] sm:$0xff]
        %v5682 = vsel %vm5680, %v5642, %v5681
        %5683 = vst [vmem:[#allocation2] sm:$0xff] %v5682
        %v5684 = vld [vmem:[#allocation2 + $0x8] sm:$0xff]
        %v5685 = vsel %vm5680, %v5649, %v5684
        %5686 = vst [vmem:[#allocation2 + $0x8] sm:$0xff] %v5685
        %v5687 = vld [vmem:[#allocation2 + $0x10] sm:$0xff]
        %v5688 = vsel %vm5680, %v5656, %v5687
        %5689 = vst [vmem:[#allocation2 + $0x10] sm:$0xff] %v5688
        %v5690 = vld [vmem:[#allocation2 + $0x18] sm:$0xf]
        %v5691 = vsel %vm5677, %v5663, %v5690
        %5692 = vst [vmem:[#allocation2 + $0x18] sm:$0xf] %v5691
        %v5693 = vld [vmem:[#allocation2 + $0x1c] sm:$0x11]
        %v5694 = vsel %vm1061, %v5664, %v5693
        %5695 = vst [vmem:[#allocation2 + $0x1c] sm:$0x11] %v5694
        %v5696 = vld [vmem:[#allocation2 + $0x24] sm:$0x11]
        %v5697 = vsel %vm1061, %v5665, %v5696
        %5698 = vst [vmem:[#allocation2 + $0x24] sm:$0x11] %v5697
        %v5699 = vld [vmem:[#allocation2 + $0x2c] sm:$0x11]
        %v5700 = vsel %vm1061, %v5666, %v5699
        %5701 = vst [vmem:[#allocation2 + $0x2c] sm:$0x11] %v5700
        %v5702 = vld [vmem:[#allocation2 + $0x34] sm:$0x1]
        %v5703 = vsel %vm1057, %v5667, %v5702
        %5704 = vst [vmem:[#allocation2 + $0x34] sm:$0x1] %v5703
        %v5705 = vld [vmem:[#allocation2] sm:$0xff]
        %v5706 = vld [vmem:[#allocation2 + $0x8] sm:$0xff]
        %v5707 = vld [vmem:[#allocation2 + $0x10] sm:$0xff]
        %v5708 = vld [vmem:[#allocation2 + $0x18] sm:$0xf]
        %v5709 = vld [vmem:[#allocation7] sm:$0xff]
        %v5710 = vld [vmem:[#allocation7 + $0x8] sm:$0xff]
        %v5711 = vld [vmem:[#allocation7 + $0x10] sm:$0xff]
        %v5712 = vld [vmem:[#allocation7 + $0x18] sm:$0xff]
        %v5713 = vld [vmem:[#allocation7 + $0x20] sm:$0xff]
        %v5714 = vld [vmem:[#allocation7 + $0x28] sm:$0xff]
        %v5715 = vld [vmem:[#allocation7 + $0x30] sm:$0xff]
        %v5716 = vld [vmem:[#allocation7 + $0x38] sm:$0xff]
        %v5717 = vld [vmem:[#allocation7 + $0x40] sm:$0xff]
        %v5718 = vld [vmem:[#allocation7 + $0x48] sm:$0xff]
        %v5719 = vld [vmem:[#allocation7 + $0x50] sm:$0xff]
        %v5720 = vld [vmem:[#allocation7 + $0x58] sm:$0xff]
        %v5721 = vld [vmem:[#allocation7 + $0x60] sm:$0xff]
        %v5722 = vld [vmem:[#allocation7 + $0x68] sm:$0xff]
        %v5723 = vld [vmem:[#allocation7 + $0x70] sm:$0xff]
        %v5724 = vld [vmem:[#allocation7 + $0x78] sm:$0xff]
        %v5725 = vld [vmem:[#allocation7 + $0x80] sm:$0xff]
        %v5726 = vld [vmem:[#allocation7 + $0x88] sm:$0xff]
        %v5727 = vld [vmem:[#allocation7 + $0x90] sm:$0xff]
        %v5728 = vld [vmem:[#allocation7 + $0x98] sm:$0xff]
        %v5729 = vld [vmem:[#allocation7 + $0xa0] sm:$0xff]
        %v5730 = vld [vmem:[#allocation7 + $0xa8] sm:$0xff]
        %v5731 = vld [vmem:[#allocation7 + $0xb0] sm:$0xff]
        %v5732 = vld [vmem:[#allocation7 + $0xb8] sm:$0xff]
        %v5733 = vld [vmem:[#allocation7 + $0xc0] sm:$0xff]
        %v5734 = vld [vmem:[#allocation7 + $0xc8] sm:$0xff]
        %v5735 = vld [vmem:[#allocation7 + $0xd0] sm:$0xff]
        %v5736 = vld [vmem:[#allocation7 + $0xd8] sm:$0xff]
        %v5737 = vld [vmem:[#allocation7 + $0xe0] sm:$0xff]
        %v5738 = vld [vmem:[#allocation7 + $0xe8] sm:$0xff]
        %v5739 = vld [vmem:[#allocation7 + $0xf0] sm:$0xff]
        %v5740 = vld [vmem:[#allocation7 + $0xf8] sm:$0xff]
        %v5741 = vld [vmem:[#allocation7 + $0x100] sm:$0xff]
        %v5742 = vld [vmem:[#allocation7 + $0x108] sm:$0xff]
        %v5743 = vld [vmem:[#allocation7 + $0x110] sm:$0xff]
        %v5744 = vld [vmem:[#allocation7 + $0x118] sm:$0xff]
        %v5745 = vld [vmem:[#allocation7 + $0x120] sm:$0xff]
        %v5746 = vld [vmem:[#allocation7 + $0x128] sm:$0xff]
        %v5747 = vld [vmem:[#allocation7 + $0x130] sm:$0xff]
        %v5748 = vld [vmem:[#allocation7 + $0x138] sm:$0xff]
        %v5749 = vld [vmem:[#allocation7 + $0x140] sm:$0xff]
        %v5750 = vld [vmem:[#allocation7 + $0x148] sm:$0xff]
        %v5751 = vld [vmem:[#allocation7 + $0x150] sm:$0xff]
        %v5752 = vld [vmem:[#allocation7 + $0x158] sm:$0xff]
        %v5753 = vld [vmem:[#allocation7 + $0x160] sm:$0xff]
        %v5754 = vld [vmem:[#allocation7 + $0x168] sm:$0xff]
        %v5755 = vld [vmem:[#allocation7 + $0x170] sm:$0xff]
        %v5756 = vld [vmem:[#allocation7 + $0x178] sm:$0xff]
        %v5757 = vld [vmem:[#allocation7 + $0x180] sm:$0xff]
        %v5758 = vld [vmem:[#allocation7 + $0x188] sm:$0xff]
        %v5759 = vld [vmem:[#allocation7 + $0x190] sm:$0xff]
        %v5760 = vld [vmem:[#allocation7 + $0x198] sm:$0xff]
        %v5761 = vld [vmem:[#allocation7 + $0x1a0] sm:$0xff]
        %v5762 = vld [vmem:[#allocation7 + $0x1a8] sm:$0xff]
        %v5763 = vld [vmem:[#allocation7 + $0x1b0] sm:$0xff]
        %v5764 = vld [vmem:[#allocation7 + $0x1b8] sm:$0xff]
        %v5765 = vld [vmem:[#allocation7 + $0x1c0] sm:$0xff]
        %v5766 = vld [vmem:[#allocation7 + $0x1c8] sm:$0xff]
        %v5767 = vld [vmem:[#allocation7 + $0x1d0] sm:$0xff]
        %v5768 = vld [vmem:[#allocation7 + $0x1d8] sm:$0xff]
        %v5769 = vld [vmem:[#allocation7 + $0x1e0] sm:$0xff]
        %v5770 = vld [vmem:[#allocation7 + $0x1e8] sm:$0xff]
        %v5771 = vld [vmem:[#allocation7 + $0x1f0] sm:$0xff]
        %v5772 = vld [vmem:[#allocation7 + $0x1f8] sm:$0xff]
        %v5773 = vld [vmem:[#allocation7 + $0x200] sm:$0xff]
        %v5774 = vld [vmem:[#allocation7 + $0x208] sm:$0xff]
        %v5775 = vld [vmem:[#allocation7 + $0x210] sm:$0xff]
        %v5776 = vld [vmem:[#allocation7 + $0x218] sm:$0xff]
        %v5777 = vld [vmem:[#allocation7 + $0x220] sm:$0xff]
        %v5778 = vld [vmem:[#allocation7 + $0x228] sm:$0xff]
        %v5779 = vld [vmem:[#allocation7 + $0x230] sm:$0xff]
        %v5780 = vld [vmem:[#allocation7 + $0x238] sm:$0xff]
        %v5781 = vld [vmem:[#allocation7 + $0x240] sm:$0xff]
        %v5782 = vld [vmem:[#allocation7 + $0x248] sm:$0xff]
        %v5783 = vld [vmem:[#allocation7 + $0x250] sm:$0xff]
        %v5784 = vld [vmem:[#allocation7 + $0x258] sm:$0xff]
        %v5785 = vld [vmem:[#allocation7 + $0x260] sm:$0xff]
        %v5786 = vld [vmem:[#allocation7 + $0x268] sm:$0xff]
        %v5787 = vld [vmem:[#allocation7 + $0x270] sm:$0xff]
        %v5788 = vld [vmem:[#allocation7 + $0x278] sm:$0xff]
        %v5789 = vld [vmem:[#allocation7 + $0x280] sm:$0xff]
        %v5790 = vld [vmem:[#allocation7 + $0x288] sm:$0xff]
        %v5791 = vld [vmem:[#allocation7 + $0x290] sm:$0xff]
        %v5792 = vld [vmem:[#allocation7 + $0x298] sm:$0xff]
        %v5793 = vld [vmem:[#allocation7 + $0x2a0] sm:$0xff]
        %v5794 = vld [vmem:[#allocation7 + $0x2a8] sm:$0xff]
        %v5795 = vld [vmem:[#allocation7 + $0x2b0] sm:$0xff]
        %v5796 = vld [vmem:[#allocation7 + $0x2b8] sm:$0xff]
        %v5797 = vld [vmem:[#allocation7 + $0x2c0] sm:$0xff]
        %v5798 = vld [vmem:[#allocation7 + $0x2c8] sm:$0xff]
        %v5799 = vld [vmem:[#allocation7 + $0x2d0] sm:$0xff]
        %v5800 = vld [vmem:[#allocation7 + $0x2d8] sm:$0xff]
        %v5801 = vld [vmem:[#allocation7 + $0x2e0] sm:$0xff]
        %v5802 = vld [vmem:[#allocation7 + $0x2e8] sm:$0xff]
        %v5803 = vld [vmem:[#allocation7 + $0x2f0] sm:$0xff]
        %v5804 = vld [vmem:[#allocation7 + $0x2f8] sm:$0xff]
        %v5805 = vld [vmem:[#allocation7 + $0x300] sm:$0xff]
        %v5806 = vld [vmem:[#allocation7 + $0x308] sm:$0xff]
        %v5807 = vld [vmem:[#allocation7 + $0x310] sm:$0xff]
        %v5808 = vld [vmem:[#allocation7 + $0x318] sm:$0xff]
        %v5809 = vld [vmem:[#allocation7 + $0x320] sm:$0xff]
        %v5810 = vld [vmem:[#allocation7 + $0x328] sm:$0xff]
        %v5811 = vld [vmem:[#allocation7 + $0x330] sm:$0xff]
        %v5812 = vld [vmem:[#allocation7 + $0x338] sm:$0xff]
        %v5813 = vld [vmem:[#allocation7 + $0x340] sm:$0xff]
        %v5814 = vld [vmem:[#allocation7 + $0x348] sm:$0xff]
        %v5815 = vld [vmem:[#allocation7 + $0x350] sm:$0xff]
        %v5816 = vld [vmem:[#allocation7 + $0x358] sm:$0xff]
        %v5817 = vld [vmem:[#allocation7 + $0x360] sm:$0xff]
        %v5818 = vld [vmem:[#allocation7 + $0x368] sm:$0xff]
        %v5819 = vld [vmem:[#allocation7 + $0x370] sm:$0xff]
        %v5820 = vld [vmem:[#allocation7 + $0x378] sm:$0xff]
        %v5821 = vld [vmem:[#allocation7 + $0x380] sm:$0xff]
        %v5822 = vld [vmem:[#allocation7 + $0x388] sm:$0xff]
        %v5823 = vld [vmem:[#allocation7 + $0x390] sm:$0xff]
        %v5824 = vld [vmem:[#allocation7 + $0x398] sm:$0xff]
        %v5825 = vld [vmem:[#allocation7 + $0x3a0] sm:$0xff]
        %v5826 = vld [vmem:[#allocation7 + $0x3a8] sm:$0xff]
        %v5827 = vld [vmem:[#allocation7 + $0x3b0] sm:$0xff]
        %v5828 = vld [vmem:[#allocation7 + $0x3b8] sm:$0xff]
        %v5829 = vld [vmem:[#allocation7 + $0x3c0] sm:$0xff]
        %v5830 = vld [vmem:[#allocation7 + $0x3c8] sm:$0xff]
        %v5831 = vld [vmem:[#allocation7 + $0x3d0] sm:$0xff]
        %v5832 = vld [vmem:[#allocation7 + $0x3d8] sm:$0xff]
        %v5833 = vld [vmem:[#allocation7 + $0x3e0] sm:$0xff]
        %v5834 = vld [vmem:[#allocation7 + $0x3e8] sm:$0xff]
        %v5835 = vld [vmem:[#allocation7 + $0x3f0] sm:$0xff]
        %v5836 = vld [vmem:[#allocation7 + $0x3f8] sm:$0xff]
        %v5837 = vld [vmem:[#allocation7 + $0x400] sm:$0xff]
        %v5838 = vld [vmem:[#allocation7 + $0x408] sm:$0xff]
        %v5839 = vld [vmem:[#allocation7 + $0x410] sm:$0xff]
        %v5840 = vld [vmem:[#allocation7 + $0x418] sm:$0xff]
        %v5841 = vld [vmem:[#allocation7 + $0x420] sm:$0xff]
        %v5842 = vld [vmem:[#allocation7 + $0x428] sm:$0xff]
        %v5843 = vld [vmem:[#allocation7 + $0x430] sm:$0xff]
        %v5844 = vld [vmem:[#allocation7 + $0x438] sm:$0xff]
        %v5845 = vld [vmem:[#allocation7 + $0x440] sm:$0xff]
        %v5846 = vld [vmem:[#allocation7 + $0x448] sm:$0xff]
        %v5847 = vld [vmem:[#allocation7 + $0x450] sm:$0xff]
        %v5848 = vld [vmem:[#allocation7 + $0x458] sm:$0xff]
        %v5849 = vld [vmem:[#allocation7 + $0x460] sm:$0xff]
        %v5850 = vld [vmem:[#allocation7 + $0x468] sm:$0xff]
        %v5851 = vld [vmem:[#allocation7 + $0x470] sm:$0xff]
        %v5852 = vld [vmem:[#allocation7 + $0x478] sm:$0xff]
        %v5853 = vld [vmem:[#allocation7 + $0x480] sm:$0xff]
        %v5854 = vld [vmem:[#allocation7 + $0x488] sm:$0xff]
        %v5855 = vld [vmem:[#allocation7 + $0x490] sm:$0xff]
        %v5856 = vld [vmem:[#allocation7 + $0x498] sm:$0xff]
        %v5857 = vld [vmem:[#allocation7 + $0x4a0] sm:$0xff]
        %v5858 = vld [vmem:[#allocation7 + $0x4a8] sm:$0xff]
        %v5859 = vld [vmem:[#allocation7 + $0x4b0] sm:$0xff]
        %v5860 = vld [vmem:[#allocation7 + $0x4b8] sm:$0xff]
        %v5861 = vld [vmem:[#allocation7 + $0x4c0] sm:$0xff]
        %v5862 = vld [vmem:[#allocation7 + $0x4c8] sm:$0xff]
        %v5863 = vld [vmem:[#allocation7 + $0x4d0] sm:$0xff]
        %v5864 = vld [vmem:[#allocation7 + $0x4d8] sm:$0xff]
        %v5865 = vld [vmem:[#allocation7 + $0x4e0] sm:$0xff]
        %v5866 = vld [vmem:[#allocation7 + $0x4e8] sm:$0xff]
        %v5867 = vld [vmem:[#allocation7 + $0x4f0] sm:$0xff]
        %v5868 = vld [vmem:[#allocation7 + $0x4f8] sm:$0xff]
        %v5869 = vld [vmem:[#allocation7 + $0x500] sm:$0xff]
        %v5870 = vld [vmem:[#allocation7 + $0x508] sm:$0xff]
        %v5871 = vld [vmem:[#allocation7 + $0x510] sm:$0xff]
        %v5872 = vld [vmem:[#allocation7 + $0x518] sm:$0xff]
        %v5873 = vld [vmem:[#allocation7 + $0x520] sm:$0xff]
        %v5874 = vld [vmem:[#allocation7 + $0x528] sm:$0xff]
        %v5875 = vld [vmem:[#allocation7 + $0x530] sm:$0xff]
        %v5876 = vld [vmem:[#allocation7 + $0x538] sm:$0xff]
        %v5877 = vld [vmem:[#allocation7 + $0x540] sm:$0xff]
        %v5878 = vld [vmem:[#allocation7 + $0x548] sm:$0xff]
        %v5879 = vld [vmem:[#allocation7 + $0x550] sm:$0xff]
        %v5880 = vld [vmem:[#allocation7 + $0x558] sm:$0xff]
        %v5881 = vld [vmem:[#allocation7 + $0x560] sm:$0xff]
        %v5882 = vld [vmem:[#allocation7 + $0x568] sm:$0xff]
        %v5883 = vld [vmem:[#allocation7 + $0x570] sm:$0xff]
        %v5884 = vld [vmem:[#allocation7 + $0x578] sm:$0xff]
        %v5885 = vld [vmem:[#allocation7 + $0x580] sm:$0xff]
        %v5886 = vld [vmem:[#allocation7 + $0x588] sm:$0xff]
        %v5887 = vld [vmem:[#allocation7 + $0x590] sm:$0xff]
        %v5888 = vld [vmem:[#allocation7 + $0x598] sm:$0xff]
        %v5889 = vld [vmem:[#allocation7 + $0x5a0] sm:$0xff]
        %v5890 = vld [vmem:[#allocation7 + $0x5a8] sm:$0xff]
        %v5891 = vld [vmem:[#allocation7 + $0x5b0] sm:$0xff]
        %v5892 = vld [vmem:[#allocation7 + $0x5b8] sm:$0xff]
        %v5893 = vld [vmem:[#allocation7 + $0x5c0] sm:$0xff]
        %v5894 = vld [vmem:[#allocation7 + $0x5c8] sm:$0xff]
        %v5895 = vld [vmem:[#allocation7 + $0x5d0] sm:$0xff]
        %v5896 = vld [vmem:[#allocation7 + $0x5d8] sm:$0xff]
        %v5897 = vld [vmem:[#allocation7 + $0x5e0] sm:$0xff]
        %v5898 = vld [vmem:[#allocation7 + $0x5e8] sm:$0xff]
        %v5899 = vld [vmem:[#allocation7 + $0x5f0] sm:$0xff]
        %v5900 = vld [vmem:[#allocation7 + $0x5f8] sm:$0xff]
        %v5901 = vld [vmem:[#allocation7 + $0x600] sm:$0xff]
        %v5902 = vld [vmem:[#allocation7 + $0x608] sm:$0xff]
        %v5903 = vld [vmem:[#allocation7 + $0x610] sm:$0xff]
        %v5904 = vld [vmem:[#allocation7 + $0x618] sm:$0xff]
        %v5905 = vld [vmem:[#allocation7 + $0x620] sm:$0xff]
        %v5906 = vld [vmem:[#allocation7 + $0x628] sm:$0xff]
        %v5907 = vld [vmem:[#allocation7 + $0x630] sm:$0xff]
        %v5908 = vld [vmem:[#allocation7 + $0x638] sm:$0xff]
        %v5909 = vld [vmem:[#allocation7 + $0x640] sm:$0xff]
        %v5910 = vld [vmem:[#allocation7 + $0x648] sm:$0xff]
        %v5911 = vld [vmem:[#allocation7 + $0x650] sm:$0xff]
        %v5912 = vld [vmem:[#allocation7 + $0x658] sm:$0xff]
        %v5913 = vld [vmem:[#allocation7 + $0x660] sm:$0xff]
        %v5914 = vld [vmem:[#allocation7 + $0x668] sm:$0xff]
        %v5915 = vld [vmem:[#allocation7 + $0x670] sm:$0xff]
        %v5916 = vld [vmem:[#allocation7 + $0x678] sm:$0xff]
        %v5917 = vld [vmem:[#allocation7 + $0x680] sm:$0xff]
        %v5918 = vld [vmem:[#allocation7 + $0x688] sm:$0xff]
        %v5919 = vld [vmem:[#allocation7 + $0x690] sm:$0xff]
        %v5920 = vld [vmem:[#allocation7 + $0x698] sm:$0xff]
        %v5921 = vld [vmem:[#allocation7 + $0x6a0] sm:$0xff]
        %v5922 = vld [vmem:[#allocation7 + $0x6a8] sm:$0xff]
        %v5923 = vld [vmem:[#allocation7 + $0x6b0] sm:$0xff]
        %v5924 = vld [vmem:[#allocation7 + $0x6b8] sm:$0xff]
        %v5925 = vld [vmem:[#allocation7 + $0x6c0] sm:$0xff]
        %v5926 = vld [vmem:[#allocation7 + $0x6c8] sm:$0xff]
        %v5927 = vld [vmem:[#allocation7 + $0x6d0] sm:$0xff]
        %v5928 = vld [vmem:[#allocation7 + $0x6d8] sm:$0xff]
        %v5929 = vld [vmem:[#allocation7 + $0x6e0] sm:$0xff]
        %v5930 = vld [vmem:[#allocation7 + $0x6e8] sm:$0xff]
        %v5931 = vld [vmem:[#allocation7 + $0x6f0] sm:$0xff]
        %v5932 = vld [vmem:[#allocation7 + $0x6f8] sm:$0xff]
        %v5933 = vld [vmem:[#allocation2 + $0x1c] sm:$0x11]
        %v5934 = vld [vmem:[#allocation2 + $0x24] sm:$0x11]
        %v5935 = vld [vmem:[#allocation2 + $0x2c] sm:$0x11]
        %v5936 = vld [vmem:[#allocation2 + $0x34] sm:$0x1]
        %s5937 = scalar_lea.vmem [#allocation7], 1792
        %v5938 = vld [vmem:[%s5937] sm:$0xff]
        %v5939 = vld [vmem:[%s5937 + $0x8] sm:$0xff]
        %v5940 = vld [vmem:[%s5937 + $0x10] sm:$0xff]
        %v5941 = vld [vmem:[%s5937 + $0x18] sm:$0xff]
        %v5942 = vld [vmem:[%s5937 + $0x20] sm:$0xff]
        %v5943 = vld [vmem:[%s5937 + $0x28] sm:$0xff]
        %v5944 = vld [vmem:[%s5937 + $0x30] sm:$0xff]
        %v5945 = vld [vmem:[%s5937 + $0x38] sm:$0xff]
        %v5946 = vld [vmem:[%s5937 + $0x40] sm:$0xff]
        %v5947 = vld [vmem:[%s5937 + $0x48] sm:$0xff]
        %v5948 = vld [vmem:[%s5937 + $0x50] sm:$0xff]
        %v5949 = vld [vmem:[%s5937 + $0x58] sm:$0xff]
        %v5950 = vld [vmem:[%s5937 + $0x60] sm:$0xff]
        %v5951 = vld [vmem:[%s5937 + $0x68] sm:$0xff]
        %v5952 = vld [vmem:[%s5937 + $0x70] sm:$0xff]
        %v5953 = vld [vmem:[%s5937 + $0x78] sm:$0xff]
        %v5954 = vld [vmem:[%s5937 + $0x80] sm:$0xff]
        %v5955 = vld [vmem:[%s5937 + $0x88] sm:$0xff]
        %v5956 = vld [vmem:[%s5937 + $0x90] sm:$0xff]
        %v5957 = vld [vmem:[%s5937 + $0x98] sm:$0xff]
        %v5958 = vld [vmem:[%s5937 + $0xa0] sm:$0xff]
        %v5959 = vld [vmem:[%s5937 + $0xa8] sm:$0xff]
        %v5960 = vld [vmem:[%s5937 + $0xb0] sm:$0xff]
        %v5961 = vld [vmem:[%s5937 + $0xb8] sm:$0xff]
        %v5962 = vld [vmem:[%s5937 + $0xc0] sm:$0xff]
        %v5963 = vld [vmem:[%s5937 + $0xc8] sm:$0xff]
        %v5964 = vld [vmem:[%s5937 + $0xd0] sm:$0xff]
        %v5965 = vld [vmem:[%s5937 + $0xd8] sm:$0xff]
        %v5966 = vld [vmem:[%s5937 + $0xe0] sm:$0xff]
        %v5967 = vld [vmem:[%s5937 + $0xe8] sm:$0xff]
        %v5968 = vld [vmem:[%s5937 + $0xf0] sm:$0xff]
        %v5969 = vld [vmem:[%s5937 + $0xf8] sm:$0xff]
        %v5970 = vld [vmem:[%s5937 + $0x100] sm:$0xff]
        %v5971 = vld [vmem:[%s5937 + $0x108] sm:$0xff]
        %v5972 = vld [vmem:[%s5937 + $0x110] sm:$0xff]
        %v5973 = vld [vmem:[%s5937 + $0x118] sm:$0xff]
        %v5974 = vld [vmem:[%s5937 + $0x120] sm:$0xff]
        %v5975 = vld [vmem:[%s5937 + $0x128] sm:$0xff]
        %v5976 = vld [vmem:[%s5937 + $0x130] sm:$0xff]
        %v5977 = vld [vmem:[%s5937 + $0x138] sm:$0xff]
        %v5978 = vld [vmem:[%s5937 + $0x140] sm:$0xff]
        %v5979 = vld [vmem:[%s5937 + $0x148] sm:$0xff]
        %v5980 = vld [vmem:[%s5937 + $0x150] sm:$0xff]
        %v5981 = vld [vmem:[%s5937 + $0x158] sm:$0xff]
        %v5982 = vld [vmem:[%s5937 + $0x160] sm:$0xff]
        %v5983 = vld [vmem:[%s5937 + $0x168] sm:$0xff]
        %v5984 = vld [vmem:[%s5937 + $0x170] sm:$0xff]
        %v5985 = vld [vmem:[%s5937 + $0x178] sm:$0xff]
        %v5986 = vld [vmem:[%s5937 + $0x180] sm:$0xff]
        %v5987 = vld [vmem:[%s5937 + $0x188] sm:$0xff]
        %v5988 = vld [vmem:[%s5937 + $0x190] sm:$0xff]
        %v5989 = vld [vmem:[%s5937 + $0x198] sm:$0xff]
        %v5990 = vld [vmem:[%s5937 + $0x1a0] sm:$0xff]
        %v5991 = vld [vmem:[%s5937 + $0x1a8] sm:$0xff]
        %v5992 = vld [vmem:[%s5937 + $0x1b0] sm:$0xff]
        %v5993 = vld [vmem:[%s5937 + $0x1b8] sm:$0xff]
        %v5994 = vld [vmem:[%s5937 + $0x1c0] sm:$0xff]
        %v5995 = vld [vmem:[%s5937 + $0x1c8] sm:$0xff]
        %v5996 = vld [vmem:[%s5937 + $0x1d0] sm:$0xff]
        %v5997 = vld [vmem:[%s5937 + $0x1d8] sm:$0xff]
        %v5998 = vld [vmem:[%s5937 + $0x1e0] sm:$0xff]
        %v5999 = vld [vmem:[%s5937 + $0x1e8] sm:$0xff]
        %v6000 = vld [vmem:[%s5937 + $0x1f0] sm:$0xff]
        %v6001 = vld [vmem:[%s5937 + $0x1f8] sm:$0xff]
        %v6002 = vld [vmem:[%s5937 + $0x200] sm:$0xff]
        %v6003 = vld [vmem:[%s5937 + $0x208] sm:$0xff]
        %v6004 = vld [vmem:[%s5937 + $0x210] sm:$0xff]
        %v6005 = vld [vmem:[%s5937 + $0x218] sm:$0xff]
        %v6006 = vld [vmem:[%s5937 + $0x220] sm:$0xff]
        %v6007 = vld [vmem:[%s5937 + $0x228] sm:$0xff]
        %v6008 = vld [vmem:[%s5937 + $0x230] sm:$0xff]
        %v6009 = vld [vmem:[%s5937 + $0x238] sm:$0xff]
        %v6010 = vld [vmem:[%s5937 + $0x240] sm:$0xff]
        %v6011 = vld [vmem:[%s5937 + $0x248] sm:$0xff]
        %v6012 = vld [vmem:[%s5937 + $0x250] sm:$0xff]
        %v6013 = vld [vmem:[%s5937 + $0x258] sm:$0xff]
        %v6014 = vld [vmem:[%s5937 + $0x260] sm:$0xff]
        %v6015 = vld [vmem:[%s5937 + $0x268] sm:$0xff]
        %v6016 = vld [vmem:[%s5937 + $0x270] sm:$0xff]
        %v6017 = vld [vmem:[%s5937 + $0x278] sm:$0xff]
        %v6018 = vld [vmem:[%s5937 + $0x280] sm:$0xff]
        %v6019 = vld [vmem:[%s5937 + $0x288] sm:$0xff]
        %v6020 = vld [vmem:[%s5937 + $0x290] sm:$0xff]
        %v6021 = vld [vmem:[%s5937 + $0x298] sm:$0xff]
        %v6022 = vld [vmem:[%s5937 + $0x2a0] sm:$0xff]
        %v6023 = vld [vmem:[%s5937 + $0x2a8] sm:$0xff]
        %v6024 = vld [vmem:[%s5937 + $0x2b0] sm:$0xff]
        %v6025 = vld [vmem:[%s5937 + $0x2b8] sm:$0xff]
        %v6026 = vld [vmem:[%s5937 + $0x2c0] sm:$0xff]
        %v6027 = vld [vmem:[%s5937 + $0x2c8] sm:$0xff]
        %v6028 = vld [vmem:[%s5937 + $0x2d0] sm:$0xff]
        %v6029 = vld [vmem:[%s5937 + $0x2d8] sm:$0xff]
        %v6030 = vld [vmem:[%s5937 + $0x2e0] sm:$0xff]
        %v6031 = vld [vmem:[%s5937 + $0x2e8] sm:$0xff]
        %v6032 = vld [vmem:[%s5937 + $0x2f0] sm:$0xff]
        %v6033 = vld [vmem:[%s5937 + $0x2f8] sm:$0xff]
        %v6034 = vld [vmem:[%s5937 + $0x300] sm:$0xff]
        %v6035 = vld [vmem:[%s5937 + $0x308] sm:$0xff]
        %v6036 = vld [vmem:[%s5937 + $0x310] sm:$0xff]
        %v6037 = vld [vmem:[%s5937 + $0x318] sm:$0xff]
        %v6038 = vld [vmem:[%s5937 + $0x320] sm:$0xff]
        %v6039 = vld [vmem:[%s5937 + $0x328] sm:$0xff]
        %v6040 = vld [vmem:[%s5937 + $0x330] sm:$0xff]
        %v6041 = vld [vmem:[%s5937 + $0x338] sm:$0xff]
        %v6042 = vld [vmem:[%s5937 + $0x340] sm:$0xff]
        %v6043 = vld [vmem:[%s5937 + $0x348] sm:$0xff]
        %v6044 = vld [vmem:[%s5937 + $0x350] sm:$0xff]
        %v6045 = vld [vmem:[%s5937 + $0x358] sm:$0xff]
        %v6046 = vld [vmem:[%s5937 + $0x360] sm:$0xff]
        %v6047 = vld [vmem:[%s5937 + $0x368] sm:$0xff]
        %v6048 = vld [vmem:[%s5937 + $0x370] sm:$0xff]
        %v6049 = vld [vmem:[%s5937 + $0x378] sm:$0xff]
        %v6050 = vld [vmem:[%s5937 + $0x380] sm:$0xff]
        %v6051 = vld [vmem:[%s5937 + $0x388] sm:$0xff]
        %v6052 = vld [vmem:[%s5937 + $0x390] sm:$0xff]
        %v6053 = vld [vmem:[%s5937 + $0x398] sm:$0xff]
        %v6054 = vld [vmem:[%s5937 + $0x3a0] sm:$0xff]
        %v6055 = vld [vmem:[%s5937 + $0x3a8] sm:$0xff]
        %v6056 = vld [vmem:[%s5937 + $0x3b0] sm:$0xff]
        %v6057 = vld [vmem:[%s5937 + $0x3b8] sm:$0xff]
        %v6058 = vld [vmem:[%s5937 + $0x3c0] sm:$0xff]
        %v6059 = vld [vmem:[%s5937 + $0x3c8] sm:$0xff]
        %v6060 = vld [vmem:[%s5937 + $0x3d0] sm:$0xff]
        %v6061 = vld [vmem:[%s5937 + $0x3d8] sm:$0xff]
        %v6062 = vld [vmem:[%s5937 + $0x3e0] sm:$0xff]
        %v6063 = vld [vmem:[%s5937 + $0x3e8] sm:$0xff]
        %v6064 = vld [vmem:[%s5937 + $0x3f0] sm:$0xff]
        %v6065 = vld [vmem:[%s5937 + $0x3f8] sm:$0xff]
        %v6066 = vld [vmem:[%s5937 + $0x400] sm:$0xff]
        %v6067 = vld [vmem:[%s5937 + $0x408] sm:$0xff]
        %v6068 = vld [vmem:[%s5937 + $0x410] sm:$0xff]
        %v6069 = vld [vmem:[%s5937 + $0x418] sm:$0xff]
        %v6070 = vld [vmem:[%s5937 + $0x420] sm:$0xff]
        %v6071 = vld [vmem:[%s5937 + $0x428] sm:$0xff]
        %v6072 = vld [vmem:[%s5937 + $0x430] sm:$0xff]
        %v6073 = vld [vmem:[%s5937 + $0x438] sm:$0xff]
        %v6074 = vld [vmem:[%s5937 + $0x440] sm:$0xff]
        %v6075 = vld [vmem:[%s5937 + $0x448] sm:$0xff]
        %v6076 = vld [vmem:[%s5937 + $0x450] sm:$0xff]
        %v6077 = vld [vmem:[%s5937 + $0x458] sm:$0xff]
        %v6078 = vld [vmem:[%s5937 + $0x460] sm:$0xff]
        %v6079 = vld [vmem:[%s5937 + $0x468] sm:$0xff]
        %v6080 = vld [vmem:[%s5937 + $0x470] sm:$0xff]
        %v6081 = vld [vmem:[%s5937 + $0x478] sm:$0xff]
        %v6082 = vld [vmem:[%s5937 + $0x480] sm:$0xff]
        %v6083 = vld [vmem:[%s5937 + $0x488] sm:$0xff]
        %v6084 = vld [vmem:[%s5937 + $0x490] sm:$0xff]
        %v6085 = vld [vmem:[%s5937 + $0x498] sm:$0xff]
        %v6086 = vld [vmem:[%s5937 + $0x4a0] sm:$0xff]
        %v6087 = vld [vmem:[%s5937 + $0x4a8] sm:$0xff]
        %v6088 = vld [vmem:[%s5937 + $0x4b0] sm:$0xff]
        %v6089 = vld [vmem:[%s5937 + $0x4b8] sm:$0xff]
        %v6090 = vld [vmem:[%s5937 + $0x4c0] sm:$0xff]
        %v6091 = vld [vmem:[%s5937 + $0x4c8] sm:$0xff]
        %v6092 = vld [vmem:[%s5937 + $0x4d0] sm:$0xff]
        %v6093 = vld [vmem:[%s5937 + $0x4d8] sm:$0xff]
        %v6094 = vld [vmem:[%s5937 + $0x4e0] sm:$0xff]
        %v6095 = vld [vmem:[%s5937 + $0x4e8] sm:$0xff]
        %v6096 = vld [vmem:[%s5937 + $0x4f0] sm:$0xff]
        %v6097 = vld [vmem:[%s5937 + $0x4f8] sm:$0xff]
        %v6098 = vld [vmem:[%s5937 + $0x500] sm:$0xff]
        %v6099 = vld [vmem:[%s5937 + $0x508] sm:$0xff]
        %v6100 = vld [vmem:[%s5937 + $0x510] sm:$0xff]
        %v6101 = vld [vmem:[%s5937 + $0x518] sm:$0xff]
        %v6102 = vld [vmem:[%s5937 + $0x520] sm:$0xff]
        %v6103 = vld [vmem:[%s5937 + $0x528] sm:$0xff]
        %v6104 = vld [vmem:[%s5937 + $0x530] sm:$0xff]
        %v6105 = vld [vmem:[%s5937 + $0x538] sm:$0xff]
        %v6106 = vld [vmem:[%s5937 + $0x540] sm:$0xff]
        %v6107 = vld [vmem:[%s5937 + $0x548] sm:$0xff]
        %v6108 = vld [vmem:[%s5937 + $0x550] sm:$0xff]
        %v6109 = vld [vmem:[%s5937 + $0x558] sm:$0xff]
        %v6110 = vld [vmem:[%s5937 + $0x560] sm:$0xff]
        %v6111 = vld [vmem:[%s5937 + $0x568] sm:$0xff]
        %v6112 = vld [vmem:[%s5937 + $0x570] sm:$0xff]
        %v6113 = vld [vmem:[%s5937 + $0x578] sm:$0xff]
        %v6114 = vld [vmem:[%s5937 + $0x580] sm:$0xff]
        %v6115 = vld [vmem:[%s5937 + $0x588] sm:$0xff]
        %v6116 = vld [vmem:[%s5937 + $0x590] sm:$0xff]
        %v6117 = vld [vmem:[%s5937 + $0x598] sm:$0xff]
        %v6118 = vld [vmem:[%s5937 + $0x5a0] sm:$0xff]
        %v6119 = vld [vmem:[%s5937 + $0x5a8] sm:$0xff]
        %v6120 = vld [vmem:[%s5937 + $0x5b0] sm:$0xff]
        %v6121 = vld [vmem:[%s5937 + $0x5b8] sm:$0xff]
        %v6122 = vld [vmem:[%s5937 + $0x5c0] sm:$0xff]
        %v6123 = vld [vmem:[%s5937 + $0x5c8] sm:$0xff]
        %v6124 = vld [vmem:[%s5937 + $0x5d0] sm:$0xff]
        %v6125 = vld [vmem:[%s5937 + $0x5d8] sm:$0xff]
        %v6126 = vld [vmem:[%s5937 + $0x5e0] sm:$0xff]
        %v6127 = vld [vmem:[%s5937 + $0x5e8] sm:$0xff]
        %v6128 = vld [vmem:[%s5937 + $0x5f0] sm:$0xff]
        %v6129 = vld [vmem:[%s5937 + $0x5f8] sm:$0xff]
        %v6130 = vld [vmem:[%s5937 + $0x600] sm:$0xff]
        %v6131 = vld [vmem:[%s5937 + $0x608] sm:$0xff]
        %v6132 = vld [vmem:[%s5937 + $0x610] sm:$0xff]
        %v6133 = vld [vmem:[%s5937 + $0x618] sm:$0xff]
        %v6134 = vld [vmem:[%s5937 + $0x620] sm:$0xff]
        %v6135 = vld [vmem:[%s5937 + $0x628] sm:$0xff]
        %v6136 = vld [vmem:[%s5937 + $0x630] sm:$0xff]
        %v6137 = vld [vmem:[%s5937 + $0x638] sm:$0xff]
        %v6138 = vld [vmem:[%s5937 + $0x640] sm:$0xff]
        %v6139 = vld [vmem:[%s5937 + $0x648] sm:$0xff]
        %v6140 = vld [vmem:[%s5937 + $0x650] sm:$0xff]
        %v6141 = vld [vmem:[%s5937 + $0x658] sm:$0xff]
        %v6142 = vld [vmem:[%s5937 + $0x660] sm:$0xff]
        %v6143 = vld [vmem:[%s5937 + $0x668] sm:$0xff]
        %v6144 = vld [vmem:[%s5937 + $0x670] sm:$0xff]
        %v6145 = vld [vmem:[%s5937 + $0x678] sm:$0xff]
        %v6146 = vld [vmem:[%s5937 + $0x680] sm:$0xff]
        %v6147 = vld [vmem:[%s5937 + $0x688] sm:$0xff]
        %v6148 = vld [vmem:[%s5937 + $0x690] sm:$0xff]
        %v6149 = vld [vmem:[%s5937 + $0x698] sm:$0xff]
        %v6150 = vld [vmem:[%s5937 + $0x6a0] sm:$0xff]
        %v6151 = vld [vmem:[%s5937 + $0x6a8] sm:$0xff]
        %v6152 = vld [vmem:[%s5937 + $0x6b0] sm:$0xff]
        %v6153 = vld [vmem:[%s5937 + $0x6b8] sm:$0xff]
        %v6154 = vld [vmem:[%s5937 + $0x6c0] sm:$0xff]
        %v6155 = vld [vmem:[%s5937 + $0x6c8] sm:$0xff]
        %v6156 = vld [vmem:[%s5937 + $0x6d0] sm:$0xff]
        %v6157 = vld [vmem:[%s5937 + $0x6d8] sm:$0xff]
        %v6158 = vld [vmem:[%s5937 + $0x6e0] sm:$0xff]
        %v6159 = vld [vmem:[%s5937 + $0x6e8] sm:$0xff]
        %v6160 = vld [vmem:[%s5937 + $0x6f0] sm:$0xff]
        %v6161 = vld [vmem:[%s5937 + $0x6f8] sm:$0xff]
        %v6170 = vunpack.c.l.b16 %v5705
        %v6171 = vunpack.c.h.b16 %v5705
        %v6172 = vunpack.c.l.b16 %v5706
        %v6173 = vunpack.c.h.b16 %v5706
        %v6174 = vunpack.c.l.b16 %v5707
        %v6175 = vunpack.c.h.b16 %v5707
        %v6176 = vunpack.c.l.b16 %v5708
        %v6177 = vunpack.c.l.b16 %v5933
        %v6178 = vunpack.c.h.b16 %v5933
        %v6179 = vunpack.c.l.b16 %v5934
        %v6180 = vunpack.c.h.b16 %v5934
        %v6181 = vunpack.c.l.b16 %v5935
        %v6182 = vunpack.c.h.b16 %v5935
        %v6183 = vunpack.c.l.b16 %v5936
        %v6184 = vpack.c.b16 %v6177, %v6170
        %v6185 = vpack.c.b16 %v6178, %v6171
        %v6186 = vpack.c.b16 %v6179, %v6172
        %v6187 = vpack.c.b16 %v6180, %v6173
        %v6188 = vpack.c.b16 %v6181, %v6174
        %v6189 = vpack.c.b16 %v6182, %v6175
        %v6190 = vpack.c.b16 %v6183, %v6176
        %v6192 = vshrl.u32 %v6184, 16
        %v6194 = vshll.u32 %v6184, 16
        %v6196 = vrot.slane %v6194, 1
        %v6197 = vor.u32 %v6192, %v6196
        %v6199 = vshrl.u32 %v6185, 16
        %v6201 = vshll.u32 %v6185, 16
        %v6203 = vrot.slane %v6201, 1
        %v6204 = vor.u32 %v6199, %v6203
        %v6206 = vshrl.u32 %v6186, 16
        %v6208 = vshll.u32 %v6186, 16
        %v6210 = vrot.slane %v6208, 1
        %v6211 = vor.u32 %v6206, %v6210
        %v6213 = vshrl.u32 %v6187, 16
        %v6215 = vshll.u32 %v6187, 16
        %v6217 = vrot.slane %v6215, 1
        %v6218 = vor.u32 %v6213, %v6217
        %v6220 = vshrl.u32 %v6188, 16
        %v6222 = vshll.u32 %v6188, 16
        %v6224 = vrot.slane %v6222, 1
        %v6225 = vor.u32 %v6220, %v6224
        %v6227 = vshrl.u32 %v6189, 16
        %v6229 = vshll.u32 %v6189, 16
        %v6231 = vrot.slane %v6229, 1
        %v6232 = vor.u32 %v6227, %v6231
        %v6234 = vshrl.u32 %v6190, 16
        %v6236 = vshll.u32 %v6190, 16
        %v6238 = vrot.slane %v6236, 1
        %v6239 = vor.u32 %v6234, %v6238
        %v6471 = vunpack.c.l.b16 %v5938
        %v6472 = vunpack.c.h.b16 %v5938
        %v6473 = vunpack.c.l.b16 %v5939
        %v6474 = vunpack.c.h.b16 %v5939
        %v6475 = vunpack.c.l.b16 %v5940
        %v6476 = vunpack.c.h.b16 %v5940
        %v6477 = vunpack.c.l.b16 %v5941
        %v6478 = vunpack.c.h.b16 %v5941
        %v6479 = vunpack.c.l.b16 %v5942
        %v6480 = vunpack.c.h.b16 %v5942
        %v6481 = vunpack.c.l.b16 %v5943
        %v6482 = vunpack.c.h.b16 %v5943
        %v6483 = vunpack.c.l.b16 %v5944
        %v6484 = vunpack.c.h.b16 %v5944
        %v6485 = vunpack.c.l.b16 %v5945
        %v6486 = vunpack.c.h.b16 %v5945
        %v6487 = vunpack.c.l.b16 %v5946
        %v6488 = vunpack.c.h.b16 %v5946
        %v6489 = vunpack.c.l.b16 %v5947
        %v6490 = vunpack.c.h.b16 %v5947
        %v6491 = vunpack.c.l.b16 %v5948
        %v6492 = vunpack.c.h.b16 %v5948
        %v6493 = vunpack.c.l.b16 %v5949
        %v6494 = vunpack.c.h.b16 %v5949
        %v6495 = vunpack.c.l.b16 %v5950
        %v6496 = vunpack.c.h.b16 %v5950
        %v6497 = vunpack.c.l.b16 %v5951
        %v6498 = vunpack.c.h.b16 %v5951
        %v6499 = vunpack.c.l.b16 %v5952
        %v6500 = vunpack.c.h.b16 %v5952
        %v6501 = vunpack.c.l.b16 %v5953
        %v6502 = vunpack.c.h.b16 %v5953
        %v6503 = vunpack.c.l.b16 %v5954
        %v6504 = vunpack.c.h.b16 %v5954
        %v6505 = vunpack.c.l.b16 %v5955
        %v6506 = vunpack.c.h.b16 %v5955
        %v6507 = vunpack.c.l.b16 %v5956
        %v6508 = vunpack.c.h.b16 %v5956
        %v6509 = vunpack.c.l.b16 %v5957
        %v6510 = vunpack.c.h.b16 %v5957
        %v6511 = vunpack.c.l.b16 %v5958
        %v6512 = vunpack.c.h.b16 %v5958
        %v6513 = vunpack.c.l.b16 %v5959
        %v6514 = vunpack.c.h.b16 %v5959
        %v6515 = vunpack.c.l.b16 %v5960
        %v6516 = vunpack.c.h.b16 %v5960
        %v6517 = vunpack.c.l.b16 %v5961
        %v6518 = vunpack.c.h.b16 %v5961
        %v6519 = vunpack.c.l.b16 %v5962
        %v6520 = vunpack.c.h.b16 %v5962
        %v6521 = vunpack.c.l.b16 %v5963
        %v6522 = vunpack.c.h.b16 %v5963
        %v6523 = vunpack.c.l.b16 %v5964
        %v6524 = vunpack.c.h.b16 %v5964
        %v6525 = vunpack.c.l.b16 %v5965
        %v6526 = vunpack.c.h.b16 %v5965
        %v6527 = vunpack.c.l.b16 %v5966
        %v6528 = vunpack.c.h.b16 %v5966
        %v6529 = vunpack.c.l.b16 %v5967
        %v6530 = vunpack.c.h.b16 %v5967
        %v6531 = vunpack.c.l.b16 %v5968
        %v6532 = vunpack.c.h.b16 %v5968
        %v6533 = vunpack.c.l.b16 %v5969
        %v6534 = vunpack.c.h.b16 %v5969
        %v6535 = vunpack.c.l.b16 %v5970
        %v6536 = vunpack.c.h.b16 %v5970
        %v6537 = vunpack.c.l.b16 %v5971
        %v6538 = vunpack.c.h.b16 %v5971
        %v6539 = vunpack.c.l.b16 %v5972
        %v6540 = vunpack.c.h.b16 %v5972
        %v6541 = vunpack.c.l.b16 %v5973
        %v6542 = vunpack.c.h.b16 %v5973
        %v6543 = vunpack.c.l.b16 %v5974
        %v6544 = vunpack.c.h.b16 %v5974
        %v6545 = vunpack.c.l.b16 %v5975
        %v6546 = vunpack.c.h.b16 %v5975
        %v6547 = vunpack.c.l.b16 %v5976
        %v6548 = vunpack.c.h.b16 %v5976
        %v6549 = vunpack.c.l.b16 %v5977
        %v6550 = vunpack.c.h.b16 %v5977
        %v6551 = vunpack.c.l.b16 %v5978
        %v6552 = vunpack.c.h.b16 %v5978
        %v6553 = vunpack.c.l.b16 %v5979
        %v6554 = vunpack.c.h.b16 %v5979
        %v6555 = vunpack.c.l.b16 %v5980
        %v6556 = vunpack.c.h.b16 %v5980
        %v6557 = vunpack.c.l.b16 %v5981
        %v6558 = vunpack.c.h.b16 %v5981
        %v6559 = vunpack.c.l.b16 %v5982
        %v6560 = vunpack.c.h.b16 %v5982
        %v6561 = vunpack.c.l.b16 %v5983
        %v6562 = vunpack.c.h.b16 %v5983
        %v6563 = vunpack.c.l.b16 %v5984
        %v6564 = vunpack.c.h.b16 %v5984
        %v6565 = vunpack.c.l.b16 %v5985
        %v6566 = vunpack.c.h.b16 %v5985
        %v6567 = vunpack.c.l.b16 %v5986
        %v6568 = vunpack.c.h.b16 %v5986
        %v6569 = vunpack.c.l.b16 %v5987
        %v6570 = vunpack.c.h.b16 %v5987
        %v6571 = vunpack.c.l.b16 %v5988
        %v6572 = vunpack.c.h.b16 %v5988
        %v6573 = vunpack.c.l.b16 %v5989
        %v6574 = vunpack.c.h.b16 %v5989
        %v6575 = vunpack.c.l.b16 %v5990
        %v6576 = vunpack.c.h.b16 %v5990
        %v6577 = vunpack.c.l.b16 %v5991
        %v6578 = vunpack.c.h.b16 %v5991
        %v6579 = vunpack.c.l.b16 %v5992
        %v6580 = vunpack.c.h.b16 %v5992
        %v6581 = vunpack.c.l.b16 %v5993
        %v6582 = vunpack.c.h.b16 %v5993
        %v6583 = vunpack.c.l.b16 %v5994
        %v6584 = vunpack.c.h.b16 %v5994
        %v6585 = vunpack.c.l.b16 %v5995
        %v6586 = vunpack.c.h.b16 %v5995
        %v6587 = vunpack.c.l.b16 %v5996
        %v6588 = vunpack.c.h.b16 %v5996
        %v6589 = vunpack.c.l.b16 %v5997
        %v6590 = vunpack.c.h.b16 %v5997
        %v6591 = vunpack.c.l.b16 %v5998
        %v6592 = vunpack.c.h.b16 %v5998
        %v6593 = vunpack.c.l.b16 %v5999
        %v6594 = vunpack.c.h.b16 %v5999
        %v6595 = vunpack.c.l.b16 %v6000
        %v6596 = vunpack.c.h.b16 %v6000
        %v6597 = vunpack.c.l.b16 %v6001
        %v6598 = vunpack.c.h.b16 %v6001
        %v6599 = vunpack.c.l.b16 %v6002
        %v6600 = vunpack.c.h.b16 %v6002
        %v6601 = vunpack.c.l.b16 %v6003
        %v6602 = vunpack.c.h.b16 %v6003
        %v6603 = vunpack.c.l.b16 %v6004
        %v6604 = vunpack.c.h.b16 %v6004
        %v6605 = vunpack.c.l.b16 %v6005
        %v6606 = vunpack.c.h.b16 %v6005
        %v6607 = vunpack.c.l.b16 %v6006
        %v6608 = vunpack.c.h.b16 %v6006
        %v6609 = vunpack.c.l.b16 %v6007
        %v6610 = vunpack.c.h.b16 %v6007
        %v6611 = vunpack.c.l.b16 %v6008
        %v6612 = vunpack.c.h.b16 %v6008
        %v6613 = vunpack.c.l.b16 %v6009
        %v6614 = vunpack.c.h.b16 %v6009
        %v6615 = vunpack.c.l.b16 %v6010
        %v6616 = vunpack.c.h.b16 %v6010
        %v6617 = vunpack.c.l.b16 %v6011
        %v6618 = vunpack.c.h.b16 %v6011
        %v6619 = vunpack.c.l.b16 %v6012
        %v6620 = vunpack.c.h.b16 %v6012
        %v6621 = vunpack.c.l.b16 %v6013
        %v6622 = vunpack.c.h.b16 %v6013
        %v6623 = vunpack.c.l.b16 %v6014
        %v6624 = vunpack.c.h.b16 %v6014
        %v6625 = vunpack.c.l.b16 %v6015
        %v6626 = vunpack.c.h.b16 %v6015
        %v6627 = vunpack.c.l.b16 %v6016
        %v6628 = vunpack.c.h.b16 %v6016
        %v6629 = vunpack.c.l.b16 %v6017
        %v6630 = vunpack.c.h.b16 %v6017
        %v6631 = vunpack.c.l.b16 %v6018
        %v6632 = vunpack.c.h.b16 %v6018
        %v6633 = vunpack.c.l.b16 %v6019
        %v6634 = vunpack.c.h.b16 %v6019
        %v6635 = vunpack.c.l.b16 %v6020
        %v6636 = vunpack.c.h.b16 %v6020
        %v6637 = vunpack.c.l.b16 %v6021
        %v6638 = vunpack.c.h.b16 %v6021
        %v6639 = vunpack.c.l.b16 %v6022
        %v6640 = vunpack.c.h.b16 %v6022
        %v6641 = vunpack.c.l.b16 %v6023
        %v6642 = vunpack.c.h.b16 %v6023
        %v6643 = vunpack.c.l.b16 %v6024
        %v6644 = vunpack.c.h.b16 %v6024
        %v6645 = vunpack.c.l.b16 %v6025
        %v6646 = vunpack.c.h.b16 %v6025
        %v6647 = vunpack.c.l.b16 %v6026
        %v6648 = vunpack.c.h.b16 %v6026
        %v6649 = vunpack.c.l.b16 %v6027
        %v6650 = vunpack.c.h.b16 %v6027
        %v6651 = vunpack.c.l.b16 %v6028
        %v6652 = vunpack.c.h.b16 %v6028
        %v6653 = vunpack.c.l.b16 %v6029
        %v6654 = vunpack.c.h.b16 %v6029
        %v6655 = vunpack.c.l.b16 %v6030
        %v6656 = vunpack.c.h.b16 %v6030
        %v6657 = vunpack.c.l.b16 %v6031
        %v6658 = vunpack.c.h.b16 %v6031
        %v6659 = vunpack.c.l.b16 %v6032
        %v6660 = vunpack.c.h.b16 %v6032
        %v6661 = vunpack.c.l.b16 %v6033
        %v6662 = vunpack.c.h.b16 %v6033
        %v6663 = vunpack.c.l.b16 %v6034
        %v6664 = vunpack.c.h.b16 %v6034
        %v6665 = vunpack.c.l.b16 %v6035
        %v6666 = vunpack.c.h.b16 %v6035
        %v6667 = vunpack.c.l.b16 %v6036
        %v6668 = vunpack.c.h.b16 %v6036
        %v6669 = vunpack.c.l.b16 %v6037
        %v6670 = vunpack.c.h.b16 %v6037
        %v6671 = vunpack.c.l.b16 %v6038
        %v6672 = vunpack.c.h.b16 %v6038
        %v6673 = vunpack.c.l.b16 %v6039
        %v6674 = vunpack.c.h.b16 %v6039
        %v6675 = vunpack.c.l.b16 %v6040
        %v6676 = vunpack.c.h.b16 %v6040
        %v6677 = vunpack.c.l.b16 %v6041
        %v6678 = vunpack.c.h.b16 %v6041
        %v6679 = vunpack.c.l.b16 %v6042
        %v6680 = vunpack.c.h.b16 %v6042
        %v6681 = vunpack.c.l.b16 %v6043
        %v6682 = vunpack.c.h.b16 %v6043
        %v6683 = vunpack.c.l.b16 %v6044
        %v6684 = vunpack.c.h.b16 %v6044
        %v6685 = vunpack.c.l.b16 %v6045
        %v6686 = vunpack.c.h.b16 %v6045
        %v6687 = vunpack.c.l.b16 %v6046
        %v6688 = vunpack.c.h.b16 %v6046
        %v6689 = vunpack.c.l.b16 %v6047
        %v6690 = vunpack.c.h.b16 %v6047
        %v6691 = vunpack.c.l.b16 %v6048
        %v6692 = vunpack.c.h.b16 %v6048
        %v6693 = vunpack.c.l.b16 %v6049
        %v6694 = vunpack.c.h.b16 %v6049
        %v6695 = vunpack.c.l.b16 %v6050
        %v6696 = vunpack.c.h.b16 %v6050
        %v6697 = vunpack.c.l.b16 %v6051
        %v6698 = vunpack.c.h.b16 %v6051
        %v6699 = vunpack.c.l.b16 %v6052
        %v6700 = vunpack.c.h.b16 %v6052
        %v6701 = vunpack.c.l.b16 %v6053
        %v6702 = vunpack.c.h.b16 %v6053
        %v6703 = vunpack.c.l.b16 %v6054
        %v6704 = vunpack.c.h.b16 %v6054
        %v6705 = vunpack.c.l.b16 %v6055
        %v6706 = vunpack.c.h.b16 %v6055
        %v6707 = vunpack.c.l.b16 %v6056
        %v6708 = vunpack.c.h.b16 %v6056
        %v6709 = vunpack.c.l.b16 %v6057
        %v6710 = vunpack.c.h.b16 %v6057
        %v6711 = vunpack.c.l.b16 %v6058
        %v6712 = vunpack.c.h.b16 %v6058
        %v6713 = vunpack.c.l.b16 %v6059
        %v6714 = vunpack.c.h.b16 %v6059
        %v6715 = vunpack.c.l.b16 %v6060
        %v6716 = vunpack.c.h.b16 %v6060
        %v6717 = vunpack.c.l.b16 %v6061
        %v6718 = vunpack.c.h.b16 %v6061
        %v6719 = vunpack.c.l.b16 %v6062
        %v6720 = vunpack.c.h.b16 %v6062
        %v6721 = vunpack.c.l.b16 %v6063
        %v6722 = vunpack.c.h.b16 %v6063
        %v6723 = vunpack.c.l.b16 %v6064
        %v6724 = vunpack.c.h.b16 %v6064
        %v6725 = vunpack.c.l.b16 %v6065
        %v6726 = vunpack.c.h.b16 %v6065
        %v6727 = vunpack.c.l.b16 %v6066
        %v6728 = vunpack.c.h.b16 %v6066
        %v6729 = vunpack.c.l.b16 %v6067
        %v6730 = vunpack.c.h.b16 %v6067
        %v6731 = vunpack.c.l.b16 %v6068
        %v6732 = vunpack.c.h.b16 %v6068
        %v6733 = vunpack.c.l.b16 %v6069
        %v6734 = vunpack.c.h.b16 %v6069
        %v6735 = vunpack.c.l.b16 %v6070
        %v6736 = vunpack.c.h.b16 %v6070
        %v6737 = vunpack.c.l.b16 %v6071
        %v6738 = vunpack.c.h.b16 %v6071
        %v6739 = vunpack.c.l.b16 %v6072
        %v6740 = vunpack.c.h.b16 %v6072
        %v6741 = vunpack.c.l.b16 %v6073
        %v6742 = vunpack.c.h.b16 %v6073
        %v6743 = vunpack.c.l.b16 %v6074
        %v6744 = vunpack.c.h.b16 %v6074
        %v6745 = vunpack.c.l.b16 %v6075
        %v6746 = vunpack.c.h.b16 %v6075
        %v6747 = vunpack.c.l.b16 %v6076
        %v6748 = vunpack.c.h.b16 %v6076
        %v6749 = vunpack.c.l.b16 %v6077
        %v6750 = vunpack.c.h.b16 %v6077
        %v6751 = vunpack.c.l.b16 %v6078
        %v6752 = vunpack.c.h.b16 %v6078
        %v6753 = vunpack.c.l.b16 %v6079
        %v6754 = vunpack.c.h.b16 %v6079
        %v6755 = vunpack.c.l.b16 %v6080
        %v6756 = vunpack.c.h.b16 %v6080
        %v6757 = vunpack.c.l.b16 %v6081
        %v6758 = vunpack.c.h.b16 %v6081
        %v6759 = vunpack.c.l.b16 %v6082
        %v6760 = vunpack.c.h.b16 %v6082
        %v6761 = vunpack.c.l.b16 %v6083
        %v6762 = vunpack.c.h.b16 %v6083
        %v6763 = vunpack.c.l.b16 %v6084
        %v6764 = vunpack.c.h.b16 %v6084
        %v6765 = vunpack.c.l.b16 %v6085
        %v6766 = vunpack.c.h.b16 %v6085
        %v6767 = vunpack.c.l.b16 %v6086
        %v6768 = vunpack.c.h.b16 %v6086
        %v6769 = vunpack.c.l.b16 %v6087
        %v6770 = vunpack.c.h.b16 %v6087
        %v6771 = vunpack.c.l.b16 %v6088
        %v6772 = vunpack.c.h.b16 %v6088
        %v6773 = vunpack.c.l.b16 %v6089
        %v6774 = vunpack.c.h.b16 %v6089
        %v6775 = vunpack.c.l.b16 %v6090
        %v6776 = vunpack.c.h.b16 %v6090
        %v6777 = vunpack.c.l.b16 %v6091
        %v6778 = vunpack.c.h.b16 %v6091
        %v6779 = vunpack.c.l.b16 %v6092
        %v6780 = vunpack.c.h.b16 %v6092
        %v6781 = vunpack.c.l.b16 %v6093
        %v6782 = vunpack.c.h.b16 %v6093
        %v6783 = vunpack.c.l.b16 %v6094
        %v6784 = vunpack.c.h.b16 %v6094
        %v6785 = vunpack.c.l.b16 %v6095
        %v6786 = vunpack.c.h.b16 %v6095
        %v6787 = vunpack.c.l.b16 %v6096
        %v6788 = vunpack.c.h.b16 %v6096
        %v6789 = vunpack.c.l.b16 %v6097
        %v6790 = vunpack.c.h.b16 %v6097
        %v6791 = vunpack.c.l.b16 %v6098
        %v6792 = vunpack.c.h.b16 %v6098
        %v6793 = vunpack.c.l.b16 %v6099
        %v6794 = vunpack.c.h.b16 %v6099
        %v6795 = vunpack.c.l.b16 %v6100
        %v6796 = vunpack.c.h.b16 %v6100
        %v6797 = vunpack.c.l.b16 %v6101
        %v6798 = vunpack.c.h.b16 %v6101
        %v6799 = vunpack.c.l.b16 %v6102
        %v6800 = vunpack.c.h.b16 %v6102
        %v6801 = vunpack.c.l.b16 %v6103
        %v6802 = vunpack.c.h.b16 %v6103
        %v6803 = vunpack.c.l.b16 %v6104
        %v6804 = vunpack.c.h.b16 %v6104
        %v6805 = vunpack.c.l.b16 %v6105
        %v6806 = vunpack.c.h.b16 %v6105
        %v6807 = vunpack.c.l.b16 %v6106
        %v6808 = vunpack.c.h.b16 %v6106
        %v6809 = vunpack.c.l.b16 %v6107
        %v6810 = vunpack.c.h.b16 %v6107
        %v6811 = vunpack.c.l.b16 %v6108
        %v6812 = vunpack.c.h.b16 %v6108
        %v6813 = vunpack.c.l.b16 %v6109
        %v6814 = vunpack.c.h.b16 %v6109
        %v6815 = vunpack.c.l.b16 %v6110
        %v6816 = vunpack.c.h.b16 %v6110
        %v6817 = vunpack.c.l.b16 %v6111
        %v6818 = vunpack.c.h.b16 %v6111
        %v6819 = vunpack.c.l.b16 %v6112
        %v6820 = vunpack.c.h.b16 %v6112
        %v6821 = vunpack.c.l.b16 %v6113
        %v6822 = vunpack.c.h.b16 %v6113
        %v6823 = vunpack.c.l.b16 %v6114
        %v6824 = vunpack.c.h.b16 %v6114
        %v6825 = vunpack.c.l.b16 %v6115
        %v6826 = vunpack.c.h.b16 %v6115
        %v6827 = vunpack.c.l.b16 %v6116
        %v6828 = vunpack.c.h.b16 %v6116
        %v6829 = vunpack.c.l.b16 %v6117
        %v6830 = vunpack.c.h.b16 %v6117
        %v6831 = vunpack.c.l.b16 %v6118
        %v6832 = vunpack.c.h.b16 %v6118
        %v6833 = vunpack.c.l.b16 %v6119
        %v6834 = vunpack.c.h.b16 %v6119
        %v6835 = vunpack.c.l.b16 %v6120
        %v6836 = vunpack.c.h.b16 %v6120
        %v6837 = vunpack.c.l.b16 %v6121
        %v6838 = vunpack.c.h.b16 %v6121
        %v6839 = vunpack.c.l.b16 %v6122
        %v6840 = vunpack.c.h.b16 %v6122
        %v6841 = vunpack.c.l.b16 %v6123
        %v6842 = vunpack.c.h.b16 %v6123
        %v6843 = vunpack.c.l.b16 %v6124
        %v6844 = vunpack.c.h.b16 %v6124
        %v6845 = vunpack.c.l.b16 %v6125
        %v6846 = vunpack.c.h.b16 %v6125
        %v6847 = vunpack.c.l.b16 %v6126
        %v6848 = vunpack.c.h.b16 %v6126
        %v6849 = vunpack.c.l.b16 %v6127
        %v6850 = vunpack.c.h.b16 %v6127
        %v6851 = vunpack.c.l.b16 %v6128
        %v6852 = vunpack.c.h.b16 %v6128
        %v6853 = vunpack.c.l.b16 %v6129
        %v6854 = vunpack.c.h.b16 %v6129
        %v6855 = vunpack.c.l.b16 %v6130
        %v6856 = vunpack.c.h.b16 %v6130
        %v6857 = vunpack.c.l.b16 %v6131
        %v6858 = vunpack.c.h.b16 %v6131
        %v6859 = vunpack.c.l.b16 %v6132
        %v6860 = vunpack.c.h.b16 %v6132
        %v6861 = vunpack.c.l.b16 %v6133
        %v6862 = vunpack.c.h.b16 %v6133
        %v6863 = vunpack.c.l.b16 %v6134
        %v6864 = vunpack.c.h.b16 %v6134
        %v6865 = vunpack.c.l.b16 %v6135
        %v6866 = vunpack.c.h.b16 %v6135
        %v6867 = vunpack.c.l.b16 %v6136
        %v6868 = vunpack.c.h.b16 %v6136
        %v6869 = vunpack.c.l.b16 %v6137
        %v6870 = vunpack.c.h.b16 %v6137
        %v6871 = vunpack.c.l.b16 %v6138
        %v6872 = vunpack.c.h.b16 %v6138
        %v6873 = vunpack.c.l.b16 %v6139
        %v6874 = vunpack.c.h.b16 %v6139
        %v6875 = vunpack.c.l.b16 %v6140
        %v6876 = vunpack.c.h.b16 %v6140
        %v6877 = vunpack.c.l.b16 %v6141
        %v6878 = vunpack.c.h.b16 %v6141
        %v6879 = vunpack.c.l.b16 %v6142
        %v6880 = vunpack.c.h.b16 %v6142
        %v6881 = vunpack.c.l.b16 %v6143
        %v6882 = vunpack.c.h.b16 %v6143
        %v6883 = vunpack.c.l.b16 %v6144
        %v6884 = vunpack.c.h.b16 %v6144
        %v6885 = vunpack.c.l.b16 %v6145
        %v6886 = vunpack.c.h.b16 %v6145
        %v6887 = vunpack.c.l.b16 %v6146
        %v6888 = vunpack.c.h.b16 %v6146
        %v6889 = vunpack.c.l.b16 %v6147
        %v6890 = vunpack.c.h.b16 %v6147
        %v6891 = vunpack.c.l.b16 %v6148
        %v6892 = vunpack.c.h.b16 %v6148
        %v6893 = vunpack.c.l.b16 %v6149
        %v6894 = vunpack.c.h.b16 %v6149
        %v6895 = vunpack.c.l.b16 %v6150
        %v6896 = vunpack.c.h.b16 %v6150
        %v6897 = vunpack.c.l.b16 %v6151
        %v6898 = vunpack.c.h.b16 %v6151
        %v6899 = vunpack.c.l.b16 %v6152
        %v6900 = vunpack.c.h.b16 %v6152
        %v6901 = vunpack.c.l.b16 %v6153
        %v6902 = vunpack.c.h.b16 %v6153
        %v6903 = vunpack.c.l.b16 %v6154
        %v6904 = vunpack.c.h.b16 %v6154
        %v6905 = vunpack.c.l.b16 %v6155
        %v6906 = vunpack.c.h.b16 %v6155
        %v6907 = vunpack.c.l.b16 %v6156
        %v6908 = vunpack.c.h.b16 %v6156
        %v6909 = vunpack.c.l.b16 %v6157
        %v6910 = vunpack.c.h.b16 %v6157
        %v6911 = vunpack.c.l.b16 %v6158
        %v6912 = vunpack.c.h.b16 %v6158
        %v6913 = vunpack.c.l.b16 %v6159
        %v6914 = vunpack.c.h.b16 %v6159
        %v6915 = vunpack.c.l.b16 %v6160
        %v6916 = vunpack.c.h.b16 %v6160
        %v6917 = vunpack.c.l.b16 %v6161
        %v6918 = vunpack.c.h.b16 %v6161
        %v6919 = vpack.c.b16 %v6475, %v6471
        %v6920 = vpack.c.b16 %v6476, %v6472
        %v6921 = vpack.c.b16 %v6477, %v6473
        %v6922 = vpack.c.b16 %v6478, %v6474
        %v6923 = vpack.c.b16 %v6483, %v6479
        %v6924 = vpack.c.b16 %v6484, %v6480
        %v6925 = vpack.c.b16 %v6485, %v6481
        %v6926 = vpack.c.b16 %v6486, %v6482
        %v6927 = vpack.c.b16 %v6491, %v6487
        %v6928 = vpack.c.b16 %v6492, %v6488
        %v6929 = vpack.c.b16 %v6493, %v6489
        %v6930 = vpack.c.b16 %v6494, %v6490
        %v6931 = vpack.c.b16 %v6499, %v6495
        %v6932 = vpack.c.b16 %v6500, %v6496
        %v6933 = vpack.c.b16 %v6501, %v6497
        %v6934 = vpack.c.b16 %v6502, %v6498
        %v6935 = vpack.c.b16 %v6507, %v6503
        %v6936 = vpack.c.b16 %v6508, %v6504
        %v6937 = vpack.c.b16 %v6509, %v6505
        %v6938 = vpack.c.b16 %v6510, %v6506
        %v6939 = vpack.c.b16 %v6515, %v6511
        %v6940 = vpack.c.b16 %v6516, %v6512
        %v6941 = vpack.c.b16 %v6517, %v6513
        %v6942 = vpack.c.b16 %v6518, %v6514
        %v6943 = vpack.c.b16 %v6523, %v6519
        %v6944 = vpack.c.b16 %v6524, %v6520
        %v6945 = vpack.c.b16 %v6525, %v6521
        %v6946 = vpack.c.b16 %v6526, %v6522
        %v6947 = vpack.c.b16 %v6531, %v6527
        %v6948 = vpack.c.b16 %v6532, %v6528
        %v6949 = vpack.c.b16 %v6533, %v6529
        %v6950 = vpack.c.b16 %v6534, %v6530
        %v6951 = vpack.c.b16 %v6539, %v6535
        %v6952 = vpack.c.b16 %v6540, %v6536
        %v6953 = vpack.c.b16 %v6541, %v6537
        %v6954 = vpack.c.b16 %v6542, %v6538
        %v6955 = vpack.c.b16 %v6547, %v6543
        %v6956 = vpack.c.b16 %v6548, %v6544
        %v6957 = vpack.c.b16 %v6549, %v6545
        %v6958 = vpack.c.b16 %v6550, %v6546
        %v6959 = vpack.c.b16 %v6555, %v6551
        %v6960 = vpack.c.b16 %v6556, %v6552
        %v6961 = vpack.c.b16 %v6557, %v6553
        %v6962 = vpack.c.b16 %v6558, %v6554
        %v6963 = vpack.c.b16 %v6563, %v6559
        %v6964 = vpack.c.b16 %v6564, %v6560
        %v6965 = vpack.c.b16 %v6565, %v6561
        %v6966 = vpack.c.b16 %v6566, %v6562
        %v6967 = vpack.c.b16 %v6571, %v6567
        %v6968 = vpack.c.b16 %v6572, %v6568
        %v6969 = vpack.c.b16 %v6573, %v6569
        %v6970 = vpack.c.b16 %v6574, %v6570
        %v6971 = vpack.c.b16 %v6579, %v6575
        %v6972 = vpack.c.b16 %v6580, %v6576
        %v6973 = vpack.c.b16 %v6581, %v6577
        %v6974 = vpack.c.b16 %v6582, %v6578
        %v6975 = vpack.c.b16 %v6587, %v6583
        %v6976 = vpack.c.b16 %v6588, %v6584
        %v6977 = vpack.c.b16 %v6589, %v6585
        %v6978 = vpack.c.b16 %v6590, %v6586
        %v6979 = vpack.c.b16 %v6595, %v6591
        %v6980 = vpack.c.b16 %v6596, %v6592
        %v6981 = vpack.c.b16 %v6597, %v6593
        %v6982 = vpack.c.b16 %v6598, %v6594
        %v6983 = vpack.c.b16 %v6603, %v6599
        %v6984 = vpack.c.b16 %v6604, %v6600
        %v6985 = vpack.c.b16 %v6605, %v6601
        %v6986 = vpack.c.b16 %v6606, %v6602
        %v6987 = vpack.c.b16 %v6611, %v6607
        %v6988 = vpack.c.b16 %v6612, %v6608
        %v6989 = vpack.c.b16 %v6613, %v6609
        %v6990 = vpack.c.b16 %v6614, %v6610
        %v6991 = vpack.c.b16 %v6619, %v6615
        %v6992 = vpack.c.b16 %v6620, %v6616
        %v6993 = vpack.c.b16 %v6621, %v6617
        %v6994 = vpack.c.b16 %v6622, %v6618
        %v6995 = vpack.c.b16 %v6627, %v6623
        %v6996 = vpack.c.b16 %v6628, %v6624
        %v6997 = vpack.c.b16 %v6629, %v6625
        %v6998 = vpack.c.b16 %v6630, %v6626
        %v6999 = vpack.c.b16 %v6635, %v6631
        %v7000 = vpack.c.b16 %v6636, %v6632
        %v7001 = vpack.c.b16 %v6637, %v6633
        %v7002 = vpack.c.b16 %v6638, %v6634
        %v7003 = vpack.c.b16 %v6643, %v6639
        %v7004 = vpack.c.b16 %v6644, %v6640
        %v7005 = vpack.c.b16 %v6645, %v6641
        %v7006 = vpack.c.b16 %v6646, %v6642
        %v7007 = vpack.c.b16 %v6651, %v6647
        %v7008 = vpack.c.b16 %v6652, %v6648
        %v7009 = vpack.c.b16 %v6653, %v6649
        %v7010 = vpack.c.b16 %v6654, %v6650
        %v7011 = vpack.c.b16 %v6659, %v6655
        %v7012 = vpack.c.b16 %v6660, %v6656
        %v7013 = vpack.c.b16 %v6661, %v6657
        %v7014 = vpack.c.b16 %v6662, %v6658
        %v7015 = vpack.c.b16 %v6667, %v6663
        %v7016 = vpack.c.b16 %v6668, %v6664
        %v7017 = vpack.c.b16 %v6669, %v6665
        %v7018 = vpack.c.b16 %v6670, %v6666
        %v7019 = vpack.c.b16 %v6675, %v6671
        %v7020 = vpack.c.b16 %v6676, %v6672
        %v7021 = vpack.c.b16 %v6677, %v6673
        %v7022 = vpack.c.b16 %v6678, %v6674
        %v7023 = vpack.c.b16 %v6683, %v6679
        %v7024 = vpack.c.b16 %v6684, %v6680
        %v7025 = vpack.c.b16 %v6685, %v6681
        %v7026 = vpack.c.b16 %v6686, %v6682
        %v7027 = vpack.c.b16 %v6691, %v6687
        %v7028 = vpack.c.b16 %v6692, %v6688
        %v7029 = vpack.c.b16 %v6693, %v6689
        %v7030 = vpack.c.b16 %v6694, %v6690
        %v7031 = vpack.c.b16 %v6699, %v6695
        %v7032 = vpack.c.b16 %v6700, %v6696
        %v7033 = vpack.c.b16 %v6701, %v6697
        %v7034 = vpack.c.b16 %v6702, %v6698
        %v7035 = vpack.c.b16 %v6707, %v6703
        %v7036 = vpack.c.b16 %v6708, %v6704
        %v7037 = vpack.c.b16 %v6709, %v6705
        %v7038 = vpack.c.b16 %v6710, %v6706
        %v7039 = vpack.c.b16 %v6715, %v6711
        %v7040 = vpack.c.b16 %v6716, %v6712
        %v7041 = vpack.c.b16 %v6717, %v6713
        %v7042 = vpack.c.b16 %v6718, %v6714
        %v7043 = vpack.c.b16 %v6723, %v6719
        %v7044 = vpack.c.b16 %v6724, %v6720
        %v7045 = vpack.c.b16 %v6725, %v6721
        %v7046 = vpack.c.b16 %v6726, %v6722
        %v7047 = vpack.c.b16 %v6731, %v6727
        %v7048 = vpack.c.b16 %v6732, %v6728
        %v7049 = vpack.c.b16 %v6733, %v6729
        %v7050 = vpack.c.b16 %v6734, %v6730
        %v7051 = vpack.c.b16 %v6739, %v6735
        %v7052 = vpack.c.b16 %v6740, %v6736
        %v7053 = vpack.c.b16 %v6741, %v6737
        %v7054 = vpack.c.b16 %v6742, %v6738
        %v7055 = vpack.c.b16 %v6747, %v6743
        %v7056 = vpack.c.b16 %v6748, %v6744
        %v7057 = vpack.c.b16 %v6749, %v6745
        %v7058 = vpack.c.b16 %v6750, %v6746
        %v7059 = vpack.c.b16 %v6755, %v6751
        %v7060 = vpack.c.b16 %v6756, %v6752
        %v7061 = vpack.c.b16 %v6757, %v6753
        %v7062 = vpack.c.b16 %v6758, %v6754
        %v7063 = vpack.c.b16 %v6763, %v6759
        %v7064 = vpack.c.b16 %v6764, %v6760
        %v7065 = vpack.c.b16 %v6765, %v6761
        %v7066 = vpack.c.b16 %v6766, %v6762
        %v7067 = vpack.c.b16 %v6771, %v6767
        %v7068 = vpack.c.b16 %v6772, %v6768
        %v7069 = vpack.c.b16 %v6773, %v6769
        %v7070 = vpack.c.b16 %v6774, %v6770
        %v7071 = vpack.c.b16 %v6779, %v6775
        %v7072 = vpack.c.b16 %v6780, %v6776
        %v7073 = vpack.c.b16 %v6781, %v6777
        %v7074 = vpack.c.b16 %v6782, %v6778
        %v7075 = vpack.c.b16 %v6787, %v6783
        %v7076 = vpack.c.b16 %v6788, %v6784
        %v7077 = vpack.c.b16 %v6789, %v6785
        %v7078 = vpack.c.b16 %v6790, %v6786
        %v7079 = vpack.c.b16 %v6795, %v6791
        %v7080 = vpack.c.b16 %v6796, %v6792
        %v7081 = vpack.c.b16 %v6797, %v6793
        %v7082 = vpack.c.b16 %v6798, %v6794
        %v7083 = vpack.c.b16 %v6803, %v6799
        %v7084 = vpack.c.b16 %v6804, %v6800
        %v7085 = vpack.c.b16 %v6805, %v6801
        %v7086 = vpack.c.b16 %v6806, %v6802
        %v7087 = vpack.c.b16 %v6811, %v6807
        %v7088 = vpack.c.b16 %v6812, %v6808
        %v7089 = vpack.c.b16 %v6813, %v6809
        %v7090 = vpack.c.b16 %v6814, %v6810
        %v7091 = vpack.c.b16 %v6819, %v6815
        %v7092 = vpack.c.b16 %v6820, %v6816
        %v7093 = vpack.c.b16 %v6821, %v6817
        %v7094 = vpack.c.b16 %v6822, %v6818
        %v7095 = vpack.c.b16 %v6827, %v6823
        %v7096 = vpack.c.b16 %v6828, %v6824
        %v7097 = vpack.c.b16 %v6829, %v6825
        %v7098 = vpack.c.b16 %v6830, %v6826
        %v7099 = vpack.c.b16 %v6835, %v6831
        %v7100 = vpack.c.b16 %v6836, %v6832
        %v7101 = vpack.c.b16 %v6837, %v6833
        %v7102 = vpack.c.b16 %v6838, %v6834
        %v7103 = vpack.c.b16 %v6843, %v6839
        %v7104 = vpack.c.b16 %v6844, %v6840
        %v7105 = vpack.c.b16 %v6845, %v6841
        %v7106 = vpack.c.b16 %v6846, %v6842
        %v7107 = vpack.c.b16 %v6851, %v6847
        %v7108 = vpack.c.b16 %v6852, %v6848
        %v7109 = vpack.c.b16 %v6853, %v6849
        %v7110 = vpack.c.b16 %v6854, %v6850
        %v7111 = vpack.c.b16 %v6859, %v6855
        %v7112 = vpack.c.b16 %v6860, %v6856
        %v7113 = vpack.c.b16 %v6861, %v6857
        %v7114 = vpack.c.b16 %v6862, %v6858
        %v7115 = vpack.c.b16 %v6867, %v6863
        %v7116 = vpack.c.b16 %v6868, %v6864
        %v7117 = vpack.c.b16 %v6869, %v6865
        %v7118 = vpack.c.b16 %v6870, %v6866
        %v7119 = vpack.c.b16 %v6875, %v6871
        %v7120 = vpack.c.b16 %v6876, %v6872
        %v7121 = vpack.c.b16 %v6877, %v6873
        %v7122 = vpack.c.b16 %v6878, %v6874
        %v7123 = vpack.c.b16 %v6883, %v6879
        %v7124 = vpack.c.b16 %v6884, %v6880
        %v7125 = vpack.c.b16 %v6885, %v6881
        %v7126 = vpack.c.b16 %v6886, %v6882
        %v7127 = vpack.c.b16 %v6891, %v6887
        %v7128 = vpack.c.b16 %v6892, %v6888
        %v7129 = vpack.c.b16 %v6893, %v6889
        %v7130 = vpack.c.b16 %v6894, %v6890
        %v7131 = vpack.c.b16 %v6899, %v6895
        %v7132 = vpack.c.b16 %v6900, %v6896
        %v7133 = vpack.c.b16 %v6901, %v6897
        %v7134 = vpack.c.b16 %v6902, %v6898
        %v7135 = vpack.c.b16 %v6907, %v6903
        %v7136 = vpack.c.b16 %v6908, %v6904
        %v7137 = vpack.c.b16 %v6909, %v6905
        %v7138 = vpack.c.b16 %v6910, %v6906
        %v7139 = vpack.c.b16 %v6915, %v6911
        %v7140 = vpack.c.b16 %v6916, %v6912
        %v7141 = vpack.c.b16 %v6917, %v6913
        %v7142 = vpack.c.b16 %v6918, %v6914
        %7367 = vmatprep.subr.bf16.mxu0 %v6920
        %7368 = vmatpush1.bf16.msra.mxu0 %v6919
        %7369 = vmatprep.subr.bf16.mxu0 %v6924
        %7370 = vmatpush1.bf16.msra.mxu0 %v6923
        %7371 = vmatprep.subr.bf16.mxu0 %v6928
        %7372 = vmatpush1.bf16.msra.mxu0 %v6927
        %7373 = vmatprep.subr.bf16.mxu0 %v6932
        %7374 = vmatpush1.bf16.msra.mxu0 %v6931
        %7375 = vmatprep.subr.bf16.mxu0 %v6936
        %7376 = vmatpush1.bf16.msra.mxu0 %v6935
        %7377 = vmatprep.subr.bf16.mxu0 %v6940
        %7378 = vmatpush1.bf16.msra.mxu0 %v6939
        %7379 = vmatprep.subr.bf16.mxu0 %v6944
        %7380 = vmatpush1.bf16.msra.mxu0 %v6943
        %7381 = vmatprep.subr.bf16.mxu0 %v6948
        %7382 = vmatpush1.bf16.msra.mxu0 %v6947
        %7383 = vmatprep.subr.bf16.mxu0 %v6952
        %7384 = vmatpush1.bf16.msra.mxu0 %v6951
        %7385 = vmatprep.subr.bf16.mxu0 %v6956
        %7386 = vmatpush1.bf16.msra.mxu0 %v6955
        %7387 = vmatprep.subr.bf16.mxu0 %v6960
        %7388 = vmatpush1.bf16.msra.mxu0 %v6959
        %7389 = vmatprep.subr.bf16.mxu0 %v6964
        %7390 = vmatpush1.bf16.msra.mxu0 %v6963
        %7391 = vmatprep.subr.bf16.mxu0 %v6968
        %7392 = vmatpush1.bf16.msra.mxu0 %v6967
        %7393 = vmatprep.subr.bf16.mxu0 %v6972
        %7394 = vmatpush1.bf16.msra.mxu0 %v6971
        %7395 = vmatprep.subr.bf16.mxu0 %v6976
        %7396 = vmatpush1.bf16.msra.mxu0 %v6975
        %7397 = vmatprep.subr.bf16.mxu0 %v6980
        %7398 = vmatpush1.bf16.msra.mxu0 %v6979
        %7399 = vmatprep.mubr.bf16.mxu0 %v6204
        %7400 = vmatmul.mubr.bf16.gmra.mrb[0].mxu0 %v6197
        %v7401 = vpop.f32.mrb[0].mxu0
        %v7402 = vadd.f32 0.0, %v7401
        %v7403 = vpop.f32.mrb[0].mxu0
        %v7404 = vadd.f32 0.0, %v7403
        %v7405 = vpop.f32.mrb[0].mxu0
        %v7406 = vpop.f32.mrb[0].mxu0
        %7407 = vdwg.mxu0
        %7408 = vmatprep.subr.bf16.mxu0 %v6984
        %7409 = vmatpush1.bf16.msra.mxu0 %v6983
        %7410 = vmatprep.subr.bf16.mxu0 %v6988
        %7411 = vmatpush1.bf16.msra.mxu0 %v6987
        %7412 = vmatprep.subr.bf16.mxu0 %v6992
        %7413 = vmatpush1.bf16.msra.mxu0 %v6991
        %7414 = vmatprep.subr.bf16.mxu0 %v6996
        %7415 = vmatpush1.bf16.msra.mxu0 %v6995
        %7416 = vmatprep.subr.bf16.mxu0 %v7000
        %7417 = vmatpush1.bf16.msra.mxu0 %v6999
        %7418 = vmatprep.subr.bf16.mxu0 %v7004
        %7419 = vmatpush1.bf16.msra.mxu0 %v7003
        %7420 = vmatprep.subr.bf16.mxu0 %v7008
        %7421 = vmatpush1.bf16.msra.mxu0 %v7007
        %7422 = vmatprep.subr.bf16.mxu0 %v7012
        %7423 = vmatpush1.bf16.msra.mxu0 %v7011
        %7424 = vmatprep.subr.bf16.mxu0 %v7016
        %7425 = vmatpush1.bf16.msra.mxu0 %v7015
        %7426 = vmatprep.subr.bf16.mxu0 %v7020
        %7427 = vmatpush1.bf16.msra.mxu0 %v7019
        %7428 = vmatprep.subr.bf16.mxu0 %v7024
        %7429 = vmatpush1.bf16.msra.mxu0 %v7023
        %7430 = vmatprep.subr.bf16.mxu0 %v7028
        %7431 = vmatpush1.bf16.msra.mxu0 %v7027
        %7432 = vmatprep.subr.bf16.mxu0 %v7032
        %7433 = vmatpush1.bf16.msra.mxu0 %v7031
        %7434 = vmatprep.subr.bf16.mxu0 %v7036
        %7435 = vmatpush1.bf16.msra.mxu0 %v7035
        %7436 = vmatprep.subr.bf16.mxu0 %v7040
        %7437 = vmatpush1.bf16.msra.mxu0 %v7039
        %7438 = vmatprep.subr.bf16.mxu0 %v7044
        %7439 = vmatpush1.bf16.msra.mxu0 %v7043
        %7440 = vmatprep.mubr.bf16.mxu0 %v6218
        %7441 = vmatmul.mubr.bf16.gmra.mrb[0].mxu0 %v6211
        %v7442 = vpop.f32.mrb[0].mxu0
        %v7443 = vadd.f32 %v7402, %v7442
        %v7444 = vpop.f32.mrb[0].mxu0
        %v7445 = vadd.f32 %v7404, %v7444
        %v7446 = vpop.f32.mrb[0].mxu0
        %v7447 = vpop.f32.mrb[0].mxu0
        %7448 = vdwg.mxu0
        %7449 = vmatprep.subr.bf16.mxu0 %v7048
        %7450 = vmatpush1.bf16.msra.mxu0 %v7047
        %7451 = vmatprep.subr.bf16.mxu0 %v7052
        %7452 = vmatpush1.bf16.msra.mxu0 %v7051
        %7453 = vmatprep.subr.bf16.mxu0 %v7056
        %7454 = vmatpush1.bf16.msra.mxu0 %v7055
        %7455 = vmatprep.subr.bf16.mxu0 %v7060
        %7456 = vmatpush1.bf16.msra.mxu0 %v7059
        %7457 = vmatprep.subr.bf16.mxu0 %v7064
        %7458 = vmatpush1.bf16.msra.mxu0 %v7063
        %7459 = vmatprep.subr.bf16.mxu0 %v7068
        %7460 = vmatpush1.bf16.msra.mxu0 %v7067
        %7461 = vmatprep.subr.bf16.mxu0 %v7072
        %7462 = vmatpush1.bf16.msra.mxu0 %v7071
        %7463 = vmatprep.subr.bf16.mxu0 %v7076
        %7464 = vmatpush1.bf16.msra.mxu0 %v7075
        %7465 = vmatprep.subr.bf16.mxu0 %v7080
        %7466 = vmatpush1.bf16.msra.mxu0 %v7079
        %7467 = vmatprep.subr.bf16.mxu0 %v7084
        %7468 = vmatpush1.bf16.msra.mxu0 %v7083
        %7469 = vmatprep.subr.bf16.mxu0 %v7088
        %7470 = vmatpush1.bf16.msra.mxu0 %v7087
        %7471 = vmatprep.subr.bf16.mxu0 %v7092
        %7472 = vmatpush1.bf16.msra.mxu0 %v7091
        %7473 = vmatprep.subr.bf16.mxu0 %v7096
        %7474 = vmatpush1.bf16.msra.mxu0 %v7095
        %7475 = vmatprep.subr.bf16.mxu0 %v7100
        %7476 = vmatpush1.bf16.msra.mxu0 %v7099
        %7477 = vmatprep.subr.bf16.mxu0 %v7104
        %7478 = vmatpush1.bf16.msra.mxu0 %v7103
        %7479 = vmatprep.subr.bf16.mxu0 %v7108
        %7480 = vmatpush1.bf16.msra.mxu0 %v7107
        %7481 = vmatprep.mubr.bf16.mxu0 %v6232
        %7482 = vmatmul.mubr.bf16.gmra.mrb[0].mxu0 %v6225
        %v7483 = vpop.f32.mrb[0].mxu0
        %v7484 = vadd.f32 %v7443, %v7483
        %v7485 = vpop.f32.mrb[0].mxu0
        %v7486 = vadd.f32 %v7445, %v7485
        %v7487 = vpop.f32.mrb[0].mxu0
        %v7488 = vpop.f32.mrb[0].mxu0
        %7489 = vdwg.mxu0
        %7490 = vmatprep.subr.bf16.mxu0 %v7112
        %7491 = vmatpush1.bf16.msra.mxu0 %v7111
        %7492 = vmatprep.subr.bf16.mxu0 %v7116
        %7493 = vmatpush1.bf16.msra.mxu0 %v7115
        %7494 = vmatprep.subr.bf16.mxu0 %v7120
        %7495 = vmatpush1.bf16.msra.mxu0 %v7119
        %7496 = vmatprep.subr.bf16.mxu0 %v7124
        %7497 = vmatpush1.bf16.msra.mxu0 %v7123
        %7498 = vmatprep.subr.bf16.mxu0 %v7128
        %7499 = vmatpush1.bf16.msra.mxu0 %v7127
        %7500 = vmatprep.subr.bf16.mxu0 %v7132
        %7501 = vmatpush1.bf16.msra.mxu0 %v7131
        %7502 = vmatprep.subr.bf16.mxu0 %v7136
        %7503 = vmatpush1.bf16.msra.mxu0 %v7135
        %7504 = vmatprep.subr.bf16.mxu0 %v7140
        %7505 = vmatpush1.bf16.msra.mxu0 %v7139
        %7506 = vmatprep.subr.bf16.mxu0 0
        %7507 = vmatpush1.bf16.msra.mxu0 0
        %7508 = vmatprep.subr.bf16.mxu0 0
        %7509 = vmatpush1.bf16.msra.mxu0 0
        %7510 = vmatprep.subr.bf16.mxu0 0
        %7511 = vmatpush1.bf16.msra.mxu0 0
        %7512 = vmatprep.subr.bf16.mxu0 0
        %7513 = vmatpush1.bf16.msra.mxu0 0
        %7514 = vmatprep.subr.bf16.mxu0 0
        %7515 = vmatpush1.bf16.msra.mxu0 0
        %7516 = vmatprep.subr.bf16.mxu0 0
        %7517 = vmatpush1.bf16.msra.mxu0 0
        %7518 = vmatprep.subr.bf16.mxu0 0
        %7519 = vmatpush1.bf16.msra.mxu0 0
        %7520 = vmatprep.subr.bf16.mxu0 0
        %7521 = vmatpush1.bf16.msra.mxu0 0
        %7522 = vmatprep.mubr.bf16.mxu0 0
        %7523 = vmatmul.mubr.bf16.gmra.mrb[0].mxu0 %v6239
        %v7524 = vpop.f32.mrb[0].mxu0
        %v7525 = vadd.f32 %v7484, %v7524
        %v7526 = vpop.f32.mrb[0].mxu0
        %v7527 = vadd.f32 %v7486, %v7526
        %v7528 = vpop.f32.mrb[0].mxu0
        %v7529 = vpop.f32.mrb[0].mxu0
        %7530 = vdwg.mxu0
        %7531 = vmatprep.subr.bf16.mxu0 %v6922
        %7532 = vmatpush1.bf16.msra.mxu0 %v6921
        %7533 = vmatprep.subr.bf16.mxu0 %v6926
        %7534 = vmatpush1.bf16.msra.mxu0 %v6925
        %7535 = vmatprep.subr.bf16.mxu0 %v6930
        %7536 = vmatpush1.bf16.msra.mxu0 %v6929
        %7537 = vmatprep.subr.bf16.mxu0 %v6934
        %7538 = vmatpush1.bf16.msra.mxu0 %v6933
        %7539 = vmatprep.subr.bf16.mxu0 %v6938
        %7540 = vmatpush1.bf16.msra.mxu0 %v6937
        %7541 = vmatprep.subr.bf16.mxu0 %v6942
        %7542 = vmatpush1.bf16.msra.mxu0 %v6941
        %7543 = vmatprep.subr.bf16.mxu0 %v6946
        %7544 = vmatpush1.bf16.msra.mxu0 %v6945
        %7545 = vmatprep.subr.bf16.mxu0 %v6950
        %7546 = vmatpush1.bf16.msra.mxu0 %v6949
        %7547 = vmatprep.subr.bf16.mxu0 %v6954
        %7548 = vmatpush1.bf16.msra.mxu0 %v6953
        %7549 = vmatprep.subr.bf16.mxu0 %v6958
        %7550 = vmatpush1.bf16.msra.mxu0 %v6957
        %7551 = vmatprep.subr.bf16.mxu0 %v6962
        %7552 = vmatpush1.bf16.msra.mxu0 %v6961
        %7553 = vmatprep.subr.bf16.mxu0 %v6966
        %7554 = vmatpush1.bf16.msra.mxu0 %v6965
        %7555 = vmatprep.subr.bf16.mxu0 %v6970
        %7556 = vmatpush1.bf16.msra.mxu0 %v6969
        %7557 = vmatprep.subr.bf16.mxu0 %v6974
        %7558 = vmatpush1.bf16.msra.mxu0 %v6973
        %7559 = vmatprep.subr.bf16.mxu0 %v6978
        %7560 = vmatpush1.bf16.msra.mxu0 %v6977
        %7561 = vmatprep.subr.bf16.mxu0 %v6982
        %7562 = vmatpush1.bf16.msra.mxu0 %v6981
        %7563 = vmatprep.mubr.bf16.mxu0 %v6204
        %7564 = vmatmul.mubr.bf16.gmra.mrb[0].mxu0 %v6197
        %v7565 = vpop.f32.mrb[0].mxu0
        %v7566 = vadd.f32 0.0, %v7565
        %v7567 = vpop.f32.mrb[0].mxu0
        %v7568 = vadd.f32 0.0, %v7567
        %v7569 = vpop.f32.mrb[0].mxu0
        %v7570 = vpop.f32.mrb[0].mxu0
        %7571 = vdwg.mxu0
        %7572 = vmatprep.subr.bf16.mxu0 %v6986
        %7573 = vmatpush1.bf16.msra.mxu0 %v6985
        %7574 = vmatprep.subr.bf16.mxu0 %v6990
        %7575 = vmatpush1.bf16.msra.mxu0 %v6989
        %7576 = vmatprep.subr.bf16.mxu0 %v6994
        %7577 = vmatpush1.bf16.msra.mxu0 %v6993
        %7578 = vmatprep.subr.bf16.mxu0 %v6998
        %7579 = vmatpush1.bf16.msra.mxu0 %v6997
        %7580 = vmatprep.subr.bf16.mxu0 %v7002
        %7581 = vmatpush1.bf16.msra.mxu0 %v7001
        %7582 = vmatprep.subr.bf16.mxu0 %v7006
        %7583 = vmatpush1.bf16.msra.mxu0 %v7005
        %7584 = vmatprep.subr.bf16.mxu0 %v7010
        %7585 = vmatpush1.bf16.msra.mxu0 %v7009
        %7586 = vmatprep.subr.bf16.mxu0 %v7014
        %7587 = vmatpush1.bf16.msra.mxu0 %v7013
        %7588 = vmatprep.subr.bf16.mxu0 %v7018
        %7589 = vmatpush1.bf16.msra.mxu0 %v7017
        %7590 = vmatprep.subr.bf16.mxu0 %v7022
        %7591 = vmatpush1.bf16.msra.mxu0 %v7021
        %7592 = vmatprep.subr.bf16.mxu0 %v7026
        %7593 = vmatpush1.bf16.msra.mxu0 %v7025
        %7594 = vmatprep.subr.bf16.mxu0 %v7030
        %7595 = vmatpush1.bf16.msra.mxu0 %v7029
        %7596 = vmatprep.subr.bf16.mxu0 %v7034
        %7597 = vmatpush1.bf16.msra.mxu0 %v7033
        %7598 = vmatprep.subr.bf16.mxu0 %v7038
        %7599 = vmatpush1.bf16.msra.mxu0 %v7037
        %7600 = vmatprep.subr.bf16.mxu0 %v7042
        %7601 = vmatpush1.bf16.msra.mxu0 %v7041
        %7602 = vmatprep.subr.bf16.mxu0 %v7046
        %7603 = vmatpush1.bf16.msra.mxu0 %v7045
        %7604 = vmatprep.mubr.bf16.mxu0 %v6218
        %7605 = vmatmul.mubr.bf16.gmra.mrb[0].mxu0 %v6211
        %v7606 = vpop.f32.mrb[0].mxu0
        %v7607 = vadd.f32 %v7566, %v7606
        %v7608 = vpop.f32.mrb[0].mxu0
        %v7609 = vadd.f32 %v7568, %v7608
        %v7610 = vpop.f32.mrb[0].mxu0
        %v7611 = vpop.f32.mrb[0].mxu0
        %7612 = vdwg.mxu0
        %7613 = vmatprep.subr.bf16.mxu0 %v7050
        %7614 = vmatpush1.bf16.msra.mxu0 %v7049
        %7615 = vmatprep.subr.bf16.mxu0 %v7054
        %7616 = vmatpush1.bf16.msra.mxu0 %v7053
        %7617 = vmatprep.subr.bf16.mxu0 %v7058
        %7618 = vmatpush1.bf16.msra.mxu0 %v7057
        %7619 = vmatprep.subr.bf16.mxu0 %v7062
        %7620 = vmatpush1.bf16.msra.mxu0 %v7061
        %7621 = vmatprep.subr.bf16.mxu0 %v7066
        %7622 = vmatpush1.bf16.msra.mxu0 %v7065
        %7623 = vmatprep.subr.bf16.mxu0 %v7070
        %7624 = vmatpush1.bf16.msra.mxu0 %v7069
        %7625 = vmatprep.subr.bf16.mxu0 %v7074
        %7626 = vmatpush1.bf16.msra.mxu0 %v7073
        %7627 = vmatprep.subr.bf16.mxu0 %v7078
        %7628 = vmatpush1.bf16.msra.mxu0 %v7077
        %7629 = vmatprep.subr.bf16.mxu0 %v7082
        %7630 = vmatpush1.bf16.msra.mxu0 %v7081
        %7631 = vmatprep.subr.bf16.mxu0 %v7086
        %7632 = vmatpush1.bf16.msra.mxu0 %v7085
        %7633 = vmatprep.subr.bf16.mxu0 %v7090
        %7634 = vmatpush1.bf16.msra.mxu0 %v7089
        %7635 = vmatprep.subr.bf16.mxu0 %v7094
        %7636 = vmatpush1.bf16.msra.mxu0 %v7093
        %7637 = vmatprep.subr.bf16.mxu0 %v7098
        %7638 = vmatpush1.bf16.msra.mxu0 %v7097
        %7639 = vmatprep.subr.bf16.mxu0 %v7102
        %7640 = vmatpush1.bf16.msra.mxu0 %v7101
        %7641 = vmatprep.subr.bf16.mxu0 %v7106
        %7642 = vmatpush1.bf16.msra.mxu0 %v7105
        %7643 = vmatprep.subr.bf16.mxu0 %v7110
        %7644 = vmatpush1.bf16.msra.mxu0 %v7109
        %7645 = vmatprep.mubr.bf16.mxu0 %v6232
        %7646 = vmatmul.mubr.bf16.gmra.mrb[0].mxu0 %v6225
        %v7647 = vpop.f32.mrb[0].mxu0
        %v7648 = vadd.f32 %v7607, %v7647
        %v7649 = vpop.f32.mrb[0].mxu0
        %v7650 = vadd.f32 %v7609, %v7649
        %v7651 = vpop.f32.mrb[0].mxu0
        %v7652 = vpop.f32.mrb[0].mxu0
        %7653 = vdwg.mxu0
        %7654 = vmatprep.subr.bf16.mxu0 %v7114
        %7655 = vmatpush1.bf16.msra.mxu0 %v7113
        %7656 = vmatprep.subr.bf16.mxu0 %v7118
        %7657 = vmatpush1.bf16.msra.mxu0 %v7117
        %7658 = vmatprep.subr.bf16.mxu0 %v7122
        %7659 = vmatpush1.bf16.msra.mxu0 %v7121
        %7660 = vmatprep.subr.bf16.mxu0 %v7126
        %7661 = vmatpush1.bf16.msra.mxu0 %v7125
        %7662 = vmatprep.subr.bf16.mxu0 %v7130
        %7663 = vmatpush1.bf16.msra.mxu0 %v7129
        %7664 = vmatprep.subr.bf16.mxu0 %v7134
        %7665 = vmatpush1.bf16.msra.mxu0 %v7133
        %7666 = vmatprep.subr.bf16.mxu0 %v7138
        %7667 = vmatpush1.bf16.msra.mxu0 %v7137
        %7668 = vmatprep.subr.bf16.mxu0 %v7142
        %7669 = vmatpush1.bf16.msra.mxu0 %v7141
        %7670 = vmatprep.subr.bf16.mxu0 0
        %7671 = vmatpush1.bf16.msra.mxu0 0
        %7672 = vmatprep.subr.bf16.mxu0 0
        %7673 = vmatpush1.bf16.msra.mxu0 0
        %7674 = vmatprep.subr.bf16.mxu0 0
        %7675 = vmatpush1.bf16.msra.mxu0 0
        %7676 = vmatprep.subr.bf16.mxu0 0
        %7677 = vmatpush1.bf16.msra.mxu0 0
        %7678 = vmatprep.subr.bf16.mxu0 0
        %7679 = vmatpush1.bf16.msra.mxu0 0
        %7680 = vmatprep.subr.bf16.mxu0 0
        %7681 = vmatpush1.bf16.msra.mxu0 0
        %7682 = vmatprep.subr.bf16.mxu0 0
        %7683 = vmatpush1.bf16.msra.mxu0 0
        %7684 = vmatprep.subr.bf16.mxu0 0
        %7685 = vmatpush1.bf16.msra.mxu0 0
        %7686 = vmatprep.mubr.bf16.mxu0 0
        %7687 = vmatmul.mubr.bf16.gmra.mrb[0].mxu0 %v6239
        %v7688 = vpop.f32.mrb[0].mxu0
        %v7689 = vadd.f32 %v7648, %v7688
        %v7690 = vpop.f32.mrb[0].mxu0
        %v7691 = vadd.f32 %v7650, %v7690
        %v7692 = vpop.f32.mrb[0].mxu0
        %v7693 = vpop.f32.mrb[0].mxu0
        %7694 = vdwg.mxu0
        %v7695 = vpack.c.b16 %v6170, %v6170
        %v7696 = vpack.c.b16 %v6171, %v6171
        %v7697 = vpack.c.b16 %v6172, %v6172
        %v7698 = vpack.c.b16 %v6173, %v6173
        %v7699 = vpack.c.b16 %v6174, %v6174
        %v7700 = vpack.c.b16 %v6175, %v6175
        %v7701 = vpack.c.b16 %v6176, %v6176
        %v7933 = vunpack.c.l.b16 %v5709
        %v7934 = vunpack.c.h.b16 %v5709
        %v7935 = vunpack.c.l.b16 %v5710
        %v7936 = vunpack.c.h.b16 %v5710
        %v7937 = vunpack.c.l.b16 %v5711
        %v7938 = vunpack.c.h.b16 %v5711
        %v7939 = vunpack.c.l.b16 %v5712
        %v7940 = vunpack.c.h.b16 %v5712
        %v7941 = vunpack.c.l.b16 %v5713
        %v7942 = vunpack.c.h.b16 %v5713
        %v7943 = vunpack.c.l.b16 %v5714
        %v7944 = vunpack.c.h.b16 %v5714
        %v7945 = vunpack.c.l.b16 %v5715
        %v7946 = vunpack.c.h.b16 %v5715
        %v7947 = vunpack.c.l.b16 %v5716
        %v7948 = vunpack.c.h.b16 %v5716
        %v7949 = vunpack.c.l.b16 %v5717
        %v7950 = vunpack.c.h.b16 %v5717
        %v7951 = vunpack.c.l.b16 %v5718
        %v7952 = vunpack.c.h.b16 %v5718
        %v7953 = vunpack.c.l.b16 %v5719
        %v7954 = vunpack.c.h.b16 %v5719
        %v7955 = vunpack.c.l.b16 %v5720
        %v7956 = vunpack.c.h.b16 %v5720
        %v7957 = vunpack.c.l.b16 %v5721
        %v7958 = vunpack.c.h.b16 %v5721
        %v7959 = vunpack.c.l.b16 %v5722
        %v7960 = vunpack.c.h.b16 %v5722
        %v7961 = vunpack.c.l.b16 %v5723
        %v7962 = vunpack.c.h.b16 %v5723
        %v7963 = vunpack.c.l.b16 %v5724
        %v7964 = vunpack.c.h.b16 %v5724
        %v7965 = vunpack.c.l.b16 %v5725
        %v7966 = vunpack.c.h.b16 %v5725
        %v7967 = vunpack.c.l.b16 %v5726
        %v7968 = vunpack.c.h.b16 %v5726
        %v7969 = vunpack.c.l.b16 %v5727
        %v7970 = vunpack.c.h.b16 %v5727
        %v7971 = vunpack.c.l.b16 %v5728
        %v7972 = vunpack.c.h.b16 %v5728
        %v7973 = vunpack.c.l.b16 %v5729
        %v7974 = vunpack.c.h.b16 %v5729
        %v7975 = vunpack.c.l.b16 %v5730
        %v7976 = vunpack.c.h.b16 %v5730
        %v7977 = vunpack.c.l.b16 %v5731
        %v7978 = vunpack.c.h.b16 %v5731
        %v7979 = vunpack.c.l.b16 %v5732
        %v7980 = vunpack.c.h.b16 %v5732
        %v7981 = vunpack.c.l.b16 %v5733
        %v7982 = vunpack.c.h.b16 %v5733
        %v7983 = vunpack.c.l.b16 %v5734
        %v7984 = vunpack.c.h.b16 %v5734
        %v7985 = vunpack.c.l.b16 %v5735
        %v7986 = vunpack.c.h.b16 %v5735
        %v7987 = vunpack.c.l.b16 %v5736
        %v7988 = vunpack.c.h.b16 %v5736
        %v7989 = vunpack.c.l.b16 %v5737
        %v7990 = vunpack.c.h.b16 %v5737
        %v7991 = vunpack.c.l.b16 %v5738
        %v7992 = vunpack.c.h.b16 %v5738
        %v7993 = vunpack.c.l.b16 %v5739
        %v7994 = vunpack.c.h.b16 %v5739
        %v7995 = vunpack.c.l.b16 %v5740
        %v7996 = vunpack.c.h.b16 %v5740
        %v7997 = vunpack.c.l.b16 %v5741
        %v7998 = vunpack.c.h.b16 %v5741
        %v7999 = vunpack.c.l.b16 %v5742
        %v8000 = vunpack.c.h.b16 %v5742
        %v8001 = vunpack.c.l.b16 %v5743
        %v8002 = vunpack.c.h.b16 %v5743
        %v8003 = vunpack.c.l.b16 %v5744
        %v8004 = vunpack.c.h.b16 %v5744
        %v8005 = vunpack.c.l.b16 %v5745
        %v8006 = vunpack.c.h.b16 %v5745
        %v8007 = vunpack.c.l.b16 %v5746
        %v8008 = vunpack.c.h.b16 %v5746
        %v8009 = vunpack.c.l.b16 %v5747
        %v8010 = vunpack.c.h.b16 %v5747
        %v8011 = vunpack.c.l.b16 %v5748
        %v8012 = vunpack.c.h.b16 %v5748
        %v8013 = vunpack.c.l.b16 %v5749
        %v8014 = vunpack.c.h.b16 %v5749
        %v8015 = vunpack.c.l.b16 %v5750
        %v8016 = vunpack.c.h.b16 %v5750
        %v8017 = vunpack.c.l.b16 %v5751
        %v8018 = vunpack.c.h.b16 %v5751
        %v8019 = vunpack.c.l.b16 %v5752
        %v8020 = vunpack.c.h.b16 %v5752
        %v8021 = vunpack.c.l.b16 %v5753
        %v8022 = vunpack.c.h.b16 %v5753
        %v8023 = vunpack.c.l.b16 %v5754
        %v8024 = vunpack.c.h.b16 %v5754
        %v8025 = vunpack.c.l.b16 %v5755
        %v8026 = vunpack.c.h.b16 %v5755
        %v8027 = vunpack.c.l.b16 %v5756
        %v8028 = vunpack.c.h.b16 %v5756
        %v8029 = vunpack.c.l.b16 %v5757
        %v8030 = vunpack.c.h.b16 %v5757
        %v8031 = vunpack.c.l.b16 %v5758
        %v8032 = vunpack.c.h.b16 %v5758
        %v8033 = vunpack.c.l.b16 %v5759
        %v8034 = vunpack.c.h.b16 %v5759
        %v8035 = vunpack.c.l.b16 %v5760
        %v8036 = vunpack.c.h.b16 %v5760
        %v8037 = vunpack.c.l.b16 %v5761
        %v8038 = vunpack.c.h.b16 %v5761
        %v8039 = vunpack.c.l.b16 %v5762
        %v8040 = vunpack.c.h.b16 %v5762
        %v8041 = vunpack.c.l.b16 %v5763
        %v8042 = vunpack.c.h.b16 %v5763
        %v8043 = vunpack.c.l.b16 %v5764
        %v8044 = vunpack.c.h.b16 %v5764
        %v8045 = vunpack.c.l.b16 %v5765
        %v8046 = vunpack.c.h.b16 %v5765
        %v8047 = vunpack.c.l.b16 %v5766
        %v8048 = vunpack.c.h.b16 %v5766
        %v8049 = vunpack.c.l.b16 %v5767
        %v8050 = vunpack.c.h.b16 %v5767
        %v8051 = vunpack.c.l.b16 %v5768
        %v8052 = vunpack.c.h.b16 %v5768
        %v8053 = vunpack.c.l.b16 %v5769
        %v8054 = vunpack.c.h.b16 %v5769
        %v8055 = vunpack.c.l.b16 %v5770
        %v8056 = vunpack.c.h.b16 %v5770
        %v8057 = vunpack.c.l.b16 %v5771
        %v8058 = vunpack.c.h.b16 %v5771
        %v8059 = vunpack.c.l.b16 %v5772
        %v8060 = vunpack.c.h.b16 %v5772
        %v8061 = vunpack.c.l.b16 %v5773
        %v8062 = vunpack.c.h.b16 %v5773
        %v8063 = vunpack.c.l.b16 %v5774
        %v8064 = vunpack.c.h.b16 %v5774
        %v8065 = vunpack.c.l.b16 %v5775
        %v8066 = vunpack.c.h.b16 %v5775
        %v8067 = vunpack.c.l.b16 %v5776
        %v8068 = vunpack.c.h.b16 %v5776
        %v8069 = vunpack.c.l.b16 %v5777
        %v8070 = vunpack.c.h.b16 %v5777
        %v8071 = vunpack.c.l.b16 %v5778
        %v8072 = vunpack.c.h.b16 %v5778
        %v8073 = vunpack.c.l.b16 %v5779
        %v8074 = vunpack.c.h.b16 %v5779
        %v8075 = vunpack.c.l.b16 %v5780
        %v8076 = vunpack.c.h.b16 %v5780
        %v8077 = vunpack.c.l.b16 %v5781
        %v8078 = vunpack.c.h.b16 %v5781
        %v8079 = vunpack.c.l.b16 %v5782
        %v8080 = vunpack.c.h.b16 %v5782
        %v8081 = vunpack.c.l.b16 %v5783
        %v8082 = vunpack.c.h.b16 %v5783
        %v8083 = vunpack.c.l.b16 %v5784
        %v8084 = vunpack.c.h.b16 %v5784
        %v8085 = vunpack.c.l.b16 %v5785
        %v8086 = vunpack.c.h.b16 %v5785
        %v8087 = vunpack.c.l.b16 %v5786
        %v8088 = vunpack.c.h.b16 %v5786
        %v8089 = vunpack.c.l.b16 %v5787
        %v8090 = vunpack.c.h.b16 %v5787
        %v8091 = vunpack.c.l.b16 %v5788
        %v8092 = vunpack.c.h.b16 %v5788
        %v8093 = vunpack.c.l.b16 %v5789
        %v8094 = vunpack.c.h.b16 %v5789
        %v8095 = vunpack.c.l.b16 %v5790
        %v8096 = vunpack.c.h.b16 %v5790
        %v8097 = vunpack.c.l.b16 %v5791
        %v8098 = vunpack.c.h.b16 %v5791
        %v8099 = vunpack.c.l.b16 %v5792
        %v8100 = vunpack.c.h.b16 %v5792
        %v8101 = vunpack.c.l.b16 %v5793
        %v8102 = vunpack.c.h.b16 %v5793
        %v8103 = vunpack.c.l.b16 %v5794
        %v8104 = vunpack.c.h.b16 %v5794
        %v8105 = vunpack.c.l.b16 %v5795
        %v8106 = vunpack.c.h.b16 %v5795
        %v8107 = vunpack.c.l.b16 %v5796
        %v8108 = vunpack.c.h.b16 %v5796
        %v8109 = vunpack.c.l.b16 %v5797
        %v8110 = vunpack.c.h.b16 %v5797
        %v8111 = vunpack.c.l.b16 %v5798
        %v8112 = vunpack.c.h.b16 %v5798
        %v8113 = vunpack.c.l.b16 %v5799
        %v8114 = vunpack.c.h.b16 %v5799
        %v8115 = vunpack.c.l.b16 %v5800
        %v8116 = vunpack.c.h.b16 %v5800
        %v8117 = vunpack.c.l.b16 %v5801
        %v8118 = vunpack.c.h.b16 %v5801
        %v8119 = vunpack.c.l.b16 %v5802
        %v8120 = vunpack.c.h.b16 %v5802
        %v8121 = vunpack.c.l.b16 %v5803
        %v8122 = vunpack.c.h.b16 %v5803
        %v8123 = vunpack.c.l.b16 %v5804
        %v8124 = vunpack.c.h.b16 %v5804
        %v8125 = vunpack.c.l.b16 %v5805
        %v8126 = vunpack.c.h.b16 %v5805
        %v8127 = vunpack.c.l.b16 %v5806
        %v8128 = vunpack.c.h.b16 %v5806
        %v8129 = vunpack.c.l.b16 %v5807
        %v8130 = vunpack.c.h.b16 %v5807
        %v8131 = vunpack.c.l.b16 %v5808
        %v8132 = vunpack.c.h.b16 %v5808
        %v8133 = vunpack.c.l.b16 %v5809
        %v8134 = vunpack.c.h.b16 %v5809
        %v8135 = vunpack.c.l.b16 %v5810
        %v8136 = vunpack.c.h.b16 %v5810
        %v8137 = vunpack.c.l.b16 %v5811
        %v8138 = vunpack.c.h.b16 %v5811
        %v8139 = vunpack.c.l.b16 %v5812
        %v8140 = vunpack.c.h.b16 %v5812
        %v8141 = vunpack.c.l.b16 %v5813
        %v8142 = vunpack.c.h.b16 %v5813
        %v8143 = vunpack.c.l.b16 %v5814
        %v8144 = vunpack.c.h.b16 %v5814
        %v8145 = vunpack.c.l.b16 %v5815
        %v8146 = vunpack.c.h.b16 %v5815
        %v8147 = vunpack.c.l.b16 %v5816
        %v8148 = vunpack.c.h.b16 %v5816
        %v8149 = vunpack.c.l.b16 %v5817
        %v8150 = vunpack.c.h.b16 %v5817
        %v8151 = vunpack.c.l.b16 %v5818
        %v8152 = vunpack.c.h.b16 %v5818
        %v8153 = vunpack.c.l.b16 %v5819
        %v8154 = vunpack.c.h.b16 %v5819
        %v8155 = vunpack.c.l.b16 %v5820
        %v8156 = vunpack.c.h.b16 %v5820
        %v8157 = vunpack.c.l.b16 %v5821
        %v8158 = vunpack.c.h.b16 %v5821
        %v8159 = vunpack.c.l.b16 %v5822
        %v8160 = vunpack.c.h.b16 %v5822
        %v8161 = vunpack.c.l.b16 %v5823
        %v8162 = vunpack.c.h.b16 %v5823
        %v8163 = vunpack.c.l.b16 %v5824
        %v8164 = vunpack.c.h.b16 %v5824
        %v8165 = vunpack.c.l.b16 %v5825
        %v8166 = vunpack.c.h.b16 %v5825
        %v8167 = vunpack.c.l.b16 %v5826
        %v8168 = vunpack.c.h.b16 %v5826
        %v8169 = vunpack.c.l.b16 %v5827
        %v8170 = vunpack.c.h.b16 %v5827
        %v8171 = vunpack.c.l.b16 %v5828
        %v8172 = vunpack.c.h.b16 %v5828
        %v8173 = vunpack.c.l.b16 %v5829
        %v8174 = vunpack.c.h.b16 %v5829
        %v8175 = vunpack.c.l.b16 %v5830
        %v8176 = vunpack.c.h.b16 %v5830
        %v8177 = vunpack.c.l.b16 %v5831
        %v8178 = vunpack.c.h.b16 %v5831
        %v8179 = vunpack.c.l.b16 %v5832
        %v8180 = vunpack.c.h.b16 %v5832
        %v8181 = vunpack.c.l.b16 %v5833
        %v8182 = vunpack.c.h.b16 %v5833
        %v8183 = vunpack.c.l.b16 %v5834
        %v8184 = vunpack.c.h.b16 %v5834
        %v8185 = vunpack.c.l.b16 %v5835
        %v8186 = vunpack.c.h.b16 %v5835
        %v8187 = vunpack.c.l.b16 %v5836
        %v8188 = vunpack.c.h.b16 %v5836
        %v8189 = vunpack.c.l.b16 %v5837
        %v8190 = vunpack.c.h.b16 %v5837
        %v8191 = vunpack.c.l.b16 %v5838
        %v8192 = vunpack.c.h.b16 %v5838
        %v8193 = vunpack.c.l.b16 %v5839
        %v8194 = vunpack.c.h.b16 %v5839
        %v8195 = vunpack.c.l.b16 %v5840
        %v8196 = vunpack.c.h.b16 %v5840
        %v8197 = vunpack.c.l.b16 %v5841
        %v8198 = vunpack.c.h.b16 %v5841
        %v8199 = vunpack.c.l.b16 %v5842
        %v8200 = vunpack.c.h.b16 %v5842
        %v8201 = vunpack.c.l.b16 %v5843
        %v8202 = vunpack.c.h.b16 %v5843
        %v8203 = vunpack.c.l.b16 %v5844
        %v8204 = vunpack.c.h.b16 %v5844
        %v8205 = vunpack.c.l.b16 %v5845
        %v8206 = vunpack.c.h.b16 %v5845
        %v8207 = vunpack.c.l.b16 %v5846
        %v8208 = vunpack.c.h.b16 %v5846
        %v8209 = vunpack.c.l.b16 %v5847
        %v8210 = vunpack.c.h.b16 %v5847
        %v8211 = vunpack.c.l.b16 %v5848
        %v8212 = vunpack.c.h.b16 %v5848
        %v8213 = vunpack.c.l.b16 %v5849
        %v8214 = vunpack.c.h.b16 %v5849
        %v8215 = vunpack.c.l.b16 %v5850
        %v8216 = vunpack.c.h.b16 %v5850
        %v8217 = vunpack.c.l.b16 %v5851
        %v8218 = vunpack.c.h.b16 %v5851
        %v8219 = vunpack.c.l.b16 %v5852
        %v8220 = vunpack.c.h.b16 %v5852
        %v8221 = vunpack.c.l.b16 %v5853
        %v8222 = vunpack.c.h.b16 %v5853
        %v8223 = vunpack.c.l.b16 %v5854
        %v8224 = vunpack.c.h.b16 %v5854
        %v8225 = vunpack.c.l.b16 %v5855
        %v8226 = vunpack.c.h.b16 %v5855
        %v8227 = vunpack.c.l.b16 %v5856
        %v8228 = vunpack.c.h.b16 %v5856
        %v8229 = vunpack.c.l.b16 %v5857
        %v8230 = vunpack.c.h.b16 %v5857
        %v8231 = vunpack.c.l.b16 %v5858
        %v8232 = vunpack.c.h.b16 %v5858
        %v8233 = vunpack.c.l.b16 %v5859
        %v8234 = vunpack.c.h.b16 %v5859
        %v8235 = vunpack.c.l.b16 %v5860
        %v8236 = vunpack.c.h.b16 %v5860
        %v8237 = vunpack.c.l.b16 %v5861
        %v8238 = vunpack.c.h.b16 %v5861
        %v8239 = vunpack.c.l.b16 %v5862
        %v8240 = vunpack.c.h.b16 %v5862
        %v8241 = vunpack.c.l.b16 %v5863
        %v8242 = vunpack.c.h.b16 %v5863
        %v8243 = vunpack.c.l.b16 %v5864
        %v8244 = vunpack.c.h.b16 %v5864
        %v8245 = vunpack.c.l.b16 %v5865
        %v8246 = vunpack.c.h.b16 %v5865
        %v8247 = vunpack.c.l.b16 %v5866
        %v8248 = vunpack.c.h.b16 %v5866
        %v8249 = vunpack.c.l.b16 %v5867
        %v8250 = vunpack.c.h.b16 %v5867
        %v8251 = vunpack.c.l.b16 %v5868
        %v8252 = vunpack.c.h.b16 %v5868
        %v8253 = vunpack.c.l.b16 %v5869
        %v8254 = vunpack.c.h.b16 %v5869
        %v8255 = vunpack.c.l.b16 %v5870
        %v8256 = vunpack.c.h.b16 %v5870
        %v8257 = vunpack.c.l.b16 %v5871
        %v8258 = vunpack.c.h.b16 %v5871
        %v8259 = vunpack.c.l.b16 %v5872
        %v8260 = vunpack.c.h.b16 %v5872
        %v8261 = vunpack.c.l.b16 %v5873
        %v8262 = vunpack.c.h.b16 %v5873
        %v8263 = vunpack.c.l.b16 %v5874
        %v8264 = vunpack.c.h.b16 %v5874
        %v8265 = vunpack.c.l.b16 %v5875
        %v8266 = vunpack.c.h.b16 %v5875
        %v8267 = vunpack.c.l.b16 %v5876
        %v8268 = vunpack.c.h.b16 %v5876
        %v8269 = vunpack.c.l.b16 %v5877
        %v8270 = vunpack.c.h.b16 %v5877
        %v8271 = vunpack.c.l.b16 %v5878
        %v8272 = vunpack.c.h.b16 %v5878
        %v8273 = vunpack.c.l.b16 %v5879
        %v8274 = vunpack.c.h.b16 %v5879
        %v8275 = vunpack.c.l.b16 %v5880
        %v8276 = vunpack.c.h.b16 %v5880
        %v8277 = vunpack.c.l.b16 %v5881
        %v8278 = vunpack.c.h.b16 %v5881
        %v8279 = vunpack.c.l.b16 %v5882
        %v8280 = vunpack.c.h.b16 %v5882
        %v8281 = vunpack.c.l.b16 %v5883
        %v8282 = vunpack.c.h.b16 %v5883
        %v8283 = vunpack.c.l.b16 %v5884
        %v8284 = vunpack.c.h.b16 %v5884
        %v8285 = vunpack.c.l.b16 %v5885
        %v8286 = vunpack.c.h.b16 %v5885
        %v8287 = vunpack.c.l.b16 %v5886
        %v8288 = vunpack.c.h.b16 %v5886
        %v8289 = vunpack.c.l.b16 %v5887
        %v8290 = vunpack.c.h.b16 %v5887
        %v8291 = vunpack.c.l.b16 %v5888
        %v8292 = vunpack.c.h.b16 %v5888
        %v8293 = vunpack.c.l.b16 %v5889
        %v8294 = vunpack.c.h.b16 %v5889
        %v8295 = vunpack.c.l.b16 %v5890
        %v8296 = vunpack.c.h.b16 %v5890
        %v8297 = vunpack.c.l.b16 %v5891
        %v8298 = vunpack.c.h.b16 %v5891
        %v8299 = vunpack.c.l.b16 %v5892
        %v8300 = vunpack.c.h.b16 %v5892
        %v8301 = vunpack.c.l.b16 %v5893
        %v8302 = vunpack.c.h.b16 %v5893
        %v8303 = vunpack.c.l.b16 %v5894
        %v8304 = vunpack.c.h.b16 %v5894
        %v8305 = vunpack.c.l.b16 %v5895
        %v8306 = vunpack.c.h.b16 %v5895
        %v8307 = vunpack.c.l.b16 %v5896
        %v8308 = vunpack.c.h.b16 %v5896
        %v8309 = vunpack.c.l.b16 %v5897
        %v8310 = vunpack.c.h.b16 %v5897
        %v8311 = vunpack.c.l.b16 %v5898
        %v8312 = vunpack.c.h.b16 %v5898
        %v8313 = vunpack.c.l.b16 %v5899
        %v8314 = vunpack.c.h.b16 %v5899
        %v8315 = vunpack.c.l.b16 %v5900
        %v8316 = vunpack.c.h.b16 %v5900
        %v8317 = vunpack.c.l.b16 %v5901
        %v8318 = vunpack.c.h.b16 %v5901
        %v8319 = vunpack.c.l.b16 %v5902
        %v8320 = vunpack.c.h.b16 %v5902
        %v8321 = vunpack.c.l.b16 %v5903
        %v8322 = vunpack.c.h.b16 %v5903
        %v8323 = vunpack.c.l.b16 %v5904
        %v8324 = vunpack.c.h.b16 %v5904
        %v8325 = vunpack.c.l.b16 %v5905
        %v8326 = vunpack.c.h.b16 %v5905
        %v8327 = vunpack.c.l.b16 %v5906
        %v8328 = vunpack.c.h.b16 %v5906
        %v8329 = vunpack.c.l.b16 %v5907
        %v8330 = vunpack.c.h.b16 %v5907
        %v8331 = vunpack.c.l.b16 %v5908
        %v8332 = vunpack.c.h.b16 %v5908
        %v8333 = vunpack.c.l.b16 %v5909
        %v8334 = vunpack.c.h.b16 %v5909
        %v8335 = vunpack.c.l.b16 %v5910
        %v8336 = vunpack.c.h.b16 %v5910
        %v8337 = vunpack.c.l.b16 %v5911
        %v8338 = vunpack.c.h.b16 %v5911
        %v8339 = vunpack.c.l.b16 %v5912
        %v8340 = vunpack.c.h.b16 %v5912
        %v8341 = vunpack.c.l.b16 %v5913
        %v8342 = vunpack.c.h.b16 %v5913
        %v8343 = vunpack.c.l.b16 %v5914
        %v8344 = vunpack.c.h.b16 %v5914
        %v8345 = vunpack.c.l.b16 %v5915
        %v8346 = vunpack.c.h.b16 %v5915
        %v8347 = vunpack.c.l.b16 %v5916
        %v8348 = vunpack.c.h.b16 %v5916
        %v8349 = vunpack.c.l.b16 %v5917
        %v8350 = vunpack.c.h.b16 %v5917
        %v8351 = vunpack.c.l.b16 %v5918
        %v8352 = vunpack.c.h.b16 %v5918
        %v8353 = vunpack.c.l.b16 %v5919
        %v8354 = vunpack.c.h.b16 %v5919
        %v8355 = vunpack.c.l.b16 %v5920
        %v8356 = vunpack.c.h.b16 %v5920
        %v8357 = vunpack.c.l.b16 %v5921
        %v8358 = vunpack.c.h.b16 %v5921
        %v8359 = vunpack.c.l.b16 %v5922
        %v8360 = vunpack.c.h.b16 %v5922
        %v8361 = vunpack.c.l.b16 %v5923
        %v8362 = vunpack.c.h.b16 %v5923
        %v8363 = vunpack.c.l.b16 %v5924
        %v8364 = vunpack.c.h.b16 %v5924
        %v8365 = vunpack.c.l.b16 %v5925
        %v8366 = vunpack.c.h.b16 %v5925
        %v8367 = vunpack.c.l.b16 %v5926
        %v8368 = vunpack.c.h.b16 %v5926
        %v8369 = vunpack.c.l.b16 %v5927
        %v8370 = vunpack.c.h.b16 %v5927
        %v8371 = vunpack.c.l.b16 %v5928
        %v8372 = vunpack.c.h.b16 %v5928
        %v8373 = vunpack.c.l.b16 %v5929
        %v8374 = vunpack.c.h.b16 %v5929
        %v8375 = vunpack.c.l.b16 %v5930
        %v8376 = vunpack.c.h.b16 %v5930
        %v8377 = vunpack.c.l.b16 %v5931
        %v8378 = vunpack.c.h.b16 %v5931
        %v8379 = vunpack.c.l.b16 %v5932
        %v8380 = vunpack.c.h.b16 %v5932
        %v8381 = vpack.c.b16 %v7937, %v7933
        %v8382 = vpack.c.b16 %v7938, %v7934
        %v8383 = vpack.c.b16 %v7939, %v7935
        %v8384 = vpack.c.b16 %v7940, %v7936
        %v8385 = vpack.c.b16 %v7945, %v7941
        %v8386 = vpack.c.b16 %v7946, %v7942
        %v8387 = vpack.c.b16 %v7947, %v7943
        %v8388 = vpack.c.b16 %v7948, %v7944
        %v8389 = vpack.c.b16 %v7953, %v7949
        %v8390 = vpack.c.b16 %v7954, %v7950
        %v8391 = vpack.c.b16 %v7955, %v7951
        %v8392 = vpack.c.b16 %v7956, %v7952
        %v8393 = vpack.c.b16 %v7961, %v7957
        %v8394 = vpack.c.b16 %v7962, %v7958
        %v8395 = vpack.c.b16 %v7963, %v7959
        %v8396 = vpack.c.b16 %v7964, %v7960
        %v8397 = vpack.c.b16 %v7969, %v7965
        %v8398 = vpack.c.b16 %v7970, %v7966
        %v8399 = vpack.c.b16 %v7971, %v7967
        %v8400 = vpack.c.b16 %v7972, %v7968
        %v8401 = vpack.c.b16 %v7977, %v7973
        %v8402 = vpack.c.b16 %v7978, %v7974
        %v8403 = vpack.c.b16 %v7979, %v7975
        %v8404 = vpack.c.b16 %v7980, %v7976
        %v8405 = vpack.c.b16 %v7985, %v7981
        %v8406 = vpack.c.b16 %v7986, %v7982
        %v8407 = vpack.c.b16 %v7987, %v7983
        %v8408 = vpack.c.b16 %v7988, %v7984
        %v8409 = vpack.c.b16 %v7993, %v7989
        %v8410 = vpack.c.b16 %v7994, %v7990
        %v8411 = vpack.c.b16 %v7995, %v7991
        %v8412 = vpack.c.b16 %v7996, %v7992
        %v8413 = vpack.c.b16 %v8001, %v7997
        %v8414 = vpack.c.b16 %v8002, %v7998
        %v8415 = vpack.c.b16 %v8003, %v7999
        %v8416 = vpack.c.b16 %v8004, %v8000
        %v8417 = vpack.c.b16 %v8009, %v8005
        %v8418 = vpack.c.b16 %v8010, %v8006
        %v8419 = vpack.c.b16 %v8011, %v8007
        %v8420 = vpack.c.b16 %v8012, %v8008
        %v8421 = vpack.c.b16 %v8017, %v8013
        %v8422 = vpack.c.b16 %v8018, %v8014
        %v8423 = vpack.c.b16 %v8019, %v8015
        %v8424 = vpack.c.b16 %v8020, %v8016
        %v8425 = vpack.c.b16 %v8025, %v8021
        %v8426 = vpack.c.b16 %v8026, %v8022
        %v8427 = vpack.c.b16 %v8027, %v8023
        %v8428 = vpack.c.b16 %v8028, %v8024
        %v8429 = vpack.c.b16 %v8033, %v8029
        %v8430 = vpack.c.b16 %v8034, %v8030
        %v8431 = vpack.c.b16 %v8035, %v8031
        %v8432 = vpack.c.b16 %v8036, %v8032
        %v8433 = vpack.c.b16 %v8041, %v8037
        %v8434 = vpack.c.b16 %v8042, %v8038
        %v8435 = vpack.c.b16 %v8043, %v8039
        %v8436 = vpack.c.b16 %v8044, %v8040
        %v8437 = vpack.c.b16 %v8049, %v8045
        %v8438 = vpack.c.b16 %v8050, %v8046
        %v8439 = vpack.c.b16 %v8051, %v8047
        %v8440 = vpack.c.b16 %v8052, %v8048
        %v8441 = vpack.c.b16 %v8057, %v8053
        %v8442 = vpack.c.b16 %v8058, %v8054
        %v8443 = vpack.c.b16 %v8059, %v8055
        %v8444 = vpack.c.b16 %v8060, %v8056
        %v8445 = vpack.c.b16 %v8065, %v8061
        %v8446 = vpack.c.b16 %v8066, %v8062
        %v8447 = vpack.c.b16 %v8067, %v8063
        %v8448 = vpack.c.b16 %v8068, %v8064
        %v8449 = vpack.c.b16 %v8073, %v8069
        %v8450 = vpack.c.b16 %v8074, %v8070
        %v8451 = vpack.c.b16 %v8075, %v8071
        %v8452 = vpack.c.b16 %v8076, %v8072
        %v8453 = vpack.c.b16 %v8081, %v8077
        %v8454 = vpack.c.b16 %v8082, %v8078
        %v8455 = vpack.c.b16 %v8083, %v8079
        %v8456 = vpack.c.b16 %v8084, %v8080
        %v8457 = vpack.c.b16 %v8089, %v8085
        %v8458 = vpack.c.b16 %v8090, %v8086
        %v8459 = vpack.c.b16 %v8091, %v8087
        %v8460 = vpack.c.b16 %v8092, %v8088
        %v8461 = vpack.c.b16 %v8097, %v8093
        %v8462 = vpack.c.b16 %v8098, %v8094
        %v8463 = vpack.c.b16 %v8099, %v8095
        %v8464 = vpack.c.b16 %v8100, %v8096
        %v8465 = vpack.c.b16 %v8105, %v8101
        %v8466 = vpack.c.b16 %v8106, %v8102
        %v8467 = vpack.c.b16 %v8107, %v8103
        %v8468 = vpack.c.b16 %v8108, %v8104
        %v8469 = vpack.c.b16 %v8113, %v8109
        %v8470 = vpack.c.b16 %v8114, %v8110
        %v8471 = vpack.c.b16 %v8115, %v8111
        %v8472 = vpack.c.b16 %v8116, %v8112
        %v8473 = vpack.c.b16 %v8121, %v8117
        %v8474 = vpack.c.b16 %v8122, %v8118
        %v8475 = vpack.c.b16 %v8123, %v8119
        %v8476 = vpack.c.b16 %v8124, %v8120
        %v8477 = vpack.c.b16 %v8129, %v8125
        %v8478 = vpack.c.b16 %v8130, %v8126
        %v8479 = vpack.c.b16 %v8131, %v8127
        %v8480 = vpack.c.b16 %v8132, %v8128
        %v8481 = vpack.c.b16 %v8137, %v8133
        %v8482 = vpack.c.b16 %v8138, %v8134
        %v8483 = vpack.c.b16 %v8139, %v8135
        %v8484 = vpack.c.b16 %v8140, %v8136
        %v8485 = vpack.c.b16 %v8145, %v8141
        %v8486 = vpack.c.b16 %v8146, %v8142
        %v8487 = vpack.c.b16 %v8147, %v8143
        %v8488 = vpack.c.b16 %v8148, %v8144
        %v8489 = vpack.c.b16 %v8153, %v8149
        %v8490 = vpack.c.b16 %v8154, %v8150
        %v8491 = vpack.c.b16 %v8155, %v8151
        %v8492 = vpack.c.b16 %v8156, %v8152
        %v8493 = vpack.c.b16 %v8161, %v8157
        %v8494 = vpack.c.b16 %v8162, %v8158
        %v8495 = vpack.c.b16 %v8163, %v8159
        %v8496 = vpack.c.b16 %v8164, %v8160
        %v8497 = vpack.c.b16 %v8169, %v8165
        %v8498 = vpack.c.b16 %v8170, %v8166
        %v8499 = vpack.c.b16 %v8171, %v8167
        %v8500 = vpack.c.b16 %v8172, %v8168
        %v8501 = vpack.c.b16 %v8177, %v8173
        %v8502 = vpack.c.b16 %v8178, %v8174
        %v8503 = vpack.c.b16 %v8179, %v8175
        %v8504 = vpack.c.b16 %v8180, %v8176
        %v8505 = vpack.c.b16 %v8185, %v8181
        %v8506 = vpack.c.b16 %v8186, %v8182
        %v8507 = vpack.c.b16 %v8187, %v8183
        %v8508 = vpack.c.b16 %v8188, %v8184
        %v8509 = vpack.c.b16 %v8193, %v8189
        %v8510 = vpack.c.b16 %v8194, %v8190
        %v8511 = vpack.c.b16 %v8195, %v8191
        %v8512 = vpack.c.b16 %v8196, %v8192
        %v8513 = vpack.c.b16 %v8201, %v8197
        %v8514 = vpack.c.b16 %v8202, %v8198
        %v8515 = vpack.c.b16 %v8203, %v8199
        %v8516 = vpack.c.b16 %v8204, %v8200
        %v8517 = vpack.c.b16 %v8209, %v8205
        %v8518 = vpack.c.b16 %v8210, %v8206
        %v8519 = vpack.c.b16 %v8211, %v8207
        %v8520 = vpack.c.b16 %v8212, %v8208
        %v8521 = vpack.c.b16 %v8217, %v8213
        %v8522 = vpack.c.b16 %v8218, %v8214
        %v8523 = vpack.c.b16 %v8219, %v8215
        %v8524 = vpack.c.b16 %v8220, %v8216
        %v8525 = vpack.c.b16 %v8225, %v8221
        %v8526 = vpack.c.b16 %v8226, %v8222
        %v8527 = vpack.c.b16 %v8227, %v8223
        %v8528 = vpack.c.b16 %v8228, %v8224
        %v8529 = vpack.c.b16 %v8233, %v8229
        %v8530 = vpack.c.b16 %v8234, %v8230
        %v8531 = vpack.c.b16 %v8235, %v8231
        %v8532 = vpack.c.b16 %v8236, %v8232
        %v8533 = vpack.c.b16 %v8241, %v8237
        %v8534 = vpack.c.b16 %v8242, %v8238
        %v8535 = vpack.c.b16 %v8243, %v8239
        %v8536 = vpack.c.b16 %v8244, %v8240
        %v8537 = vpack.c.b16 %v8249, %v8245
        %v8538 = vpack.c.b16 %v8250, %v8246
        %v8539 = vpack.c.b16 %v8251, %v8247
        %v8540 = vpack.c.b16 %v8252, %v8248
        %v8541 = vpack.c.b16 %v8257, %v8253
        %v8542 = vpack.c.b16 %v8258, %v8254
        %v8543 = vpack.c.b16 %v8259, %v8255
        %v8544 = vpack.c.b16 %v8260, %v8256
        %v8545 = vpack.c.b16 %v8265, %v8261
        %v8546 = vpack.c.b16 %v8266, %v8262
        %v8547 = vpack.c.b16 %v8267, %v8263
        %v8548 = vpack.c.b16 %v8268, %v8264
        %v8549 = vpack.c.b16 %v8273, %v8269
        %v8550 = vpack.c.b16 %v8274, %v8270
        %v8551 = vpack.c.b16 %v8275, %v8271
        %v8552 = vpack.c.b16 %v8276, %v8272
        %v8553 = vpack.c.b16 %v8281, %v8277
        %v8554 = vpack.c.b16 %v8282, %v8278
        %v8555 = vpack.c.b16 %v8283, %v8279
        %v8556 = vpack.c.b16 %v8284, %v8280
        %v8557 = vpack.c.b16 %v8289, %v8285
        %v8558 = vpack.c.b16 %v8290, %v8286
        %v8559 = vpack.c.b16 %v8291, %v8287
        %v8560 = vpack.c.b16 %v8292, %v8288
        %v8561 = vpack.c.b16 %v8297, %v8293
        %v8562 = vpack.c.b16 %v8298, %v8294
        %v8563 = vpack.c.b16 %v8299, %v8295
        %v8564 = vpack.c.b16 %v8300, %v8296
        %v8565 = vpack.c.b16 %v8305, %v8301
        %v8566 = vpack.c.b16 %v8306, %v8302
        %v8567 = vpack.c.b16 %v8307, %v8303
        %v8568 = vpack.c.b16 %v8308, %v8304
        %v8569 = vpack.c.b16 %v8313, %v8309
        %v8570 = vpack.c.b16 %v8314, %v8310
        %v8571 = vpack.c.b16 %v8315, %v8311
        %v8572 = vpack.c.b16 %v8316, %v8312
        %v8573 = vpack.c.b16 %v8321, %v8317
        %v8574 = vpack.c.b16 %v8322, %v8318
        %v8575 = vpack.c.b16 %v8323, %v8319
        %v8576 = vpack.c.b16 %v8324, %v8320
        %v8577 = vpack.c.b16 %v8329, %v8325
        %v8578 = vpack.c.b16 %v8330, %v8326
        %v8579 = vpack.c.b16 %v8331, %v8327
        %v8580 = vpack.c.b16 %v8332, %v8328
        %v8581 = vpack.c.b16 %v8337, %v8333
        %v8582 = vpack.c.b16 %v8338, %v8334
        %v8583 = vpack.c.b16 %v8339, %v8335
        %v8584 = vpack.c.b16 %v8340, %v8336
        %v8585 = vpack.c.b16 %v8345, %v8341
        %v8586 = vpack.c.b16 %v8346, %v8342
        %v8587 = vpack.c.b16 %v8347, %v8343
        %v8588 = vpack.c.b16 %v8348, %v8344
        %v8589 = vpack.c.b16 %v8353, %v8349
        %v8590 = vpack.c.b16 %v8354, %v8350
        %v8591 = vpack.c.b16 %v8355, %v8351
        %v8592 = vpack.c.b16 %v8356, %v8352
        %v8593 = vpack.c.b16 %v8361, %v8357
        %v8594 = vpack.c.b16 %v8362, %v8358
        %v8595 = vpack.c.b16 %v8363, %v8359
        %v8596 = vpack.c.b16 %v8364, %v8360
        %v8597 = vpack.c.b16 %v8369, %v8365
        %v8598 = vpack.c.b16 %v8370, %v8366
        %v8599 = vpack.c.b16 %v8371, %v8367
        %v8600 = vpack.c.b16 %v8372, %v8368
        %v8601 = vpack.c.b16 %v8377, %v8373
        %v8602 = vpack.c.b16 %v8378, %v8374
        %v8603 = vpack.c.b16 %v8379, %v8375
        %v8604 = vpack.c.b16 %v8380, %v8376
        %8829 = vmatprep.subr.bf16.mxu0 %v8382
        %8830 = vmatpush1.bf16.msra.mxu0 %v8381
        %8831 = vmatprep.subr.bf16.mxu0 %v8386
        %8832 = vmatpush1.bf16.msra.mxu0 %v8385
        %8833 = vmatprep.subr.bf16.mxu0 %v8390
        %8834 = vmatpush1.bf16.msra.mxu0 %v8389
        %8835 = vmatprep.subr.bf16.mxu0 %v8394
        %8836 = vmatpush1.bf16.msra.mxu0 %v8393
        %8837 = vmatprep.subr.bf16.mxu0 %v8398
        %8838 = vmatpush1.bf16.msra.mxu0 %v8397
        %8839 = vmatprep.subr.bf16.mxu0 %v8402
        %8840 = vmatpush1.bf16.msra.mxu0 %v8401
        %8841 = vmatprep.subr.bf16.mxu0 %v8406
        %8842 = vmatpush1.bf16.msra.mxu0 %v8405
        %8843 = vmatprep.subr.bf16.mxu0 %v8410
        %8844 = vmatpush1.bf16.msra.mxu0 %v8409
        %8845 = vmatprep.subr.bf16.mxu0 %v8414
        %8846 = vmatpush1.bf16.msra.mxu0 %v8413
        %8847 = vmatprep.subr.bf16.mxu0 %v8418
        %8848 = vmatpush1.bf16.msra.mxu0 %v8417
        %8849 = vmatprep.subr.bf16.mxu0 %v8422
        %8850 = vmatpush1.bf16.msra.mxu0 %v8421
        %8851 = vmatprep.subr.bf16.mxu0 %v8426
        %8852 = vmatpush1.bf16.msra.mxu0 %v8425
        %8853 = vmatprep.subr.bf16.mxu0 %v8430
        %8854 = vmatpush1.bf16.msra.mxu0 %v8429
        %8855 = vmatprep.subr.bf16.mxu0 %v8434
        %8856 = vmatpush1.bf16.msra.mxu0 %v8433
        %8857 = vmatprep.subr.bf16.mxu0 %v8438
        %8858 = vmatpush1.bf16.msra.mxu0 %v8437
        %8859 = vmatprep.subr.bf16.mxu0 %v8442
        %8860 = vmatpush1.bf16.msra.mxu0 %v8441
        %8861 = vmatprep.mubr.bf16.mxu0 %v7696
        %8862 = vmatmul.mubr.bf16.gmra.mrb[0].mxu0 %v7695
        %v8863 = vpop.f32.mrb[0].mxu0
        %v8864 = vadd.f32 %v7525, %v8863
        %v8865 = vpop.f32.mrb[0].mxu0
        %v8866 = vadd.f32 %v7527, %v8865
        %v8867 = vpop.f32.mrb[0].mxu0
        %v8868 = vpop.f32.mrb[0].mxu0
        %8869 = vdwg.mxu0
        %8870 = vmatprep.subr.bf16.mxu0 %v8446
        %8871 = vmatpush1.bf16.msra.mxu0 %v8445
        %8872 = vmatprep.subr.bf16.mxu0 %v8450
        %8873 = vmatpush1.bf16.msra.mxu0 %v8449
        %8874 = vmatprep.subr.bf16.mxu0 %v8454
        %8875 = vmatpush1.bf16.msra.mxu0 %v8453
        %8876 = vmatprep.subr.bf16.mxu0 %v8458
        %8877 = vmatpush1.bf16.msra.mxu0 %v8457
        %8878 = vmatprep.subr.bf16.mxu0 %v8462
        %8879 = vmatpush1.bf16.msra.mxu0 %v8461
        %8880 = vmatprep.subr.bf16.mxu0 %v8466
        %8881 = vmatpush1.bf16.msra.mxu0 %v8465
        %8882 = vmatprep.subr.bf16.mxu0 %v8470
        %8883 = vmatpush1.bf16.msra.mxu0 %v8469
        %8884 = vmatprep.subr.bf16.mxu0 %v8474
        %8885 = vmatpush1.bf16.msra.mxu0 %v8473
        %8886 = vmatprep.subr.bf16.mxu0 %v8478
        %8887 = vmatpush1.bf16.msra.mxu0 %v8477
        %8888 = vmatprep.subr.bf16.mxu0 %v8482
        %8889 = vmatpush1.bf16.msra.mxu0 %v8481
        %8890 = vmatprep.subr.bf16.mxu0 %v8486
        %8891 = vmatpush1.bf16.msra.mxu0 %v8485
        %8892 = vmatprep.subr.bf16.mxu0 %v8490
        %8893 = vmatpush1.bf16.msra.mxu0 %v8489
        %8894 = vmatprep.subr.bf16.mxu0 %v8494
        %8895 = vmatpush1.bf16.msra.mxu0 %v8493
        %8896 = vmatprep.subr.bf16.mxu0 %v8498
        %8897 = vmatpush1.bf16.msra.mxu0 %v8497
        %8898 = vmatprep.subr.bf16.mxu0 %v8502
        %8899 = vmatpush1.bf16.msra.mxu0 %v8501
        %8900 = vmatprep.subr.bf16.mxu0 %v8506
        %8901 = vmatpush1.bf16.msra.mxu0 %v8505
        %8902 = vmatprep.mubr.bf16.mxu0 %v7698
        %8903 = vmatmul.mubr.bf16.gmra.mrb[0].mxu0 %v7697
        %v8904 = vpop.f32.mrb[0].mxu0
        %v8905 = vadd.f32 %v8864, %v8904
        %v8906 = vpop.f32.mrb[0].mxu0
        %v8907 = vadd.f32 %v8866, %v8906
        %v8908 = vpop.f32.mrb[0].mxu0
        %v8909 = vpop.f32.mrb[0].mxu0
        %8910 = vdwg.mxu0
        %8911 = vmatprep.subr.bf16.mxu0 %v8510
        %8912 = vmatpush1.bf16.msra.mxu0 %v8509
        %8913 = vmatprep.subr.bf16.mxu0 %v8514
        %8914 = vmatpush1.bf16.msra.mxu0 %v8513
        %8915 = vmatprep.subr.bf16.mxu0 %v8518
        %8916 = vmatpush1.bf16.msra.mxu0 %v8517
        %8917 = vmatprep.subr.bf16.mxu0 %v8522
        %8918 = vmatpush1.bf16.msra.mxu0 %v8521
        %8919 = vmatprep.subr.bf16.mxu0 %v8526
        %8920 = vmatpush1.bf16.msra.mxu0 %v8525
        %8921 = vmatprep.subr.bf16.mxu0 %v8530
        %8922 = vmatpush1.bf16.msra.mxu0 %v8529
        %8923 = vmatprep.subr.bf16.mxu0 %v8534
        %8924 = vmatpush1.bf16.msra.mxu0 %v8533
        %8925 = vmatprep.subr.bf16.mxu0 %v8538
        %8926 = vmatpush1.bf16.msra.mxu0 %v8537
        %8927 = vmatprep.subr.bf16.mxu0 %v8542
        %8928 = vmatpush1.bf16.msra.mxu0 %v8541
        %8929 = vmatprep.subr.bf16.mxu0 %v8546
        %8930 = vmatpush1.bf16.msra.mxu0 %v8545
        %8931 = vmatprep.subr.bf16.mxu0 %v8550
        %8932 = vmatpush1.bf16.msra.mxu0 %v8549
        %8933 = vmatprep.subr.bf16.mxu0 %v8554
        %8934 = vmatpush1.bf16.msra.mxu0 %v8553
        %8935 = vmatprep.subr.bf16.mxu0 %v8558
        %8936 = vmatpush1.bf16.msra.mxu0 %v8557
        %8937 = vmatprep.subr.bf16.mxu0 %v8562
        %8938 = vmatpush1.bf16.msra.mxu0 %v8561
        %8939 = vmatprep.subr.bf16.mxu0 %v8566
        %8940 = vmatpush1.bf16.msra.mxu0 %v8565
        %8941 = vmatprep.subr.bf16.mxu0 %v8570
        %8942 = vmatpush1.bf16.msra.mxu0 %v8569
        %8943 = vmatprep.mubr.bf16.mxu0 %v7700
        %8944 = vmatmul.mubr.bf16.gmra.mrb[0].mxu0 %v7699
        %v8945 = vpop.f32.mrb[0].mxu0
        %v8946 = vadd.f32 %v8905, %v8945
        %v8947 = vpop.f32.mrb[0].mxu0
        %v8948 = vadd.f32 %v8907, %v8947
        %v8949 = vpop.f32.mrb[0].mxu0
        %v8950 = vpop.f32.mrb[0].mxu0
        %8951 = vdwg.mxu0
        %8952 = vmatprep.subr.bf16.mxu0 %v8574
        %8953 = vmatpush1.bf16.msra.mxu0 %v8573
        %8954 = vmatprep.subr.bf16.mxu0 %v8578
        %8955 = vmatpush1.bf16.msra.mxu0 %v8577
        %8956 = vmatprep.subr.bf16.mxu0 %v8582
        %8957 = vmatpush1.bf16.msra.mxu0 %v8581
        %8958 = vmatprep.subr.bf16.mxu0 %v8586
        %8959 = vmatpush1.bf16.msra.mxu0 %v8585
        %8960 = vmatprep.subr.bf16.mxu0 %v8590
        %8961 = vmatpush1.bf16.msra.mxu0 %v8589
        %8962 = vmatprep.subr.bf16.mxu0 %v8594
        %8963 = vmatpush1.bf16.msra.mxu0 %v8593
        %8964 = vmatprep.subr.bf16.mxu0 %v8598
        %8965 = vmatpush1.bf16.msra.mxu0 %v8597
        %8966 = vmatprep.subr.bf16.mxu0 %v8602
        %8967 = vmatpush1.bf16.msra.mxu0 %v8601
        %8968 = vmatprep.subr.bf16.mxu0 0
        %8969 = vmatpush1.bf16.msra.mxu0 0
        %8970 = vmatprep.subr.bf16.mxu0 0
        %8971 = vmatpush1.bf16.msra.mxu0 0
        %8972 = vmatprep.subr.bf16.mxu0 0
        %8973 = vmatpush1.bf16.msra.mxu0 0
        %8974 = vmatprep.subr.bf16.mxu0 0
        %8975 = vmatpush1.bf16.msra.mxu0 0
        %8976 = vmatprep.subr.bf16.mxu0 0
        %8977 = vmatpush1.bf16.msra.mxu0 0
        %8978 = vmatprep.subr.bf16.mxu0 0
        %8979 = vmatpush1.bf16.msra.mxu0 0
        %8980 = vmatprep.subr.bf16.mxu0 0
        %8981 = vmatpush1.bf16.msra.mxu0 0
        %8982 = vmatprep.subr.bf16.mxu0 0
        %8983 = vmatpush1.bf16.msra.mxu0 0
        %8984 = vmatprep.mubr.bf16.mxu0 0
        %8985 = vmatmul.mubr.bf16.gmra.mrb[0].mxu0 %v7701
        %v8986 = vpop.f32.mrb[0].mxu0
        %v8987 = vadd.f32 %v8946, %v8986
        %v8988 = vpop.f32.mrb[0].mxu0
        %v8989 = vadd.f32 %v8948, %v8988
        %v8990 = vpop.f32.mrb[0].mxu0
        %v8991 = vpop.f32.mrb[0].mxu0
        %8992 = vdwg.mxu0
        %8993 = vmatprep.subr.bf16.mxu0 %v8384
        %8994 = vmatpush1.bf16.msra.mxu0 %v8383
        %8995 = vmatprep.subr.bf16.mxu0 %v8388
        %8996 = vmatpush1.bf16.msra.mxu0 %v8387
        %8997 = vmatprep.subr.bf16.mxu0 %v8392
        %8998 = vmatpush1.bf16.msra.mxu0 %v8391
        %8999 = vmatprep.subr.bf16.mxu0 %v8396
        %9000 = vmatpush1.bf16.msra.mxu0 %v8395
        %9001 = vmatprep.subr.bf16.mxu0 %v8400
        %9002 = vmatpush1.bf16.msra.mxu0 %v8399
        %9003 = vmatprep.subr.bf16.mxu0 %v8404
        %9004 = vmatpush1.bf16.msra.mxu0 %v8403
        %9005 = vmatprep.subr.bf16.mxu0 %v8408
        %9006 = vmatpush1.bf16.msra.mxu0 %v8407
        %9007 = vmatprep.subr.bf16.mxu0 %v8412
        %9008 = vmatpush1.bf16.msra.mxu0 %v8411
        %9009 = vmatprep.subr.bf16.mxu0 %v8416
        %9010 = vmatpush1.bf16.msra.mxu0 %v8415
        %9011 = vmatprep.subr.bf16.mxu0 %v8420
        %9012 = vmatpush1.bf16.msra.mxu0 %v8419
        %9013 = vmatprep.subr.bf16.mxu0 %v8424
        %9014 = vmatpush1.bf16.msra.mxu0 %v8423
        %9015 = vmatprep.subr.bf16.mxu0 %v8428
        %9016 = vmatpush1.bf16.msra.mxu0 %v8427
        %9017 = vmatprep.subr.bf16.mxu0 %v8432
        %9018 = vmatpush1.bf16.msra.mxu0 %v8431
        %9019 = vmatprep.subr.bf16.mxu0 %v8436
        %9020 = vmatpush1.bf16.msra.mxu0 %v8435
        %9021 = vmatprep.subr.bf16.mxu0 %v8440
        %9022 = vmatpush1.bf16.msra.mxu0 %v8439
        %9023 = vmatprep.subr.bf16.mxu0 %v8444
        %9024 = vmatpush1.bf16.msra.mxu0 %v8443
        %9025 = vmatprep.mubr.bf16.mxu0 %v7696
        %9026 = vmatmul.mubr.bf16.gmra.mrb[0].mxu0 %v7695
        %v9027 = vpop.f32.mrb[0].mxu0
        %v9028 = vadd.f32 %v7689, %v9027
        %v9029 = vpop.f32.mrb[0].mxu0
        %v9030 = vadd.f32 %v7691, %v9029
        %v9031 = vpop.f32.mrb[0].mxu0
        %v9032 = vpop.f32.mrb[0].mxu0
        %9033 = vdwg.mxu0
        %9034 = vmatprep.subr.bf16.mxu0 %v8448
        %9035 = vmatpush1.bf16.msra.mxu0 %v8447
        %9036 = vmatprep.subr.bf16.mxu0 %v8452
        %9037 = vmatpush1.bf16.msra.mxu0 %v8451
        %9038 = vmatprep.subr.bf16.mxu0 %v8456
        %9039 = vmatpush1.bf16.msra.mxu0 %v8455
        %9040 = vmatprep.subr.bf16.mxu0 %v8460
        %9041 = vmatpush1.bf16.msra.mxu0 %v8459
        %9042 = vmatprep.subr.bf16.mxu0 %v8464
        %9043 = vmatpush1.bf16.msra.mxu0 %v8463
        %9044 = vmatprep.subr.bf16.mxu0 %v8468
        %9045 = vmatpush1.bf16.msra.mxu0 %v8467
        %9046 = vmatprep.subr.bf16.mxu0 %v8472
        %9047 = vmatpush1.bf16.msra.mxu0 %v8471
        %9048 = vmatprep.subr.bf16.mxu0 %v8476
        %9049 = vmatpush1.bf16.msra.mxu0 %v8475
        %9050 = vmatprep.subr.bf16.mxu0 %v8480
        %9051 = vmatpush1.bf16.msra.mxu0 %v8479
        %9052 = vmatprep.subr.bf16.mxu0 %v8484
        %9053 = vmatpush1.bf16.msra.mxu0 %v8483
        %9054 = vmatprep.subr.bf16.mxu0 %v8488
        %9055 = vmatpush1.bf16.msra.mxu0 %v8487
        %9056 = vmatprep.subr.bf16.mxu0 %v8492
        %9057 = vmatpush1.bf16.msra.mxu0 %v8491
        %9058 = vmatprep.subr.bf16.mxu0 %v8496
        %9059 = vmatpush1.bf16.msra.mxu0 %v8495
        %9060 = vmatprep.subr.bf16.mxu0 %v8500
        %9061 = vmatpush1.bf16.msra.mxu0 %v8499
        %9062 = vmatprep.subr.bf16.mxu0 %v8504
        %9063 = vmatpush1.bf16.msra.mxu0 %v8503
        %9064 = vmatprep.subr.bf16.mxu0 %v8508
        %9065 = vmatpush1.bf16.msra.mxu0 %v8507
        %9066 = vmatprep.mubr.bf16.mxu0 %v7698
        %9067 = vmatmul.mubr.bf16.gmra.mrb[0].mxu0 %v7697
        %v9068 = vpop.f32.mrb[0].mxu0
        %v9069 = vadd.f32 %v9028, %v9068
        %v9070 = vpop.f32.mrb[0].mxu0
        %v9071 = vadd.f32 %v9030, %v9070
        %v9072 = vpop.f32.mrb[0].mxu0
        %v9073 = vpop.f32.mrb[0].mxu0
        %9074 = vdwg.mxu0
        %9075 = vmatprep.subr.bf16.mxu0 %v8512
        %9076 = vmatpush1.bf16.msra.mxu0 %v8511
        %9077 = vmatprep.subr.bf16.mxu0 %v8516
        %9078 = vmatpush1.bf16.msra.mxu0 %v8515
        %9079 = vmatprep.subr.bf16.mxu0 %v8520
        %9080 = vmatpush1.bf16.msra.mxu0 %v8519
        %9081 = vmatprep.subr.bf16.mxu0 %v8524
        %9082 = vmatpush1.bf16.msra.mxu0 %v8523
        %9083 = vmatprep.subr.bf16.mxu0 %v8528
        %9084 = vmatpush1.bf16.msra.mxu0 %v8527
        %9085 = vmatprep.subr.bf16.mxu0 %v8532
        %9086 = vmatpush1.bf16.msra.mxu0 %v8531
        %9087 = vmatprep.subr.bf16.mxu0 %v8536
        %9088 = vmatpush1.bf16.msra.mxu0 %v8535
        %9089 = vmatprep.subr.bf16.mxu0 %v8540
        %9090 = vmatpush1.bf16.msra.mxu0 %v8539
        %9091 = vmatprep.subr.bf16.mxu0 %v8544
        %9092 = vmatpush1.bf16.msra.mxu0 %v8543
        %9093 = vmatprep.subr.bf16.mxu0 %v8548
        %9094 = vmatpush1.bf16.msra.mxu0 %v8547
        %9095 = vmatprep.subr.bf16.mxu0 %v8552
        %9096 = vmatpush1.bf16.msra.mxu0 %v8551
        %9097 = vmatprep.subr.bf16.mxu0 %v8556
        %9098 = vmatpush1.bf16.msra.mxu0 %v8555
        %9099 = vmatprep.subr.bf16.mxu0 %v8560
        %9100 = vmatpush1.bf16.msra.mxu0 %v8559
        %9101 = vmatprep.subr.bf16.mxu0 %v8564
        %9102 = vmatpush1.bf16.msra.mxu0 %v8563
        %9103 = vmatprep.subr.bf16.mxu0 %v8568
        %9104 = vmatpush1.bf16.msra.mxu0 %v8567
        %9105 = vmatprep.subr.bf16.mxu0 %v8572
        %9106 = vmatpush1.bf16.msra.mxu0 %v8571
        %9107 = vmatprep.mubr.bf16.mxu0 %v7700
        %9108 = vmatmul.mubr.bf16.gmra.mrb[0].mxu0 %v7699
        %v9109 = vpop.f32.mrb[0].mxu0
        %v9110 = vadd.f32 %v9069, %v9109
        %v9111 = vpop.f32.mrb[0].mxu0
        %v9112 = vadd.f32 %v9071, %v9111
        %v9113 = vpop.f32.mrb[0].mxu0
        %v9114 = vpop.f32.mrb[0].mxu0
        %9115 = vdwg.mxu0
        %9116 = vmatprep.subr.bf16.mxu0 %v8576
        %9117 = vmatpush1.bf16.msra.mxu0 %v8575
        %9118 = vmatprep.subr.bf16.mxu0 %v8580
        %9119 = vmatpush1.bf16.msra.mxu0 %v8579
        %9120 = vmatprep.subr.bf16.mxu0 %v8584
        %9121 = vmatpush1.bf16.msra.mxu0 %v8583
        %9122 = vmatprep.subr.bf16.mxu0 %v8588
        %9123 = vmatpush1.bf16.msra.mxu0 %v8587
        %9124 = vmatprep.subr.bf16.mxu0 %v8592
        %9125 = vmatpush1.bf16.msra.mxu0 %v8591
        %9126 = vmatprep.subr.bf16.mxu0 %v8596
        %9127 = vmatpush1.bf16.msra.mxu0 %v8595
        %9128 = vmatprep.subr.bf16.mxu0 %v8600
        %9129 = vmatpush1.bf16.msra.mxu0 %v8599
        %9130 = vmatprep.subr.bf16.mxu0 %v8604
        %9131 = vmatpush1.bf16.msra.mxu0 %v8603
        %9132 = vmatprep.subr.bf16.mxu0 0
        %9133 = vmatpush1.bf16.msra.mxu0 0
        %9134 = vmatprep.subr.bf16.mxu0 0
        %9135 = vmatpush1.bf16.msra.mxu0 0
        %9136 = vmatprep.subr.bf16.mxu0 0
        %9137 = vmatpush1.bf16.msra.mxu0 0
        %9138 = vmatprep.subr.bf16.mxu0 0
        %9139 = vmatpush1.bf16.msra.mxu0 0
        %9140 = vmatprep.subr.bf16.mxu0 0
        %9141 = vmatpush1.bf16.msra.mxu0 0
        %9142 = vmatprep.subr.bf16.mxu0 0
        %9143 = vmatpush1.bf16.msra.mxu0 0
        %9144 = vmatprep.subr.bf16.mxu0 0
        %9145 = vmatpush1.bf16.msra.mxu0 0
        %9146 = vmatprep.subr.bf16.mxu0 0
        %9147 = vmatpush1.bf16.msra.mxu0 0
        %9148 = vmatprep.mubr.bf16.mxu0 0
        %9149 = vmatmul.mubr.bf16.gmra.mrb[0].mxu0 %v7701
        %v9150 = vpop.f32.mrb[0].mxu0
        %v9151 = vadd.f32 %v9110, %v9150
        %v9152 = vpop.f32.mrb[0].mxu0
        %v9153 = vadd.f32 %v9112, %v9152
        %v9154 = vpop.f32.mrb[0].mxu0
        %v9155 = vpop.f32.mrb[0].mxu0
        %9156 = vdwg.mxu0
        %v9157 = vld [vmem:[#allocation2] sm:$0xee]
        %v9158 = vld [vmem:[#allocation2 + $0x8] sm:$0xee]
        %v9159 = vld [vmem:[#allocation2 + $0x10] sm:$0xee]
        %v9160 = vld [vmem:[#allocation2 + $0x18] sm:$0xe]
        %s9161 = scalar_lea.vmem [#allocation7], 3584
        %v9162 = vld [vmem:[%s9161] sm:$0xff]
        %v9163 = vld [vmem:[%s9161 + $0x8] sm:$0xff]
        %v9164 = vld [vmem:[%s9161 + $0x10] sm:$0xff]
        %v9165 = vld [vmem:[%s9161 + $0x18] sm:$0xff]
        %v9166 = vld [vmem:[%s9161 + $0x20] sm:$0xff]
        %v9167 = vld [vmem:[%s9161 + $0x28] sm:$0xff]
        %v9168 = vld [vmem:[%s9161 + $0x30] sm:$0xff]
        %v9169 = vld [vmem:[%s9161 + $0x38] sm:$0xff]
        %v9170 = vld [vmem:[%s9161 + $0x40] sm:$0xff]
        %v9171 = vld [vmem:[%s9161 + $0x48] sm:$0xff]
        %v9172 = vld [vmem:[%s9161 + $0x50] sm:$0xff]
        %v9173 = vld [vmem:[%s9161 + $0x58] sm:$0xff]
        %v9174 = vld [vmem:[%s9161 + $0x60] sm:$0xff]
        %v9175 = vld [vmem:[%s9161 + $0x68] sm:$0xff]
        %v9176 = vld [vmem:[%s9161 + $0x70] sm:$0xff]
        %v9177 = vld [vmem:[%s9161 + $0x78] sm:$0xff]
        %v9178 = vld [vmem:[%s9161 + $0x80] sm:$0xff]
        %v9179 = vld [vmem:[%s9161 + $0x88] sm:$0xff]
        %v9180 = vld [vmem:[%s9161 + $0x90] sm:$0xff]
        %v9181 = vld [vmem:[%s9161 + $0x98] sm:$0xff]
        %v9182 = vld [vmem:[%s9161 + $0xa0] sm:$0xff]
        %v9183 = vld [vmem:[%s9161 + $0xa8] sm:$0xff]
        %v9184 = vld [vmem:[%s9161 + $0xb0] sm:$0xff]
        %v9185 = vld [vmem:[%s9161 + $0xb8] sm:$0xff]
        %v9186 = vld [vmem:[%s9161 + $0xc0] sm:$0xff]
        %v9187 = vld [vmem:[%s9161 + $0xc8] sm:$0xff]
        %v9188 = vld [vmem:[%s9161 + $0xd0] sm:$0xff]
        %v9189 = vld [vmem:[%s9161 + $0xd8] sm:$0xff]
        %v9190 = vld [vmem:[%s9161 + $0xe0] sm:$0xff]
        %v9191 = vld [vmem:[%s9161 + $0xe8] sm:$0xff]
        %v9192 = vld [vmem:[%s9161 + $0xf0] sm:$0xff]
        %v9193 = vld [vmem:[%s9161 + $0xf8] sm:$0xff]
        %v9194 = vld [vmem:[%s9161 + $0x100] sm:$0xff]
        %v9195 = vld [vmem:[%s9161 + $0x108] sm:$0xff]
        %v9196 = vld [vmem:[%s9161 + $0x110] sm:$0xff]
        %v9197 = vld [vmem:[%s9161 + $0x118] sm:$0xff]
        %v9198 = vld [vmem:[%s9161 + $0x120] sm:$0xff]
        %v9199 = vld [vmem:[%s9161 + $0x128] sm:$0xff]
        %v9200 = vld [vmem:[%s9161 + $0x130] sm:$0xff]
        %v9201 = vld [vmem:[%s9161 + $0x138] sm:$0xff]
        %v9202 = vld [vmem:[%s9161 + $0x140] sm:$0xff]
        %v9203 = vld [vmem:[%s9161 + $0x148] sm:$0xff]
        %v9204 = vld [vmem:[%s9161 + $0x150] sm:$0xff]
        %v9205 = vld [vmem:[%s9161 + $0x158] sm:$0xff]
        %v9206 = vld [vmem:[%s9161 + $0x160] sm:$0xff]
        %v9207 = vld [vmem:[%s9161 + $0x168] sm:$0xff]
        %v9208 = vld [vmem:[%s9161 + $0x170] sm:$0xff]
        %v9209 = vld [vmem:[%s9161 + $0x178] sm:$0xff]
        %v9210 = vld [vmem:[%s9161 + $0x180] sm:$0xff]
        %v9211 = vld [vmem:[%s9161 + $0x188] sm:$0xff]
        %v9212 = vld [vmem:[%s9161 + $0x190] sm:$0xff]
        %v9213 = vld [vmem:[%s9161 + $0x198] sm:$0xff]
        %v9214 = vld [vmem:[%s9161 + $0x1a0] sm:$0xff]
        %v9215 = vld [vmem:[%s9161 + $0x1a8] sm:$0xff]
        %v9216 = vld [vmem:[%s9161 + $0x1b0] sm:$0xff]
        %v9217 = vld [vmem:[%s9161 + $0x1b8] sm:$0xff]
        %v9218 = vld [vmem:[%s9161 + $0x1c0] sm:$0xff]
        %v9219 = vld [vmem:[%s9161 + $0x1c8] sm:$0xff]
        %v9220 = vld [vmem:[%s9161 + $0x1d0] sm:$0xff]
        %v9221 = vld [vmem:[%s9161 + $0x1d8] sm:$0xff]
        %v9222 = vld [vmem:[%s9161 + $0x1e0] sm:$0xff]
        %v9223 = vld [vmem:[%s9161 + $0x1e8] sm:$0xff]
        %v9224 = vld [vmem:[%s9161 + $0x1f0] sm:$0xff]
        %v9225 = vld [vmem:[%s9161 + $0x1f8] sm:$0xff]
        %v9226 = vld [vmem:[%s9161 + $0x200] sm:$0xff]
        %v9227 = vld [vmem:[%s9161 + $0x208] sm:$0xff]
        %v9228 = vld [vmem:[%s9161 + $0x210] sm:$0xff]
        %v9229 = vld [vmem:[%s9161 + $0x218] sm:$0xff]
        %v9230 = vld [vmem:[%s9161 + $0x220] sm:$0xff]
        %v9231 = vld [vmem:[%s9161 + $0x228] sm:$0xff]
        %v9232 = vld [vmem:[%s9161 + $0x230] sm:$0xff]
        %v9233 = vld [vmem:[%s9161 + $0x238] sm:$0xff]
        %v9234 = vld [vmem:[%s9161 + $0x240] sm:$0xff]
        %v9235 = vld [vmem:[%s9161 + $0x248] sm:$0xff]
        %v9236 = vld [vmem:[%s9161 + $0x250] sm:$0xff]
        %v9237 = vld [vmem:[%s9161 + $0x258] sm:$0xff]
        %v9238 = vld [vmem:[%s9161 + $0x260] sm:$0xff]
        %v9239 = vld [vmem:[%s9161 + $0x268] sm:$0xff]
        %v9240 = vld [vmem:[%s9161 + $0x270] sm:$0xff]
        %v9241 = vld [vmem:[%s9161 + $0x278] sm:$0xff]
        %v9242 = vld [vmem:[%s9161 + $0x280] sm:$0xff]
        %v9243 = vld [vmem:[%s9161 + $0x288] sm:$0xff]
        %v9244 = vld [vmem:[%s9161 + $0x290] sm:$0xff]
        %v9245 = vld [vmem:[%s9161 + $0x298] sm:$0xff]
        %v9246 = vld [vmem:[%s9161 + $0x2a0] sm:$0xff]
        %v9247 = vld [vmem:[%s9161 + $0x2a8] sm:$0xff]
        %v9248 = vld [vmem:[%s9161 + $0x2b0] sm:$0xff]
        %v9249 = vld [vmem:[%s9161 + $0x2b8] sm:$0xff]
        %v9250 = vld [vmem:[%s9161 + $0x2c0] sm:$0xff]
        %v9251 = vld [vmem:[%s9161 + $0x2c8] sm:$0xff]
        %v9252 = vld [vmem:[%s9161 + $0x2d0] sm:$0xff]
        %v9253 = vld [vmem:[%s9161 + $0x2d8] sm:$0xff]
        %v9254 = vld [vmem:[%s9161 + $0x2e0] sm:$0xff]
        %v9255 = vld [vmem:[%s9161 + $0x2e8] sm:$0xff]
        %v9256 = vld [vmem:[%s9161 + $0x2f0] sm:$0xff]
        %v9257 = vld [vmem:[%s9161 + $0x2f8] sm:$0xff]
        %v9258 = vld [vmem:[%s9161 + $0x300] sm:$0xff]
        %v9259 = vld [vmem:[%s9161 + $0x308] sm:$0xff]
        %v9260 = vld [vmem:[%s9161 + $0x310] sm:$0xff]
        %v9261 = vld [vmem:[%s9161 + $0x318] sm:$0xff]
        %v9262 = vld [vmem:[%s9161 + $0x320] sm:$0xff]
        %v9263 = vld [vmem:[%s9161 + $0x328] sm:$0xff]
        %v9264 = vld [vmem:[%s9161 + $0x330] sm:$0xff]
        %v9265 = vld [vmem:[%s9161 + $0x338] sm:$0xff]
        %v9266 = vld [vmem:[%s9161 + $0x340] sm:$0xff]
        %v9267 = vld [vmem:[%s9161 + $0x348] sm:$0xff]
        %v9268 = vld [vmem:[%s9161 + $0x350] sm:$0xff]
        %v9269 = vld [vmem:[%s9161 + $0x358] sm:$0xff]
        %v9270 = vld [vmem:[%s9161 + $0x360] sm:$0xff]
        %v9271 = vld [vmem:[%s9161 + $0x368] sm:$0xff]
        %v9272 = vld [vmem:[%s9161 + $0x370] sm:$0xff]
        %v9273 = vld [vmem:[%s9161 + $0x378] sm:$0xff]
        %v9274 = vld [vmem:[%s9161 + $0x380] sm:$0xff]
        %v9275 = vld [vmem:[%s9161 + $0x388] sm:$0xff]
        %v9276 = vld [vmem:[%s9161 + $0x390] sm:$0xff]
        %v9277 = vld [vmem:[%s9161 + $0x398] sm:$0xff]
        %v9278 = vld [vmem:[%s9161 + $0x3a0] sm:$0xff]
        %v9279 = vld [vmem:[%s9161 + $0x3a8] sm:$0xff]
        %v9280 = vld [vmem:[%s9161 + $0x3b0] sm:$0xff]
        %v9281 = vld [vmem:[%s9161 + $0x3b8] sm:$0xff]
        %v9282 = vld [vmem:[%s9161 + $0x3c0] sm:$0xff]
        %v9283 = vld [vmem:[%s9161 + $0x3c8] sm:$0xff]
        %v9284 = vld [vmem:[%s9161 + $0x3d0] sm:$0xff]
        %v9285 = vld [vmem:[%s9161 + $0x3d8] sm:$0xff]
        %v9286 = vld [vmem:[%s9161 + $0x3e0] sm:$0xff]
        %v9287 = vld [vmem:[%s9161 + $0x3e8] sm:$0xff]
        %v9288 = vld [vmem:[%s9161 + $0x3f0] sm:$0xff]
        %v9289 = vld [vmem:[%s9161 + $0x3f8] sm:$0xff]
        %v9290 = vld [vmem:[%s9161 + $0x400] sm:$0xff]
        %v9291 = vld [vmem:[%s9161 + $0x408] sm:$0xff]
        %v9292 = vld [vmem:[%s9161 + $0x410] sm:$0xff]
        %v9293 = vld [vmem:[%s9161 + $0x418] sm:$0xff]
        %v9294 = vld [vmem:[%s9161 + $0x420] sm:$0xff]
        %v9295 = vld [vmem:[%s9161 + $0x428] sm:$0xff]
        %v9296 = vld [vmem:[%s9161 + $0x430] sm:$0xff]
        %v9297 = vld [vmem:[%s9161 + $0x438] sm:$0xff]
        %v9298 = vld [vmem:[%s9161 + $0x440] sm:$0xff]
        %v9299 = vld [vmem:[%s9161 + $0x448] sm:$0xff]
        %v9300 = vld [vmem:[%s9161 + $0x450] sm:$0xff]
        %v9301 = vld [vmem:[%s9161 + $0x458] sm:$0xff]
        %v9302 = vld [vmem:[%s9161 + $0x460] sm:$0xff]
        %v9303 = vld [vmem:[%s9161 + $0x468] sm:$0xff]
        %v9304 = vld [vmem:[%s9161 + $0x470] sm:$0xff]
        %v9305 = vld [vmem:[%s9161 + $0x478] sm:$0xff]
        %v9306 = vld [vmem:[%s9161 + $0x480] sm:$0xff]
        %v9307 = vld [vmem:[%s9161 + $0x488] sm:$0xff]
        %v9308 = vld [vmem:[%s9161 + $0x490] sm:$0xff]
        %v9309 = vld [vmem:[%s9161 + $0x498] sm:$0xff]
        %v9310 = vld [vmem:[%s9161 + $0x4a0] sm:$0xff]
        %v9311 = vld [vmem:[%s9161 + $0x4a8] sm:$0xff]
        %v9312 = vld [vmem:[%s9161 + $0x4b0] sm:$0xff]
        %v9313 = vld [vmem:[%s9161 + $0x4b8] sm:$0xff]
        %v9314 = vld [vmem:[%s9161 + $0x4c0] sm:$0xff]
        %v9315 = vld [vmem:[%s9161 + $0x4c8] sm:$0xff]
        %v9316 = vld [vmem:[%s9161 + $0x4d0] sm:$0xff]
        %v9317 = vld [vmem:[%s9161 + $0x4d8] sm:$0xff]
        %v9318 = vld [vmem:[%s9161 + $0x4e0] sm:$0xff]
        %v9319 = vld [vmem:[%s9161 + $0x4e8] sm:$0xff]
        %v9320 = vld [vmem:[%s9161 + $0x4f0] sm:$0xff]
        %v9321 = vld [vmem:[%s9161 + $0x4f8] sm:$0xff]
        %v9322 = vld [vmem:[%s9161 + $0x500] sm:$0xff]
        %v9323 = vld [vmem:[%s9161 + $0x508] sm:$0xff]
        %v9324 = vld [vmem:[%s9161 + $0x510] sm:$0xff]
        %v9325 = vld [vmem:[%s9161 + $0x518] sm:$0xff]
        %v9326 = vld [vmem:[%s9161 + $0x520] sm:$0xff]
        %v9327 = vld [vmem:[%s9161 + $0x528] sm:$0xff]
        %v9328 = vld [vmem:[%s9161 + $0x530] sm:$0xff]
        %v9329 = vld [vmem:[%s9161 + $0x538] sm:$0xff]
        %v9330 = vld [vmem:[%s9161 + $0x540] sm:$0xff]
        %v9331 = vld [vmem:[%s9161 + $0x548] sm:$0xff]
        %v9332 = vld [vmem:[%s9161 + $0x550] sm:$0xff]
        %v9333 = vld [vmem:[%s9161 + $0x558] sm:$0xff]
        %v9334 = vld [vmem:[%s9161 + $0x560] sm:$0xff]
        %v9335 = vld [vmem:[%s9161 + $0x568] sm:$0xff]
        %v9336 = vld [vmem:[%s9161 + $0x570] sm:$0xff]
        %v9337 = vld [vmem:[%s9161 + $0x578] sm:$0xff]
        %v9338 = vld [vmem:[%s9161 + $0x580] sm:$0xff]
        %v9339 = vld [vmem:[%s9161 + $0x588] sm:$0xff]
        %v9340 = vld [vmem:[%s9161 + $0x590] sm:$0xff]
        %v9341 = vld [vmem:[%s9161 + $0x598] sm:$0xff]
        %v9342 = vld [vmem:[%s9161 + $0x5a0] sm:$0xff]
        %v9343 = vld [vmem:[%s9161 + $0x5a8] sm:$0xff]
        %v9344 = vld [vmem:[%s9161 + $0x5b0] sm:$0xff]
        %v9345 = vld [vmem:[%s9161 + $0x5b8] sm:$0xff]
        %v9346 = vld [vmem:[%s9161 + $0x5c0] sm:$0xff]
        %v9347 = vld [vmem:[%s9161 + $0x5c8] sm:$0xff]
        %v9348 = vld [vmem:[%s9161 + $0x5d0] sm:$0xff]
        %v9349 = vld [vmem:[%s9161 + $0x5d8] sm:$0xff]
        %v9350 = vld [vmem:[%s9161 + $0x5e0] sm:$0xff]
        %v9351 = vld [vmem:[%s9161 + $0x5e8] sm:$0xff]
        %v9352 = vld [vmem:[%s9161 + $0x5f0] sm:$0xff]
        %v9353 = vld [vmem:[%s9161 + $0x5f8] sm:$0xff]
        %v9354 = vld [vmem:[%s9161 + $0x600] sm:$0xff]
        %v9355 = vld [vmem:[%s9161 + $0x608] sm:$0xff]
        %v9356 = vld [vmem:[%s9161 + $0x610] sm:$0xff]
        %v9357 = vld [vmem:[%s9161 + $0x618] sm:$0xff]
        %v9358 = vld [vmem:[%s9161 + $0x620] sm:$0xff]
        %v9359 = vld [vmem:[%s9161 + $0x628] sm:$0xff]
        %v9360 = vld [vmem:[%s9161 + $0x630] sm:$0xff]
        %v9361 = vld [vmem:[%s9161 + $0x638] sm:$0xff]
        %v9362 = vld [vmem:[%s9161 + $0x640] sm:$0xff]
        %v9363 = vld [vmem:[%s9161 + $0x648] sm:$0xff]
        %v9364 = vld [vmem:[%s9161 + $0x650] sm:$0xff]
        %v9365 = vld [vmem:[%s9161 + $0x658] sm:$0xff]
        %v9366 = vld [vmem:[%s9161 + $0x660] sm:$0xff]
        %v9367 = vld [vmem:[%s9161 + $0x668] sm:$0xff]
        %v9368 = vld [vmem:[%s9161 + $0x670] sm:$0xff]
        %v9369 = vld [vmem:[%s9161 + $0x678] sm:$0xff]
        %v9370 = vld [vmem:[%s9161 + $0x680] sm:$0xff]
        %v9371 = vld [vmem:[%s9161 + $0x688] sm:$0xff]
        %v9372 = vld [vmem:[%s9161 + $0x690] sm:$0xff]
        %v9373 = vld [vmem:[%s9161 + $0x698] sm:$0xff]
        %v9374 = vld [vmem:[%s9161 + $0x6a0] sm:$0xff]
        %v9375 = vld [vmem:[%s9161 + $0x6a8] sm:$0xff]
        %v9376 = vld [vmem:[%s9161 + $0x6b0] sm:$0xff]
        %v9377 = vld [vmem:[%s9161 + $0x6b8] sm:$0xff]
        %v9378 = vld [vmem:[%s9161 + $0x6c0] sm:$0xff]
        %v9379 = vld [vmem:[%s9161 + $0x6c8] sm:$0xff]
        %v9380 = vld [vmem:[%s9161 + $0x6d0] sm:$0xff]
        %v9381 = vld [vmem:[%s9161 + $0x6d8] sm:$0xff]
        %v9382 = vld [vmem:[%s9161 + $0x6e0] sm:$0xff]
        %v9383 = vld [vmem:[%s9161 + $0x6e8] sm:$0xff]
        %v9384 = vld [vmem:[%s9161 + $0x6f0] sm:$0xff]
        %v9385 = vld [vmem:[%s9161 + $0x6f8] sm:$0xff]
        %v9390 = vunpack.c.l.b16 %v9157
        %v9391 = vunpack.c.h.b16 %v9157
        %v9392 = vunpack.c.l.b16 %v9158
        %v9393 = vunpack.c.h.b16 %v9158
        %v9394 = vunpack.c.l.b16 %v9159
        %v9395 = vunpack.c.h.b16 %v9159
        %v9396 = vunpack.c.l.b16 %v9160
        %v9397 = vpack.c.b16 %v6177, %v9390
        %v9398 = vpack.c.b16 %v6178, %v9391
        %v9399 = vpack.c.b16 %v6179, %v9392
        %v9400 = vpack.c.b16 %v6180, %v9393
        %v9401 = vpack.c.b16 %v6181, %v9394
        %v9402 = vpack.c.b16 %v6182, %v9395
        %v9403 = vpack.c.b16 %v6183, %v9396
        %v9404 = vrot.slane %v9397, 1
        %v9405 = vrot.slane %v9398, 1
        %v9406 = vrot.slane %v9399, 1
        %v9407 = vrot.slane %v9400, 1
        %v9408 = vrot.slane %v9401, 1
        %v9409 = vrot.slane %v9402, 1
        %v9410 = vrot.slane %v9403, 1
        %v9642 = vunpack.c.l.b16 %v9162
        %v9643 = vunpack.c.h.b16 %v9162
        %v9644 = vunpack.c.l.b16 %v9163
        %v9645 = vunpack.c.h.b16 %v9163
        %v9646 = vunpack.c.l.b16 %v9164
        %v9647 = vunpack.c.h.b16 %v9164
        %v9648 = vunpack.c.l.b16 %v9165
        %v9649 = vunpack.c.h.b16 %v9165
        %v9650 = vunpack.c.l.b16 %v9166
        %v9651 = vunpack.c.h.b16 %v9166
        %v9652 = vunpack.c.l.b16 %v9167
        %v9653 = vunpack.c.h.b16 %v9167
        %v9654 = vunpack.c.l.b16 %v9168
        %v9655 = vunpack.c.h.b16 %v9168
        %v9656 = vunpack.c.l.b16 %v9169
        %v9657 = vunpack.c.h.b16 %v9169
        %v9658 = vunpack.c.l.b16 %v9170
        %v9659 = vunpack.c.h.b16 %v9170
        %v9660 = vunpack.c.l.b16 %v9171
        %v9661 = vunpack.c.h.b16 %v9171
        %v9662 = vunpack.c.l.b16 %v9172
        %v9663 = vunpack.c.h.b16 %v9172
        %v9664 = vunpack.c.l.b16 %v9173
        %v9665 = vunpack.c.h.b16 %v9173
        %v9666 = vunpack.c.l.b16 %v9174
        %v9667 = vunpack.c.h.b16 %v9174
        %v9668 = vunpack.c.l.b16 %v9175
        %v9669 = vunpack.c.h.b16 %v9175
        %v9670 = vunpack.c.l.b16 %v9176
        %v9671 = vunpack.c.h.b16 %v9176
        %v9672 = vunpack.c.l.b16 %v9177
        %v9673 = vunpack.c.h.b16 %v9177
        %v9674 = vunpack.c.l.b16 %v9178
        %v9675 = vunpack.c.h.b16 %v9178
        %v9676 = vunpack.c.l.b16 %v9179
        %v9677 = vunpack.c.h.b16 %v9179
        %v9678 = vunpack.c.l.b16 %v9180
        %v9679 = vunpack.c.h.b16 %v9180
        %v9680 = vunpack.c.l.b16 %v9181
        %v9681 = vunpack.c.h.b16 %v9181
        %v9682 = vunpack.c.l.b16 %v9182
        %v9683 = vunpack.c.h.b16 %v9182
        %v9684 = vunpack.c.l.b16 %v9183
        %v9685 = vunpack.c.h.b16 %v9183
        %v9686 = vunpack.c.l.b16 %v9184
        %v9687 = vunpack.c.h.b16 %v9184
        %v9688 = vunpack.c.l.b16 %v9185
        %v9689 = vunpack.c.h.b16 %v9185
        %v9690 = vunpack.c.l.b16 %v9186
        %v9691 = vunpack.c.h.b16 %v9186
        %v9692 = vunpack.c.l.b16 %v9187
        %v9693 = vunpack.c.h.b16 %v9187
        %v9694 = vunpack.c.l.b16 %v9188
        %v9695 = vunpack.c.h.b16 %v9188
        %v9696 = vunpack.c.l.b16 %v9189
        %v9697 = vunpack.c.h.b16 %v9189
        %v9698 = vunpack.c.l.b16 %v9190
        %v9699 = vunpack.c.h.b16 %v9190
        %v9700 = vunpack.c.l.b16 %v9191
        %v9701 = vunpack.c.h.b16 %v9191
        %v9702 = vunpack.c.l.b16 %v9192
        %v9703 = vunpack.c.h.b16 %v9192
        %v9704 = vunpack.c.l.b16 %v9193
        %v9705 = vunpack.c.h.b16 %v9193
        %v9706 = vunpack.c.l.b16 %v9194
        %v9707 = vunpack.c.h.b16 %v9194
        %v9708 = vunpack.c.l.b16 %v9195
        %v9709 = vunpack.c.h.b16 %v9195
        %v9710 = vunpack.c.l.b16 %v9196
        %v9711 = vunpack.c.h.b16 %v9196
        %v9712 = vunpack.c.l.b16 %v9197
        %v9713 = vunpack.c.h.b16 %v9197
        %v9714 = vunpack.c.l.b16 %v9198
        %v9715 = vunpack.c.h.b16 %v9198
        %v9716 = vunpack.c.l.b16 %v9199
        %v9717 = vunpack.c.h.b16 %v9199
        %v9718 = vunpack.c.l.b16 %v9200
        %v9719 = vunpack.c.h.b16 %v9200
        %v9720 = vunpack.c.l.b16 %v9201
        %v9721 = vunpack.c.h.b16 %v9201
        %v9722 = vunpack.c.l.b16 %v9202
        %v9723 = vunpack.c.h.b16 %v9202
        %v9724 = vunpack.c.l.b16 %v9203
        %v9725 = vunpack.c.h.b16 %v9203
        %v9726 = vunpack.c.l.b16 %v9204
        %v9727 = vunpack.c.h.b16 %v9204
        %v9728 = vunpack.c.l.b16 %v9205
        %v9729 = vunpack.c.h.b16 %v9205
        %v9730 = vunpack.c.l.b16 %v9206
        %v9731 = vunpack.c.h.b16 %v9206
        %v9732 = vunpack.c.l.b16 %v9207
        %v9733 = vunpack.c.h.b16 %v9207
        %v9734 = vunpack.c.l.b16 %v9208
        %v9735 = vunpack.c.h.b16 %v9208
        %v9736 = vunpack.c.l.b16 %v9209
        %v9737 = vunpack.c.h.b16 %v9209
        %v9738 = vunpack.c.l.b16 %v9210
        %v9739 = vunpack.c.h.b16 %v9210
        %v9740 = vunpack.c.l.b16 %v9211
        %v9741 = vunpack.c.h.b16 %v9211
        %v9742 = vunpack.c.l.b16 %v9212
        %v9743 = vunpack.c.h.b16 %v9212
        %v9744 = vunpack.c.l.b16 %v9213
        %v9745 = vunpack.c.h.b16 %v9213
        %v9746 = vunpack.c.l.b16 %v9214
        %v9747 = vunpack.c.h.b16 %v9214
        %v9748 = vunpack.c.l.b16 %v9215
        %v9749 = vunpack.c.h.b16 %v9215
        %v9750 = vunpack.c.l.b16 %v9216
        %v9751 = vunpack.c.h.b16 %v9216
        %v9752 = vunpack.c.l.b16 %v9217
        %v9753 = vunpack.c.h.b16 %v9217
        %v9754 = vunpack.c.l.b16 %v9218
        %v9755 = vunpack.c.h.b16 %v9218
        %v9756 = vunpack.c.l.b16 %v9219
        %v9757 = vunpack.c.h.b16 %v9219
        %v9758 = vunpack.c.l.b16 %v9220
        %v9759 = vunpack.c.h.b16 %v9220
        %v9760 = vunpack.c.l.b16 %v9221
        %v9761 = vunpack.c.h.b16 %v9221
        %v9762 = vunpack.c.l.b16 %v9222
        %v9763 = vunpack.c.h.b16 %v9222
        %v9764 = vunpack.c.l.b16 %v9223
        %v9765 = vunpack.c.h.b16 %v9223
        %v9766 = vunpack.c.l.b16 %v9224
        %v9767 = vunpack.c.h.b16 %v9224
        %v9768 = vunpack.c.l.b16 %v9225
        %v9769 = vunpack.c.h.b16 %v9225
        %v9770 = vunpack.c.l.b16 %v9226
        %v9771 = vunpack.c.h.b16 %v9226
        %v9772 = vunpack.c.l.b16 %v9227
        %v9773 = vunpack.c.h.b16 %v9227
        %v9774 = vunpack.c.l.b16 %v9228
        %v9775 = vunpack.c.h.b16 %v9228
        %v9776 = vunpack.c.l.b16 %v9229
        %v9777 = vunpack.c.h.b16 %v9229
        %v9778 = vunpack.c.l.b16 %v9230
        %v9779 = vunpack.c.h.b16 %v9230
        %v9780 = vunpack.c.l.b16 %v9231
        %v9781 = vunpack.c.h.b16 %v9231
        %v9782 = vunpack.c.l.b16 %v9232
        %v9783 = vunpack.c.h.b16 %v9232
        %v9784 = vunpack.c.l.b16 %v9233
        %v9785 = vunpack.c.h.b16 %v9233
        %v9786 = vunpack.c.l.b16 %v9234
        %v9787 = vunpack.c.h.b16 %v9234
        %v9788 = vunpack.c.l.b16 %v9235
        %v9789 = vunpack.c.h.b16 %v9235
        %v9790 = vunpack.c.l.b16 %v9236
        %v9791 = vunpack.c.h.b16 %v9236
        %v9792 = vunpack.c.l.b16 %v9237
        %v9793 = vunpack.c.h.b16 %v9237
        %v9794 = vunpack.c.l.b16 %v9238
        %v9795 = vunpack.c.h.b16 %v9238
        %v9796 = vunpack.c.l.b16 %v9239
        %v9797 = vunpack.c.h.b16 %v9239
        %v9798 = vunpack.c.l.b16 %v9240
        %v9799 = vunpack.c.h.b16 %v9240
        %v9800 = vunpack.c.l.b16 %v9241
        %v9801 = vunpack.c.h.b16 %v9241
        %v9802 = vunpack.c.l.b16 %v9242
        %v9803 = vunpack.c.h.b16 %v9242
        %v9804 = vunpack.c.l.b16 %v9243
        %v9805 = vunpack.c.h.b16 %v9243
        %v9806 = vunpack.c.l.b16 %v9244
        %v9807 = vunpack.c.h.b16 %v9244
        %v9808 = vunpack.c.l.b16 %v9245
        %v9809 = vunpack.c.h.b16 %v9245
        %v9810 = vunpack.c.l.b16 %v9246
        %v9811 = vunpack.c.h.b16 %v9246
        %v9812 = vunpack.c.l.b16 %v9247
        %v9813 = vunpack.c.h.b16 %v9247
        %v9814 = vunpack.c.l.b16 %v9248
        %v9815 = vunpack.c.h.b16 %v9248
        %v9816 = vunpack.c.l.b16 %v9249
        %v9817 = vunpack.c.h.b16 %v9249
        %v9818 = vunpack.c.l.b16 %v9250
        %v9819 = vunpack.c.h.b16 %v9250
        %v9820 = vunpack.c.l.b16 %v9251
        %v9821 = vunpack.c.h.b16 %v9251
        %v9822 = vunpack.c.l.b16 %v9252
        %v9823 = vunpack.c.h.b16 %v9252
        %v9824 = vunpack.c.l.b16 %v9253
        %v9825 = vunpack.c.h.b16 %v9253
        %v9826 = vunpack.c.l.b16 %v9254
        %v9827 = vunpack.c.h.b16 %v9254
        %v9828 = vunpack.c.l.b16 %v9255
        %v9829 = vunpack.c.h.b16 %v9255
        %v9830 = vunpack.c.l.b16 %v9256
        %v9831 = vunpack.c.h.b16 %v9256
        %v9832 = vunpack.c.l.b16 %v9257
        %v9833 = vunpack.c.h.b16 %v9257
        %v9834 = vunpack.c.l.b16 %v9258
        %v9835 = vunpack.c.h.b16 %v9258
        %v9836 = vunpack.c.l.b16 %v9259
        %v9837 = vunpack.c.h.b16 %v9259
        %v9838 = vunpack.c.l.b16 %v9260
        %v9839 = vunpack.c.h.b16 %v9260
        %v9840 = vunpack.c.l.b16 %v9261
        %v9841 = vunpack.c.h.b16 %v9261
        %v9842 = vunpack.c.l.b16 %v9262
        %v9843 = vunpack.c.h.b16 %v9262
        %v9844 = vunpack.c.l.b16 %v9263
        %v9845 = vunpack.c.h.b16 %v9263
        %v9846 = vunpack.c.l.b16 %v9264
        %v9847 = vunpack.c.h.b16 %v9264
        %v9848 = vunpack.c.l.b16 %v9265
        %v9849 = vunpack.c.h.b16 %v9265
        %v9850 = vunpack.c.l.b16 %v9266
        %v9851 = vunpack.c.h.b16 %v9266
        %v9852 = vunpack.c.l.b16 %v9267
        %v9853 = vunpack.c.h.b16 %v9267
        %v9854 = vunpack.c.l.b16 %v9268
        %v9855 = vunpack.c.h.b16 %v9268
        %v9856 = vunpack.c.l.b16 %v9269
        %v9857 = vunpack.c.h.b16 %v9269
        %v9858 = vunpack.c.l.b16 %v9270
        %v9859 = vunpack.c.h.b16 %v9270
        %v9860 = vunpack.c.l.b16 %v9271
        %v9861 = vunpack.c.h.b16 %v9271
        %v9862 = vunpack.c.l.b16 %v9272
        %v9863 = vunpack.c.h.b16 %v9272
        %v9864 = vunpack.c.l.b16 %v9273
        %v9865 = vunpack.c.h.b16 %v9273
        %v9866 = vunpack.c.l.b16 %v9274
        %v9867 = vunpack.c.h.b16 %v9274
        %v9868 = vunpack.c.l.b16 %v9275
        %v9869 = vunpack.c.h.b16 %v9275
        %v9870 = vunpack.c.l.b16 %v9276
        %v9871 = vunpack.c.h.b16 %v9276
        %v9872 = vunpack.c.l.b16 %v9277
        %v9873 = vunpack.c.h.b16 %v9277
        %v9874 = vunpack.c.l.b16 %v9278
        %v9875 = vunpack.c.h.b16 %v9278
        %v9876 = vunpack.c.l.b16 %v9279
        %v9877 = vunpack.c.h.b16 %v9279
        %v9878 = vunpack.c.l.b16 %v9280
        %v9879 = vunpack.c.h.b16 %v9280
        %v9880 = vunpack.c.l.b16 %v9281
        %v9881 = vunpack.c.h.b16 %v9281
        %v9882 = vunpack.c.l.b16 %v9282
        %v9883 = vunpack.c.h.b16 %v9282
        %v9884 = vunpack.c.l.b16 %v9283
        %v9885 = vunpack.c.h.b16 %v9283
        %v9886 = vunpack.c.l.b16 %v9284
        %v9887 = vunpack.c.h.b16 %v9284
        %v9888 = vunpack.c.l.b16 %v9285
        %v9889 = vunpack.c.h.b16 %v9285
        %v9890 = vunpack.c.l.b16 %v9286
        %v9891 = vunpack.c.h.b16 %v9286
        %v9892 = vunpack.c.l.b16 %v9287
        %v9893 = vunpack.c.h.b16 %v9287
        %v9894 = vunpack.c.l.b16 %v9288
        %v9895 = vunpack.c.h.b16 %v9288
        %v9896 = vunpack.c.l.b16 %v9289
        %v9897 = vunpack.c.h.b16 %v9289
        %v9898 = vunpack.c.l.b16 %v9290
        %v9899 = vunpack.c.h.b16 %v9290
        %v9900 = vunpack.c.l.b16 %v9291
        %v9901 = vunpack.c.h.b16 %v9291
        %v9902 = vunpack.c.l.b16 %v9292
        %v9903 = vunpack.c.h.b16 %v9292
        %v9904 = vunpack.c.l.b16 %v9293
        %v9905 = vunpack.c.h.b16 %v9293
        %v9906 = vunpack.c.l.b16 %v9294
        %v9907 = vunpack.c.h.b16 %v9294
        %v9908 = vunpack.c.l.b16 %v9295
        %v9909 = vunpack.c.h.b16 %v9295
        %v9910 = vunpack.c.l.b16 %v9296
        %v9911 = vunpack.c.h.b16 %v9296
        %v9912 = vunpack.c.l.b16 %v9297
        %v9913 = vunpack.c.h.b16 %v9297
        %v9914 = vunpack.c.l.b16 %v9298
        %v9915 = vunpack.c.h.b16 %v9298
        %v9916 = vunpack.c.l.b16 %v9299
        %v9917 = vunpack.c.h.b16 %v9299
        %v9918 = vunpack.c.l.b16 %v9300
        %v9919 = vunpack.c.h.b16 %v9300
        %v9920 = vunpack.c.l.b16 %v9301
        %v9921 = vunpack.c.h.b16 %v9301
        %v9922 = vunpack.c.l.b16 %v9302
        %v9923 = vunpack.c.h.b16 %v9302
        %v9924 = vunpack.c.l.b16 %v9303
        %v9925 = vunpack.c.h.b16 %v9303
        %v9926 = vunpack.c.l.b16 %v9304
        %v9927 = vunpack.c.h.b16 %v9304
        %v9928 = vunpack.c.l.b16 %v9305
        %v9929 = vunpack.c.h.b16 %v9305
        %v9930 = vunpack.c.l.b16 %v9306
        %v9931 = vunpack.c.h.b16 %v9306
        %v9932 = vunpack.c.l.b16 %v9307
        %v9933 = vunpack.c.h.b16 %v9307
        %v9934 = vunpack.c.l.b16 %v9308
        %v9935 = vunpack.c.h.b16 %v9308
        %v9936 = vunpack.c.l.b16 %v9309
        %v9937 = vunpack.c.h.b16 %v9309
        %v9938 = vunpack.c.l.b16 %v9310
        %v9939 = vunpack.c.h.b16 %v9310
        %v9940 = vunpack.c.l.b16 %v9311
        %v9941 = vunpack.c.h.b16 %v9311
        %v9942 = vunpack.c.l.b16 %v9312
        %v9943 = vunpack.c.h.b16 %v9312
        %v9944 = vunpack.c.l.b16 %v9313
        %v9945 = vunpack.c.h.b16 %v9313
        %v9946 = vunpack.c.l.b16 %v9314
        %v9947 = vunpack.c.h.b16 %v9314
        %v9948 = vunpack.c.l.b16 %v9315
        %v9949 = vunpack.c.h.b16 %v9315
        %v9950 = vunpack.c.l.b16 %v9316
        %v9951 = vunpack.c.h.b16 %v9316
        %v9952 = vunpack.c.l.b16 %v9317
        %v9953 = vunpack.c.h.b16 %v9317
        %v9954 = vunpack.c.l.b16 %v9318
        %v9955 = vunpack.c.h.b16 %v9318
        %v9956 = vunpack.c.l.b16 %v9319
        %v9957 = vunpack.c.h.b16 %v9319
        %v9958 = vunpack.c.l.b16 %v9320
        %v9959 = vunpack.c.h.b16 %v9320
        %v9960 = vunpack.c.l.b16 %v9321
        %v9961 = vunpack.c.h.b16 %v9321
        %v9962 = vunpack.c.l.b16 %v9322
        %v9963 = vunpack.c.h.b16 %v9322
        %v9964 = vunpack.c.l.b16 %v9323
        %v9965 = vunpack.c.h.b16 %v9323
        %v9966 = vunpack.c.l.b16 %v9324
        %v9967 = vunpack.c.h.b16 %v9324
        %v9968 = vunpack.c.l.b16 %v9325
        %v9969 = vunpack.c.h.b16 %v9325
        %v9970 = vunpack.c.l.b16 %v9326
        %v9971 = vunpack.c.h.b16 %v9326
        %v9972 = vunpack.c.l.b16 %v9327
        %v9973 = vunpack.c.h.b16 %v9327
        %v9974 = vunpack.c.l.b16 %v9328
        %v9975 = vunpack.c.h.b16 %v9328
        %v9976 = vunpack.c.l.b16 %v9329
        %v9977 = vunpack.c.h.b16 %v9329
        %v9978 = vunpack.c.l.b16 %v9330
        %v9979 = vunpack.c.h.b16 %v9330
        %v9980 = vunpack.c.l.b16 %v9331
        %v9981 = vunpack.c.h.b16 %v9331
        %v9982 = vunpack.c.l.b16 %v9332
        %v9983 = vunpack.c.h.b16 %v9332
        %v9984 = vunpack.c.l.b16 %v9333
        %v9985 = vunpack.c.h.b16 %v9333
        %v9986 = vunpack.c.l.b16 %v9334
        %v9987 = vunpack.c.h.b16 %v9334
        %v9988 = vunpack.c.l.b16 %v9335
        %v9989 = vunpack.c.h.b16 %v9335
        %v9990 = vunpack.c.l.b16 %v9336
        %v9991 = vunpack.c.h.b16 %v9336
        %v9992 = vunpack.c.l.b16 %v9337
        %v9993 = vunpack.c.h.b16 %v9337
        %v9994 = vunpack.c.l.b16 %v9338
        %v9995 = vunpack.c.h.b16 %v9338
        %v9996 = vunpack.c.l.b16 %v9339
        %v9997 = vunpack.c.h.b16 %v9339
        %v9998 = vunpack.c.l.b16 %v9340
        %v9999 = vunpack.c.h.b16 %v9340
        %v10000 = vunpack.c.l.b16 %v9341
        %v10001 = vunpack.c.h.b16 %v9341
        %v10002 = vunpack.c.l.b16 %v9342
        %v10003 = vunpack.c.h.b16 %v9342
        %v10004 = vunpack.c.l.b16 %v9343
        %v10005 = vunpack.c.h.b16 %v9343
        %v10006 = vunpack.c.l.b16 %v9344
        %v10007 = vunpack.c.h.b16 %v9344
        %v10008 = vunpack.c.l.b16 %v9345
        %v10009 = vunpack.c.h.b16 %v9345
        %v10010 = vunpack.c.l.b16 %v9346
        %v10011 = vunpack.c.h.b16 %v9346
        %v10012 = vunpack.c.l.b16 %v9347
        %v10013 = vunpack.c.h.b16 %v9347
        %v10014 = vunpack.c.l.b16 %v9348
        %v10015 = vunpack.c.h.b16 %v9348
        %v10016 = vunpack.c.l.b16 %v9349
        %v10017 = vunpack.c.h.b16 %v9349
        %v10018 = vunpack.c.l.b16 %v9350
        %v10019 = vunpack.c.h.b16 %v9350
        %v10020 = vunpack.c.l.b16 %v9351
        %v10021 = vunpack.c.h.b16 %v9351
        %v10022 = vunpack.c.l.b16 %v9352
        %v10023 = vunpack.c.h.b16 %v9352
        %v10024 = vunpack.c.l.b16 %v9353
        %v10025 = vunpack.c.h.b16 %v9353
        %v10026 = vunpack.c.l.b16 %v9354
        %v10027 = vunpack.c.h.b16 %v9354
        %v10028 = vunpack.c.l.b16 %v9355
        %v10029 = vunpack.c.h.b16 %v9355
        %v10030 = vunpack.c.l.b16 %v9356
        %v10031 = vunpack.c.h.b16 %v9356
        %v10032 = vunpack.c.l.b16 %v9357
        %v10033 = vunpack.c.h.b16 %v9357
        %v10034 = vunpack.c.l.b16 %v9358
        %v10035 = vunpack.c.h.b16 %v9358
        %v10036 = vunpack.c.l.b16 %v9359
        %v10037 = vunpack.c.h.b16 %v9359
        %v10038 = vunpack.c.l.b16 %v9360
        %v10039 = vunpack.c.h.b16 %v9360
        %v10040 = vunpack.c.l.b16 %v9361
        %v10041 = vunpack.c.h.b16 %v9361
        %v10042 = vunpack.c.l.b16 %v9362
        %v10043 = vunpack.c.h.b16 %v9362
        %v10044 = vunpack.c.l.b16 %v9363
        %v10045 = vunpack.c.h.b16 %v9363
        %v10046 = vunpack.c.l.b16 %v9364
        %v10047 = vunpack.c.h.b16 %v9364
        %v10048 = vunpack.c.l.b16 %v9365
        %v10049 = vunpack.c.h.b16 %v9365
        %v10050 = vunpack.c.l.b16 %v9366
        %v10051 = vunpack.c.h.b16 %v9366
        %v10052 = vunpack.c.l.b16 %v9367
        %v10053 = vunpack.c.h.b16 %v9367
        %v10054 = vunpack.c.l.b16 %v9368
        %v10055 = vunpack.c.h.b16 %v9368
        %v10056 = vunpack.c.l.b16 %v9369
        %v10057 = vunpack.c.h.b16 %v9369
        %v10058 = vunpack.c.l.b16 %v9370
        %v10059 = vunpack.c.h.b16 %v9370
        %v10060 = vunpack.c.l.b16 %v9371
        %v10061 = vunpack.c.h.b16 %v9371
        %v10062 = vunpack.c.l.b16 %v9372
        %v10063 = vunpack.c.h.b16 %v9372
        %v10064 = vunpack.c.l.b16 %v9373
        %v10065 = vunpack.c.h.b16 %v9373
        %v10066 = vunpack.c.l.b16 %v9374
        %v10067 = vunpack.c.h.b16 %v9374
        %v10068 = vunpack.c.l.b16 %v9375
        %v10069 = vunpack.c.h.b16 %v9375
        %v10070 = vunpack.c.l.b16 %v9376
        %v10071 = vunpack.c.h.b16 %v9376
        %v10072 = vunpack.c.l.b16 %v9377
        %v10073 = vunpack.c.h.b16 %v9377
        %v10074 = vunpack.c.l.b16 %v9378
        %v10075 = vunpack.c.h.b16 %v9378
        %v10076 = vunpack.c.l.b16 %v9379
        %v10077 = vunpack.c.h.b16 %v9379
        %v10078 = vunpack.c.l.b16 %v9380
        %v10079 = vunpack.c.h.b16 %v9380
        %v10080 = vunpack.c.l.b16 %v9381
        %v10081 = vunpack.c.h.b16 %v9381
        %v10082 = vunpack.c.l.b16 %v9382
        %v10083 = vunpack.c.h.b16 %v9382
        %v10084 = vunpack.c.l.b16 %v9383
        %v10085 = vunpack.c.h.b16 %v9383
        %v10086 = vunpack.c.l.b16 %v9384
        %v10087 = vunpack.c.h.b16 %v9384
        %v10088 = vunpack.c.l.b16 %v9385
        %v10089 = vunpack.c.h.b16 %v9385
        %v10090 = vpack.c.b16 %v9646, %v9642
        %v10091 = vpack.c.b16 %v9647, %v9643
        %v10092 = vpack.c.b16 %v9648, %v9644
        %v10093 = vpack.c.b16 %v9649, %v9645
        %v10094 = vpack.c.b16 %v9654, %v9650
        %v10095 = vpack.c.b16 %v9655, %v9651
        %v10096 = vpack.c.b16 %v9656, %v9652
        %v10097 = vpack.c.b16 %v9657, %v9653
        %v10098 = vpack.c.b16 %v9662, %v9658
        %v10099 = vpack.c.b16 %v9663, %v9659
        %v10100 = vpack.c.b16 %v9664, %v9660
        %v10101 = vpack.c.b16 %v9665, %v9661
        %v10102 = vpack.c.b16 %v9670, %v9666
        %v10103 = vpack.c.b16 %v9671, %v9667
        %v10104 = vpack.c.b16 %v9672, %v9668
        %v10105 = vpack.c.b16 %v9673, %v9669
        %v10106 = vpack.c.b16 %v9678, %v9674
        %v10107 = vpack.c.b16 %v9679, %v9675
        %v10108 = vpack.c.b16 %v9680, %v9676
        %v10109 = vpack.c.b16 %v9681, %v9677
        %v10110 = vpack.c.b16 %v9686, %v9682
        %v10111 = vpack.c.b16 %v9687, %v9683
        %v10112 = vpack.c.b16 %v9688, %v9684
        %v10113 = vpack.c.b16 %v9689, %v9685
        %v10114 = vpack.c.b16 %v9694, %v9690
        %v10115 = vpack.c.b16 %v9695, %v9691
        %v10116 = vpack.c.b16 %v9696, %v9692
        %v10117 = vpack.c.b16 %v9697, %v9693
        %v10118 = vpack.c.b16 %v9702, %v9698
        %v10119 = vpack.c.b16 %v9703, %v9699
        %v10120 = vpack.c.b16 %v9704, %v9700
        %v10121 = vpack.c.b16 %v9705, %v9701
        %v10122 = vpack.c.b16 %v9710, %v9706
        %v10123 = vpack.c.b16 %v9711, %v9707
        %v10124 = vpack.c.b16 %v9712, %v9708
        %v10125 = vpack.c.b16 %v9713, %v9709
        %v10126 = vpack.c.b16 %v9718, %v9714
        %v10127 = vpack.c.b16 %v9719, %v9715
        %v10128 = vpack.c.b16 %v9720, %v9716
        %v10129 = vpack.c.b16 %v9721, %v9717
        %v10130 = vpack.c.b16 %v9726, %v9722
        %v10131 = vpack.c.b16 %v9727, %v9723
        %v10132 = vpack.c.b16 %v9728, %v9724
        %v10133 = vpack.c.b16 %v9729, %v9725
        %v10134 = vpack.c.b16 %v9734, %v9730
        %v10135 = vpack.c.b16 %v9735, %v9731
        %v10136 = vpack.c.b16 %v9736, %v9732
        %v10137 = vpack.c.b16 %v9737, %v9733
        %v10138 = vpack.c.b16 %v9742, %v9738
        %v10139 = vpack.c.b16 %v9743, %v9739
        %v10140 = vpack.c.b16 %v9744, %v9740
        %v10141 = vpack.c.b16 %v9745, %v9741
        %v10142 = vpack.c.b16 %v9750, %v9746
        %v10143 = vpack.c.b16 %v9751, %v9747
        %v10144 = vpack.c.b16 %v9752, %v9748
        %v10145 = vpack.c.b16 %v9753, %v9749
        %v10146 = vpack.c.b16 %v9758, %v9754
        %v10147 = vpack.c.b16 %v9759, %v9755
        %v10148 = vpack.c.b16 %v9760, %v9756
        %v10149 = vpack.c.b16 %v9761, %v9757
        %v10150 = vpack.c.b16 %v9766, %v9762
        %v10151 = vpack.c.b16 %v9767, %v9763
        %v10152 = vpack.c.b16 %v9768, %v9764
        %v10153 = vpack.c.b16 %v9769, %v9765
        %v10154 = vpack.c.b16 %v9774, %v9770
        %v10155 = vpack.c.b16 %v9775, %v9771
        %v10156 = vpack.c.b16 %v9776, %v9772
        %v10157 = vpack.c.b16 %v9777, %v9773
        %v10158 = vpack.c.b16 %v9782, %v9778
        %v10159 = vpack.c.b16 %v9783, %v9779
        %v10160 = vpack.c.b16 %v9784, %v9780
        %v10161 = vpack.c.b16 %v9785, %v9781
        %v10162 = vpack.c.b16 %v9790, %v9786
        %v10163 = vpack.c.b16 %v9791, %v9787
        %v10164 = vpack.c.b16 %v9792, %v9788
        %v10165 = vpack.c.b16 %v9793, %v9789
        %v10166 = vpack.c.b16 %v9798, %v9794
        %v10167 = vpack.c.b16 %v9799, %v9795
        %v10168 = vpack.c.b16 %v9800, %v9796
        %v10169 = vpack.c.b16 %v9801, %v9797
        %v10170 = vpack.c.b16 %v9806, %v9802
        %v10171 = vpack.c.b16 %v9807, %v9803
        %v10172 = vpack.c.b16 %v9808, %v9804
        %v10173 = vpack.c.b16 %v9809, %v9805
        %v10174 = vpack.c.b16 %v9814, %v9810
        %v10175 = vpack.c.b16 %v9815, %v9811
        %v10176 = vpack.c.b16 %v9816, %v9812
        %v10177 = vpack.c.b16 %v9817, %v9813
        %v10178 = vpack.c.b16 %v9822, %v9818
        %v10179 = vpack.c.b16 %v9823, %v9819
        %v10180 = vpack.c.b16 %v9824, %v9820
        %v10181 = vpack.c.b16 %v9825, %v9821
        %v10182 = vpack.c.b16 %v9830, %v9826
        %v10183 = vpack.c.b16 %v9831, %v9827
        %v10184 = vpack.c.b16 %v9832, %v9828
        %v10185 = vpack.c.b16 %v9833, %v9829
        %v10186 = vpack.c.b16 %v9838, %v9834
        %v10187 = vpack.c.b16 %v9839, %v9835
        %v10188 = vpack.c.b16 %v9840, %v9836
        %v10189 = vpack.c.b16 %v9841, %v9837
        %v10190 = vpack.c.b16 %v9846, %v9842
        %v10191 = vpack.c.b16 %v9847, %v9843
        %v10192 = vpack.c.b16 %v9848, %v9844
        %v10193 = vpack.c.b16 %v9849, %v9845
        %v10194 = vpack.c.b16 %v9854, %v9850
        %v10195 = vpack.c.b16 %v9855, %v9851
        %v10196 = vpack.c.b16 %v9856, %v9852
        %v10197 = vpack.c.b16 %v9857, %v9853
        %v10198 = vpack.c.b16 %v9862, %v9858
        %v10199 = vpack.c.b16 %v9863, %v9859
        %v10200 = vpack.c.b16 %v9864, %v9860
        %v10201 = vpack.c.b16 %v9865, %v9861
        %v10202 = vpack.c.b16 %v9870, %v9866
        %v10203 = vpack.c.b16 %v9871, %v9867
        %v10204 = vpack.c.b16 %v9872, %v9868
        %v10205 = vpack.c.b16 %v9873, %v9869
        %v10206 = vpack.c.b16 %v9878, %v9874
        %v10207 = vpack.c.b16 %v9879, %v9875
        %v10208 = vpack.c.b16 %v9880, %v9876
        %v10209 = vpack.c.b16 %v9881, %v9877
        %v10210 = vpack.c.b16 %v9886, %v9882
        %v10211 = vpack.c.b16 %v9887, %v9883
        %v10212 = vpack.c.b16 %v9888, %v9884
        %v10213 = vpack.c.b16 %v9889, %v9885
        %v10214 = vpack.c.b16 %v9894, %v9890
        %v10215 = vpack.c.b16 %v9895, %v9891
        %v10216 = vpack.c.b16 %v9896, %v9892
        %v10217 = vpack.c.b16 %v9897, %v9893
        %v10218 = vpack.c.b16 %v9902, %v9898
        %v10219 = vpack.c.b16 %v9903, %v9899
        %v10220 = vpack.c.b16 %v9904, %v9900
        %v10221 = vpack.c.b16 %v9905, %v9901
        %v10222 = vpack.c.b16 %v9910, %v9906
        %v10223 = vpack.c.b16 %v9911, %v9907
        %v10224 = vpack.c.b16 %v9912, %v9908
        %v10225 = vpack.c.b16 %v9913, %v9909
        %v10226 = vpack.c.b16 %v9918, %v9914
        %v10227 = vpack.c.b16 %v9919, %v9915
        %v10228 = vpack.c.b16 %v9920, %v9916
        %v10229 = vpack.c.b16 %v9921, %v9917
        %v10230 = vpack.c.b16 %v9926, %v9922
        %v10231 = vpack.c.b16 %v9927, %v9923
        %v10232 = vpack.c.b16 %v9928, %v9924
        %v10233 = vpack.c.b16 %v9929, %v9925
        %v10234 = vpack.c.b16 %v9934, %v9930
        %v10235 = vpack.c.b16 %v9935, %v9931
        %v10236 = vpack.c.b16 %v9936, %v9932
        %v10237 = vpack.c.b16 %v9937, %v9933
        %v10238 = vpack.c.b16 %v9942, %v9938
        %v10239 = vpack.c.b16 %v9943, %v9939
        %v10240 = vpack.c.b16 %v9944, %v9940
        %v10241 = vpack.c.b16 %v9945, %v9941
        %v10242 = vpack.c.b16 %v9950, %v9946
        %v10243 = vpack.c.b16 %v9951, %v9947
        %v10244 = vpack.c.b16 %v9952, %v9948
        %v10245 = vpack.c.b16 %v9953, %v9949
        %v10246 = vpack.c.b16 %v9958, %v9954
        %v10247 = vpack.c.b16 %v9959, %v9955
        %v10248 = vpack.c.b16 %v9960, %v9956
        %v10249 = vpack.c.b16 %v9961, %v9957
        %v10250 = vpack.c.b16 %v9966, %v9962
        %v10251 = vpack.c.b16 %v9967, %v9963
        %v10252 = vpack.c.b16 %v9968, %v9964
        %v10253 = vpack.c.b16 %v9969, %v9965
        %v10254 = vpack.c.b16 %v9974, %v9970
        %v10255 = vpack.c.b16 %v9975, %v9971
        %v10256 = vpack.c.b16 %v9976, %v9972
        %v10257 = vpack.c.b16 %v9977, %v9973
        %v10258 = vpack.c.b16 %v9982, %v9978
        %v10259 = vpack.c.b16 %v9983, %v9979
        %v10260 = vpack.c.b16 %v9984, %v9980
        %v10261 = vpack.c.b16 %v9985, %v9981
        %v10262 = vpack.c.b16 %v9990, %v9986
        %v10263 = vpack.c.b16 %v9991, %v9987
        %v10264 = vpack.c.b16 %v9992, %v9988
        %v10265 = vpack.c.b16 %v9993, %v9989
        %v10266 = vpack.c.b16 %v9998, %v9994
        %v10267 = vpack.c.b16 %v9999, %v9995
        %v10268 = vpack.c.b16 %v10000, %v9996
        %v10269 = vpack.c.b16 %v10001, %v9997
        %v10270 = vpack.c.b16 %v10006, %v10002
        %v10271 = vpack.c.b16 %v10007, %v10003
        %v10272 = vpack.c.b16 %v10008, %v10004
        %v10273 = vpack.c.b16 %v10009, %v10005
        %v10274 = vpack.c.b16 %v10014, %v10010
        %v10275 = vpack.c.b16 %v10015, %v10011
        %v10276 = vpack.c.b16 %v10016, %v10012
        %v10277 = vpack.c.b16 %v10017, %v10013
        %v10278 = vpack.c.b16 %v10022, %v10018
        %v10279 = vpack.c.b16 %v10023, %v10019
        %v10280 = vpack.c.b16 %v10024, %v10020
        %v10281 = vpack.c.b16 %v10025, %v10021
        %v10282 = vpack.c.b16 %v10030, %v10026
        %v10283 = vpack.c.b16 %v10031, %v10027
        %v10284 = vpack.c.b16 %v10032, %v10028
        %v10285 = vpack.c.b16 %v10033, %v10029
        %v10286 = vpack.c.b16 %v10038, %v10034
        %v10287 = vpack.c.b16 %v10039, %v10035
        %v10288 = vpack.c.b16 %v10040, %v10036
        %v10289 = vpack.c.b16 %v10041, %v10037
        %v10290 = vpack.c.b16 %v10046, %v10042
        %v10291 = vpack.c.b16 %v10047, %v10043
        %v10292 = vpack.c.b16 %v10048, %v10044
        %v10293 = vpack.c.b16 %v10049, %v10045
        %v10294 = vpack.c.b16 %v10054, %v10050
        %v10295 = vpack.c.b16 %v10055, %v10051
        %v10296 = vpack.c.b16 %v10056, %v10052
        %v10297 = vpack.c.b16 %v10057, %v10053
        %v10298 = vpack.c.b16 %v10062, %v10058
        %v10299 = vpack.c.b16 %v10063, %v10059
        %v10300 = vpack.c.b16 %v10064, %v10060
        %v10301 = vpack.c.b16 %v10065, %v10061
        %v10302 = vpack.c.b16 %v10070, %v10066
        %v10303 = vpack.c.b16 %v10071, %v10067
        %v10304 = vpack.c.b16 %v10072, %v10068
        %v10305 = vpack.c.b16 %v10073, %v10069
        %v10306 = vpack.c.b16 %v10078, %v10074
        %v10307 = vpack.c.b16 %v10079, %v10075
        %v10308 = vpack.c.b16 %v10080, %v10076
        %v10309 = vpack.c.b16 %v10081, %v10077
        %v10310 = vpack.c.b16 %v10086, %v10082
        %v10311 = vpack.c.b16 %v10087, %v10083
        %v10312 = vpack.c.b16 %v10088, %v10084
        %v10313 = vpack.c.b16 %v10089, %v10085
        %10538 = vmatprep.subr.bf16.mxu0 %v10091
        %10539 = vmatpush1.bf16.msra.mxu0 %v10090
        %10540 = vmatprep.subr.bf16.mxu0 %v10095
        %10541 = vmatpush1.bf16.msra.mxu0 %v10094
        %10542 = vmatprep.subr.bf16.mxu0 %v10099
        %10543 = vmatpush1.bf16.msra.mxu0 %v10098
        %10544 = vmatprep.subr.bf16.mxu0 %v10103
        %10545 = vmatpush1.bf16.msra.mxu0 %v10102
        %10546 = vmatprep.subr.bf16.mxu0 %v10107
        %10547 = vmatpush1.bf16.msra.mxu0 %v10106
        %10548 = vmatprep.subr.bf16.mxu0 %v10111
        %10549 = vmatpush1.bf16.msra.mxu0 %v10110
        %10550 = vmatprep.subr.bf16.mxu0 %v10115
        %10551 = vmatpush1.bf16.msra.mxu0 %v10114
        %10552 = vmatprep.subr.bf16.mxu0 %v10119
        %10553 = vmatpush1.bf16.msra.mxu0 %v10118
        %10554 = vmatprep.subr.bf16.mxu0 %v10123
        %10555 = vmatpush1.bf16.msra.mxu0 %v10122
        %10556 = vmatprep.subr.bf16.mxu0 %v10127
        %10557 = vmatpush1.bf16.msra.mxu0 %v10126
        %10558 = vmatprep.subr.bf16.mxu0 %v10131
        %10559 = vmatpush1.bf16.msra.mxu0 %v10130
        %10560 = vmatprep.subr.bf16.mxu0 %v10135
        %10561 = vmatpush1.bf16.msra.mxu0 %v10134
        %10562 = vmatprep.subr.bf16.mxu0 %v10139
        %10563 = vmatpush1.bf16.msra.mxu0 %v10138
        %10564 = vmatprep.subr.bf16.mxu0 %v10143
        %10565 = vmatpush1.bf16.msra.mxu0 %v10142
        %10566 = vmatprep.subr.bf16.mxu0 %v10147
        %10567 = vmatpush1.bf16.msra.mxu0 %v10146
        %10568 = vmatprep.subr.bf16.mxu0 %v10151
        %10569 = vmatpush1.bf16.msra.mxu0 %v10150
        %10570 = vmatprep.mubr.bf16.mxu0 %v9405
        %10571 = vmatmul.mubr.bf16.gmra.mrb[0].mxu0 %v9404
        %v10572 = vpop.f32.mrb[0].mxu0
        %v10573 = vadd.f32 0.0, %v10572
        %v10574 = vpop.f32.mrb[0].mxu0
        %v10575 = vadd.f32 0.0, %v10574
        %v10576 = vpop.f32.mrb[0].mxu0
        %v10577 = vpop.f32.mrb[0].mxu0
        %10578 = vdwg.mxu0
        %10579 = vmatprep.subr.bf16.mxu0 %v10155
        %10580 = vmatpush1.bf16.msra.mxu0 %v10154
        %10581 = vmatprep.subr.bf16.mxu0 %v10159
        %10582 = vmatpush1.bf16.msra.mxu0 %v10158
        %10583 = vmatprep.subr.bf16.mxu0 %v10163
        %10584 = vmatpush1.bf16.msra.mxu0 %v10162
        %10585 = vmatprep.subr.bf16.mxu0 %v10167
        %10586 = vmatpush1.bf16.msra.mxu0 %v10166
        %10587 = vmatprep.subr.bf16.mxu0 %v10171
        %10588 = vmatpush1.bf16.msra.mxu0 %v10170
        %10589 = vmatprep.subr.bf16.mxu0 %v10175
        %10590 = vmatpush1.bf16.msra.mxu0 %v10174
        %10591 = vmatprep.subr.bf16.mxu0 %v10179
        %10592 = vmatpush1.bf16.msra.mxu0 %v10178
        %10593 = vmatprep.subr.bf16.mxu0 %v10183
        %10594 = vmatpush1.bf16.msra.mxu0 %v10182
        %10595 = vmatprep.subr.bf16.mxu0 %v10187
        %10596 = vmatpush1.bf16.msra.mxu0 %v10186
        %10597 = vmatprep.subr.bf16.mxu0 %v10191
        %10598 = vmatpush1.bf16.msra.mxu0 %v10190
        %10599 = vmatprep.subr.bf16.mxu0 %v10195
        %10600 = vmatpush1.bf16.msra.mxu0 %v10194
        %10601 = vmatprep.subr.bf16.mxu0 %v10199
        %10602 = vmatpush1.bf16.msra.mxu0 %v10198
        %10603 = vmatprep.subr.bf16.mxu0 %v10203
        %10604 = vmatpush1.bf16.msra.mxu0 %v10202
        %10605 = vmatprep.subr.bf16.mxu0 %v10207
        %10606 = vmatpush1.bf16.msra.mxu0 %v10206
        %10607 = vmatprep.subr.bf16.mxu0 %v10211
        %10608 = vmatpush1.bf16.msra.mxu0 %v10210
        %10609 = vmatprep.subr.bf16.mxu0 %v10215
        %10610 = vmatpush1.bf16.msra.mxu0 %v10214
        %10611 = vmatprep.mubr.bf16.mxu0 %v9407
        %10612 = vmatmul.mubr.bf16.gmra.mrb[0].mxu0 %v9406
        %v10613 = vpop.f32.mrb[0].mxu0
        %v10614 = vadd.f32 %v10573, %v10613
        %v10615 = vpop.f32.mrb[0].mxu0
        %v10616 = vadd.f32 %v10575, %v10615
        %v10617 = vpop.f32.mrb[0].mxu0
        %v10618 = vpop.f32.mrb[0].mxu0
        %10619 = vdwg.mxu0
        %10620 = vmatprep.subr.bf16.mxu0 %v10219
        %10621 = vmatpush1.bf16.msra.mxu0 %v10218
        %10622 = vmatprep.subr.bf16.mxu0 %v10223
        %10623 = vmatpush1.bf16.msra.mxu0 %v10222
        %10624 = vmatprep.subr.bf16.mxu0 %v10227
        %10625 = vmatpush1.bf16.msra.mxu0 %v10226
        %10626 = vmatprep.subr.bf16.mxu0 %v10231
        %10627 = vmatpush1.bf16.msra.mxu0 %v10230
        %10628 = vmatprep.subr.bf16.mxu0 %v10235
        %10629 = vmatpush1.bf16.msra.mxu0 %v10234
        %10630 = vmatprep.subr.bf16.mxu0 %v10239
        %10631 = vmatpush1.bf16.msra.mxu0 %v10238
        %10632 = vmatprep.subr.bf16.mxu0 %v10243
        %10633 = vmatpush1.bf16.msra.mxu0 %v10242
        %10634 = vmatprep.subr.bf16.mxu0 %v10247
        %10635 = vmatpush1.bf16.msra.mxu0 %v10246
        %10636 = vmatprep.subr.bf16.mxu0 %v10251
        %10637 = vmatpush1.bf16.msra.mxu0 %v10250
        %10638 = vmatprep.subr.bf16.mxu0 %v10255
        %10639 = vmatpush1.bf16.msra.mxu0 %v10254
        %10640 = vmatprep.subr.bf16.mxu0 %v10259
        %10641 = vmatpush1.bf16.msra.mxu0 %v10258
        %10642 = vmatprep.subr.bf16.mxu0 %v10263
        %10643 = vmatpush1.bf16.msra.mxu0 %v10262
        %10644 = vmatprep.subr.bf16.mxu0 %v10267
        %10645 = vmatpush1.bf16.msra.mxu0 %v10266
        %10646 = vmatprep.subr.bf16.mxu0 %v10271
        %10647 = vmatpush1.bf16.msra.mxu0 %v10270
        %10648 = vmatprep.subr.bf16.mxu0 %v10275
        %10649 = vmatpush1.bf16.msra.mxu0 %v10274
        %10650 = vmatprep.subr.bf16.mxu0 %v10279
        %10651 = vmatpush1.bf16.msra.mxu0 %v10278
        %10652 = vmatprep.mubr.bf16.mxu0 %v9409
        %10653 = vmatmul.mubr.bf16.gmra.mrb[0].mxu0 %v9408
        %v10654 = vpop.f32.mrb[0].mxu0
        %v10655 = vadd.f32 %v10614, %v10654
        %v10656 = vpop.f32.mrb[0].mxu0
        %v10657 = vadd.f32 %v10616, %v10656
        %v10658 = vpop.f32.mrb[0].mxu0
        %v10659 = vpop.f32.mrb[0].mxu0
        %10660 = vdwg.mxu0
        %10661 = vmatprep.subr.bf16.mxu0 %v10283
        %10662 = vmatpush1.bf16.msra.mxu0 %v10282
        %10663 = vmatprep.subr.bf16.mxu0 %v10287
        %10664 = vmatpush1.bf16.msra.mxu0 %v10286
        %10665 = vmatprep.subr.bf16.mxu0 %v10291
        %10666 = vmatpush1.bf16.msra.mxu0 %v10290
        %10667 = vmatprep.subr.bf16.mxu0 %v10295
        %10668 = vmatpush1.bf16.msra.mxu0 %v10294
        %10669 = vmatprep.subr.bf16.mxu0 %v10299
        %10670 = vmatpush1.bf16.msra.mxu0 %v10298
        %10671 = vmatprep.subr.bf16.mxu0 %v10303
        %10672 = vmatpush1.bf16.msra.mxu0 %v10302
        %10673 = vmatprep.subr.bf16.mxu0 %v10307
        %10674 = vmatpush1.bf16.msra.mxu0 %v10306
        %10675 = vmatprep.subr.bf16.mxu0 %v10311
        %10676 = vmatpush1.bf16.msra.mxu0 %v10310
        %10677 = vmatprep.subr.bf16.mxu0 0
        %10678 = vmatpush1.bf16.msra.mxu0 0
        %10679 = vmatprep.subr.bf16.mxu0 0
        %10680 = vmatpush1.bf16.msra.mxu0 0
        %10681 = vmatprep.subr.bf16.mxu0 0
        %10682 = vmatpush1.bf16.msra.mxu0 0
        %10683 = vmatprep.subr.bf16.mxu0 0
        %10684 = vmatpush1.bf16.msra.mxu0 0
        %10685 = vmatprep.subr.bf16.mxu0 0
        %10686 = vmatpush1.bf16.msra.mxu0 0
        %10687 = vmatprep.subr.bf16.mxu0 0
        %10688 = vmatpush1.bf16.msra.mxu0 0
        %10689 = vmatprep.subr.bf16.mxu0 0
        %10690 = vmatpush1.bf16.msra.mxu0 0
        %10691 = vmatprep.subr.bf16.mxu0 0
        %10692 = vmatpush1.bf16.msra.mxu0 0
        %10693 = vmatprep.mubr.bf16.mxu0 0
        %10694 = vmatmul.mubr.bf16.gmra.mrb[0].mxu0 %v9410
        %v10695 = vpop.f32.mrb[0].mxu0
        %v10696 = vadd.f32 %v10655, %v10695
        %v10697 = vpop.f32.mrb[0].mxu0
        %v10698 = vadd.f32 %v10657, %v10697
        %v10699 = vpop.f32.mrb[0].mxu0
        %v10700 = vpop.f32.mrb[0].mxu0
        %10701 = vdwg.mxu0
        %10702 = vmatprep.subr.bf16.mxu0 %v10093
        %10703 = vmatpush1.bf16.msra.mxu0 %v10092
        %10704 = vmatprep.subr.bf16.mxu0 %v10097
        %10705 = vmatpush1.bf16.msra.mxu0 %v10096
        %10706 = vmatprep.subr.bf16.mxu0 %v10101
        %10707 = vmatpush1.bf16.msra.mxu0 %v10100
        %10708 = vmatprep.subr.bf16.mxu0 %v10105
        %10709 = vmatpush1.bf16.msra.mxu0 %v10104
        %10710 = vmatprep.subr.bf16.mxu0 %v10109
        %10711 = vmatpush1.bf16.msra.mxu0 %v10108
        %10712 = vmatprep.subr.bf16.mxu0 %v10113
        %10713 = vmatpush1.bf16.msra.mxu0 %v10112
        %10714 = vmatprep.subr.bf16.mxu0 %v10117
        %10715 = vmatpush1.bf16.msra.mxu0 %v10116
        %10716 = vmatprep.subr.bf16.mxu0 %v10121
        %10717 = vmatpush1.bf16.msra.mxu0 %v10120
        %10718 = vmatprep.subr.bf16.mxu0 %v10125
        %10719 = vmatpush1.bf16.msra.mxu0 %v10124
        %10720 = vmatprep.subr.bf16.mxu0 %v10129
        %10721 = vmatpush1.bf16.msra.mxu0 %v10128
        %10722 = vmatprep.subr.bf16.mxu0 %v10133
        %10723 = vmatpush1.bf16.msra.mxu0 %v10132
        %10724 = vmatprep.subr.bf16.mxu0 %v10137
        %10725 = vmatpush1.bf16.msra.mxu0 %v10136
        %10726 = vmatprep.subr.bf16.mxu0 %v10141
        %10727 = vmatpush1.bf16.msra.mxu0 %v10140
        %10728 = vmatprep.subr.bf16.mxu0 %v10145
        %10729 = vmatpush1.bf16.msra.mxu0 %v10144
        %10730 = vmatprep.subr.bf16.mxu0 %v10149
        %10731 = vmatpush1.bf16.msra.mxu0 %v10148
        %10732 = vmatprep.subr.bf16.mxu0 %v10153
        %10733 = vmatpush1.bf16.msra.mxu0 %v10152
        %10734 = vmatprep.mubr.bf16.mxu0 %v9405
        %10735 = vmatmul.mubr.bf16.gmra.mrb[0].mxu0 %v9404
        %v10736 = vpop.f32.mrb[0].mxu0
        %v10737 = vadd.f32 0.0, %v10736
        %v10738 = vpop.f32.mrb[0].mxu0
        %v10739 = vadd.f32 0.0, %v10738
        %v10740 = vpop.f32.mrb[0].mxu0
        %v10741 = vpop.f32.mrb[0].mxu0
        %10742 = vdwg.mxu0
        %10743 = vmatprep.subr.bf16.mxu0 %v10157
        %10744 = vmatpush1.bf16.msra.mxu0 %v10156
        %10745 = vmatprep.subr.bf16.mxu0 %v10161
        %10746 = vmatpush1.bf16.msra.mxu0 %v10160
        %10747 = vmatprep.subr.bf16.mxu0 %v10165
        %10748 = vmatpush1.bf16.msra.mxu0 %v10164
        %10749 = vmatprep.subr.bf16.mxu0 %v10169
        %10750 = vmatpush1.bf16.msra.mxu0 %v10168
        %10751 = vmatprep.subr.bf16.mxu0 %v10173
        %10752 = vmatpush1.bf16.msra.mxu0 %v10172
        %10753 = vmatprep.subr.bf16.mxu0 %v10177
        %10754 = vmatpush1.bf16.msra.mxu0 %v10176
        %10755 = vmatprep.subr.bf16.mxu0 %v10181
        %10756 = vmatpush1.bf16.msra.mxu0 %v10180
        %10757 = vmatprep.subr.bf16.mxu0 %v10185
        %10758 = vmatpush1.bf16.msra.mxu0 %v10184
        %10759 = vmatprep.subr.bf16.mxu0 %v10189
        %10760 = vmatpush1.bf16.msra.mxu0 %v10188
        %10761 = vmatprep.subr.bf16.mxu0 %v10193
        %10762 = vmatpush1.bf16.msra.mxu0 %v10192
        %10763 = vmatprep.subr.bf16.mxu0 %v10197
        %10764 = vmatpush1.bf16.msra.mxu0 %v10196
        %10765 = vmatprep.subr.bf16.mxu0 %v10201
        %10766 = vmatpush1.bf16.msra.mxu0 %v10200
        %10767 = vmatprep.subr.bf16.mxu0 %v10205
        %10768 = vmatpush1.bf16.msra.mxu0 %v10204
        %10769 = vmatprep.subr.bf16.mxu0 %v10209
        %10770 = vmatpush1.bf16.msra.mxu0 %v10208
        %10771 = vmatprep.subr.bf16.mxu0 %v10213
        %10772 = vmatpush1.bf16.msra.mxu0 %v10212
        %10773 = vmatprep.subr.bf16.mxu0 %v10217
        %10774 = vmatpush1.bf16.msra.mxu0 %v10216
        %10775 = vmatprep.mubr.bf16.mxu0 %v9407
        %10776 = vmatmul.mubr.bf16.gmra.mrb[0].mxu0 %v9406
        %v10777 = vpop.f32.mrb[0].mxu0
        %v10778 = vadd.f32 %v10737, %v10777
        %v10779 = vpop.f32.mrb[0].mxu0
        %v10780 = vadd.f32 %v10739, %v10779
        %v10781 = vpop.f32.mrb[0].mxu0
        %v10782 = vpop.f32.mrb[0].mxu0
        %10783 = vdwg.mxu0
        %10784 = vmatprep.subr.bf16.mxu0 %v10221
        %10785 = vmatpush1.bf16.msra.mxu0 %v10220
        %10786 = vmatprep.subr.bf16.mxu0 %v10225
        %10787 = vmatpush1.bf16.msra.mxu0 %v10224
        %10788 = vmatprep.subr.bf16.mxu0 %v10229
        %10789 = vmatpush1.bf16.msra.mxu0 %v10228
        %10790 = vmatprep.subr.bf16.mxu0 %v10233
        %10791 = vmatpush1.bf16.msra.mxu0 %v10232
        %10792 = vmatprep.subr.bf16.mxu0 %v10237
        %10793 = vmatpush1.bf16.msra.mxu0 %v10236
        %10794 = vmatprep.subr.bf16.mxu0 %v10241
        %10795 = vmatpush1.bf16.msra.mxu0 %v10240
        %10796 = vmatprep.subr.bf16.mxu0 %v10245
        %10797 = vmatpush1.bf16.msra.mxu0 %v10244
        %10798 = vmatprep.subr.bf16.mxu0 %v10249
        %10799 = vmatpush1.bf16.msra.mxu0 %v10248
        %10800 = vmatprep.subr.bf16.mxu0 %v10253
        %10801 = vmatpush1.bf16.msra.mxu0 %v10252
        %10802 = vmatprep.subr.bf16.mxu0 %v10257
        %10803 = vmatpush1.bf16.msra.mxu0 %v10256
        %10804 = vmatprep.subr.bf16.mxu0 %v10261
        %10805 = vmatpush1.bf16.msra.mxu0 %v10260
        %10806 = vmatprep.subr.bf16.mxu0 %v10265
        %10807 = vmatpush1.bf16.msra.mxu0 %v10264
        %10808 = vmatprep.subr.bf16.mxu0 %v10269
        %10809 = vmatpush1.bf16.msra.mxu0 %v10268
        %10810 = vmatprep.subr.bf16.mxu0 %v10273
        %10811 = vmatpush1.bf16.msra.mxu0 %v10272
        %10812 = vmatprep.subr.bf16.mxu0 %v10277
        %10813 = vmatpush1.bf16.msra.mxu0 %v10276
        %10814 = vmatprep.subr.bf16.mxu0 %v10281
        %10815 = vmatpush1.bf16.msra.mxu0 %v10280
        %10816 = vmatprep.mubr.bf16.mxu0 %v9409
        %10817 = vmatmul.mubr.bf16.gmra.mrb[0].mxu0 %v9408
        %v10818 = vpop.f32.mrb[0].mxu0
        %v10819 = vadd.f32 %v10778, %v10818
        %v10820 = vpop.f32.mrb[0].mxu0
        %v10821 = vadd.f32 %v10780, %v10820
        %v10822 = vpop.f32.mrb[0].mxu0
        %v10823 = vpop.f32.mrb[0].mxu0
        %10824 = vdwg.mxu0
        %10825 = vmatprep.subr.bf16.mxu0 %v10285
        %10826 = vmatpush1.bf16.msra.mxu0 %v10284
        %10827 = vmatprep.subr.bf16.mxu0 %v10289
        %10828 = vmatpush1.bf16.msra.mxu0 %v10288
        %10829 = vmatprep.subr.bf16.mxu0 %v10293
        %10830 = vmatpush1.bf16.msra.mxu0 %v10292
        %10831 = vmatprep.subr.bf16.mxu0 %v10297
        %10832 = vmatpush1.bf16.msra.mxu0 %v10296
        %10833 = vmatprep.subr.bf16.mxu0 %v10301
        %10834 = vmatpush1.bf16.msra.mxu0 %v10300
        %10835 = vmatprep.subr.bf16.mxu0 %v10305
        %10836 = vmatpush1.bf16.msra.mxu0 %v10304
        %10837 = vmatprep.subr.bf16.mxu0 %v10309
        %10838 = vmatpush1.bf16.msra.mxu0 %v10308
        %10839 = vmatprep.subr.bf16.mxu0 %v10313
        %10840 = vmatpush1.bf16.msra.mxu0 %v10312
        %10841 = vmatprep.subr.bf16.mxu0 0
        %10842 = vmatpush1.bf16.msra.mxu0 0
        %10843 = vmatprep.subr.bf16.mxu0 0
        %10844 = vmatpush1.bf16.msra.mxu0 0
        %10845 = vmatprep.subr.bf16.mxu0 0
        %10846 = vmatpush1.bf16.msra.mxu0 0
        %10847 = vmatprep.subr.bf16.mxu0 0
        %10848 = vmatpush1.bf16.msra.mxu0 0
        %10849 = vmatprep.subr.bf16.mxu0 0
        %10850 = vmatpush1.bf16.msra.mxu0 0
        %10851 = vmatprep.subr.bf16.mxu0 0
        %10852 = vmatpush1.bf16.msra.mxu0 0
        %10853 = vmatprep.subr.bf16.mxu0 0
        %10854 = vmatpush1.bf16.msra.mxu0 0
        %10855 = vmatprep.subr.bf16.mxu0 0
        %10856 = vmatpush1.bf16.msra.mxu0 0
        %10857 = vmatprep.mubr.bf16.mxu0 0
        %10858 = vmatmul.mubr.bf16.gmra.mrb[0].mxu0 %v9410
        %v10859 = vpop.f32.mrb[0].mxu0
        %v10860 = vadd.f32 %v10819, %v10859
        %v10861 = vpop.f32.mrb[0].mxu0
        %v10862 = vadd.f32 %v10821, %v10861
        %v10863 = vpop.f32.mrb[0].mxu0
        %v10864 = vpop.f32.mrb[0].mxu0
        %10865 = vdwg.mxu0
        %v10866 = vadd.f32 %v8987, %v10696
        %v10867 = vadd.f32 %v8989, %v10698
        %v10868 = vadd.f32 %v9151, %v10860
        %v10869 = vadd.f32 %v9153, %v10862
        %v10870 = vld [vmem:[#allocation8] sm:$0xf]
        %v10872 = vlaneseq
        %v10873 = vshrl.u32 %v10872, 7
        %v10874 = vsub.s32 0, %v10873
        %v10875 = vrot.slane %v10870, %v10874
        %v10876 = vlaneseq
        %v10877 = vshrl.u32 %v10876, 7
        %v10878 = vsub.s32 1, %v10877
        %v10879 = vrot.slane %v10870, %v10878
        %v10880 = vlaneseq
        %v10881 = vshrl.u32 %v10880, 7
        %v10882 = vsub.s32 2, %v10881
        %v10883 = vrot.slane %v10870, %v10882
        %v10884 = vlaneseq
        %v10885 = vshrl.u32 %v10884, 7
        %v10886 = vsub.s32 3, %v10885
        %v10887 = vrot.slane %v10870, %v10886
        %v10892 = vadd.f32 %v10866, %v10875
        %v10893 = vadd.f32 %v10867, %v10879
        %v10894 = vadd.f32 %v10868, %v10883
        %v10895 = vadd.f32 %v10869, %v10887
        %v10896 = vmax.f32 %v10892, 0.0
        %v10897 = vmax.f32 %v10893, 0.0
        %v10898 = vmax.f32 %v10894, 0.0
        %v10899 = vmax.f32 %v10895, 0.0
        %10900 = vst [vmem:[%s279] sm:$0xff] %v10896
        %10901 = vst [vmem:[%s279 + $0x8] sm:$0xff] %v10897
        %10902 = vst [vmem:[%s279 + $0x10] sm:$0xff] %v10898
        %10903 = vst [vmem:[%s279 + $0x18] sm:$0xff] %v10899
        %p10904 = scmp.lt.s32.totalorder %s19, 1
        %s10905 = scalar_select %p10904, %s19, 1
        %s10906 = smul.addr %s10905, 4
        %s10907 = smul.addr %s10906, 8
        %s10908 = scalar_lea.vmem %s5, %s10907
        // Predicated region
        $region57: #{double_conv_forward.1} parent=39 // pred_check
          %p10909 = pneg %p147
        $region58: #{double_conv_forward.1} parent=39 // pred_check_branch
          %10911 = sbr.rel (%p10909) target = $region60
        $region59: #{double_conv_forward.1} parent=39 // pred_region
          _
        $region60: #{double_conv_forward.1} parent=39 // pred_fallthru
          _
      $region40: #{double_conv_forward.1} parent=5 // pred_fallthru
        _
      %p10912 = scmp.le.s32.totalorder 2, %s14
      // Predicated region
      $region61: #{double_conv_forward.1} parent=5 // pred_check
        %p10913 = pneg %p10912
      $region62: #{double_conv_forward.1} parent=5 // pred_check_branch
        %10915 = sbr.rel (%p10913) target = $region64
      $region63: #{double_conv_forward.1} parent=5 // pred_region
        %s10916 = ssub.s32 %s14, 2
        // Predicated region
        $region65: #{double_conv_forward.1} parent=63 // pred_check
          %p10917 = pneg %p153
        $region66: #{double_conv_forward.1} parent=63 // pred_check_branch
          %10919 = sbr.rel (%p10917) target = $region68
        $region67: #{double_conv_forward.1} parent=63 // pred_region
          %p10920 = scmp.lt.s32.totalorder %s20, 1
          %s10921 = scalar_select %p10920, %s20, 1
          %s10922 = smul.addr %s10921, 4
          %s10923 = smul.addr %s10922, 8
          %s10924 = scalar_lea.vmem %s5, %s10923
        $region68: #{double_conv_forward.1} parent=63 // pred_fallthru
          _
      $region64: #{double_conv_forward.1} parent=5 // pred_fallthru
        _
    $region6: #{double_conv_forward.1} parent=1 // loop_footer
      %s18 = sadd.s32 1, %s14
    $region7: #{double_conv_forward.1} parent=1 // loop_footer_branch
      %13 = sbr.rel target = $region3
    $region8: #{double_conv_forward.1} parent=1 // loop_exit
      _
    %10925 = vsyncpa [#allocation4], 1
    %s10926 = scalar_lea.sflag [#allocation4], 1
    %10927 = vsyncpa %s10926, 1
    %10928 = vsyncpa [#allocation6], 1
    %10929 = vsyncpa [#allocation9], 1

</llo_original>
